<compile_context>
chip_gen: v5e
topology: v5e:2x2
jax: 0.10.0
libtpu: 0.0.40
codegen_flags: <defaults>
</compile_context>

<pallas_src>
import functools

import jax
import jax.numpy as jnp
from jax.experimental import pallas as pl
from jax.experimental.pallas import tpu as pltpu

BN_EPS = 1e-5
LANE = 128
VMEM_LIMIT = 64 * 1024 * 1024          # scoped VMEM limit handed to Mosaic
VMEM_STEP_BUDGET = 32 * 1024 * 1024    # per-grid-step working set incl. double buffers


def _round_up(x, m):
    return ((x + m - 1) // m) * m


# ----------------------------- Pallas kernels ------------------------------ #

def _conv_single_kernel(p_ref, w_ref, shift_ref, o_ref, *, relu):
    # patches (TM,K) @ BN-scale-folded weights (K,TN) on the MXU, fused shift
    # (+ ReLU).  Single K step -> write result directly, no accumulator scratch.
    out = jnp.dot(p_ref[...], w_ref[...], preferred_element_type=jnp.float32)
    out = out + shift_ref[...]
    if relu:
        out = jnp.maximum(out, 0.0)
    o_ref[...] = out.astype(o_ref.dtype)


def _conv_single_res_kernel(p_ref, w_ref, shift_ref, res_ref, o_ref, *, relu):
    out = jnp.dot(p_ref[...], w_ref[...], preferred_element_type=jnp.float32)
    out = out + shift_ref[...] + res_ref[...].astype(jnp.float32)
    if relu:
        out = jnp.maximum(out, 0.0)
    o_ref[...] = out.astype(o_ref.dtype)


def _conv_ksplit_kernel(p_ref, w_ref, shift_ref, o_ref, acc_ref, *, relu):
    # K reduction grid axis (last, "arbitrary") with an f32 VMEM accumulator.
    k = pl.program_id(2)

    @pl.when(k == 0)
    def _():
        acc_ref[...] = jnp.zeros_like(acc_ref)

    acc_ref[...] += jnp.dot(p_ref[...], w_ref[...],
                            preferred_element_type=jnp.float32)

    @pl.when(k == pl.num_programs(2) - 1)
    def _():
        out = acc_ref[...] + shift_ref[...]
        if relu:
            out = jnp.maximum(out, 0.0)
        o_ref[...] = out.astype(o_ref.dtype)


def _conv_ksplit_res_kernel(p_ref, w_ref, shift_ref, res_ref, o_ref, acc_ref, *, relu):
    k = pl.program_id(2)

    @pl.when(k == 0)
    def _():
        acc_ref[...] = jnp.zeros_like(acc_ref)

    acc_ref[...] += jnp.dot(p_ref[...], w_ref[...],
                            preferred_element_type=jnp.float32)

    @pl.when(k == pl.num_programs(2) - 1)
    def _():
        out = acc_ref[...] + shift_ref[...] + res_ref[...].astype(jnp.float32)
        if relu:
            out = jnp.maximum(out, 0.0)
        o_ref[...] = out.astype(o_ref.dtype)


def _head_kernel(x_ref, w_ref, b_ref, o_ref):
    # AdaptiveAvgPool2d(1) + Linear: mean over the spatial (sublane) axis, then
    # a bf16 MXU matmul with f32 accumulation and an f32 bias add.
    pooled = jnp.mean(x_ref[...].astype(jnp.float32), axis=1)
    out = jnp.dot(pooled.astype(jnp.bfloat16), w_ref[...],
                  preferred_element_type=jnp.float32) + b_ref[...]
    o_ref[...] = out


# ------------------------------ glue helpers ------------------------------- #

def _extract_patches(x, kh, kw, stride, pad):
    """x: (N,H,W,C) bf16 -> im2col matrix (N*OH*OW, kh*kw*C) with NO transpose.

    The taps are stacked on axis=3 so the result is already laid out as
    (N,OH,OW,kh*kw,C); flattening is a contiguous reshape.
    """
    N, H, W, C = x.shape
    xp = jnp.pad(x, ((0, 0), (pad, pad), (pad, pad), (0, 0)))
    Hp, Wp = H + 2 * pad, W + 2 * pad
    OH = (Hp - kh) // stride + 1
    OW = (Wp - kw) // stride + 1
    cols = []
    for i in range(kh):
        for j in range(kw):
            cols.append(xp[:, i:i + stride * (OH - 1) + 1:stride,
                           j:j + stride * (OW - 1) + 1:stride, :])
    patches = jnp.stack(cols, axis=3)                  # (N, OH, OW, kh*kw, C)
    return patches.reshape(N * OH * OW, kh * kw * C), OH, OW


def _step_bytes(tm, tk, tn, has_res, has_acc):
    """Per-grid-step VMEM footprint estimate, incl. double buffering."""
    b = 2 * tm * tk * 2        # patches   (bf16, 2 buffers)
    b += 2 * tk * tn * 2       # weights   (bf16, 2 buffers)
    b += 2 * tm * tn * 2       # output    (bf16, 2 buffers)
    b += 2 * tn * 4            # shift
    if has_res:
        b += 2 * tm * tn * 2   # residual  (bf16, 2 buffers)
    if has_acc:
        b += tm * tn * 4       # f32 accumulator scratch
    return b


def _plan_tiling(M, K, Cout_p, has_res):
    """Pick (TM, TK, TN).  TK == K means no K reduction axis (weights resident)."""
    TN = 256 if Cout_p >= 512 else Cout_p
    TM = 8
    for cand in (256, 128, 64, 32, 16, 8):
        if M >= cand:
            TM = cand
            break
    while TM > 8 and _step_bytes(TM, 128, TN, has_res, True) > VMEM_STEP_BUDGET:
        TM //= 2
    if _step_bytes(TM, K, TN, has_res, False) <= VMEM_STEP_BUDGET:
        return TM, K, TN                              # no K split
    TK = 128                                          # 128 always divides K here
    for cand in range(K - 128, 0, -128):
        if K % cand == 0 and _step_bytes(TM, cand, TN, has_res, True) <= VMEM_STEP_BUDGET:
            TK = cand
            break
    return TM, TK, TN


# --------------------- one-time weight prepacking (no jit) ------------------ #

def prepack_conv(w, bn, cin_padded, *, stride, pad):
    """Fold BN into the weights + a per-channel shift; pad and repack to
    (K_pad, Cout_p) bf16.  Runs once, outside the jitted forward."""
    gamma, beta, mean, var = bn
    Cout, Cin, kh, kw = w.shape
    Cout_p = _round_up(Cout, LANE)
    inv = gamma / jnp.sqrt(var + BN_EPS)                    # (Cout,)
    shift = beta - mean * inv                               # (Cout,)
    shift_p = jnp.pad(shift, (0, Cout_p - Cout)).reshape(1, Cout_p).astype(jnp.float32)
    w_p = jnp.pad(w, ((0, Cout_p - Cout), (0, cin_padded - Cin), (0, 0), (0, 0)))
    # (Cout_p, Cin_p, kh, kw) -> (kh, kw, Cin_p, Cout_p) -> (K, Cout_p)
    wmat = jnp.transpose(w_p, (2, 3, 1, 0)).reshape(kh * kw * cin_padded, Cout_p)
    wmat = wmat * jnp.pad(inv, (0, Cout_p - Cout))[None, :]
    K = kh * kw * cin_padded
    K_pad = _round_up(K, LANE)                              # aligns conv1's K=147
    if K_pad != K:
        wmat = jnp.pad(wmat, ((0, K_pad - K), (0, 0)))
    return {'wmat': wmat.astype(jnp.bfloat16), 'shift': shift_p,
            'kh': kh, 'kw': kw, 'stride': stride, 'pad': pad,
            'cin_padded': cin_padded, 'cout_p': Cout_p, 'k': K, 'k_pad': K_pad}


def prepack_head(fc_w, fc_b, c_act):
    num_classes, c_in = fc_w.shape
    NC_p = _round_up(num_classes, LANE)
    w_p = jnp.pad(fc_w, ((0, NC_p - num_classes), (0, c_act - c_in)))
    return {'wmat': w_p.T.astype(jnp.bfloat16),                         # (C_act, NC_p)
            'bias': jnp.pad(fc_b, (0, NC_p - num_classes)).reshape(1, NC_p).astype(jnp.float32),
            'num_classes': num_classes}


def prepack_block(bp, c_in_pad):
    pb = {'convs': []}
    c_pad = c_in_pad
    for c in bp['convs']:
        pc = prepack_conv(c['w'], c['bn'], c_pad, stride=c['stride'], pad=c['pad'])
        pb['convs'].append(pc)
        c_pad = pc['cout_p']
    if bp['proj'] is None:
        pb['proj'] = None
    else:
        pb['proj'] = prepack_conv(bp['proj']['w'], bp['proj']['bn'], c_in_pad,
                                  stride=bp['stride'], pad=0)
    return pb, c_pad


def prepack_resnet(params, in_channels):
    packed = {'conv1': prepack_conv(params['conv1_w'], params['bn1'], in_channels,
                                    stride=2, pad=3),
              'stages': []}
    c_pad = packed['conv1']['cout_p']
    for stage in params['stages']:
        pstage = []
        for bp in stage:
            pb, c_pad = prepack_block(bp, c_pad)
            pstage.append(pb)
        packed['stages'].append(pstage)
    packed['head'] = prepack_head(params['fc_w'], params['fc_b'], c_pad)
    return packed


# ------------------------------ fused conv call ----------------------------- #

def conv_bn_packed(x, layer, *, relu, residual=None):
    """Fused conv2d(no bias) + BatchNorm(eval) [+ residual] [+ ReLU].

    x: (N,H,W,Cin_pad) NHWC (padded channels, if any, must be zero).
    Returns (N,OH,OW,Cout_pad) bf16 with padded channels exactly zero.
    """
    kh, kw = layer['kh'], layer['kw']
    stride, pad = layer['stride'], layer['pad']
    Cout_p, K, K_pad = layer['cout_p'], layer['k'], layer['k_pad']
    wmat, shift = layer['wmat'], layer['shift']

    N, H, W, Cin_act = x.shape
    assert Cin_act == layer['cin_padded']

    x_bf = x.astype(jnp.bfloat16)
    if kh == 1 and kw == 1 and pad == 0:
        xs = x_bf[:, ::stride, ::stride, :]
        OH, OW = xs.shape[1], xs.shape[2]
        pmat = xs.reshape(N * OH * OW, Cin_act)
    else:
        pmat, OH, OW = _extract_patches(x_bf, kh, kw, stride, pad)
    M = N * OH * OW
    if K_pad != K:
        pmat = jnp.pad(pmat, ((0, 0), (0, K_pad - K)))

    has_res = residual is not None
    TM, TK, TN = _plan_tiling(M, K_pad, Cout_p, has_res)
    Mp = _round_up(M, TM)
    if Mp != M:
        pmat = jnp.pad(pmat, ((0, Mp - M), (0, 0)))

    res = None
    if has_res:
        res = residual.reshape(-1, Cout_p).astype(jnp.bfloat16)
        if Mp != M:
            res = jnp.pad(res, ((0, Mp - M), (0, 0)))

    flops = 2 * Mp * K_pad * Cout_p
    bytes_accessed = (pmat.size * 2 + wmat.size * 2 + shift.size * 4
                      + Mp * Cout_p * 2 + (res.size * 2 if has_res else 0))
    cost = pl.CostEstimate(flops=flops, transcendentals=0,
                           bytes_accessed=bytes_accessed)

    if TK == K_pad:
        # fast path: weights resident, no accumulator scratch
        in_specs = [
            pl.BlockSpec((TM, K_pad), lambda i, j: (i, 0)),      # patches
            pl.BlockSpec((K_pad, TN), lambda i, j: (0, j)),      # scaled weights
            pl.BlockSpec((1, TN), lambda i, j: (0, j)),          # bn shift
        ]
        args = [pmat, wmat, shift]
        if has_res:
            in_specs.append(pl.BlockSpec((TM, TN), lambda i, j: (i, j)))
            args.append(res)
            kernel = functools.partial(_conv_single_res_kernel, relu=relu)
        else:
            kernel = functools.partial(_conv_single_kernel, relu=relu)
        out = pl.pallas_call(
            kernel,
            out_shape=jax.ShapeDtypeStruct((Mp, Cout_p), jnp.bfloat16),
            grid=(Mp // TM, Cout_p // TN),
            in_specs=in_specs,
            out_specs=pl.BlockSpec((TM, TN), lambda i, j: (i, j)),
            compiler_params=pltpu.CompilerParams(
                dimension_semantics=("parallel", "parallel"),
                vmem_limit_bytes=VMEM_LIMIT),
            cost_estimate=cost,
        )(*args)
    else:
        in_specs = [
            pl.BlockSpec((TM, TK), lambda i, j, k: (i, k)),
            pl.BlockSpec((TK, TN), lambda i, j, k: (k, j)),
            pl.BlockSpec((1, TN), lambda i, j, k: (0, j)),
        ]
        args = [pmat, wmat, shift]
        if has_res:
            in_specs.append(pl.BlockSpec((TM, TN), lambda i, j, k: (i, j)))
            args.append(res)
            kernel = functools.partial(_conv_ksplit_res_kernel, relu=relu)
        else:
            kernel = functools.partial(_conv_ksplit_kernel, relu=relu)
        out = pl.pallas_call(
            kernel,
            out_shape=jax.ShapeDtypeStruct((Mp, Cout_p), jnp.bfloat16),
            grid=(Mp // TM, Cout_p // TN, K_pad // TK),
            in_specs=in_specs,
            out_specs=pl.BlockSpec((TM, TN), lambda i, j, k: (i, j)),
            scratch_shapes=[pltpu.VMEM((TM, TN), jnp.float32)],
            compiler_params=pltpu.CompilerParams(
                dimension_semantics=("parallel", "parallel", "arbitrary"),
                vmem_limit_bytes=VMEM_LIMIT),
            cost_estimate=cost,
        )(*args)

    if Mp != M:
        out = out[:M]
    return out.reshape(N, OH, OW, Cout_p)


def avgpool_fc_packed(x, head):
    """AdaptiveAvgPool2d(1) + flatten + Linear (class dim lane-padded)."""
    N, H, W, C_act = x.shape
    wmat, bias = head['wmat'], head['bias']
    NC_p = wmat.shape[1]
    xm = x.reshape(N, H * W, C_act)
    out = pl.pallas_call(
        _head_kernel,
        out_shape=jax.ShapeDtypeStruct((N, NC_p), jnp.float32),
        grid=(1,),
        in_specs=[
            pl.BlockSpec((N, H * W, C_act), lambda i: (0, 0, 0)),
            pl.BlockSpec((C_act, NC_p), lambda i: (0, 0)),
            pl.BlockSpec((1, NC_p), lambda i: (0, 0)),
        ],
        out_specs=pl.BlockSpec((N, NC_p), lambda i: (0, 0)),
        compiler_params=pltpu.CompilerParams(vmem_limit_bytes=VMEM_LIMIT),
    )(xm, wmat, bias)
    return out[:, :head['num_classes']]


# ----------------------- parameter init (deterministic) -------------------- #

def init_bn(key, c):
    k1, k2, k3, k4 = jax.random.split(key, 4)
    return (jax.random.uniform(k1, (c,), jnp.float32, 0.5, 1.5),   # gamma
            jax.random.normal(k2, (c,), jnp.float32) * 0.1,        # beta
            jax.random.normal(k3, (c,), jnp.float32) * 0.1,        # running_mean
            jax.random.uniform(k4, (c,), jnp.float32, 0.5, 1.5))   # running_var


def init_conv(key, cout, cin, kh, kw):
    fan_in = cin * kh * kw
    return jax.random.normal(key, (cout, cin, kh, kw), jnp.float32) / jnp.sqrt(fan_in)


def init_bottleneck(key, in_c, inter_c, expansion, is_bottleneck, stride):
    out_c = inter_c * expansion
    keys = jax.random.split(key, 8)
    bp = {'stride': stride}
    # identity shortcut only when shape is preserved (channels AND spatial)
    if in_c == out_c and stride == 1:
        bp['proj'] = None
    else:                                  # 1x1 projection conv + BN
        bp['proj'] = {'w': init_conv(keys[6], out_c, in_c, 1, 1),
                      'bn': init_bn(keys[7], out_c)}
    if is_bottleneck:
        bp['convs'] = [
            {'w': init_conv(keys[0], inter_c, in_c, 1, 1),
             'bn': init_bn(keys[1], inter_c), 'stride': 1, 'pad': 0},
            {'w': init_conv(keys[2], inter_c, inter_c, 3, 3),
             'bn': init_bn(keys[3], inter_c), 'stride': stride, 'pad': 1},
            {'w': init_conv(keys[4], out_c, inter_c, 1, 1),
             'bn': init_bn(keys[5], out_c), 'stride': 1, 'pad': 0},
        ]
    else:
        bp['convs'] = [
            {'w': init_conv(keys[0], inter_c, in_c, 3, 3),
             'bn': init_bn(keys[1], inter_c), 'stride': stride, 'pad': 1},
            {'w': init_conv(keys[2], out_c, inter_c, 3, 3),
             'bn': init_bn(keys[3], out_c), 'stride': 1, 'pad': 1},
        ]
    return bp


def init_resnet(key, variant, in_channels, num_classes):
    channels_blocks, blocks_rep, expansion, is_bottleneck = variant
    keys = jax.random.split(key, 8)
    params = {
        'conv1_w': init_conv(keys[0], 64, in_channels, 7, 7),
        'bn1': init_bn(keys[1], 64),
        'stages': [],
    }
    in_c = 64
    stage_keys = jax.random.split(keys[2], 4)
    for s in range(4):
        inter = channels_blocks[s]
        stride = 1 if s == 0 else 2
        reps = blocks_rep[s]
        bkeys = jax.random.split(stage_keys[s], reps)
        stage = [init_bottleneck(bkeys[0], in_c, inter, expansion, is_bottleneck, stride)]
        for r in range(1, reps):
            stage.append(init_bottleneck(bkeys[r], inter * expansion, inter,
                                         expansion, is_bottleneck, 1))
        params['stages'].append(stage)
        in_c = inter * expansion
    c_final = channels_blocks[3] * expansion
    params['fc_w'] = jax.random.normal(keys[3], (num_classes, c_final),
                                       jnp.float32) / jnp.sqrt(c_final)
    params['fc_b'] = jax.random.normal(keys[4], (num_classes,), jnp.float32) * 0.1
    return params


# ------------------------------- forward pass ------------------------------ #

def bottleneck_forward(x, pb):
    if pb['proj'] is None:
        res = x
    else:
        res = conv_bn_packed(x, pb['proj'], relu=False)
    h = x
    for c in pb['convs'][:-1]:
        h = conv_bn_packed(h, c, relu=True)
    # residual add + final ReLU fused into the last conv kernel
    return conv_bn_packed(h, pb['convs'][-1], relu=True, residual=res)


def resnet_forward(x_nchw, packed):
    x = jnp.transpose(x_nchw, (0, 2, 3, 1)).astype(jnp.float32)   # NCHW -> NHWC
    x = conv_bn_packed(x, packed['conv1'], relu=True)
    # TODO(synk): reference forward() never calls self.max_pool, so it is skipped.
    for stage in packed['stages']:
        for pb in stage:
            x = bottleneck_forward(x, pb)
    return avgpool_fc_packed(x, packed['head'])


# ----------------------------------- main ----------------------------------- #

if __name__ == "__main__":
    # small bottleneck variant: ([inter channels per stage], [reps], expansion, is_Bottleneck)
    variant = ([16, 32, 64, 128], [1, 1, 1, 1], 4, True)
    in_channels, num_classes = 3, 10

    key = jax.random.PRNGKey(0)
    kp, kx = jax.random.split(key)
    params = init_resnet(kp, variant, in_channels, num_classes)
    packed = prepack_resnet(params, in_channels)   # one-time weight prep, outside jit
    x = jax.random.normal(kx, (2, in_channels, 32, 32), jnp.float32)  # NCHW like PyTorch

    fwd = jax.jit(lambda inp: resnet_forward(inp, packed))
    logits = fwd(x)
    jax.block_until_ready(logits)
    assert logits.shape == (2, num_classes)
    assert bool(jnp.all(jnp.isfinite(logits)))
    print("KERNEL_OK")
</pallas_src>

<mosaic_0001>
module attributes {stable_mosaic.version = 11 : i64} {
  func.func @_conv_single_kernel(%arg0: i32, %arg1: i32, %arg2: memref<256x256xbf16, #tpu.memory_space<vmem>>, %arg3: memref<256x128xbf16, #tpu.memory_space<vmem>>, %arg4: memref<1x128xf32, #tpu.memory_space<vmem>>, %arg5: memref<256x128xbf16, #tpu.memory_space<vmem>>) attributes {dimension_semantics = [#tpu.dimension_semantics<parallel>, #tpu.dimension_semantics<parallel>], iteration_bounds = array<i64: 2, 1>, scalar_prefetch = 0 : i64, scratch_operands = 0 : i64, tpu.core_type = #tpu.core_type<tc>, window_params = [{transform_indices = @transform_0, window_bounds = array<i64: 256, 256>}, {transform_indices = @transform_1, window_bounds = array<i64: 256, 128>}, {transform_indices = @transform_2, window_bounds = array<i64: 1, 128>}, {transform_indices = @transform_3, window_bounds = array<i64: 256, 128>}]} {
    %c0 = arith.constant 0 : index
    %c0_0 = arith.constant 0 : index
    %0 = vector.load %arg2[%c0, %c0_0] : memref<256x256xbf16, #tpu.memory_space<vmem>>, vector<256x256xbf16>
    %c0_1 = arith.constant 0 : index
    %c0_2 = arith.constant 0 : index
    %1 = vector.load %arg3[%c0_1, %c0_2] : memref<256x128xbf16, #tpu.memory_space<vmem>>, vector<256x128xbf16>
    %cst = arith.constant dense<0.000000e+00> : vector<256x128xf32>
    %2 = tpu.matmul %0, %1, %cst {dimension_numbers = #tpu.dot_dimension_numbers<[1], [0], [0], [1], [0, 0, 1, 1], [], []>} : vector<256x256xbf16>, vector<256x128xbf16>, vector<256x128xf32> -> vector<256x128xf32>
    %c0_3 = arith.constant 0 : index
    %c0_4 = arith.constant 0 : index
    %3 = vector.load %arg4[%c0_3, %c0_4] : memref<1x128xf32, #tpu.memory_space<vmem>>, vector<1x128xf32>
    %4 = vector.broadcast %3 : vector<1x128xf32> to vector<256x128xf32>
    %5 = arith.addf %2, %4 : vector<256x128xf32>
    %cst_5 = arith.constant 0.000000e+00 : f32
    %6 = vector.broadcast %cst_5 : f32 to vector<256x128xf32>
    %7 = arith.maximumf %5, %6 : vector<256x128xf32>
    %8 = arith.truncf %7 : vector<256x128xf32> to vector<256x128xbf16>
    %c0_6 = arith.constant 0 : index
    %c0_7 = arith.constant 0 : index
    %9 = vector.load %arg5[%c0_6, %c0_7] : memref<256x128xbf16, #tpu.memory_space<vmem>>, vector<256x128xbf16>
    tpu.vector_store %arg5[%c0_6, %c0_7], %8 {strides = array<i32>} : memref<256x128xbf16, #tpu.memory_space<vmem>>, vector<256x128xbf16>,
    return
  }
  func.func @transform_0(%arg0: i32, %arg1: i32) -> (i32, i32) {
    %c0_i32 = arith.constant 0 : i32
    %c0_i32_0 = arith.constant 0 : i32
    return %arg0, %c0_i32 : i32, i32
  }
  func.func @transform_1(%arg0: i32, %arg1: i32) -> (i32, i32) {
    %c0_i32 = arith.constant 0 : i32
    %c0_i32_0 = arith.constant 0 : i32
    return %c0_i32, %arg1 : i32, i32
  }
  func.func @transform_2(%arg0: i32, %arg1: i32) -> (i32, i32) {
    %c0_i32 = arith.constant 0 : i32
    %c0_i32_0 = arith.constant 0 : i32
    return %c0_i32, %arg1 : i32, i32
  }
  func.func @transform_3(%arg0: i32, %arg1: i32) -> (i32, i32) {
    %c0_i32 = arith.constant 0 : i32
    return %arg0, %arg1 : i32, i32
  }
}

module attributes {stable_mosaic.version = 11 : i64} {
  func.func @_conv_single_kernel(%arg0: i32, %arg1: i32, %arg2: memref<256x128xbf16, #tpu.memory_space<vmem>>, %arg3: memref<128x128xbf16, #tpu.memory_space<vmem>>, %arg4: memref<1x128xf32, #tpu.memory_space<vmem>>, %arg5: memref<256x128xbf16, #tpu.memory_space<vmem>>) attributes {dimension_semantics = [#tpu.dimension_semantics<parallel>, #tpu.dimension_semantics<parallel>], iteration_bounds = array<i64: 2, 1>, scalar_prefetch = 0 : i64, scratch_operands = 0 : i64, tpu.core_type = #tpu.core_type<tc>, window_params = [{transform_indices = @transform_0, window_bounds = array<i64: 256, 128>}, {transform_indices = @transform_1, window_bounds = array<i64: 128, 128>}, {transform_indices = @transform_2, window_bounds = array<i64: 1, 128>}, {transform_indices = @transform_3, window_bounds = array<i64: 256, 128>}]} {
    %c0 = arith.constant 0 : index
    %c0_0 = arith.constant 0 : index
    %0 = vector.load %arg2[%c0, %c0_0] : memref<256x128xbf16, #tpu.memory_space<vmem>>, vector<256x128xbf16>
    %c0_1 = arith.constant 0 : index
    %c0_2 = arith.constant 0 : index
    %1 = vector.load %arg3[%c0_1, %c0_2] : memref<128x128xbf16, #tpu.memory_space<vmem>>, vector<128x128xbf16>
    %cst = arith.constant dense<0.000000e+00> : vector<256x128xf32>
    %2 = tpu.matmul %0, %1, %cst {dimension_numbers = #tpu.dot_dimension_numbers<[1], [0], [0], [1], [0, 0, 1, 1], [], []>} : vector<256x128xbf16>, vector<128x128xbf16>, vector<256x128xf32> -> vector<256x128xf32>
    %c0_3 = arith.constant 0 : index
    %c0_4 = arith.constant 0 : index
    %3 = vector.load %arg4[%c0_3, %c0_4] : memref<1x128xf32, #tpu.memory_space<vmem>>, vector<1x128xf32>
    %4 = vector.broadcast %3 : vector<1x128xf32> to vector<256x128xf32>
    %5 = arith.addf %2, %4 : vector<256x128xf32>
    %cst_5 = arith.constant 0.000000e+00 : f32
    %6 = vector.broadcast %cst_5 : f32 to vector<256x128xf32>
    %7 = arith.maximumf %5, %6 : vector<256x128xf32>
    %8 = arith.truncf %7 : vector<256x128xf32> to vector<256x128xbf16>
    %c0_6 = arith.constant 0 : index
    %c0_7 = arith.constant 0 : index
    %9 = vector.load %arg5[%c0_6, %c0_7] : memref<256x128xbf16, #tpu.memory_space<vmem>>, vector<256x128xbf16>
    tpu.vector_store %arg5[%c0_6, %c0_7], %8 {strides = array<i32>} : memref<256x128xbf16, #tpu.memory_space<vmem>>, vector<256x128xbf16>,
    return
  }
  func.func @transform_0(%arg0: i32, %arg1: i32) -> (i32, i32) {
    %c0_i32 = arith.constant 0 : i32
    %c0_i32_0 = arith.constant 0 : i32
    return %arg0, %c0_i32 : i32, i32
  }
  func.func @transform_1(%arg0: i32, %arg1: i32) -> (i32, i32) {
    %c0_i32 = arith.constant 0 : i32
    %c0_i32_0 = arith.constant 0 : i32
    return %c0_i32, %arg1 : i32, i32
  }
  func.func @transform_2(%arg0: i32, %arg1: i32) -> (i32, i32) {
    %c0_i32 = arith.constant 0 : i32
    %c0_i32_0 = arith.constant 0 : i32
    return %c0_i32, %arg1 : i32, i32
  }
  func.func @transform_3(%arg0: i32, %arg1: i32) -> (i32, i32) {
    %c0_i32 = arith.constant 0 : i32
    return %arg0, %arg1 : i32, i32
  }
}

module attributes {stable_mosaic.version = 11 : i64} {
  func.func @_conv_single_kernel(%arg0: i32, %arg1: i32, %arg2: memref<256x1152xbf16, #tpu.memory_space<vmem>>, %arg3: memref<1152x128xbf16, #tpu.memory_space<vmem>>, %arg4: memref<1x128xf32, #tpu.memory_space<vmem>>, %arg5: memref<256x128xbf16, #tpu.memory_space<vmem>>) attributes {dimension_semantics = [#tpu.dimension_semantics<parallel>, #tpu.dimension_semantics<parallel>], iteration_bounds = array<i64: 2, 1>, scalar_prefetch = 0 : i64, scratch_operands = 0 : i64, tpu.core_type = #tpu.core_type<tc>, window_params = [{transform_indices = @transform_0, window_bounds = array<i64: 256, 1152>}, {transform_indices = @transform_1, window_bounds = array<i64: 1152, 128>}, {transform_indices = @transform_2, window_bounds = array<i64: 1, 128>}, {transform_indices = @transform_3, window_bounds = array<i64: 256, 128>}]} {
    %c0 = arith.constant 0 : index
    %c0_0 = arith.constant 0 : index
    %0 = vector.load %arg2[%c0, %c0_0] : memref<256x1152xbf16, #tpu.memory_space<vmem>>, vector<256x1152xbf16>
    %c0_1 = arith.constant 0 : index
    %c0_2 = arith.constant 0 : index
    %1 = vector.load %arg3[%c0_1, %c0_2] : memref<1152x128xbf16, #tpu.memory_space<vmem>>, vector<1152x128xbf16>
    %cst = arith.constant dense<0.000000e+00> : vector<256x128xf32>
    %2 = tpu.matmul %0, %1, %cst {dimension_numbers = #tpu.dot_dimension_numbers<[1], [0], [0], [1], [0, 0, 1, 1], [], []>} : vector<256x1152xbf16>, vector<1152x128xbf16>, vector<256x128xf32> -> vector<256x128xf32>
    %c0_3 = arith.constant 0 : index
    %c0_4 = arith.constant 0 : index
    %3 = vector.load %arg4[%c0_3, %c0_4] : memref<1x128xf32, #tpu.memory_space<vmem>>, vector<1x128xf32>
    %4 = vector.broadcast %3 : vector<1x128xf32> to vector<256x128xf32>
    %5 = arith.addf %2, %4 : vector<256x128xf32>
    %cst_5 = arith.constant 0.000000e+00 : f32
    %6 = vector.broadcast %cst_5 : f32 to vector<256x128xf32>
    %7 = arith.maximumf %5, %6 : vector<256x128xf32>
    %8 = arith.truncf %7 : vector<256x128xf32> to vector<256x128xbf16>
    %c0_6 = arith.constant 0 : index
    %c0_7 = arith.constant 0 : index
    %9 = vector.load %arg5[%c0_6, %c0_7] : memref<256x128xbf16, #tpu.memory_space<vmem>>, vector<256x128xbf16>
    tpu.vector_store %arg5[%c0_6, %c0_7], %8 {strides = array<i32>} : memref<256x128xbf16, #tpu.memory_space<vmem>>, vector<256x128xbf16>,
    return
  }
  func.func @transform_0(%arg0: i32, %arg1: i32) -> (i32, i32) {
    %c0_i32 = arith.constant 0 : i32
    %c0_i32_0 = arith.constant 0 : i32
    return %arg0, %c0_i32 : i32, i32
  }
  func.func @transform_1(%arg0: i32, %arg1: i32) -> (i32, i32) {
    %c0_i32 = arith.constant 0 : i32
    %c0_i32_0 = arith.constant 0 : i32
    return %c0_i32, %arg1 : i32, i32
  }
  func.func @transform_2(%arg0: i32, %arg1: i32) -> (i32, i32) {
    %c0_i32 = arith.constant 0 : i32
    %c0_i32_0 = arith.constant 0 : i32
    return %c0_i32, %arg1 : i32, i32
  }
  func.func @transform_3(%arg0: i32, %arg1: i32) -> (i32, i32) {
    %c0_i32 = arith.constant 0 : i32
    return %arg0, %arg1 : i32, i32
  }
}

module attributes {stable_mosaic.version = 11 : i64} {
  func.func @_conv_single_res_kernel(%arg0: i32, %arg1: i32, %arg2: memref<256x128xbf16, #tpu.memory_space<vmem>>, %arg3: memref<128x128xbf16, #tpu.memory_space<vmem>>, %arg4: memref<1x128xf32, #tpu.memory_space<vmem>>, %arg5: memref<256x128xbf16, #tpu.memory_space<vmem>>, %arg6: memref<256x128xbf16, #tpu.memory_space<vmem>>) attributes {dimension_semantics = [#tpu.dimension_semantics<parallel>, #tpu.dimension_semantics<parallel>], iteration_bounds = array<i64: 2, 1>, scalar_prefetch = 0 : i64, scratch_operands = 0 : i64, tpu.core_type = #tpu.core_type<tc>, window_params = [{transform_indices = @transform_0, window_bounds = array<i64: 256, 128>}, {transform_indices = @transform_1, window_bounds = array<i64: 128, 128>}, {transform_indices = @transform_2, window_bounds = array<i64: 1, 128>}, {transform_indices = @transform_3, window_bounds = array<i64: 256, 128>}, {transform_indices = @transform_4, window_bounds = array<i64: 256, 128>}]} {
    %c0 = arith.constant 0 : index
    %c0_0 = arith.constant 0 : index
    %0 = vector.load %arg2[%c0, %c0_0] : memref<256x128xbf16, #tpu.memory_space<vmem>>, vector<256x128xbf16>
    %c0_1 = arith.constant 0 : index
    %c0_2 = arith.constant 0 : index
    %1 = vector.load %arg3[%c0_1, %c0_2] : memref<128x128xbf16, #tpu.memory_space<vmem>>, vector<128x128xbf16>
    %cst = arith.constant dense<0.000000e+00> : vector<256x128xf32>
    %2 = tpu.matmul %0, %1, %cst {dimension_numbers = #tpu.dot_dimension_numbers<[1], [0], [0], [1], [0, 0, 1, 1], [], []>} : vector<256x128xbf16>, vector<128x128xbf16>, vector<256x128xf32> -> vector<256x128xf32>
    %c0_3 = arith.constant 0 : index
    %c0_4 = arith.constant 0 : index
    %3 = vector.load %arg4[%c0_3, %c0_4] : memref<1x128xf32, #tpu.memory_space<vmem>>, vector<1x128xf32>
    %4 = vector.broadcast %3 : vector<1x128xf32> to vector<256x128xf32>
    %5 = arith.addf %2, %4 : vector<256x128xf32>
    %c0_5 = arith.constant 0 : index
    %c0_6 = arith.constant 0 : index
    %6 = vector.load %arg5[%c0_5, %c0_6] : memref<256x128xbf16, #tpu.memory_space<vmem>>, vector<256x128xbf16>
    %7 = arith.extf %6 : vector<256x128xbf16> to vector<256x128xf32>
    %8 = arith.addf %5, %7 : vector<256x128xf32>
    %cst_7 = arith.constant 0.000000e+00 : f32
    %9 = vector.broadcast %cst_7 : f32 to vector<256x128xf32>
    %10 = arith.maximumf %8, %9 : vector<256x128xf32>
    %11 = arith.truncf %10 : vector<256x128xf32> to vector<256x128xbf16>
    %c0_8 = arith.constant 0 : index
    %c0_9 = arith.constant 0 : index
    %12 = vector.load %arg6[%c0_8, %c0_9] : memref<256x128xbf16, #tpu.memory_space<vmem>>, vector<256x128xbf16>
    tpu.vector_store %arg6[%c0_8, %c0_9], %11 {strides = array<i32>} : memref<256x128xbf16, #tpu.memory_space<vmem>>, vector<256x128xbf16>,
    return
  }
  func.func @transform_0(%arg0: i32, %arg1: i32) -> (i32, i32) {
    %c0_i32 = arith.constant 0 : i32
    %c0_i32_0 = arith.constant 0 : i32
    return %arg0, %c0_i32 : i32, i32
  }
  func.func @transform_1(%arg0: i32, %arg1: i32) -> (i32, i32) {
    %c0_i32 = arith.constant 0 : i32
    %c0_i32_0 = arith.constant 0 : i32
    return %c0_i32, %arg1 : i32, i32
  }
  func.func @transform_2(%arg0: i32, %arg1: i32) -> (i32, i32) {
    %c0_i32 = arith.constant 0 : i32
    %c0_i32_0 = arith.constant 0 : i32
    return %c0_i32, %arg1 : i32, i32
  }
  func.func @transform_3(%arg0: i32, %arg1: i32) -> (i32, i32) {
    %c0_i32 = arith.constant 0 : i32
    return %arg0, %arg1 : i32, i32
  }
  func.func @transform_4(%arg0: i32, %arg1: i32) -> (i32, i32) {
    %c0_i32 = arith.constant 0 : i32
    return %arg0, %arg1 : i32, i32
  }
}

module attributes {stable_mosaic.version = 11 : i64} {
  func.func @_conv_single_kernel(%arg0: i32, %arg1: i32, %arg2: memref<128x1152xbf16, #tpu.memory_space<vmem>>, %arg3: memref<1152x128xbf16, #tpu.memory_space<vmem>>, %arg4: memref<1x128xf32, #tpu.memory_space<vmem>>, %arg5: memref<128x128xbf16, #tpu.memory_space<vmem>>) attributes {dimension_semantics = [#tpu.dimension_semantics<parallel>, #tpu.dimension_semantics<parallel>], iteration_bounds = array<i64: 1, 1>, scalar_prefetch = 0 : i64, scratch_operands = 0 : i64, tpu.core_type = #tpu.core_type<tc>, window_params = [{transform_indices = @transform_0, window_bounds = array<i64: 128, 1152>}, {transform_indices = @transform_1, window_bounds = array<i64: 1152, 128>}, {transform_indices = @transform_2, window_bounds = array<i64: 1, 128>}, {transform_indices = @transform_3, window_bounds = array<i64: 128, 128>}]} {
    %c0 = arith.constant 0 : index
    %c0_0 = arith.constant 0 : index
    %0 = vector.load %arg2[%c0, %c0_0] : memref<128x1152xbf16, #tpu.memory_space<vmem>>, vector<128x1152xbf16>
    %c0_1 = arith.constant 0 : index
    %c0_2 = arith.constant 0 : index
    %1 = vector.load %arg3[%c0_1, %c0_2] : memref<1152x128xbf16, #tpu.memory_space<vmem>>, vector<1152x128xbf16>
    %cst = arith.constant dense<0.000000e+00> : vector<128x128xf32>
    %2 = tpu.matmul %0, %1, %cst {dimension_numbers = #tpu.dot_dimension_numbers<[1], [0], [0], [1], [0, 0, 1, 1], [], []>} : vector<128x1152xbf16>, vector<1152x128xbf16>, vector<128x128xf32> -> vector<128x128xf32>
    %c0_3 = arith.constant 0 : index
    %c0_4 = arith.constant 0 : index
    %3 = vector.load %arg4[%c0_3, %c0_4] : memref<1x128xf32, #tpu.memory_space<vmem>>, vector<1x128xf32>
    %4 = vector.broadcast %3 : vector<1x128xf32> to vector<128x128xf32>
    %5 = arith.addf %2, %4 : vector<128x128xf32>
    %cst_5 = arith.constant 0.000000e+00 : f32
    %6 = vector.broadcast %cst_5 : f32 to vector<128x128xf32>
    %7 = arith.maximumf %5, %6 : vector<128x128xf32>
    %8 = arith.truncf %7 : vector<128x128xf32> to vector<128x128xbf16>
    %c0_6 = arith.constant 0 : index
    %c0_7 = arith.constant 0 : index
    %9 = vector.load %arg5[%c0_6, %c0_7] : memref<128x128xbf16, #tpu.memory_space<vmem>>, vector<128x128xbf16>
    tpu.vector_store %arg5[%c0_6, %c0_7], %8 {strides = array<i32>} : memref<128x128xbf16, #tpu.memory_space<vmem>>, vector<128x128xbf16>,
    return
  }
  func.func @transform_0(%arg0: i32, %arg1: i32) -> (i32, i32) {
    %c0_i32 = arith.constant 0 : i32
    %c0_i32_0 = arith.constant 0 : i32
    return %arg0, %c0_i32 : i32, i32
  }
  func.func @transform_1(%arg0: i32, %arg1: i32) -> (i32, i32) {
    %c0_i32 = arith.constant 0 : i32
    %c0_i32_0 = arith.constant 0 : i32
    return %c0_i32, %arg1 : i32, i32
  }
  func.func @transform_2(%arg0: i32, %arg1: i32) -> (i32, i32) {
    %c0_i32 = arith.constant 0 : i32
    %c0_i32_0 = arith.constant 0 : i32
    return %c0_i32, %arg1 : i32, i32
  }
  func.func @transform_3(%arg0: i32, %arg1: i32) -> (i32, i32) {
    %c0_i32 = arith.constant 0 : i32
    return %arg0, %arg1 : i32, i32
  }
}

module attributes {stable_mosaic.version = 11 : i64} {
  func.func @_conv_single_kernel(%arg0: i32, %arg1: i32, %arg2: memref<128x128xbf16, #tpu.memory_space<vmem>>, %arg3: memref<128x128xbf16, #tpu.memory_space<vmem>>, %arg4: memref<1x128xf32, #tpu.memory_space<vmem>>, %arg5: memref<128x128xbf16, #tpu.memory_space<vmem>>) attributes {dimension_semantics = [#tpu.dimension_semantics<parallel>, #tpu.dimension_semantics<parallel>], iteration_bounds = array<i64: 1, 1>, scalar_prefetch = 0 : i64, scratch_operands = 0 : i64, tpu.core_type = #tpu.core_type<tc>, window_params = [{transform_indices = @transform_0, window_bounds = array<i64: 128, 128>}, {transform_indices = @transform_1, window_bounds = array<i64: 128, 128>}, {transform_indices = @transform_2, window_bounds = array<i64: 1, 128>}, {transform_indices = @transform_3, window_bounds = array<i64: 128, 128>}]} {
    %c0 = arith.constant 0 : index
    %c0_0 = arith.constant 0 : index
    %0 = vector.load %arg2[%c0, %c0_0] : memref<128x128xbf16, #tpu.memory_space<vmem>>, vector<128x128xbf16>
    %c0_1 = arith.constant 0 : index
    %c0_2 = arith.constant 0 : index
    %1 = vector.load %arg3[%c0_1, %c0_2] : memref<128x128xbf16, #tpu.memory_space<vmem>>, vector<128x128xbf16>
    %cst = arith.constant dense<0.000000e+00> : vector<128x128xf32>
    %2 = tpu.matmul %0, %1, %cst {dimension_numbers = #tpu.dot_dimension_numbers<[1], [0], [0], [1], [0, 0, 1, 1], [], []>} : vector<128x128xbf16>, vector<128x128xbf16>, vector<128x128xf32> -> vector<128x128xf32>
    %c0_3 = arith.constant 0 : index
    %c0_4 = arith.constant 0 : index
    %3 = vector.load %arg4[%c0_3, %c0_4] : memref<1x128xf32, #tpu.memory_space<vmem>>, vector<1x128xf32>
    %4 = vector.broadcast %3 : vector<1x128xf32> to vector<128x128xf32>
    %5 = arith.addf %2, %4 : vector<128x128xf32>
    %6 = arith.truncf %5 : vector<128x128xf32> to vector<128x128xbf16>
    %c0_5 = arith.constant 0 : index
    %c0_6 = arith.constant 0 : index
    %7 = vector.load %arg5[%c0_5, %c0_6] : memref<128x128xbf16, #tpu.memory_space<vmem>>, vector<128x128xbf16>
    tpu.vector_store %arg5[%c0_5, %c0_6], %6 {strides = array<i32>} : memref<128x128xbf16, #tpu.memory_space<vmem>>, vector<128x128xbf16>,
    return
  }
  func.func @transform_0(%arg0: i32, %arg1: i32) -> (i32, i32) {
    %c0_i32 = arith.constant 0 : i32
    %c0_i32_0 = arith.constant 0 : i32
    return %arg0, %c0_i32 : i32, i32
  }
  func.func @transform_1(%arg0: i32, %arg1: i32) -> (i32, i32) {
    %c0_i32 = arith.constant 0 : i32
    %c0_i32_0 = arith.constant 0 : i32
    return %c0_i32, %arg1 : i32, i32
  }
  func.func @transform_2(%arg0: i32, %arg1: i32) -> (i32, i32) {
    %c0_i32 = arith.constant 0 : i32
    %c0_i32_0 = arith.constant 0 : i32
    return %c0_i32, %arg1 : i32, i32
  }
  func.func @transform_3(%arg0: i32, %arg1: i32) -> (i32, i32) {
    %c0_i32 = arith.constant 0 : i32
    return %arg0, %arg1 : i32, i32
  }
}

module attributes {stable_mosaic.version = 11 : i64} {
  func.func @_conv_single_res_kernel(%arg0: i32, %arg1: i32, %arg2: memref<128x128xbf16, #tpu.memory_space<vmem>>, %arg3: memref<128x128xbf16, #tpu.memory_space<vmem>>, %arg4: memref<1x128xf32, #tpu.memory_space<vmem>>, %arg5: memref<128x128xbf16, #tpu.memory_space<vmem>>, %arg6: memref<128x128xbf16, #tpu.memory_space<vmem>>) attributes {dimension_semantics = [#tpu.dimension_semantics<parallel>, #tpu.dimension_semantics<parallel>], iteration_bounds = array<i64: 1, 1>, scalar_prefetch = 0 : i64, scratch_operands = 0 : i64, tpu.core_type = #tpu.core_type<tc>, window_params = [{transform_indices = @transform_0, window_bounds = array<i64: 128, 128>}, {transform_indices = @transform_1, window_bounds = array<i64: 128, 128>}, {transform_indices = @transform_2, window_bounds = array<i64: 1, 128>}, {transform_indices = @transform_3, window_bounds = array<i64: 128, 128>}, {transform_indices = @transform_4, window_bounds = array<i64: 128, 128>}]} {
    %c0 = arith.constant 0 : index
    %c0_0 = arith.constant 0 : index
    %0 = vector.load %arg2[%c0, %c0_0] : memref<128x128xbf16, #tpu.memory_space<vmem>>, vector<128x128xbf16>
    %c0_1 = arith.constant 0 : index
    %c0_2 = arith.constant 0 : index
    %1 = vector.load %arg3[%c0_1, %c0_2] : memref<128x128xbf16, #tpu.memory_space<vmem>>, vector<128x128xbf16>
    %cst = arith.constant dense<0.000000e+00> : vector<128x128xf32>
    %2 = tpu.matmul %0, %1, %cst {dimension_numbers = #tpu.dot_dimension_numbers<[1], [0], [0], [1], [0, 0, 1, 1], [], []>} : vector<128x128xbf16>, vector<128x128xbf16>, vector<128x128xf32> -> vector<128x128xf32>
    %c0_3 = arith.constant 0 : index
    %c0_4 = arith.constant 0 : index
    %3 = vector.load %arg4[%c0_3, %c0_4] : memref<1x128xf32, #tpu.memory_space<vmem>>, vector<1x128xf32>
    %4 = vector.broadcast %3 : vector<1x128xf32> to vector<128x128xf32>
    %5 = arith.addf %2, %4 : vector<128x128xf32>
    %c0_5 = arith.constant 0 : index
    %c0_6 = arith.constant 0 : index
    %6 = vector.load %arg5[%c0_5, %c0_6] : memref<128x128xbf16, #tpu.memory_space<vmem>>, vector<128x128xbf16>
    %7 = arith.extf %6 : vector<128x128xbf16> to vector<128x128xf32>
    %8 = arith.addf %5, %7 : vector<128x128xf32>
    %cst_7 = arith.constant 0.000000e+00 : f32
    %9 = vector.broadcast %cst_7 : f32 to vector<128x128xf32>
    %10 = arith.maximumf %8, %9 : vector<128x128xf32>
    %11 = arith.truncf %10 : vector<128x128xf32> to vector<128x128xbf16>
    %c0_8 = arith.constant 0 : index
    %c0_9 = arith.constant 0 : index
    %12 = vector.load %arg6[%c0_8, %c0_9] : memref<128x128xbf16, #tpu.memory_space<vmem>>, vector<128x128xbf16>
    tpu.vector_store %arg6[%c0_8, %c0_9], %11 {strides = array<i32>} : memref<128x128xbf16, #tpu.memory_space<vmem>>, vector<128x128xbf16>,
    return
  }
  func.func @transform_0(%arg0: i32, %arg1: i32) -> (i32, i32) {
    %c0_i32 = arith.constant 0 : i32
    %c0_i32_0 = arith.constant 0 : i32
    return %arg0, %c0_i32 : i32, i32
  }
  func.func @transform_1(%arg0: i32, %arg1: i32) -> (i32, i32) {
    %c0_i32 = arith.constant 0 : i32
    %c0_i32_0 = arith.constant 0 : i32
    return %c0_i32, %arg1 : i32, i32
  }
  func.func @transform_2(%arg0: i32, %arg1: i32) -> (i32, i32) {
    %c0_i32 = arith.constant 0 : i32
    %c0_i32_0 = arith.constant 0 : i32
    return %c0_i32, %arg1 : i32, i32
  }
  func.func @transform_3(%arg0: i32, %arg1: i32) -> (i32, i32) {
    %c0_i32 = arith.constant 0 : i32
    return %arg0, %arg1 : i32, i32
  }
  func.func @transform_4(%arg0: i32, %arg1: i32) -> (i32, i32) {
    %c0_i32 = arith.constant 0 : i32
    return %arg0, %arg1 : i32, i32
  }
}

module attributes {stable_mosaic.version = 11 : i64} {
  func.func @_conv_single_kernel(%arg0: i32, %arg1: i32, %arg2: memref<128x128xbf16, #tpu.memory_space<vmem>>, %arg3: memref<128x128xbf16, #tpu.memory_space<vmem>>, %arg4: memref<1x128xf32, #tpu.memory_space<vmem>>, %arg5: memref<128x128xbf16, #tpu.memory_space<vmem>>) attributes {dimension_semantics = [#tpu.dimension_semantics<parallel>, #tpu.dimension_semantics<parallel>], iteration_bounds = array<i64: 1, 1>, scalar_prefetch = 0 : i64, scratch_operands = 0 : i64, tpu.core_type = #tpu.core_type<tc>, window_params = [{transform_indices = @transform_0, window_bounds = array<i64: 128, 128>}, {transform_indices = @transform_1, window_bounds = array<i64: 128, 128>}, {transform_indices = @transform_2, window_bounds = array<i64: 1, 128>}, {transform_indices = @transform_3, window_bounds = array<i64: 128, 128>}]} {
    %c0 = arith.constant 0 : index
    %c0_0 = arith.constant 0 : index
    %0 = vector.load %arg2[%c0, %c0_0] : memref<128x128xbf16, #tpu.memory_space<vmem>>, vector<128x128xbf16>
    %c0_1 = arith.constant 0 : index
    %c0_2 = arith.constant 0 : index
    %1 = vector.load %arg3[%c0_1, %c0_2] : memref<128x128xbf16, #tpu.memory_space<vmem>>, vector<128x128xbf16>
    %cst = arith.constant dense<0.000000e+00> : vector<128x128xf32>
    %2 = tpu.matmul %0, %1, %cst {dimension_numbers = #tpu.dot_dimension_numbers<[1], [0], [0], [1], [0, 0, 1, 1], [], []>} : vector<128x128xbf16>, vector<128x128xbf16>, vector<128x128xf32> -> vector<128x128xf32>
    %c0_3 = arith.constant 0 : index
    %c0_4 = arith.constant 0 : index
    %3 = vector.load %arg4[%c0_3, %c0_4] : memref<1x128xf32, #tpu.memory_space<vmem>>, vector<1x128xf32>
    %4 = vector.broadcast %3 : vector<1x128xf32> to vector<128x128xf32>
    %5 = arith.addf %2, %4 : vector<128x128xf32>
    %cst_5 = arith.constant 0.000000e+00 : f32
    %6 = vector.broadcast %cst_5 : f32 to vector<128x128xf32>
    %7 = arith.maximumf %5, %6 : vector<128x128xf32>
    %8 = arith.truncf %7 : vector<128x128xf32> to vector<128x128xbf16>
    %c0_6 = arith.constant 0 : index
    %c0_7 = arith.constant 0 : index
    %9 = vector.load %arg5[%c0_6, %c0_7] : memref<128x128xbf16, #tpu.memory_space<vmem>>, vector<128x128xbf16>
    tpu.vector_store %arg5[%c0_6, %c0_7], %8 {strides = array<i32>} : memref<128x128xbf16, #tpu.memory_space<vmem>>, vector<128x128xbf16>,
    return
  }
  func.func @transform_0(%arg0: i32, %arg1: i32) -> (i32, i32) {
    %c0_i32 = arith.constant 0 : i32
    %c0_i32_0 = arith.constant 0 : i32
    return %arg0, %c0_i32 : i32, i32
  }
  func.func @transform_1(%arg0: i32, %arg1: i32) -> (i32, i32) {
    %c0_i32 = arith.constant 0 : i32
    %c0_i32_0 = arith.constant 0 : i32
    return %c0_i32, %arg1 : i32, i32
  }
  func.func @transform_2(%arg0: i32, %arg1: i32) -> (i32, i32) {
    %c0_i32 = arith.constant 0 : i32
    %c0_i32_0 = arith.constant 0 : i32
    return %c0_i32, %arg1 : i32, i32
  }
  func.func @transform_3(%arg0: i32, %arg1: i32) -> (i32, i32) {
    %c0_i32 = arith.constant 0 : i32
    return %arg0, %arg1 : i32, i32
  }
}

module attributes {stable_mosaic.version = 11 : i64} {
  func.func @_conv_single_kernel(%arg0: i32, %arg1: i32, %arg2: memref<32x1152xbf16, #tpu.memory_space<vmem>>, %arg3: memref<1152x128xbf16, #tpu.memory_space<vmem>>, %arg4: memref<1x128xf32, #tpu.memory_space<vmem>>, %arg5: memref<32x128xbf16, #tpu.memory_space<vmem>>) attributes {dimension_semantics = [#tpu.dimension_semantics<parallel>, #tpu.dimension_semantics<parallel>], iteration_bounds = array<i64: 1, 1>, scalar_prefetch = 0 : i64, scratch_operands = 0 : i64, tpu.core_type = #tpu.core_type<tc>, window_params = [{transform_indices = @transform_0, window_bounds = array<i64: 32, 1152>}, {transform_indices = @transform_1, window_bounds = array<i64: 1152, 128>}, {transform_indices = @transform_2, window_bounds = array<i64: 1, 128>}, {transform_indices = @transform_3, window_bounds = array<i64: 32, 128>}]} {
    %c0 = arith.constant 0 : index
    %c0_0 = arith.constant 0 : index
    %0 = vector.load %arg2[%c0, %c0_0] : memref<32x1152xbf16, #tpu.memory_space<vmem>>, vector<32x1152xbf16>
    %c0_1 = arith.constant 0 : index
    %c0_2 = arith.constant 0 : index
    %1 = vector.load %arg3[%c0_1, %c0_2] : memref<1152x128xbf16, #tpu.memory_space<vmem>>, vector<1152x128xbf16>
    %cst = arith.constant dense<0.000000e+00> : vector<32x128xf32>
    %2 = tpu.matmul %0, %1, %cst {dimension_numbers = #tpu.dot_dimension_numbers<[1], [0], [0], [1], [0, 0, 1, 1], [], []>} : vector<32x1152xbf16>, vector<1152x128xbf16>, vector<32x128xf32> -> vector<32x128xf32>
    %c0_3 = arith.constant 0 : index
    %c0_4 = arith.constant 0 : index
    %3 = vector.load %arg4[%c0_3, %c0_4] : memref<1x128xf32, #tpu.memory_space<vmem>>, vector<1x128xf32>
    %4 = vector.broadcast %3 : vector<1x128xf32> to vector<32x128xf32>
    %5 = arith.addf %2, %4 : vector<32x128xf32>
    %cst_5 = arith.constant 0.000000e+00 : f32
    %6 = vector.broadcast %cst_5 : f32 to vector<32x128xf32>
    %7 = arith.maximumf %5, %6 : vector<32x128xf32>
    %8 = arith.truncf %7 : vector<32x128xf32> to vector<32x128xbf16>
    %c0_6 = arith.constant 0 : index
    %c0_7 = arith.constant 0 : index
    %9 = vector.load %arg5[%c0_6, %c0_7] : memref<32x128xbf16, #tpu.memory_space<vmem>>, vector<32x128xbf16>
    tpu.vector_store %arg5[%c0_6, %c0_7], %8 {strides = array<i32>} : memref<32x128xbf16, #tpu.memory_space<vmem>>, vector<32x128xbf16>,
    return
  }
  func.func @transform_0(%arg0: i32, %arg1: i32) -> (i32, i32) {
    %c0_i32 = arith.constant 0 : i32
    %c0_i32_0 = arith.constant 0 : i32
    return %arg0, %c0_i32 : i32, i32
  }
  func.func @transform_1(%arg0: i32, %arg1: i32) -> (i32, i32) {
    %c0_i32 = arith.constant 0 : i32
    %c0_i32_0 = arith.constant 0 : i32
    return %c0_i32, %arg1 : i32, i32
  }
  func.func @transform_2(%arg0: i32, %arg1: i32) -> (i32, i32) {
    %c0_i32 = arith.constant 0 : i32
    %c0_i32_0 = arith.constant 0 : i32
    return %c0_i32, %arg1 : i32, i32
  }
  func.func @transform_3(%arg0: i32, %arg1: i32) -> (i32, i32) {
    %c0_i32 = arith.constant 0 : i32
    return %arg0, %arg1 : i32, i32
  }
}

module attributes {stable_mosaic.version = 11 : i64} {
  func.func @_conv_single_kernel(%arg0: i32, %arg1: i32, %arg2: memref<32x128xbf16, #tpu.memory_space<vmem>>, %arg3: memref<128x256xbf16, #tpu.memory_space<vmem>>, %arg4: memref<1x256xf32, #tpu.memory_space<vmem>>, %arg5: memref<32x256xbf16, #tpu.memory_space<vmem>>) attributes {dimension_semantics = [#tpu.dimension_semantics<parallel>, #tpu.dimension_semantics<parallel>], iteration_bounds = array<i64: 1, 1>, scalar_prefetch = 0 : i64, scratch_operands = 0 : i64, tpu.core_type = #tpu.core_type<tc>, window_params = [{transform_indices = @transform_0, window_bounds = array<i64: 32, 128>}, {transform_indices = @transform_1, window_bounds = array<i64: 128, 256>}, {transform_indices = @transform_2, window_bounds = array<i64: 1, 256>}, {transform_indices = @transform_3, window_bounds = array<i64: 32, 256>}]} {
    %c0 = arith.constant 0 : index
    %c0_0 = arith.constant 0 : index
    %0 = vector.load %arg2[%c0, %c0_0] : memref<32x128xbf16, #tpu.memory_space<vmem>>, vector<32x128xbf16>
    %c0_1 = arith.constant 0 : index
    %c0_2 = arith.constant 0 : index
    %1 = vector.load %arg3[%c0_1, %c0_2] : memref<128x256xbf16, #tpu.memory_space<vmem>>, vector<128x256xbf16>
    %cst = arith.constant dense<0.000000e+00> : vector<32x256xf32>
    %2 = tpu.matmul %0, %1, %cst {dimension_numbers = #tpu.dot_dimension_numbers<[1], [0], [0], [1], [0, 0, 1, 1], [], []>} : vector<32x128xbf16>, vector<128x256xbf16>, vector<32x256xf32> -> vector<32x256xf32>
    %c0_3 = arith.constant 0 : index
    %c0_4 = arith.constant 0 : index
    %3 = vector.load %arg4[%c0_3, %c0_4] : memref<1x256xf32, #tpu.memory_space<vmem>>, vector<1x256xf32>
    %4 = vector.broadcast %3 : vector<1x256xf32> to vector<32x256xf32>
    %5 = arith.addf %2, %4 : vector<32x256xf32>
    %6 = arith.truncf %5 : vector<32x256xf32> to vector<32x256xbf16>
    %c0_5 = arith.constant 0 : index
    %c0_6 = arith.constant 0 : index
    %7 = vector.load %arg5[%c0_5, %c0_6] : memref<32x256xbf16, #tpu.memory_space<vmem>>, vector<32x256xbf16>
    tpu.vector_store %arg5[%c0_5, %c0_6], %6 {strides = array<i32>} : memref<32x256xbf16, #tpu.memory_space<vmem>>, vector<32x256xbf16>,
    return
  }
  func.func @transform_0(%arg0: i32, %arg1: i32) -> (i32, i32) {
    %c0_i32 = arith.constant 0 : i32
    %c0_i32_0 = arith.constant 0 : i32
    return %arg0, %c0_i32 : i32, i32
  }
  func.func @transform_1(%arg0: i32, %arg1: i32) -> (i32, i32) {
    %c0_i32 = arith.constant 0 : i32
    %c0_i32_0 = arith.constant 0 : i32
    return %c0_i32, %arg1 : i32, i32
  }
  func.func @transform_2(%arg0: i32, %arg1: i32) -> (i32, i32) {
    %c0_i32 = arith.constant 0 : i32
    %c0_i32_0 = arith.constant 0 : i32
    return %c0_i32, %arg1 : i32, i32
  }
  func.func @transform_3(%arg0: i32, %arg1: i32) -> (i32, i32) {
    %c0_i32 = arith.constant 0 : i32
    return %arg0, %arg1 : i32, i32
  }
}

module attributes {stable_mosaic.version = 11 : i64} {
  func.func @_conv_single_res_kernel(%arg0: i32, %arg1: i32, %arg2: memref<32x128xbf16, #tpu.memory_space<vmem>>, %arg3: memref<128x256xbf16, #tpu.memory_space<vmem>>, %arg4: memref<1x256xf32, #tpu.memory_space<vmem>>, %arg5: memref<32x256xbf16, #tpu.memory_space<vmem>>, %arg6: memref<32x256xbf16, #tpu.memory_space<vmem>>) attributes {dimension_semantics = [#tpu.dimension_semantics<parallel>, #tpu.dimension_semantics<parallel>], iteration_bounds = array<i64: 1, 1>, scalar_prefetch = 0 : i64, scratch_operands = 0 : i64, tpu.core_type = #tpu.core_type<tc>, window_params = [{transform_indices = @transform_0, window_bounds = array<i64: 32, 128>}, {transform_indices = @transform_1, window_bounds = array<i64: 128, 256>}, {transform_indices = @transform_2, window_bounds = array<i64: 1, 256>}, {transform_indices = @transform_3, window_bounds = array<i64: 32, 256>}, {transform_indices = @transform_4, window_bounds = array<i64: 32, 256>}]} {
    %c0 = arith.constant 0 : index
    %c0_0 = arith.constant 0 : index
    %0 = vector.load %arg2[%c0, %c0_0] : memref<32x128xbf16, #tpu.memory_space<vmem>>, vector<32x128xbf16>
    %c0_1 = arith.constant 0 : index
    %c0_2 = arith.constant 0 : index
    %1 = vector.load %arg3[%c0_1, %c0_2] : memref<128x256xbf16, #tpu.memory_space<vmem>>, vector<128x256xbf16>
    %cst = arith.constant dense<0.000000e+00> : vector<32x256xf32>
    %2 = tpu.matmul %0, %1, %cst {dimension_numbers = #tpu.dot_dimension_numbers<[1], [0], [0], [1], [0, 0, 1, 1], [], []>} : vector<32x128xbf16>, vector<128x256xbf16>, vector<32x256xf32> -> vector<32x256xf32>
    %c0_3 = arith.constant 0 : index
    %c0_4 = arith.constant 0 : index
    %3 = vector.load %arg4[%c0_3, %c0_4] : memref<1x256xf32, #tpu.memory_space<vmem>>, vector<1x256xf32>
    %4 = vector.broadcast %3 : vector<1x256xf32> to vector<32x256xf32>
    %5 = arith.addf %2, %4 : vector<32x256xf32>
    %c0_5 = arith.constant 0 : index
    %c0_6 = arith.constant 0 : index
    %6 = vector.load %arg5[%c0_5, %c0_6] : memref<32x256xbf16, #tpu.memory_space<vmem>>, vector<32x256xbf16>
    %7 = arith.extf %6 : vector<32x256xbf16> to vector<32x256xf32>
    %8 = arith.addf %5, %7 : vector<32x256xf32>
    %cst_7 = arith.constant 0.000000e+00 : f32
    %9 = vector.broadcast %cst_7 : f32 to vector<32x256xf32>
    %10 = arith.maximumf %8, %9 : vector<32x256xf32>
    %11 = arith.truncf %10 : vector<32x256xf32> to vector<32x256xbf16>
    %c0_8 = arith.constant 0 : index
    %c0_9 = arith.constant 0 : index
    %12 = vector.load %arg6[%c0_8, %c0_9] : memref<32x256xbf16, #tpu.memory_space<vmem>>, vector<32x256xbf16>
    tpu.vector_store %arg6[%c0_8, %c0_9], %11 {strides = array<i32>} : memref<32x256xbf16, #tpu.memory_space<vmem>>, vector<32x256xbf16>,
    return
  }
  func.func @transform_0(%arg0: i32, %arg1: i32) -> (i32, i32) {
    %c0_i32 = arith.constant 0 : i32
    %c0_i32_0 = arith.constant 0 : i32
    return %arg0, %c0_i32 : i32, i32
  }
  func.func @transform_1(%arg0: i32, %arg1: i32) -> (i32, i32) {
    %c0_i32 = arith.constant 0 : i32
    %c0_i32_0 = arith.constant 0 : i32
    return %c0_i32, %arg1 : i32, i32
  }
  func.func @transform_2(%arg0: i32, %arg1: i32) -> (i32, i32) {
    %c0_i32 = arith.constant 0 : i32
    %c0_i32_0 = arith.constant 0 : i32
    return %c0_i32, %arg1 : i32, i32
  }
  func.func @transform_3(%arg0: i32, %arg1: i32) -> (i32, i32) {
    %c0_i32 = arith.constant 0 : i32
    return %arg0, %arg1 : i32, i32
  }
  func.func @transform_4(%arg0: i32, %arg1: i32) -> (i32, i32) {
    %c0_i32 = arith.constant 0 : i32
    return %arg0, %arg1 : i32, i32
  }
}

module attributes {stable_mosaic.version = 11 : i64} {
  func.func @_conv_single_kernel(%arg0: i32, %arg1: i32, %arg2: memref<32x256xbf16, #tpu.memory_space<vmem>>, %arg3: memref<256x128xbf16, #tpu.memory_space<vmem>>, %arg4: memref<1x128xf32, #tpu.memory_space<vmem>>, %arg5: memref<32x128xbf16, #tpu.memory_space<vmem>>) attributes {dimension_semantics = [#tpu.dimension_semantics<parallel>, #tpu.dimension_semantics<parallel>], iteration_bounds = array<i64: 1, 1>, scalar_prefetch = 0 : i64, scratch_operands = 0 : i64, tpu.core_type = #tpu.core_type<tc>, window_params = [{transform_indices = @transform_0, window_bounds = array<i64: 32, 256>}, {transform_indices = @transform_1, window_bounds = array<i64: 256, 128>}, {transform_indices = @transform_2, window_bounds = array<i64: 1, 128>}, {transform_indices = @transform_3, window_bounds = array<i64: 32, 128>}]} {
    %c0 = arith.constant 0 : index
    %c0_0 = arith.constant 0 : index
    %0 = vector.load %arg2[%c0, %c0_0] : memref<32x256xbf16, #tpu.memory_space<vmem>>, vector<32x256xbf16>
    %c0_1 = arith.constant 0 : index
    %c0_2 = arith.constant 0 : index
    %1 = vector.load %arg3[%c0_1, %c0_2] : memref<256x128xbf16, #tpu.memory_space<vmem>>, vector<256x128xbf16>
    %cst = arith.constant dense<0.000000e+00> : vector<32x128xf32>
    %2 = tpu.matmul %0, %1, %cst {dimension_numbers = #tpu.dot_dimension_numbers<[1], [0], [0], [1], [0, 0, 1, 1], [], []>} : vector<32x256xbf16>, vector<256x128xbf16>, vector<32x128xf32> -> vector<32x128xf32>
    %c0_3 = arith.constant 0 : index
    %c0_4 = arith.constant 0 : index
    %3 = vector.load %arg4[%c0_3, %c0_4] : memref<1x128xf32, #tpu.memory_space<vmem>>, vector<1x128xf32>
    %4 = vector.broadcast %3 : vector<1x128xf32> to vector<32x128xf32>
    %5 = arith.addf %2, %4 : vector<32x128xf32>
    %cst_5 = arith.constant 0.000000e+00 : f32
    %6 = vector.broadcast %cst_5 : f32 to vector<32x128xf32>
    %7 = arith.maximumf %5, %6 : vector<32x128xf32>
    %8 = arith.truncf %7 : vector<32x128xf32> to vector<32x128xbf16>
    %c0_6 = arith.constant 0 : index
    %c0_7 = arith.constant 0 : index
    %9 = vector.load %arg5[%c0_6, %c0_7] : memref<32x128xbf16, #tpu.memory_space<vmem>>, vector<32x128xbf16>
    tpu.vector_store %arg5[%c0_6, %c0_7], %8 {strides = array<i32>} : memref<32x128xbf16, #tpu.memory_space<vmem>>, vector<32x128xbf16>,
    return
  }
  func.func @transform_0(%arg0: i32, %arg1: i32) -> (i32, i32) {
    %c0_i32 = arith.constant 0 : i32
    %c0_i32_0 = arith.constant 0 : i32
    return %arg0, %c0_i32 : i32, i32
  }
  func.func @transform_1(%arg0: i32, %arg1: i32) -> (i32, i32) {
    %c0_i32 = arith.constant 0 : i32
    %c0_i32_0 = arith.constant 0 : i32
    return %c0_i32, %arg1 : i32, i32
  }
  func.func @transform_2(%arg0: i32, %arg1: i32) -> (i32, i32) {
    %c0_i32 = arith.constant 0 : i32
    %c0_i32_0 = arith.constant 0 : i32
    return %c0_i32, %arg1 : i32, i32
  }
  func.func @transform_3(%arg0: i32, %arg1: i32) -> (i32, i32) {
    %c0_i32 = arith.constant 0 : i32
    return %arg0, %arg1 : i32, i32
  }
}

module attributes {stable_mosaic.version = 11 : i64} {
  func.func @_conv_single_res_kernel(%arg0: i32, %arg1: i32, %arg2: memref<8x128xbf16, #tpu.memory_space<vmem>>, %arg3: memref<128x256xbf16, #tpu.memory_space<vmem>>, %arg4: memref<1x256xf32, #tpu.memory_space<vmem>>, %arg5: memref<8x256xbf16, #tpu.memory_space<vmem>>, %arg6: memref<8x256xbf16, #tpu.memory_space<vmem>>) attributes {dimension_semantics = [#tpu.dimension_semantics<parallel>, #tpu.dimension_semantics<parallel>], iteration_bounds = array<i64: 1, 2>, scalar_prefetch = 0 : i64, scratch_operands = 0 : i64, tpu.core_type = #tpu.core_type<tc>, window_params = [{transform_indices = @transform_0, window_bounds = array<i64: 8, 128>}, {transform_indices = @transform_1, window_bounds = array<i64: 128, 256>}, {transform_indices = @transform_2, window_bounds = array<i64: 1, 256>}, {transform_indices = @transform_3, window_bounds = array<i64: 8, 256>}, {transform_indices = @transform_4, window_bounds = array<i64: 8, 256>}]} {
    %c0 = arith.constant 0 : index
    %c0_0 = arith.constant 0 : index
    %0 = vector.load %arg2[%c0, %c0_0] : memref<8x128xbf16, #tpu.memory_space<vmem>>, vector<8x128xbf16>
    %c0_1 = arith.constant 0 : index
    %c0_2 = arith.constant 0 : index
    %1 = vector.load %arg3[%c0_1, %c0_2] : memref<128x256xbf16, #tpu.memory_space<vmem>>, vector<128x256xbf16>
    %cst = arith.constant dense<0.000000e+00> : vector<8x256xf32>
    %2 = tpu.matmul %0, %1, %cst {dimension_numbers = #tpu.dot_dimension_numbers<[1], [0], [0], [1], [0, 0, 1, 1], [], []>} : vector<8x128xbf16>, vector<128x256xbf16>, vector<8x256xf32> -> vector<8x256xf32>
    %c0_3 = arith.constant 0 : index
    %c0_4 = arith.constant 0 : index
    %3 = vector.load %arg4[%c0_3, %c0_4] : memref<1x256xf32, #tpu.memory_space<vmem>>, vector<1x256xf32>
    %4 = vector.broadcast %3 : vector<1x256xf32> to vector<8x256xf32>
    %5 = arith.addf %2, %4 : vector<8x256xf32>
    %c0_5 = arith.constant 0 : index
    %c0_6 = arith.constant 0 : index
    %6 = vector.load %arg5[%c0_5, %c0_6] : memref<8x256xbf16, #tpu.memory_space<vmem>>, vector<8x256xbf16>
    %7 = arith.extf %6 : vector<8x256xbf16> to vector<8x256xf32>
    %8 = arith.addf %5, %7 : vector<8x256xf32>
    %cst_7 = arith.constant 0.000000e+00 : f32
    %9 = vector.broadcast %cst_7 : f32 to vector<8x256xf32>
    %10 = arith.maximumf %8, %9 : vector<8x256xf32>
    %11 = arith.truncf %10 : vector<8x256xf32> to vector<8x256xbf16>
    %c0_8 = arith.constant 0 : index
    %c0_9 = arith.constant 0 : index
    %12 = vector.load %arg6[%c0_8, %c0_9] : memref<8x256xbf16, #tpu.memory_space<vmem>>, vector<8x256xbf16>
    tpu.vector_store %arg6[%c0_8, %c0_9], %11 {strides = array<i32>} : memref<8x256xbf16, #tpu.memory_space<vmem>>, vector<8x256xbf16>,
    return
  }
  func.func @transform_0(%arg0: i32, %arg1: i32) -> (i32, i32) {
    %c0_i32 = arith.constant 0 : i32
    %c0_i32_0 = arith.constant 0 : i32
    return %arg0, %c0_i32 : i32, i32
  }
  func.func @transform_1(%arg0: i32, %arg1: i32) -> (i32, i32) {
    %c0_i32 = arith.constant 0 : i32
    %c0_i32_0 = arith.constant 0 : i32
    return %c0_i32, %arg1 : i32, i32
  }
  func.func @transform_2(%arg0: i32, %arg1: i32) -> (i32, i32) {
    %c0_i32 = arith.constant 0 : i32
    %c0_i32_0 = arith.constant 0 : i32
    return %c0_i32, %arg1 : i32, i32
  }
  func.func @transform_3(%arg0: i32, %arg1: i32) -> (i32, i32) {
    %c0_i32 = arith.constant 0 : i32
    return %arg0, %arg1 : i32, i32
  }
  func.func @transform_4(%arg0: i32, %arg1: i32) -> (i32, i32) {
    %c0_i32 = arith.constant 0 : i32
    return %arg0, %arg1 : i32, i32
  }
}

module attributes {stable_mosaic.version = 11 : i64} {
  func.func @_conv_single_kernel(%arg0: i32, %arg1: i32, %arg2: memref<8x1152xbf16, #tpu.memory_space<vmem>>, %arg3: memref<1152x128xbf16, #tpu.memory_space<vmem>>, %arg4: memref<1x128xf32, #tpu.memory_space<vmem>>, %arg5: memref<8x128xbf16, #tpu.memory_space<vmem>>) attributes {dimension_semantics = [#tpu.dimension_semantics<parallel>, #tpu.dimension_semantics<parallel>], iteration_bounds = array<i64: 1, 1>, scalar_prefetch = 0 : i64, scratch_operands = 0 : i64, tpu.core_type = #tpu.core_type<tc>, window_params = [{transform_indices = @transform_0, window_bounds = array<i64: 8, 1152>}, {transform_indices = @transform_1, window_bounds = array<i64: 1152, 128>}, {transform_indices = @transform_2, window_bounds = array<i64: 1, 128>}, {transform_indices = @transform_3, window_bounds = array<i64: 8, 128>}]} {
    %c0 = arith.constant 0 : index
    %c0_0 = arith.constant 0 : index
    %0 = vector.load %arg2[%c0, %c0_0] : memref<8x1152xbf16, #tpu.memory_space<vmem>>, vector<8x1152xbf16>
    %c0_1 = arith.constant 0 : index
    %c0_2 = arith.constant 0 : index
    %1 = vector.load %arg3[%c0_1, %c0_2] : memref<1152x128xbf16, #tpu.memory_space<vmem>>, vector<1152x128xbf16>
    %cst = arith.constant dense<0.000000e+00> : vector<8x128xf32>
    %2 = tpu.matmul %0, %1, %cst {dimension_numbers = #tpu.dot_dimension_numbers<[1], [0], [0], [1], [0, 0, 1, 1], [], []>} : vector<8x1152xbf16>, vector<1152x128xbf16>, vector<8x128xf32> -> vector<8x128xf32>
    %c0_3 = arith.constant 0 : index
    %c0_4 = arith.constant 0 : index
    %3 = vector.load %arg4[%c0_3, %c0_4] : memref<1x128xf32, #tpu.memory_space<vmem>>, vector<1x128xf32>
    %4 = vector.broadcast %3 : vector<1x128xf32> to vector<8x128xf32>
    %5 = arith.addf %2, %4 : vector<8x128xf32>
    %cst_5 = arith.constant 0.000000e+00 : f32
    %6 = vector.broadcast %cst_5 : f32 to vector<8x128xf32>
    %7 = arith.maximumf %5, %6 : vector<8x128xf32>
    %8 = arith.truncf %7 : vector<8x128xf32> to vector<8x128xbf16>
    %c0_6 = arith.constant 0 : index
    %c0_7 = arith.constant 0 : index
    %9 = vector.load %arg5[%c0_6, %c0_7] : memref<8x128xbf16, #tpu.memory_space<vmem>>, vector<8x128xbf16>
    tpu.vector_store %arg5[%c0_6, %c0_7], %8 {strides = array<i32>} : memref<8x128xbf16, #tpu.memory_space<vmem>>, vector<8x128xbf16>,
    return
  }
  func.func @transform_0(%arg0: i32, %arg1: i32) -> (i32, i32) {
    %c0_i32 = arith.constant 0 : i32
    %c0_i32_0 = arith.constant 0 : i32
    return %arg0, %c0_i32 : i32, i32
  }
  func.func @transform_1(%arg0: i32, %arg1: i32) -> (i32, i32) {
    %c0_i32 = arith.constant 0 : i32
    %c0_i32_0 = arith.constant 0 : i32
    return %c0_i32, %arg1 : i32, i32
  }
  func.func @transform_2(%arg0: i32, %arg1: i32) -> (i32, i32) {
    %c0_i32 = arith.constant 0 : i32
    %c0_i32_0 = arith.constant 0 : i32
    return %c0_i32, %arg1 : i32, i32
  }
  func.func @transform_3(%arg0: i32, %arg1: i32) -> (i32, i32) {
    %c0_i32 = arith.constant 0 : i32
    return %arg0, %arg1 : i32, i32
  }
}

module attributes {stable_mosaic.version = 11 : i64} {
  func.func @_conv_single_kernel(%arg0: i32, %arg1: i32, %arg2: memref<8x256xbf16, #tpu.memory_space<vmem>>, %arg3: memref<256x256xbf16, #tpu.memory_space<vmem>>, %arg4: memref<1x256xf32, #tpu.memory_space<vmem>>, %arg5: memref<8x256xbf16, #tpu.memory_space<vmem>>) attributes {dimension_semantics = [#tpu.dimension_semantics<parallel>, #tpu.dimension_semantics<parallel>], iteration_bounds = array<i64: 1, 2>, scalar_prefetch = 0 : i64, scratch_operands = 0 : i64, tpu.core_type = #tpu.core_type<tc>, window_params = [{transform_indices = @transform_0, window_bounds = array<i64: 8, 256>}, {transform_indices = @transform_1, window_bounds = array<i64: 256, 256>}, {transform_indices = @transform_2, window_bounds = array<i64: 1, 256>}, {transform_indices = @transform_3, window_bounds = array<i64: 8, 256>}]} {
    %c0 = arith.constant 0 : index
    %c0_0 = arith.constant 0 : index
    %0 = vector.load %arg2[%c0, %c0_0] : memref<8x256xbf16, #tpu.memory_space<vmem>>, vector<8x256xbf16>
    %c0_1 = arith.constant 0 : index
    %c0_2 = arith.constant 0 : index
    %1 = vector.load %arg3[%c0_1, %c0_2] : memref<256x256xbf16, #tpu.memory_space<vmem>>, vector<256x256xbf16>
    %cst = arith.constant dense<0.000000e+00> : vector<8x256xf32>
    %2 = tpu.matmul %0, %1, %cst {dimension_numbers = #tpu.dot_dimension_numbers<[1], [0], [0], [1], [0, 0, 1, 1], [], []>} : vector<8x256xbf16>, vector<256x256xbf16>, vector<8x256xf32> -> vector<8x256xf32>
    %c0_3 = arith.constant 0 : index
    %c0_4 = arith.constant 0 : index
    %3 = vector.load %arg4[%c0_3, %c0_4] : memref<1x256xf32, #tpu.memory_space<vmem>>, vector<1x256xf32>
    %4 = vector.broadcast %3 : vector<1x256xf32> to vector<8x256xf32>
    %5 = arith.addf %2, %4 : vector<8x256xf32>
    %6 = arith.truncf %5 : vector<8x256xf32> to vector<8x256xbf16>
    %c0_5 = arith.constant 0 : index
    %c0_6 = arith.constant 0 : index
    %7 = vector.load %arg5[%c0_5, %c0_6] : memref<8x256xbf16, #tpu.memory_space<vmem>>, vector<8x256xbf16>
    tpu.vector_store %arg5[%c0_5, %c0_6], %6 {strides = array<i32>} : memref<8x256xbf16, #tpu.memory_space<vmem>>, vector<8x256xbf16>,
    return
  }
  func.func @transform_0(%arg0: i32, %arg1: i32) -> (i32, i32) {
    %c0_i32 = arith.constant 0 : i32
    %c0_i32_0 = arith.constant 0 : i32
    return %arg0, %c0_i32 : i32, i32
  }
  func.func @transform_1(%arg0: i32, %arg1: i32) -> (i32, i32) {
    %c0_i32 = arith.constant 0 : i32
    %c0_i32_0 = arith.constant 0 : i32
    return %c0_i32, %arg1 : i32, i32
  }
  func.func @transform_2(%arg0: i32, %arg1: i32) -> (i32, i32) {
    %c0_i32 = arith.constant 0 : i32
    %c0_i32_0 = arith.constant 0 : i32
    return %c0_i32, %arg1 : i32, i32
  }
  func.func @transform_3(%arg0: i32, %arg1: i32) -> (i32, i32) {
    %c0_i32 = arith.constant 0 : i32
    return %arg0, %arg1 : i32, i32
  }
}

module attributes {stable_mosaic.version = 11 : i64} {
  func.func @_head_kernel(%arg0: i32, %arg1: memref<2x4x512xbf16, #tpu.memory_space<vmem>>, %arg2: memref<512x128xbf16, #tpu.memory_space<vmem>>, %arg3: memref<1x128xf32, #tpu.memory_space<vmem>>, %arg4: memref<2x128xf32, #tpu.memory_space<vmem>>) attributes {dimension_semantics = [#tpu.dimension_semantics<arbitrary>], iteration_bounds = array<i64: 1>, scalar_prefetch = 0 : i64, scratch_operands = 0 : i64, tpu.core_type = #tpu.core_type<tc>, window_params = [{pipeline_mode = #tpu.pipeline_mode<synchronous>, transform_indices = @transform_0, window_bounds = array<i64: 2, 4, 512>}, {pipeline_mode = #tpu.pipeline_mode<synchronous>, transform_indices = @transform_1, window_bounds = array<i64: 512, 128>}, {pipeline_mode = #tpu.pipeline_mode<synchronous>, transform_indices = @transform_2, window_bounds = array<i64: 1, 128>}, {pipeline_mode = #tpu.pipeline_mode<synchronous>, transform_indices = @transform_3, window_bounds = array<i64: 2, 128>}]} {
    %c0 = arith.constant 0 : index
    %c0_0 = arith.constant 0 : index
    %c0_1 = arith.constant 0 : index
    %0 = vector.load %arg1[%c0, %c0_0, %c0_1] : memref<2x4x512xbf16, #tpu.memory_space<vmem>>, vector<2x4x512xbf16>
    %1 = arith.extf %0 : vector<2x4x512xbf16> to vector<2x4x512xf32>
    %cst = arith.constant dense<0.000000e+00> : vector<2x512xf32>
    %2 = vector.multi_reduction <add>, %1, %cst [1] : vector<2x4x512xf32> to vector<2x512xf32>
    %cst_2 = arith.constant 4.000000e+00 : f32
    %3 = vector.broadcast %cst_2 : f32 to vector<2x512xf32>
    %4 = arith.divf %2, %3 : vector<2x512xf32>
    %5 = arith.truncf %4 : vector<2x512xf32> to vector<2x512xbf16>
    %c0_3 = arith.constant 0 : index
    %c0_4 = arith.constant 0 : index
    %6 = vector.load %arg2[%c0_3, %c0_4] : memref<512x128xbf16, #tpu.memory_space<vmem>>, vector<512x128xbf16>
    %cst_5 = arith.constant dense<0.000000e+00> : vector<2x128xf32>
    %7 = tpu.matmul %5, %6, %cst_5 {dimension_numbers = #tpu.dot_dimension_numbers<[1], [0], [0], [1], [0, 0, 1, 1], [], []>} : vector<2x512xbf16>, vector<512x128xbf16>, vector<2x128xf32> -> vector<2x128xf32>
    %c0_6 = arith.constant 0 : index
    %c0_7 = arith.constant 0 : index
    %8 = vector.load %arg3[%c0_6, %c0_7] : memref<1x128xf32, #tpu.memory_space<vmem>>, vector<1x128xf32>
    %9 = vector.broadcast %8 : vector<1x128xf32> to vector<2x128xf32>
    %10 = arith.addf %7, %9 : vector<2x128xf32>
    %c0_8 = arith.constant 0 : index
    %c0_9 = arith.constant 0 : index
    %11 = vector.load %arg4[%c0_8, %c0_9] : memref<2x128xf32, #tpu.memory_space<vmem>>, vector<2x128xf32>
    tpu.vector_store %arg4[%c0_8, %c0_9], %10 {strides = array<i32>} : memref<2x128xf32, #tpu.memory_space<vmem>>, vector<2x128xf32>,
    return
  }
  func.func @transform_0(%arg0: i32) -> (i32, i32, i32) {
    %c0_i32 = arith.constant 0 : i32
    %c0_i32_0 = arith.constant 0 : i32
    %c0_i32_1 = arith.constant 0 : i32
    %c0_i32_2 = arith.constant 0 : i32
    return %c0_i32, %c0_i32_0, %c0_i32_1 : i32, i32, i32
  }
  func.func @transform_1(%arg0: i32) -> (i32, i32) {
    %c0_i32 = arith.constant 0 : i32
    %c0_i32_0 = arith.constant 0 : i32
    %c0_i32_1 = arith.constant 0 : i32
    return %c0_i32, %c0_i32_0 : i32, i32
  }
  func.func @transform_2(%arg0: i32) -> (i32, i32) {
    %c0_i32 = arith.constant 0 : i32
    %c0_i32_0 = arith.constant 0 : i32
    %c0_i32_1 = arith.constant 0 : i32
    return %c0_i32, %c0_i32_0 : i32, i32
  }
  func.func @transform_3(%arg0: i32) -> (i32, i32) {
    %c0_i32 = arith.constant 0 : i32
    %c0_i32_0 = arith.constant 0 : i32
    %c0_i32_1 = arith.constant 0 : i32
    return %c0_i32, %c0_i32_0 : i32, i32
  }
}

</mosaic_0001>

<llo_original>
// kernel: _lambda_.18
$region0: #{_lambda_.18}
  #allocation0 [shape = 'u32[]', space=smem, size = 0x4, offset = 0x4, fixed_abs, tag = 'smem constant byte address 0x4 - core index']
  #allocation1 [shape = 'u32[72,128]{1,0:T(1,128)}', space=vmem, size = 0x9000, scoped, tag = 'internal scratch']
  %s0 = inlined_call_operand.vmem [shape: bf16[512,128], index: 0, kind: input, shape index: {}]
  %s1 = inlined_call_operand.vmem [shape: bf16[128,128], index: 1, kind: input, shape index: {}]
  %s2 = inlined_call_operand.vmem [shape: f32[1,128], index: 2, kind: input, shape index: {}]
  %s3 = inlined_call_operand.vmem [shape: bf16[512,128], index: 3, kind: output, shape index: {}]
  %s4 = sld [smem:[#allocation0]]
  $region45: #{_lambda_.18} parent=0
    _
  %s6 = ssub.s32 1, %s4
  %s7 = scalar_select 0, %s6, %s4
  loop: start=0, step=1, limit=4
  $region2: #{_lambda_.18} parent=0 // loop_pre_header
    _
  $region3: #{_lambda_.18} parent=0 // loop_header
    %s9 = sphi 0, %s13
    %p10 = scmp.ge.s32.totalorder %s9, 4
    %s16 = sphi 0, %s28
    %s17 = sphi 0, %s24
    %s18 = sphi 0, %s16
    %s19 = sphi 0, %s17
    %s20 = sphi 0, %s18
    %s21 = sphi 0, %s19
    %s31 = sphi 0, %s33
    %s34 = sphi 0, %s31
    %s35 = sphi 0, %s34
    %s51 = sphi 0, %s35
    %s57 = sphi 0, %s59
    %s60 = sphi 0, %s57
    %s61 = sphi 0, %s60
    %s77 = sphi 0, %s61
    %s83 = sphi 0, %s85
    %s86 = sphi 0, %s83
    %s87 = sphi 0, %s86
    %s103 = sphi 0, %s87
    %s111 = sphi 0, %s113
    %s114 = sphi 0, %s111
    %s115 = sphi 0, %s114
    %s131 = sphi 0, %s115
  $region4: #{_lambda_.18} parent=0 // loop_header_branch
    %12 = sbr.rel (%p10) target = $region8
  $region5: #{_lambda_.18} parent=0 // loop_body
    %s14 = ssub.s32 %s9, 1
    %s15 = ssub.s32 %s9, 2
    %s22 = sadd.s32 1, %s17
    %p23 = scmp.ge.s32.totalorder %s22, 1
    %s24 = scalar_select %p23, 0, %s22
    %s25 = sadd.s32 1, %s16
    %s26 = scalar_select %p23, %s25, %s16
    %p27 = scmp.ge.s32.totalorder %s26, 2
    %s28 = scalar_select %p27, 0, %s26
    %s29 = ssub.s32 %s16, %s28
    %p30 = scmp.eq.s32.totalorder %s29, 0
    %s32 = sadd.s32 %s31, 1
    %s33 = scalar_select %p30, %s31, %s32
    %p36 = pneg %p30
    %p37 = scmp.eq.s32.totalorder %s9, 1
    %p38 = por %p36, %p37
    %p39 = scmp.ne.s32.totalorder %s31, %s34
    %p40 = scmp.eq.s32.totalorder %s9, 0
    %p41 = por %p39, %p40
    %p42 = scmp.ne.s32.totalorder %s31, %s34
    %p43 = scmp.eq.s32.totalorder %s14, 1
    %p44 = por %p42, %p43
    %p45 = scmp.ne.s32.totalorder %s34, %s35
    %p46 = scmp.eq.s32.totalorder %s14, 0
    %p47 = por %p45, %p46
    %p48 = scmp.ne.s32.totalorder %s34, %s35
    %p49 = scmp.eq.s32.totalorder %s15, 1
    %p50 = por %p48, %p49
    %p52 = scmp.ne.s32.totalorder %s35, %s51
    %p53 = scmp.eq.s32.totalorder %s15, 0
    %p54 = por %p52, %p53
    %s55 = ssub.s32 %s17, %s24
    %p56 = scmp.eq.s32.totalorder %s55, 0
    %s58 = sadd.s32 %s57, 1
    %s59 = scalar_select %p56, %s57, %s58
    %p62 = pneg %p56
    %p63 = scmp.eq.s32.totalorder %s9, 1
    %p64 = por %p62, %p63
    %p65 = scmp.ne.s32.totalorder %s57, %s60
    %p66 = scmp.eq.s32.totalorder %s9, 0
    %p67 = por %p65, %p66
    %p68 = scmp.ne.s32.totalorder %s57, %s60
    %p69 = scmp.eq.s32.totalorder %s14, 1
    %p70 = por %p68, %p69
    %p71 = scmp.ne.s32.totalorder %s60, %s61
    %p72 = scmp.eq.s32.totalorder %s14, 0
    %p73 = por %p71, %p72
    %p74 = scmp.ne.s32.totalorder %s60, %s61
    %p75 = scmp.eq.s32.totalorder %s15, 1
    %p76 = por %p74, %p75
    %p78 = scmp.ne.s32.totalorder %s61, %s77
    %p79 = scmp.eq.s32.totalorder %s15, 0
    %p80 = por %p78, %p79
    %s81 = ssub.s32 %s17, %s24
    %p82 = scmp.eq.s32.totalorder %s81, 0
    %s84 = sadd.s32 %s83, 1
    %s85 = scalar_select %p82, %s83, %s84
    %p88 = pneg %p82
    %p89 = scmp.eq.s32.totalorder %s9, 1
    %p90 = por %p88, %p89
    %p91 = scmp.ne.s32.totalorder %s83, %s86
    %p92 = scmp.eq.s32.totalorder %s9, 0
    %p93 = por %p91, %p92
    %p94 = scmp.ne.s32.totalorder %s83, %s86
    %p95 = scmp.eq.s32.totalorder %s14, 1
    %p96 = por %p94, %p95
    %p97 = scmp.ne.s32.totalorder %s86, %s87
    %p98 = scmp.eq.s32.totalorder %s14, 0
    %p99 = por %p97, %p98
    %p100 = scmp.ne.s32.totalorder %s86, %s87
    %p101 = scmp.eq.s32.totalorder %s15, 1
    %p102 = por %p100, %p101
    %p104 = scmp.ne.s32.totalorder %s87, %s103
    %p105 = scmp.eq.s32.totalorder %s15, 0
    %p106 = por %p104, %p105
    %s107 = ssub.s32 %s16, %s28
    %s108 = ssub.s32 %s17, %s24
    %s109 = sor.u32 %s107, %s108
    %p110 = scmp.eq.s32.totalorder %s109, 0
    %s112 = sadd.s32 %s111, 1
    %s113 = scalar_select %p110, %s111, %s112
    %p116 = pneg %p110
    %p117 = scmp.eq.s32.totalorder %s9, 1
    %p118 = por %p116, %p117
    %p119 = scmp.ne.s32.totalorder %s111, %s114
    %p120 = scmp.eq.s32.totalorder %s9, 0
    %p121 = por %p119, %p120
    %p122 = scmp.ne.s32.totalorder %s111, %s114
    %p123 = scmp.eq.s32.totalorder %s14, 1
    %p124 = por %p122, %p123
    %p125 = scmp.ne.s32.totalorder %s114, %s115
    %p126 = scmp.eq.s32.totalorder %s14, 0
    %p127 = por %p125, %p126
    %p128 = scmp.ne.s32.totalorder %s114, %s115
    %p129 = scmp.eq.s32.totalorder %s15, 1
    %p130 = por %p128, %p129
    %p132 = scmp.ne.s32.totalorder %s115, %s131
    %p133 = scmp.eq.s32.totalorder %s15, 0
    %p134 = por %p132, %p133
    %p135 = scmp.le.s32.totalorder 1, %s9
    %p136 = scmp.lt.s32.totalorder %s9, 3
    %p137 = pnand %p135, %p136
    %p138 = pneg %p137
    // Predicated region
    $region9: #{_lambda_.18} parent=5 // pred_check
      _
    $region10: #{_lambda_.18} parent=5 // pred_check_branch
      %140 = sbr.rel (%p137) target = $region12
    $region11: #{_lambda_.18} parent=5 // pred_region
      %s141 = ssub.s32 %s9, 1
      // Predicated region
      $region13: #{_lambda_.18} parent=11 // pred_check
        %p142 = pneg %p73
      $region14: #{_lambda_.18} parent=11 // pred_check_branch
        %144 = sbr.rel (%p142) target = $region16
      $region15: #{_lambda_.18} parent=11 // pred_region
        %p145 = scmp.lt.s32.totalorder %s19, 0
        %s146 = scalar_select %p145, %s19, 0
        %s147 = smul.addr %s146, 4
        %s148 = scalar_lea.vmem %s1, %s147
      $region16: #{_lambda_.18} parent=11 // pred_fallthru
        _
      // Predicated region
      $region17: #{_lambda_.18} parent=11 // pred_check
        %p149 = pneg %p99
      $region18: #{_lambda_.18} parent=11 // pred_check_branch
        %151 = sbr.rel (%p149) target = $region20
      $region19: #{_lambda_.18} parent=11 // pred_region
        %p152 = scmp.lt.s32.totalorder %s19, 0
        %s153 = scalar_select %p152, %s19, 0
        %s154 = scalar_lea.vmem %s2, %s153
      $region20: #{_lambda_.18} parent=11 // pred_fallthru
        _
    $region12: #{_lambda_.18} parent=5 // pred_fallthru
      _
    %p155 = scmp.lt.s32.totalorder %s9, 2
    // Predicated region
    $region21: #{_lambda_.18} parent=5 // pred_check
      %p156 = pneg %p155
    $region22: #{_lambda_.18} parent=5 // pred_check_branch
      %158 = sbr.rel (%p156) target = $region24
    $region23: #{_lambda_.18} parent=5 // pred_region
      // Predicated region
      $region25: #{_lambda_.18} parent=23 // pred_check
        %p159 = pneg %p41
      $region26: #{_lambda_.18} parent=23 // pred_check_branch
        %161 = sbr.rel (%p159) target = $region28
      $region27: #{_lambda_.18} parent=23 // pred_region
        %s162 = smul.u32 32, %s16
        %p163 = scmp.lt.s32.totalorder %s162, 63
        %s164 = scalar_select %p163, %s162, 63
        %s165 = smul.addr %s164, 4
        %s166 = scalar_lea.vmem %s0, %s165
        %s167 = smul.u32 32, %s16
      $region28: #{_lambda_.18} parent=23 // pred_fallthru
        _
    $region24: #{_lambda_.18} parent=5 // pred_fallthru
      _
    %p168 = scmp.le.s32.totalorder 1, %s9
    %p169 = scmp.lt.s32.totalorder %s9, 3
    %p170 = pnand %p168, %p169
    %p171 = pneg %p170
    // Predicated region
    $region29: #{_lambda_.18} parent=5 // pred_check
      _
    $region30: #{_lambda_.18} parent=5 // pred_check_branch
      %173 = sbr.rel (%p170) target = $region32
    $region31: #{_lambda_.18} parent=5 // pred_region
      %s174 = ssub.s32 %s9, 1
      %s175 = smul.u32 32, %s18
      %p176 = scmp.lt.s32.totalorder %s175, 63
      %s177 = scalar_select %p176, %s175, 63
      %s178 = smul.addr %s177, 4
      %s179 = scalar_lea.vmem %s0, %s178
      %p180 = pneg %p47
      %p181 = pneg %p44
      %p182 = scmp.lt.s32.totalorder %s19, 0
      %s183 = scalar_select %p182, %s19, 0
      %s184 = smul.addr %s183, 4
      %s185 = scalar_lea.vmem %s1, %s184
      %p186 = pneg %p73
      %p187 = pneg %p70
      %p188 = scmp.lt.s32.totalorder %s19, 0
      %s189 = scalar_select %p188, %s19, 0
      %s190 = scalar_lea.vmem %s2, %s189
      %p191 = pneg %p99
      %p192 = pneg %p96
      %p193 = pneg %p127
      %p194 = pneg %p124
      %s195 = smul.u32 32, %s18
      %p196 = scmp.lt.s32.totalorder %s195, 63
      %s197 = scalar_select %p196, %s195, 63
      %p198 = scmp.lt.s32.totalorder %s19, 0
      %s199 = scalar_select %p198, %s19, 0
      %s200 = sadd.s32 %s199, %s197
      %s201 = smul.addr %s200, 4
      %s202 = scalar_lea.vmem %s3, %s201
      %s203 = smul.u32 32, %s18
      %p204 = scmp.lt.s32.totalorder %s203, 63
      %s205 = scalar_select %p204, %s203, 63
      %s206 = smul.addr %s205, 4
      %s207 = scalar_lea.vmem %s0, %s206
      %s208 = smul.u32 32, %s18
      %p209 = scmp.lt.s32.totalorder %s19, 0
      %s210 = scalar_select %p209, %s19, 0
      %s211 = smul.addr %s210, 4
      %s212 = scalar_lea.vmem %s1, %s211
      %p213 = scmp.lt.s32.totalorder %s19, 0
      %s214 = scalar_select %p213, %s19, 0
      %s215 = scalar_lea.vmem %s2, %s214
      %s216 = smul.u32 32, %s18
      %p217 = scmp.lt.s32.totalorder %s216, 63
      %s218 = scalar_select %p217, %s216, 63
      %p219 = scmp.lt.s32.totalorder %s19, 0
      %s220 = scalar_select %p219, %s19, 0
      %s221 = sadd.s32 %s220, %s218
      %s222 = smul.addr %s221, 4
      %s223 = scalar_lea.vmem %s3, %s222
      %s224 = smul.u32 32, %s18
      %v225 = vld [vmem:[%s207] sm:$0xf]
      %v226 = vld [vmem:[%s207 + $0x4] sm:$0xf]
      %v227 = vld [vmem:[%s207 + $0x8] sm:$0xf]
      %v228 = vld [vmem:[%s207 + $0xc] sm:$0xf]
      %v229 = vld [vmem:[%s207 + $0x10] sm:$0xf]
      %v230 = vld [vmem:[%s207 + $0x14] sm:$0xf]
      %v231 = vld [vmem:[%s207 + $0x18] sm:$0xf]
      %v232 = vld [vmem:[%s207 + $0x1c] sm:$0xf]
      %v233 = vld [vmem:[%s207 + $0x20] sm:$0xf]
      %v234 = vld [vmem:[%s207 + $0x24] sm:$0xf]
      %v235 = vld [vmem:[%s207 + $0x28] sm:$0xf]
      %v236 = vld [vmem:[%s207 + $0x2c] sm:$0xf]
      %v237 = vld [vmem:[%s207 + $0x30] sm:$0xf]
      %v238 = vld [vmem:[%s207 + $0x34] sm:$0xf]
      %v239 = vld [vmem:[%s207 + $0x38] sm:$0xf]
      %v240 = vld [vmem:[%s207 + $0x3c] sm:$0xf]
      %v241 = vld [vmem:[%s207 + $0x40] sm:$0xf]
      %v242 = vld [vmem:[%s207 + $0x44] sm:$0xf]
      %v243 = vld [vmem:[%s207 + $0x48] sm:$0xf]
      %v244 = vld [vmem:[%s207 + $0x4c] sm:$0xf]
      %v245 = vld [vmem:[%s207 + $0x50] sm:$0xf]
      %v246 = vld [vmem:[%s207 + $0x54] sm:$0xf]
      %v247 = vld [vmem:[%s207 + $0x58] sm:$0xf]
      %v248 = vld [vmem:[%s207 + $0x5c] sm:$0xf]
      %v249 = vld [vmem:[%s207 + $0x60] sm:$0xf]
      %v250 = vld [vmem:[%s207 + $0x64] sm:$0xf]
      %v251 = vld [vmem:[%s207 + $0x68] sm:$0xf]
      %v252 = vld [vmem:[%s207 + $0x6c] sm:$0xf]
      %v253 = vld [vmem:[%s207 + $0x70] sm:$0xf]
      %v254 = vld [vmem:[%s207 + $0x74] sm:$0xf]
      %v255 = vld [vmem:[%s207 + $0x78] sm:$0xf]
      %v256 = vld [vmem:[%s207 + $0x7c] sm:$0xf]
      %v257 = vld [vmem:[%s212] sm:$0xf]
      %v258 = vld [vmem:[%s212 + $0x4] sm:$0xf]
      %v259 = vld [vmem:[%s212 + $0x8] sm:$0xf]
      %v260 = vld [vmem:[%s212 + $0xc] sm:$0xf]
      %v261 = vld [vmem:[%s212 + $0x10] sm:$0xf]
      %v262 = vld [vmem:[%s212 + $0x14] sm:$0xf]
      %v263 = vld [vmem:[%s212 + $0x18] sm:$0xf]
      %v264 = vld [vmem:[%s212 + $0x1c] sm:$0xf]
      %v265 = vld [vmem:[%s212 + $0x20] sm:$0xf]
      %v266 = vld [vmem:[%s212 + $0x24] sm:$0xf]
      %v267 = vld [vmem:[%s212 + $0x28] sm:$0xf]
      %v268 = vld [vmem:[%s212 + $0x2c] sm:$0xf]
      %v269 = vld [vmem:[%s212 + $0x30] sm:$0xf]
      %v270 = vld [vmem:[%s212 + $0x34] sm:$0xf]
      %v271 = vld [vmem:[%s212 + $0x38] sm:$0xf]
      %v272 = vld [vmem:[%s212 + $0x3c] sm:$0xf]
      %v273 = vld [vmem:[%s215] sm:$0x1]
      %v275 = vperm.slane %v273, 0
      %v309 = vunpack.c.l.b16 %v225
      %v310 = vunpack.c.l.b16 %v226
      %v311 = vunpack.c.l.b16 %v227
      %v312 = vunpack.c.l.b16 %v228
      %v313 = vunpack.c.l.b16 %v229
      %v314 = vunpack.c.l.b16 %v230
      %v315 = vunpack.c.l.b16 %v231
      %v316 = vunpack.c.l.b16 %v232
      %v317 = vunpack.c.l.b16 %v233
      %v318 = vunpack.c.l.b16 %v234
      %v319 = vunpack.c.l.b16 %v235
      %v320 = vunpack.c.l.b16 %v236
      %v321 = vunpack.c.l.b16 %v237
      %v322 = vunpack.c.l.b16 %v238
      %v323 = vunpack.c.l.b16 %v239
      %v324 = vunpack.c.l.b16 %v240
      %v325 = vunpack.c.l.b16 %v241
      %v326 = vunpack.c.l.b16 %v242
      %v327 = vunpack.c.l.b16 %v243
      %v328 = vunpack.c.l.b16 %v244
      %v329 = vunpack.c.l.b16 %v245
      %v330 = vunpack.c.l.b16 %v246
      %v331 = vunpack.c.l.b16 %v247
      %v332 = vunpack.c.l.b16 %v248
      %v333 = vunpack.c.l.b16 %v249
      %v334 = vunpack.c.l.b16 %v250
      %v335 = vunpack.c.l.b16 %v251
      %v336 = vunpack.c.l.b16 %v252
      %v337 = vunpack.c.l.b16 %v253
      %v338 = vunpack.c.l.b16 %v254
      %v339 = vunpack.c.l.b16 %v255
      %v340 = vunpack.c.l.b16 %v256
      %v341 = vpack.c.b16 %v310, %v309
      %v342 = vpack.c.b16 %v312, %v311
      %v343 = vpack.c.b16 %v314, %v313
      %v344 = vpack.c.b16 %v316, %v315
      %v345 = vpack.c.b16 %v318, %v317
      %v346 = vpack.c.b16 %v320, %v319
      %v347 = vpack.c.b16 %v322, %v321
      %v348 = vpack.c.b16 %v324, %v323
      %v349 = vpack.c.b16 %v326, %v325
      %v350 = vpack.c.b16 %v328, %v327
      %v351 = vpack.c.b16 %v330, %v329
      %v352 = vpack.c.b16 %v332, %v331
      %v353 = vpack.c.b16 %v334, %v333
      %v354 = vpack.c.b16 %v336, %v335
      %v355 = vpack.c.b16 %v338, %v337
      %v356 = vpack.c.b16 %v340, %v339
      %v389 = vunpack.c.l.b16 %v257
      %v390 = vunpack.c.l.b16 %v258
      %v391 = vunpack.c.l.b16 %v259
      %v392 = vunpack.c.l.b16 %v260
      %v393 = vunpack.c.l.b16 %v261
      %v394 = vunpack.c.l.b16 %v262
      %v395 = vunpack.c.l.b16 %v263
      %v396 = vunpack.c.l.b16 %v264
      %v397 = vunpack.c.l.b16 %v265
      %v398 = vunpack.c.l.b16 %v266
      %v399 = vunpack.c.l.b16 %v267
      %v400 = vunpack.c.l.b16 %v268
      %v401 = vunpack.c.l.b16 %v269
      %v402 = vunpack.c.l.b16 %v270
      %v403 = vunpack.c.l.b16 %v271
      %v404 = vunpack.c.l.b16 %v272
      %v405 = vpack.c.b16 %v390, %v389
      %v406 = vpack.c.b16 %v392, %v391
      %v407 = vpack.c.b16 %v394, %v393
      %v408 = vpack.c.b16 %v396, %v395
      %v409 = vpack.c.b16 %v398, %v397
      %v410 = vpack.c.b16 %v400, %v399
      %v411 = vpack.c.b16 %v402, %v401
      %v412 = vpack.c.b16 %v404, %v403
      %421 = vmatpush.bf16.msra.mxu0 %v412
      %422 = vmatpush.bf16.msra.mxu0 %v411
      %423 = vmatpush.bf16.msra.mxu0 %v410
      %424 = vmatpush.bf16.msra.mxu0 %v409
      %425 = vmatpush.bf16.msra.mxu0 %v408
      %426 = vmatpush.bf16.msra.mxu0 %v407
      %427 = vmatpush.bf16.msra.mxu0 %v406
      %428 = vmatpush.bf16.msra.mxu0 %v405
      %429 = vmatmul.bf16.gmra.mxu0 %v341
      %v430 = vpop.f32.mrf.mxu0
      %v431 = vadd.f32 %v275, %v430
      %v432 = vpop.f32.mrf.mxu0
      %v433 = vadd.f32 %v275, %v432
      %434 = vmatmul.bf16.gmra.mxu0 %v342
      %v435 = vpop.f32.mrf.mxu0
      %v436 = vadd.f32 %v275, %v435
      %v437 = vpop.f32.mrf.mxu0
      %v438 = vadd.f32 %v275, %v437
      %439 = vmatmul.bf16.gmra.mxu0 %v343
      %v440 = vpop.f32.mrf.mxu0
      %v441 = vadd.f32 %v275, %v440
      %v442 = vpop.f32.mrf.mxu0
      %v443 = vadd.f32 %v275, %v442
      %444 = vmatmul.bf16.gmra.mxu0 %v344
      %v445 = vpop.f32.mrf.mxu0
      %v446 = vadd.f32 %v275, %v445
      %v447 = vpop.f32.mrf.mxu0
      %v448 = vadd.f32 %v275, %v447
      %449 = vmatmul.bf16.gmra.mxu0 %v345
      %v450 = vpop.f32.mrf.mxu0
      %v451 = vadd.f32 %v275, %v450
      %v452 = vpop.f32.mrf.mxu0
      %v453 = vadd.f32 %v275, %v452
      %454 = vmatmul.bf16.gmra.mxu0 %v346
      %v455 = vpop.f32.mrf.mxu0
      %v456 = vadd.f32 %v275, %v455
      %v457 = vpop.f32.mrf.mxu0
      %v458 = vadd.f32 %v275, %v457
      %459 = vmatmul.bf16.gmra.mxu0 %v347
      %v460 = vpop.f32.mrf.mxu0
      %v461 = vadd.f32 %v275, %v460
      %v462 = vpop.f32.mrf.mxu0
      %v463 = vadd.f32 %v275, %v462
      %464 = vmatmul.bf16.gmra.mxu0 %v348
      %v465 = vpop.f32.mrf.mxu0
      %v466 = vadd.f32 %v275, %v465
      %v467 = vpop.f32.mrf.mxu0
      %v468 = vadd.f32 %v275, %v467
      %469 = vmatmul.bf16.gmra.mxu0 %v349
      %v470 = vpop.f32.mrf.mxu0
      %v471 = vadd.f32 %v275, %v470
      %v472 = vpop.f32.mrf.mxu0
      %v473 = vadd.f32 %v275, %v472
      %474 = vmatmul.bf16.gmra.mxu0 %v350
      %v475 = vpop.f32.mrf.mxu0
      %v476 = vadd.f32 %v275, %v475
      %v477 = vpop.f32.mrf.mxu0
      %v478 = vadd.f32 %v275, %v477
      %479 = vmatmul.bf16.gmra.mxu0 %v351
      %v480 = vpop.f32.mrf.mxu0
      %v481 = vadd.f32 %v275, %v480
      %v482 = vpop.f32.mrf.mxu0
      %v483 = vadd.f32 %v275, %v482
      %484 = vmatmul.bf16.gmra.mxu0 %v352
      %v485 = vpop.f32.mrf.mxu0
      %v486 = vadd.f32 %v275, %v485
      %v487 = vpop.f32.mrf.mxu0
      %v488 = vadd.f32 %v275, %v487
      %489 = vmatmul.bf16.gmra.mxu0 %v353
      %v490 = vpop.f32.mrf.mxu0
      %v491 = vadd.f32 %v275, %v490
      %v492 = vpop.f32.mrf.mxu0
      %v493 = vadd.f32 %v275, %v492
      %494 = vmatmul.bf16.gmra.mxu0 %v354
      %v495 = vpop.f32.mrf.mxu0
      %v496 = vadd.f32 %v275, %v495
      %v497 = vpop.f32.mrf.mxu0
      %v498 = vadd.f32 %v275, %v497
      %499 = vmatmul.bf16.gmra.mxu0 %v355
      %v500 = vpop.f32.mrf.mxu0
      %v501 = vadd.f32 %v275, %v500
      %v502 = vpop.f32.mrf.mxu0
      %v503 = vadd.f32 %v275, %v502
      %504 = vmatmul.bf16.gmra.mxu0 %v356
      %v505 = vpop.f32.mrf.mxu0
      %v506 = vadd.f32 %v275, %v505
      %v507 = vpop.f32.mrf.mxu0
      %v508 = vadd.f32 %v275, %v507
      %509 = vdwg.mxu0
      %v510 = vmax.f32 %v431, 0.0
      %v511 = vmax.f32 %v433, 0.0
      %v512 = vmax.f32 %v436, 0.0
      %v513 = vmax.f32 %v438, 0.0
      %v514 = vmax.f32 %v441, 0.0
      %v515 = vmax.f32 %v443, 0.0
      %v516 = vmax.f32 %v446, 0.0
      %v517 = vmax.f32 %v448, 0.0
      %v518 = vmax.f32 %v451, 0.0
      %v519 = vmax.f32 %v453, 0.0
      %v520 = vmax.f32 %v456, 0.0
      %v521 = vmax.f32 %v458, 0.0
      %v522 = vmax.f32 %v461, 0.0
      %v523 = vmax.f32 %v463, 0.0
      %v524 = vmax.f32 %v466, 0.0
      %v525 = vmax.f32 %v468, 0.0
      %v526 = vmax.f32 %v471, 0.0
      %v527 = vmax.f32 %v473, 0.0
      %v528 = vmax.f32 %v476, 0.0
      %v529 = vmax.f32 %v478, 0.0
      %v530 = vmax.f32 %v481, 0.0
      %v531 = vmax.f32 %v483, 0.0
      %v532 = vmax.f32 %v486, 0.0
      %v533 = vmax.f32 %v488, 0.0
      %v534 = vmax.f32 %v491, 0.0
      %v535 = vmax.f32 %v493, 0.0
      %v536 = vmax.f32 %v496, 0.0
      %v537 = vmax.f32 %v498, 0.0
      %v538 = vmax.f32 %v501, 0.0
      %v539 = vmax.f32 %v503, 0.0
      %v540 = vmax.f32 %v506, 0.0
      %v541 = vmax.f32 %v508, 0.0
      %v542 = vpack.c.bf16 %v510, %v510
      %v543 = vpack.c.bf16 %v511, %v511
      %v544 = vpack.c.bf16 %v512, %v512
      %v545 = vpack.c.bf16 %v513, %v513
      %v546 = vpack.c.bf16 %v514, %v514
      %v547 = vpack.c.bf16 %v515, %v515
      %v548 = vpack.c.bf16 %v516, %v516
      %v549 = vpack.c.bf16 %v517, %v517
      %v550 = vpack.c.bf16 %v518, %v518
      %v551 = vpack.c.bf16 %v519, %v519
      %v552 = vpack.c.bf16 %v520, %v520
      %v553 = vpack.c.bf16 %v521, %v521
      %v554 = vpack.c.bf16 %v522, %v522
      %v555 = vpack.c.bf16 %v523, %v523
      %v556 = vpack.c.bf16 %v524, %v524
      %v557 = vpack.c.bf16 %v525, %v525
      %v558 = vpack.c.bf16 %v526, %v526
      %v559 = vpack.c.bf16 %v527, %v527
      %v560 = vpack.c.bf16 %v528, %v528
      %v561 = vpack.c.bf16 %v529, %v529
      %v562 = vpack.c.bf16 %v530, %v530
      %v563 = vpack.c.bf16 %v531, %v531
      %v564 = vpack.c.bf16 %v532, %v532
      %v565 = vpack.c.bf16 %v533, %v533
      %v566 = vpack.c.bf16 %v534, %v534
      %v567 = vpack.c.bf16 %v535, %v535
      %v568 = vpack.c.bf16 %v536, %v536
      %v569 = vpack.c.bf16 %v537, %v537
      %v570 = vpack.c.bf16 %v538, %v538
      %v571 = vpack.c.bf16 %v539, %v539
      %v572 = vpack.c.bf16 %v540, %v540
      %v573 = vpack.c.bf16 %v541, %v541
      %574 = vst [vmem:[%s223] sm:$0xf] %v542
      %575 = vst [vmem:[%s223 + $0x4] sm:$0xf] %v543
      %576 = vst [vmem:[%s223 + $0x8] sm:$0xf] %v544
      %577 = vst [vmem:[%s223 + $0xc] sm:$0xf] %v545
      %578 = vst [vmem:[%s223 + $0x10] sm:$0xf] %v546
      %579 = vst [vmem:[%s223 + $0x14] sm:$0xf] %v547
      %580 = vst [vmem:[%s223 + $0x18] sm:$0xf] %v548
      %581 = vst [vmem:[%s223 + $0x1c] sm:$0xf] %v549
      %582 = vst [vmem:[%s223 + $0x20] sm:$0xf] %v550
      %583 = vst [vmem:[%s223 + $0x24] sm:$0xf] %v551
      %584 = vst [vmem:[%s223 + $0x28] sm:$0xf] %v552
      %585 = vst [vmem:[%s223 + $0x2c] sm:$0xf] %v553
      %586 = vst [vmem:[%s223 + $0x30] sm:$0xf] %v554
      %587 = vst [vmem:[%s223 + $0x34] sm:$0xf] %v555
      %588 = vst [vmem:[%s223 + $0x38] sm:$0xf] %v556
      %589 = vst [vmem:[%s223 + $0x3c] sm:$0xf] %v557
      %590 = vst [vmem:[%s223 + $0x40] sm:$0xf] %v558
      %591 = vst [vmem:[%s223 + $0x44] sm:$0xf] %v559
      %592 = vst [vmem:[%s223 + $0x48] sm:$0xf] %v560
      %593 = vst [vmem:[%s223 + $0x4c] sm:$0xf] %v561
      %594 = vst [vmem:[%s223 + $0x50] sm:$0xf] %v562
      %595 = vst [vmem:[%s223 + $0x54] sm:$0xf] %v563
      %596 = vst [vmem:[%s223 + $0x58] sm:$0xf] %v564
      %597 = vst [vmem:[%s223 + $0x5c] sm:$0xf] %v565
      %598 = vst [vmem:[%s223 + $0x60] sm:$0xf] %v566
      %599 = vst [vmem:[%s223 + $0x64] sm:$0xf] %v567
      %600 = vst [vmem:[%s223 + $0x68] sm:$0xf] %v568
      %601 = vst [vmem:[%s223 + $0x6c] sm:$0xf] %v569
      %602 = vst [vmem:[%s223 + $0x70] sm:$0xf] %v570
      %603 = vst [vmem:[%s223 + $0x74] sm:$0xf] %v571
      %604 = vst [vmem:[%s223 + $0x78] sm:$0xf] %v572
      %605 = vst [vmem:[%s223 + $0x7c] sm:$0xf] %v573
      %s606 = smul.u32 32, %s18
      %p607 = scmp.lt.s32.totalorder %s606, 63
      %s608 = scalar_select %p607, %s606, 63
      %p609 = scmp.lt.s32.totalorder %s19, 0
      %s610 = scalar_select %p609, %s19, 0
      %s611 = sadd.s32 %s610, %s608
      %s612 = smul.addr %s611, 4
      %s613 = scalar_lea.vmem %s3, %s612
      // Predicated region
      $region33: #{_lambda_.18} parent=31 // pred_check
        %p614 = pneg %p124
      $region34: #{_lambda_.18} parent=31 // pred_check_branch
        %616 = sbr.rel (%p614) target = $region36
      $region35: #{_lambda_.18} parent=31 // pred_region
        %s617 = smul.u32 32, %s18
      $region36: #{_lambda_.18} parent=31 // pred_fallthru
        _
    $region32: #{_lambda_.18} parent=5 // pred_fallthru
      _
    %p618 = scmp.le.s32.totalorder 2, %s9
    // Predicated region
    $region37: #{_lambda_.18} parent=5 // pred_check
      %p619 = pneg %p618
    $region38: #{_lambda_.18} parent=5 // pred_check_branch
      %621 = sbr.rel (%p619) target = $region40
    $region39: #{_lambda_.18} parent=5 // pred_region
      %s622 = ssub.s32 %s9, 2
      // Predicated region
      $region41: #{_lambda_.18} parent=39 // pred_check
        %p623 = pneg %p130
      $region42: #{_lambda_.18} parent=39 // pred_check_branch
        %625 = sbr.rel (%p623) target = $region44
      $region43: #{_lambda_.18} parent=39 // pred_region
        %s626 = smul.u32 32, %s20
        %p627 = scmp.lt.s32.totalorder %s626, 63
        %s628 = scalar_select %p627, %s626, 63
        %p629 = scmp.lt.s32.totalorder %s21, 0
        %s630 = scalar_select %p629, %s21, 0
        %s631 = sadd.s32 %s630, %s628
        %s632 = smul.addr %s631, 4
        %s633 = scalar_lea.vmem %s3, %s632
      $region44: #{_lambda_.18} parent=39 // pred_fallthru
        _
    $region40: #{_lambda_.18} parent=5 // pred_fallthru
      _
  $region6: #{_lambda_.18} parent=0 // loop_footer
    %s13 = sadd.s32 1, %s9
  $region7: #{_lambda_.18} parent=0 // loop_footer_branch
    %8 = sbr.rel target = $region3
  $region8: #{_lambda_.18} parent=0 // loop_exit
    _

// kernel: _lambda_.17
$region0: #{_lambda_.17}
  #allocation0 [shape = 'u32[]', space=smem, size = 0x4, offset = 0x4, fixed_abs, tag = 'smem constant byte address 0x4 - core index']
  #allocation1 [shape = 'u32[72,128]{1,0:T(1,128)}', space=vmem, size = 0x9000, scoped, tag = 'internal scratch']
  %s0 = inlined_call_operand.vmem [shape: bf16[512,256], index: 0, kind: input, shape index: {}]
  %s1 = inlined_call_operand.vmem [shape: bf16[256,128], index: 1, kind: input, shape index: {}]
  %s2 = inlined_call_operand.vmem [shape: f32[1,128], index: 2, kind: input, shape index: {}]
  %s3 = inlined_call_operand.vmem [shape: bf16[512,128], index: 3, kind: output, shape index: {}]
  %s4 = sld [smem:[#allocation0]]
  $region45: #{_lambda_.17} parent=0
    _
  %s6 = ssub.s32 1, %s4
  %s7 = scalar_select 0, %s6, %s4
  loop: start=0, step=1, limit=4
  $region2: #{_lambda_.17} parent=0 // loop_pre_header
    _
  $region3: #{_lambda_.17} parent=0 // loop_header
    %s9 = sphi 0, %s13
    %p10 = scmp.ge.s32.totalorder %s9, 4
    %s16 = sphi 0, %s28
    %s17 = sphi 0, %s24
    %s18 = sphi 0, %s16
    %s19 = sphi 0, %s17
    %s20 = sphi 0, %s18
    %s21 = sphi 0, %s19
    %s31 = sphi 0, %s33
    %s34 = sphi 0, %s31
    %s35 = sphi 0, %s34
    %s51 = sphi 0, %s35
    %s57 = sphi 0, %s59
    %s60 = sphi 0, %s57
    %s61 = sphi 0, %s60
    %s77 = sphi 0, %s61
    %s83 = sphi 0, %s85
    %s86 = sphi 0, %s83
    %s87 = sphi 0, %s86
    %s103 = sphi 0, %s87
    %s111 = sphi 0, %s113
    %s114 = sphi 0, %s111
    %s115 = sphi 0, %s114
    %s131 = sphi 0, %s115
  $region4: #{_lambda_.17} parent=0 // loop_header_branch
    %12 = sbr.rel (%p10) target = $region8
  $region5: #{_lambda_.17} parent=0 // loop_body
    %s14 = ssub.s32 %s9, 1
    %s15 = ssub.s32 %s9, 2
    %s22 = sadd.s32 1, %s17
    %p23 = scmp.ge.s32.totalorder %s22, 1
    %s24 = scalar_select %p23, 0, %s22
    %s25 = sadd.s32 1, %s16
    %s26 = scalar_select %p23, %s25, %s16
    %p27 = scmp.ge.s32.totalorder %s26, 2
    %s28 = scalar_select %p27, 0, %s26
    %s29 = ssub.s32 %s16, %s28
    %p30 = scmp.eq.s32.totalorder %s29, 0
    %s32 = sadd.s32 %s31, 1
    %s33 = scalar_select %p30, %s31, %s32
    %p36 = pneg %p30
    %p37 = scmp.eq.s32.totalorder %s9, 1
    %p38 = por %p36, %p37
    %p39 = scmp.ne.s32.totalorder %s31, %s34
    %p40 = scmp.eq.s32.totalorder %s9, 0
    %p41 = por %p39, %p40
    %p42 = scmp.ne.s32.totalorder %s31, %s34
    %p43 = scmp.eq.s32.totalorder %s14, 1
    %p44 = por %p42, %p43
    %p45 = scmp.ne.s32.totalorder %s34, %s35
    %p46 = scmp.eq.s32.totalorder %s14, 0
    %p47 = por %p45, %p46
    %p48 = scmp.ne.s32.totalorder %s34, %s35
    %p49 = scmp.eq.s32.totalorder %s15, 1
    %p50 = por %p48, %p49
    %p52 = scmp.ne.s32.totalorder %s35, %s51
    %p53 = scmp.eq.s32.totalorder %s15, 0
    %p54 = por %p52, %p53
    %s55 = ssub.s32 %s17, %s24
    %p56 = scmp.eq.s32.totalorder %s55, 0
    %s58 = sadd.s32 %s57, 1
    %s59 = scalar_select %p56, %s57, %s58
    %p62 = pneg %p56
    %p63 = scmp.eq.s32.totalorder %s9, 1
    %p64 = por %p62, %p63
    %p65 = scmp.ne.s32.totalorder %s57, %s60
    %p66 = scmp.eq.s32.totalorder %s9, 0
    %p67 = por %p65, %p66
    %p68 = scmp.ne.s32.totalorder %s57, %s60
    %p69 = scmp.eq.s32.totalorder %s14, 1
    %p70 = por %p68, %p69
    %p71 = scmp.ne.s32.totalorder %s60, %s61
    %p72 = scmp.eq.s32.totalorder %s14, 0
    %p73 = por %p71, %p72
    %p74 = scmp.ne.s32.totalorder %s60, %s61
    %p75 = scmp.eq.s32.totalorder %s15, 1
    %p76 = por %p74, %p75
    %p78 = scmp.ne.s32.totalorder %s61, %s77
    %p79 = scmp.eq.s32.totalorder %s15, 0
    %p80 = por %p78, %p79
    %s81 = ssub.s32 %s17, %s24
    %p82 = scmp.eq.s32.totalorder %s81, 0
    %s84 = sadd.s32 %s83, 1
    %s85 = scalar_select %p82, %s83, %s84
    %p88 = pneg %p82
    %p89 = scmp.eq.s32.totalorder %s9, 1
    %p90 = por %p88, %p89
    %p91 = scmp.ne.s32.totalorder %s83, %s86
    %p92 = scmp.eq.s32.totalorder %s9, 0
    %p93 = por %p91, %p92
    %p94 = scmp.ne.s32.totalorder %s83, %s86
    %p95 = scmp.eq.s32.totalorder %s14, 1
    %p96 = por %p94, %p95
    %p97 = scmp.ne.s32.totalorder %s86, %s87
    %p98 = scmp.eq.s32.totalorder %s14, 0
    %p99 = por %p97, %p98
    %p100 = scmp.ne.s32.totalorder %s86, %s87
    %p101 = scmp.eq.s32.totalorder %s15, 1
    %p102 = por %p100, %p101
    %p104 = scmp.ne.s32.totalorder %s87, %s103
    %p105 = scmp.eq.s32.totalorder %s15, 0
    %p106 = por %p104, %p105
    %s107 = ssub.s32 %s16, %s28
    %s108 = ssub.s32 %s17, %s24
    %s109 = sor.u32 %s107, %s108
    %p110 = scmp.eq.s32.totalorder %s109, 0
    %s112 = sadd.s32 %s111, 1
    %s113 = scalar_select %p110, %s111, %s112
    %p116 = pneg %p110
    %p117 = scmp.eq.s32.totalorder %s9, 1
    %p118 = por %p116, %p117
    %p119 = scmp.ne.s32.totalorder %s111, %s114
    %p120 = scmp.eq.s32.totalorder %s9, 0
    %p121 = por %p119, %p120
    %p122 = scmp.ne.s32.totalorder %s111, %s114
    %p123 = scmp.eq.s32.totalorder %s14, 1
    %p124 = por %p122, %p123
    %p125 = scmp.ne.s32.totalorder %s114, %s115
    %p126 = scmp.eq.s32.totalorder %s14, 0
    %p127 = por %p125, %p126
    %p128 = scmp.ne.s32.totalorder %s114, %s115
    %p129 = scmp.eq.s32.totalorder %s15, 1
    %p130 = por %p128, %p129
    %p132 = scmp.ne.s32.totalorder %s115, %s131
    %p133 = scmp.eq.s32.totalorder %s15, 0
    %p134 = por %p132, %p133
    %p135 = scmp.le.s32.totalorder 1, %s9
    %p136 = scmp.lt.s32.totalorder %s9, 3
    %p137 = pnand %p135, %p136
    %p138 = pneg %p137
    // Predicated region
    $region9: #{_lambda_.17} parent=5 // pred_check
      _
    $region10: #{_lambda_.17} parent=5 // pred_check_branch
      %140 = sbr.rel (%p137) target = $region12
    $region11: #{_lambda_.17} parent=5 // pred_region
      %s141 = ssub.s32 %s9, 1
      // Predicated region
      $region13: #{_lambda_.17} parent=11 // pred_check
        %p142 = pneg %p73
      $region14: #{_lambda_.17} parent=11 // pred_check_branch
        %144 = sbr.rel (%p142) target = $region16
      $region15: #{_lambda_.17} parent=11 // pred_region
        %p145 = scmp.lt.s32.totalorder %s19, 0
        %s146 = scalar_select %p145, %s19, 0
        %s147 = smul.addr %s146, 4
        %s148 = scalar_lea.vmem %s1, %s147
      $region16: #{_lambda_.17} parent=11 // pred_fallthru
        _
      // Predicated region
      $region17: #{_lambda_.17} parent=11 // pred_check
        %p149 = pneg %p99
      $region18: #{_lambda_.17} parent=11 // pred_check_branch
        %151 = sbr.rel (%p149) target = $region20
      $region19: #{_lambda_.17} parent=11 // pred_region
        %p152 = scmp.lt.s32.totalorder %s19, 0
        %s153 = scalar_select %p152, %s19, 0
        %s154 = scalar_lea.vmem %s2, %s153
      $region20: #{_lambda_.17} parent=11 // pred_fallthru
        _
    $region12: #{_lambda_.17} parent=5 // pred_fallthru
      _
    %p155 = scmp.lt.s32.totalorder %s9, 2
    // Predicated region
    $region21: #{_lambda_.17} parent=5 // pred_check
      %p156 = pneg %p155
    $region22: #{_lambda_.17} parent=5 // pred_check_branch
      %158 = sbr.rel (%p156) target = $region24
    $region23: #{_lambda_.17} parent=5 // pred_region
      // Predicated region
      $region25: #{_lambda_.17} parent=23 // pred_check
        %p159 = pneg %p41
      $region26: #{_lambda_.17} parent=23 // pred_check_branch
        %161 = sbr.rel (%p159) target = $region28
      $region27: #{_lambda_.17} parent=23 // pred_region
        %s162 = smul.u32 32, %s16
        %p163 = scmp.lt.s32.totalorder %s162, 63
        %s164 = scalar_select %p163, %s162, 63
        %s165 = smul.addr %s164, 2
        %s166 = smul.addr %s165, 4
        %s167 = scalar_lea.vmem %s0, %s166
        %s168 = smul.u32 32, %s16
      $region28: #{_lambda_.17} parent=23 // pred_fallthru
        _
    $region24: #{_lambda_.17} parent=5 // pred_fallthru
      _
    %p169 = scmp.le.s32.totalorder 1, %s9
    %p170 = scmp.lt.s32.totalorder %s9, 3
    %p171 = pnand %p169, %p170
    %p172 = pneg %p171
    // Predicated region
    $region29: #{_lambda_.17} parent=5 // pred_check
      _
    $region30: #{_lambda_.17} parent=5 // pred_check_branch
      %174 = sbr.rel (%p171) target = $region32
    $region31: #{_lambda_.17} parent=5 // pred_region
      %s175 = ssub.s32 %s9, 1
      %s176 = smul.u32 32, %s18
      %p177 = scmp.lt.s32.totalorder %s176, 63
      %s178 = scalar_select %p177, %s176, 63
      %s179 = smul.addr %s178, 2
      %s180 = smul.addr %s179, 4
      %s181 = scalar_lea.vmem %s0, %s180
      %p182 = pneg %p47
      %p183 = pneg %p44
      %p184 = scmp.lt.s32.totalorder %s19, 0
      %s185 = scalar_select %p184, %s19, 0
      %s186 = smul.addr %s185, 4
      %s187 = scalar_lea.vmem %s1, %s186
      %p188 = pneg %p73
      %p189 = pneg %p70
      %p190 = scmp.lt.s32.totalorder %s19, 0
      %s191 = scalar_select %p190, %s19, 0
      %s192 = scalar_lea.vmem %s2, %s191
      %p193 = pneg %p99
      %p194 = pneg %p96
      %p195 = pneg %p127
      %p196 = pneg %p124
      %s197 = smul.u32 32, %s18
      %p198 = scmp.lt.s32.totalorder %s197, 63
      %s199 = scalar_select %p198, %s197, 63
      %p200 = scmp.lt.s32.totalorder %s19, 0
      %s201 = scalar_select %p200, %s19, 0
      %s202 = sadd.s32 %s201, %s199
      %s203 = smul.addr %s202, 4
      %s204 = scalar_lea.vmem %s3, %s203
      %s205 = smul.u32 32, %s18
      %p206 = scmp.lt.s32.totalorder %s205, 63
      %s207 = scalar_select %p206, %s205, 63
      %s208 = smul.addr %s207, 2
      %s209 = smul.addr %s208, 4
      %s210 = scalar_lea.vmem %s0, %s209
      %s211 = smul.u32 32, %s18
      %p212 = scmp.lt.s32.totalorder %s19, 0
      %s213 = scalar_select %p212, %s19, 0
      %s214 = smul.addr %s213, 4
      %s215 = scalar_lea.vmem %s1, %s214
      %p216 = scmp.lt.s32.totalorder %s19, 0
      %s217 = scalar_select %p216, %s19, 0
      %s218 = scalar_lea.vmem %s2, %s217
      %s219 = smul.u32 32, %s18
      %p220 = scmp.lt.s32.totalorder %s219, 63
      %s221 = scalar_select %p220, %s219, 63
      %p222 = scmp.lt.s32.totalorder %s19, 0
      %s223 = scalar_select %p222, %s19, 0
      %s224 = sadd.s32 %s223, %s221
      %s225 = smul.addr %s224, 4
      %s226 = scalar_lea.vmem %s3, %s225
      %s227 = smul.u32 32, %s18
      %v228 = vld [vmem:[%s210] sm:$0xff]
      %v229 = vld [vmem:[%s210 + $0x8] sm:$0xff]
      %v230 = vld [vmem:[%s210 + $0x10] sm:$0xff]
      %v231 = vld [vmem:[%s210 + $0x18] sm:$0xff]
      %v232 = vld [vmem:[%s210 + $0x20] sm:$0xff]
      %v233 = vld [vmem:[%s210 + $0x28] sm:$0xff]
      %v234 = vld [vmem:[%s210 + $0x30] sm:$0xff]
      %v235 = vld [vmem:[%s210 + $0x38] sm:$0xff]
      %v236 = vld [vmem:[%s210 + $0x40] sm:$0xff]
      %v237 = vld [vmem:[%s210 + $0x48] sm:$0xff]
      %v238 = vld [vmem:[%s210 + $0x50] sm:$0xff]
      %v239 = vld [vmem:[%s210 + $0x58] sm:$0xff]
      %v240 = vld [vmem:[%s210 + $0x60] sm:$0xff]
      %v241 = vld [vmem:[%s210 + $0x68] sm:$0xff]
      %v242 = vld [vmem:[%s210 + $0x70] sm:$0xff]
      %v243 = vld [vmem:[%s210 + $0x78] sm:$0xff]
      %v244 = vld [vmem:[%s210 + $0x80] sm:$0xff]
      %v245 = vld [vmem:[%s210 + $0x88] sm:$0xff]
      %v246 = vld [vmem:[%s210 + $0x90] sm:$0xff]
      %v247 = vld [vmem:[%s210 + $0x98] sm:$0xff]
      %v248 = vld [vmem:[%s210 + $0xa0] sm:$0xff]
      %v249 = vld [vmem:[%s210 + $0xa8] sm:$0xff]
      %v250 = vld [vmem:[%s210 + $0xb0] sm:$0xff]
      %v251 = vld [vmem:[%s210 + $0xb8] sm:$0xff]
      %v252 = vld [vmem:[%s210 + $0xc0] sm:$0xff]
      %v253 = vld [vmem:[%s210 + $0xc8] sm:$0xff]
      %v254 = vld [vmem:[%s210 + $0xd0] sm:$0xff]
      %v255 = vld [vmem:[%s210 + $0xd8] sm:$0xff]
      %v256 = vld [vmem:[%s210 + $0xe0] sm:$0xff]
      %v257 = vld [vmem:[%s210 + $0xe8] sm:$0xff]
      %v258 = vld [vmem:[%s210 + $0xf0] sm:$0xff]
      %v259 = vld [vmem:[%s210 + $0xf8] sm:$0xff]
      %v260 = vld [vmem:[%s215] sm:$0xf]
      %v261 = vld [vmem:[%s215 + $0x4] sm:$0xf]
      %v262 = vld [vmem:[%s215 + $0x8] sm:$0xf]
      %v263 = vld [vmem:[%s215 + $0xc] sm:$0xf]
      %v264 = vld [vmem:[%s215 + $0x10] sm:$0xf]
      %v265 = vld [vmem:[%s215 + $0x14] sm:$0xf]
      %v266 = vld [vmem:[%s215 + $0x18] sm:$0xf]
      %v267 = vld [vmem:[%s215 + $0x1c] sm:$0xf]
      %v268 = vld [vmem:[%s215 + $0x20] sm:$0xf]
      %v269 = vld [vmem:[%s215 + $0x24] sm:$0xf]
      %v270 = vld [vmem:[%s215 + $0x28] sm:$0xf]
      %v271 = vld [vmem:[%s215 + $0x2c] sm:$0xf]
      %v272 = vld [vmem:[%s215 + $0x30] sm:$0xf]
      %v273 = vld [vmem:[%s215 + $0x34] sm:$0xf]
      %v274 = vld [vmem:[%s215 + $0x38] sm:$0xf]
      %v275 = vld [vmem:[%s215 + $0x3c] sm:$0xf]
      %v276 = vld [vmem:[%s215 + $0x40] sm:$0xf]
      %v277 = vld [vmem:[%s215 + $0x44] sm:$0xf]
      %v278 = vld [vmem:[%s215 + $0x48] sm:$0xf]
      %v279 = vld [vmem:[%s215 + $0x4c] sm:$0xf]
      %v280 = vld [vmem:[%s215 + $0x50] sm:$0xf]
      %v281 = vld [vmem:[%s215 + $0x54] sm:$0xf]
      %v282 = vld [vmem:[%s215 + $0x58] sm:$0xf]
      %v283 = vld [vmem:[%s215 + $0x5c] sm:$0xf]
      %v284 = vld [vmem:[%s215 + $0x60] sm:$0xf]
      %v285 = vld [vmem:[%s215 + $0x64] sm:$0xf]
      %v286 = vld [vmem:[%s215 + $0x68] sm:$0xf]
      %v287 = vld [vmem:[%s215 + $0x6c] sm:$0xf]
      %v288 = vld [vmem:[%s215 + $0x70] sm:$0xf]
      %v289 = vld [vmem:[%s215 + $0x74] sm:$0xf]
      %v290 = vld [vmem:[%s215 + $0x78] sm:$0xf]
      %v291 = vld [vmem:[%s215 + $0x7c] sm:$0xf]
      %v292 = vld [vmem:[%s218] sm:$0x1]
      %v294 = vperm.slane %v292, 0
      %v328 = vunpack.c.l.b16 %v228
      %v329 = vunpack.c.h.b16 %v228
      %v330 = vunpack.c.l.b16 %v229
      %v331 = vunpack.c.h.b16 %v229
      %v332 = vunpack.c.l.b16 %v230
      %v333 = vunpack.c.h.b16 %v230
      %v334 = vunpack.c.l.b16 %v231
      %v335 = vunpack.c.h.b16 %v231
      %v336 = vunpack.c.l.b16 %v232
      %v337 = vunpack.c.h.b16 %v232
      %v338 = vunpack.c.l.b16 %v233
      %v339 = vunpack.c.h.b16 %v233
      %v340 = vunpack.c.l.b16 %v234
      %v341 = vunpack.c.h.b16 %v234
      %v342 = vunpack.c.l.b16 %v235
      %v343 = vunpack.c.h.b16 %v235
      %v344 = vunpack.c.l.b16 %v236
      %v345 = vunpack.c.h.b16 %v236
      %v346 = vunpack.c.l.b16 %v237
      %v347 = vunpack.c.h.b16 %v237
      %v348 = vunpack.c.l.b16 %v238
      %v349 = vunpack.c.h.b16 %v238
      %v350 = vunpack.c.l.b16 %v239
      %v351 = vunpack.c.h.b16 %v239
      %v352 = vunpack.c.l.b16 %v240
      %v353 = vunpack.c.h.b16 %v240
      %v354 = vunpack.c.l.b16 %v241
      %v355 = vunpack.c.h.b16 %v241
      %v356 = vunpack.c.l.b16 %v242
      %v357 = vunpack.c.h.b16 %v242
      %v358 = vunpack.c.l.b16 %v243
      %v359 = vunpack.c.h.b16 %v243
      %v360 = vunpack.c.l.b16 %v244
      %v361 = vunpack.c.h.b16 %v244
      %v362 = vunpack.c.l.b16 %v245
      %v363 = vunpack.c.h.b16 %v245
      %v364 = vunpack.c.l.b16 %v246
      %v365 = vunpack.c.h.b16 %v246
      %v366 = vunpack.c.l.b16 %v247
      %v367 = vunpack.c.h.b16 %v247
      %v368 = vunpack.c.l.b16 %v248
      %v369 = vunpack.c.h.b16 %v248
      %v370 = vunpack.c.l.b16 %v249
      %v371 = vunpack.c.h.b16 %v249
      %v372 = vunpack.c.l.b16 %v250
      %v373 = vunpack.c.h.b16 %v250
      %v374 = vunpack.c.l.b16 %v251
      %v375 = vunpack.c.h.b16 %v251
      %v376 = vunpack.c.l.b16 %v252
      %v377 = vunpack.c.h.b16 %v252
      %v378 = vunpack.c.l.b16 %v253
      %v379 = vunpack.c.h.b16 %v253
      %v380 = vunpack.c.l.b16 %v254
      %v381 = vunpack.c.h.b16 %v254
      %v382 = vunpack.c.l.b16 %v255
      %v383 = vunpack.c.h.b16 %v255
      %v384 = vunpack.c.l.b16 %v256
      %v385 = vunpack.c.h.b16 %v256
      %v386 = vunpack.c.l.b16 %v257
      %v387 = vunpack.c.h.b16 %v257
      %v388 = vunpack.c.l.b16 %v258
      %v389 = vunpack.c.h.b16 %v258
      %v390 = vunpack.c.l.b16 %v259
      %v391 = vunpack.c.h.b16 %v259
      %v392 = vpack.c.b16 %v330, %v328
      %v393 = vpack.c.b16 %v331, %v329
      %v394 = vpack.c.b16 %v334, %v332
      %v395 = vpack.c.b16 %v335, %v333
      %v396 = vpack.c.b16 %v338, %v336
      %v397 = vpack.c.b16 %v339, %v337
      %v398 = vpack.c.b16 %v342, %v340
      %v399 = vpack.c.b16 %v343, %v341
      %v400 = vpack.c.b16 %v346, %v344
      %v401 = vpack.c.b16 %v347, %v345
      %v402 = vpack.c.b16 %v350, %v348
      %v403 = vpack.c.b16 %v351, %v349
      %v404 = vpack.c.b16 %v354, %v352
      %v405 = vpack.c.b16 %v355, %v353
      %v406 = vpack.c.b16 %v358, %v356
      %v407 = vpack.c.b16 %v359, %v357
      %v408 = vpack.c.b16 %v362, %v360
      %v409 = vpack.c.b16 %v363, %v361
      %v410 = vpack.c.b16 %v366, %v364
      %v411 = vpack.c.b16 %v367, %v365
      %v412 = vpack.c.b16 %v370, %v368
      %v413 = vpack.c.b16 %v371, %v369
      %v414 = vpack.c.b16 %v374, %v372
      %v415 = vpack.c.b16 %v375, %v373
      %v416 = vpack.c.b16 %v378, %v376
      %v417 = vpack.c.b16 %v379, %v377
      %v418 = vpack.c.b16 %v382, %v380
      %v419 = vpack.c.b16 %v383, %v381
      %v420 = vpack.c.b16 %v386, %v384
      %v421 = vpack.c.b16 %v387, %v385
      %v422 = vpack.c.b16 %v390, %v388
      %v423 = vpack.c.b16 %v391, %v389
      %v488 = vunpack.c.l.b16 %v260
      %v489 = vunpack.c.l.b16 %v261
      %v490 = vunpack.c.l.b16 %v262
      %v491 = vunpack.c.l.b16 %v263
      %v492 = vunpack.c.l.b16 %v264
      %v493 = vunpack.c.l.b16 %v265
      %v494 = vunpack.c.l.b16 %v266
      %v495 = vunpack.c.l.b16 %v267
      %v496 = vunpack.c.l.b16 %v268
      %v497 = vunpack.c.l.b16 %v269
      %v498 = vunpack.c.l.b16 %v270
      %v499 = vunpack.c.l.b16 %v271
      %v500 = vunpack.c.l.b16 %v272
      %v501 = vunpack.c.l.b16 %v273
      %v502 = vunpack.c.l.b16 %v274
      %v503 = vunpack.c.l.b16 %v275
      %v504 = vunpack.c.l.b16 %v276
      %v505 = vunpack.c.l.b16 %v277
      %v506 = vunpack.c.l.b16 %v278
      %v507 = vunpack.c.l.b16 %v279
      %v508 = vunpack.c.l.b16 %v280
      %v509 = vunpack.c.l.b16 %v281
      %v510 = vunpack.c.l.b16 %v282
      %v511 = vunpack.c.l.b16 %v283
      %v512 = vunpack.c.l.b16 %v284
      %v513 = vunpack.c.l.b16 %v285
      %v514 = vunpack.c.l.b16 %v286
      %v515 = vunpack.c.l.b16 %v287
      %v516 = vunpack.c.l.b16 %v288
      %v517 = vunpack.c.l.b16 %v289
      %v518 = vunpack.c.l.b16 %v290
      %v519 = vunpack.c.l.b16 %v291
      %v520 = vpack.c.b16 %v489, %v488
      %v521 = vpack.c.b16 %v491, %v490
      %v522 = vpack.c.b16 %v493, %v492
      %v523 = vpack.c.b16 %v495, %v494
      %v524 = vpack.c.b16 %v497, %v496
      %v525 = vpack.c.b16 %v499, %v498
      %v526 = vpack.c.b16 %v501, %v500
      %v527 = vpack.c.b16 %v503, %v502
      %v528 = vpack.c.b16 %v505, %v504
      %v529 = vpack.c.b16 %v507, %v506
      %v530 = vpack.c.b16 %v509, %v508
      %v531 = vpack.c.b16 %v511, %v510
      %v532 = vpack.c.b16 %v513, %v512
      %v533 = vpack.c.b16 %v515, %v514
      %v534 = vpack.c.b16 %v517, %v516
      %v535 = vpack.c.b16 %v519, %v518
      %552 = vmatpush.bf16.msra.mxu0 %v527
      %553 = vmatpush.bf16.msra.mxu0 %v526
      %554 = vmatpush.bf16.msra.mxu0 %v525
      %555 = vmatpush.bf16.msra.mxu0 %v524
      %556 = vmatpush.bf16.msra.mxu0 %v523
      %557 = vmatpush.bf16.msra.mxu0 %v522
      %558 = vmatpush.bf16.msra.mxu0 %v521
      %559 = vmatpush.bf16.msra.mxu0 %v520
      %560 = vmatmul.bf16.gmra.mxu0 %v392
      %v561 = vpop.f32.mrf.mxu0
      %v562 = vadd.f32 %v294, %v561
      %v563 = vpop.f32.mrf.mxu0
      %v564 = vadd.f32 %v294, %v563
      %565 = vmatmul.bf16.gmra.mxu0 %v394
      %v566 = vpop.f32.mrf.mxu0
      %v567 = vadd.f32 %v294, %v566
      %v568 = vpop.f32.mrf.mxu0
      %v569 = vadd.f32 %v294, %v568
      %570 = vmatmul.bf16.gmra.mxu0 %v396
      %v571 = vpop.f32.mrf.mxu0
      %v572 = vadd.f32 %v294, %v571
      %v573 = vpop.f32.mrf.mxu0
      %v574 = vadd.f32 %v294, %v573
      %575 = vmatmul.bf16.gmra.mxu0 %v398
      %v576 = vpop.f32.mrf.mxu0
      %v577 = vadd.f32 %v294, %v576
      %v578 = vpop.f32.mrf.mxu0
      %v579 = vadd.f32 %v294, %v578
      %580 = vmatmul.bf16.gmra.mxu0 %v400
      %v581 = vpop.f32.mrf.mxu0
      %v582 = vadd.f32 %v294, %v581
      %v583 = vpop.f32.mrf.mxu0
      %v584 = vadd.f32 %v294, %v583
      %585 = vmatmul.bf16.gmra.mxu0 %v402
      %v586 = vpop.f32.mrf.mxu0
      %v587 = vadd.f32 %v294, %v586
      %v588 = vpop.f32.mrf.mxu0
      %v589 = vadd.f32 %v294, %v588
      %590 = vmatmul.bf16.gmra.mxu0 %v404
      %v591 = vpop.f32.mrf.mxu0
      %v592 = vadd.f32 %v294, %v591
      %v593 = vpop.f32.mrf.mxu0
      %v594 = vadd.f32 %v294, %v593
      %595 = vmatmul.bf16.gmra.mxu0 %v406
      %v596 = vpop.f32.mrf.mxu0
      %v597 = vadd.f32 %v294, %v596
      %v598 = vpop.f32.mrf.mxu0
      %v599 = vadd.f32 %v294, %v598
      %600 = vmatmul.bf16.gmra.mxu0 %v408
      %v601 = vpop.f32.mrf.mxu0
      %v602 = vadd.f32 %v294, %v601
      %v603 = vpop.f32.mrf.mxu0
      %v604 = vadd.f32 %v294, %v603
      %605 = vmatmul.bf16.gmra.mxu0 %v410
      %v606 = vpop.f32.mrf.mxu0
      %v607 = vadd.f32 %v294, %v606
      %v608 = vpop.f32.mrf.mxu0
      %v609 = vadd.f32 %v294, %v608
      %610 = vmatmul.bf16.gmra.mxu0 %v412
      %v611 = vpop.f32.mrf.mxu0
      %v612 = vadd.f32 %v294, %v611
      %v613 = vpop.f32.mrf.mxu0
      %v614 = vadd.f32 %v294, %v613
      %615 = vmatmul.bf16.gmra.mxu0 %v414
      %v616 = vpop.f32.mrf.mxu0
      %v617 = vadd.f32 %v294, %v616
      %v618 = vpop.f32.mrf.mxu0
      %v619 = vadd.f32 %v294, %v618
      %620 = vmatmul.bf16.gmra.mxu0 %v416
      %v621 = vpop.f32.mrf.mxu0
      %v622 = vadd.f32 %v294, %v621
      %v623 = vpop.f32.mrf.mxu0
      %v624 = vadd.f32 %v294, %v623
      %625 = vmatmul.bf16.gmra.mxu0 %v418
      %v626 = vpop.f32.mrf.mxu0
      %v627 = vadd.f32 %v294, %v626
      %v628 = vpop.f32.mrf.mxu0
      %v629 = vadd.f32 %v294, %v628
      %630 = vmatmul.bf16.gmra.mxu0 %v420
      %v631 = vpop.f32.mrf.mxu0
      %v632 = vadd.f32 %v294, %v631
      %v633 = vpop.f32.mrf.mxu0
      %v634 = vadd.f32 %v294, %v633
      %635 = vmatmul.bf16.gmra.mxu0 %v422
      %v636 = vpop.f32.mrf.mxu0
      %v637 = vadd.f32 %v294, %v636
      %v638 = vpop.f32.mrf.mxu0
      %v639 = vadd.f32 %v294, %v638
      %640 = vdwg.mxu0
      %641 = vmatpush.bf16.msra.mxu0 %v535
      %642 = vmatpush.bf16.msra.mxu0 %v534
      %643 = vmatpush.bf16.msra.mxu0 %v533
      %644 = vmatpush.bf16.msra.mxu0 %v532
      %645 = vmatpush.bf16.msra.mxu0 %v531
      %646 = vmatpush.bf16.msra.mxu0 %v530
      %647 = vmatpush.bf16.msra.mxu0 %v529
      %648 = vmatpush.bf16.msra.mxu0 %v528
      %649 = vmatmul.bf16.gmra.mxu0 %v393
      %v650 = vpop.f32.mrf.mxu0
      %v651 = vadd.f32 %v562, %v650
      %v652 = vpop.f32.mrf.mxu0
      %v653 = vadd.f32 %v564, %v652
      %654 = vmatmul.bf16.gmra.mxu0 %v395
      %v655 = vpop.f32.mrf.mxu0
      %v656 = vadd.f32 %v567, %v655
      %v657 = vpop.f32.mrf.mxu0
      %v658 = vadd.f32 %v569, %v657
      %659 = vmatmul.bf16.gmra.mxu0 %v397
      %v660 = vpop.f32.mrf.mxu0
      %v661 = vadd.f32 %v572, %v660
      %v662 = vpop.f32.mrf.mxu0
      %v663 = vadd.f32 %v574, %v662
      %664 = vmatmul.bf16.gmra.mxu0 %v399
      %v665 = vpop.f32.mrf.mxu0
      %v666 = vadd.f32 %v577, %v665
      %v667 = vpop.f32.mrf.mxu0
      %v668 = vadd.f32 %v579, %v667
      %669 = vmatmul.bf16.gmra.mxu0 %v401
      %v670 = vpop.f32.mrf.mxu0
      %v671 = vadd.f32 %v582, %v670
      %v672 = vpop.f32.mrf.mxu0
      %v673 = vadd.f32 %v584, %v672
      %674 = vmatmul.bf16.gmra.mxu0 %v403
      %v675 = vpop.f32.mrf.mxu0
      %v676 = vadd.f32 %v587, %v675
      %v677 = vpop.f32.mrf.mxu0
      %v678 = vadd.f32 %v589, %v677
      %679 = vmatmul.bf16.gmra.mxu0 %v405
      %v680 = vpop.f32.mrf.mxu0
      %v681 = vadd.f32 %v592, %v680
      %v682 = vpop.f32.mrf.mxu0
      %v683 = vadd.f32 %v594, %v682
      %684 = vmatmul.bf16.gmra.mxu0 %v407
      %v685 = vpop.f32.mrf.mxu0
      %v686 = vadd.f32 %v597, %v685
      %v687 = vpop.f32.mrf.mxu0
      %v688 = vadd.f32 %v599, %v687
      %689 = vmatmul.bf16.gmra.mxu0 %v409
      %v690 = vpop.f32.mrf.mxu0
      %v691 = vadd.f32 %v602, %v690
      %v692 = vpop.f32.mrf.mxu0
      %v693 = vadd.f32 %v604, %v692
      %694 = vmatmul.bf16.gmra.mxu0 %v411
      %v695 = vpop.f32.mrf.mxu0
      %v696 = vadd.f32 %v607, %v695
      %v697 = vpop.f32.mrf.mxu0
      %v698 = vadd.f32 %v609, %v697
      %699 = vmatmul.bf16.gmra.mxu0 %v413
      %v700 = vpop.f32.mrf.mxu0
      %v701 = vadd.f32 %v612, %v700
      %v702 = vpop.f32.mrf.mxu0
      %v703 = vadd.f32 %v614, %v702
      %704 = vmatmul.bf16.gmra.mxu0 %v415
      %v705 = vpop.f32.mrf.mxu0
      %v706 = vadd.f32 %v617, %v705
      %v707 = vpop.f32.mrf.mxu0
      %v708 = vadd.f32 %v619, %v707
      %709 = vmatmul.bf16.gmra.mxu0 %v417
      %v710 = vpop.f32.mrf.mxu0
      %v711 = vadd.f32 %v622, %v710
      %v712 = vpop.f32.mrf.mxu0
      %v713 = vadd.f32 %v624, %v712
      %714 = vmatmul.bf16.gmra.mxu0 %v419
      %v715 = vpop.f32.mrf.mxu0
      %v716 = vadd.f32 %v627, %v715
      %v717 = vpop.f32.mrf.mxu0
      %v718 = vadd.f32 %v629, %v717
      %719 = vmatmul.bf16.gmra.mxu0 %v421
      %v720 = vpop.f32.mrf.mxu0
      %v721 = vadd.f32 %v632, %v720
      %v722 = vpop.f32.mrf.mxu0
      %v723 = vadd.f32 %v634, %v722
      %724 = vmatmul.bf16.gmra.mxu0 %v423
      %v725 = vpop.f32.mrf.mxu0
      %v726 = vadd.f32 %v637, %v725
      %v727 = vpop.f32.mrf.mxu0
      %v728 = vadd.f32 %v639, %v727
      %729 = vdwg.mxu0
      %v730 = vmax.f32 %v651, 0.0
      %v731 = vmax.f32 %v653, 0.0
      %v732 = vmax.f32 %v656, 0.0
      %v733 = vmax.f32 %v658, 0.0
      %v734 = vmax.f32 %v661, 0.0
      %v735 = vmax.f32 %v663, 0.0
      %v736 = vmax.f32 %v666, 0.0
      %v737 = vmax.f32 %v668, 0.0
      %v738 = vmax.f32 %v671, 0.0
      %v739 = vmax.f32 %v673, 0.0
      %v740 = vmax.f32 %v676, 0.0
      %v741 = vmax.f32 %v678, 0.0
      %v742 = vmax.f32 %v681, 0.0
      %v743 = vmax.f32 %v683, 0.0
      %v744 = vmax.f32 %v686, 0.0
      %v745 = vmax.f32 %v688, 0.0
      %v746 = vmax.f32 %v691, 0.0
      %v747 = vmax.f32 %v693, 0.0
      %v748 = vmax.f32 %v696, 0.0
      %v749 = vmax.f32 %v698, 0.0
      %v750 = vmax.f32 %v701, 0.0
      %v751 = vmax.f32 %v703, 0.0
      %v752 = vmax.f32 %v706, 0.0
      %v753 = vmax.f32 %v708, 0.0
      %v754 = vmax.f32 %v711, 0.0
      %v755 = vmax.f32 %v713, 0.0
      %v756 = vmax.f32 %v716, 0.0
      %v757 = vmax.f32 %v718, 0.0
      %v758 = vmax.f32 %v721, 0.0
      %v759 = vmax.f32 %v723, 0.0
      %v760 = vmax.f32 %v726, 0.0
      %v761 = vmax.f32 %v728, 0.0
      %v762 = vpack.c.bf16 %v730, %v730
      %v763 = vpack.c.bf16 %v731, %v731
      %v764 = vpack.c.bf16 %v732, %v732
      %v765 = vpack.c.bf16 %v733, %v733
      %v766 = vpack.c.bf16 %v734, %v734
      %v767 = vpack.c.bf16 %v735, %v735
      %v768 = vpack.c.bf16 %v736, %v736
      %v769 = vpack.c.bf16 %v737, %v737
      %v770 = vpack.c.bf16 %v738, %v738
      %v771 = vpack.c.bf16 %v739, %v739
      %v772 = vpack.c.bf16 %v740, %v740
      %v773 = vpack.c.bf16 %v741, %v741
      %v774 = vpack.c.bf16 %v742, %v742
      %v775 = vpack.c.bf16 %v743, %v743
      %v776 = vpack.c.bf16 %v744, %v744
      %v777 = vpack.c.bf16 %v745, %v745
      %v778 = vpack.c.bf16 %v746, %v746
      %v779 = vpack.c.bf16 %v747, %v747
      %v780 = vpack.c.bf16 %v748, %v748
      %v781 = vpack.c.bf16 %v749, %v749
      %v782 = vpack.c.bf16 %v750, %v750
      %v783 = vpack.c.bf16 %v751, %v751
      %v784 = vpack.c.bf16 %v752, %v752
      %v785 = vpack.c.bf16 %v753, %v753
      %v786 = vpack.c.bf16 %v754, %v754
      %v787 = vpack.c.bf16 %v755, %v755
      %v788 = vpack.c.bf16 %v756, %v756
      %v789 = vpack.c.bf16 %v757, %v757
      %v790 = vpack.c.bf16 %v758, %v758
      %v791 = vpack.c.bf16 %v759, %v759
      %v792 = vpack.c.bf16 %v760, %v760
      %v793 = vpack.c.bf16 %v761, %v761
      %794 = vst [vmem:[%s226] sm:$0xf] %v762
      %795 = vst [vmem:[%s226 + $0x4] sm:$0xf] %v763
      %796 = vst [vmem:[%s226 + $0x8] sm:$0xf] %v764
      %797 = vst [vmem:[%s226 + $0xc] sm:$0xf] %v765
      %798 = vst [vmem:[%s226 + $0x10] sm:$0xf] %v766
      %799 = vst [vmem:[%s226 + $0x14] sm:$0xf] %v767
      %800 = vst [vmem:[%s226 + $0x18] sm:$0xf] %v768
      %801 = vst [vmem:[%s226 + $0x1c] sm:$0xf] %v769
      %802 = vst [vmem:[%s226 + $0x20] sm:$0xf] %v770
      %803 = vst [vmem:[%s226 + $0x24] sm:$0xf] %v771
      %804 = vst [vmem:[%s226 + $0x28] sm:$0xf] %v772
      %805 = vst [vmem:[%s226 + $0x2c] sm:$0xf] %v773
      %806 = vst [vmem:[%s226 + $0x30] sm:$0xf] %v774
      %807 = vst [vmem:[%s226 + $0x34] sm:$0xf] %v775
      %808 = vst [vmem:[%s226 + $0x38] sm:$0xf] %v776
      %809 = vst [vmem:[%s226 + $0x3c] sm:$0xf] %v777
      %810 = vst [vmem:[%s226 + $0x40] sm:$0xf] %v778
      %811 = vst [vmem:[%s226 + $0x44] sm:$0xf] %v779
      %812 = vst [vmem:[%s226 + $0x48] sm:$0xf] %v780
      %813 = vst [vmem:[%s226 + $0x4c] sm:$0xf] %v781
      %814 = vst [vmem:[%s226 + $0x50] sm:$0xf] %v782
      %815 = vst [vmem:[%s226 + $0x54] sm:$0xf] %v783
      %816 = vst [vmem:[%s226 + $0x58] sm:$0xf] %v784
      %817 = vst [vmem:[%s226 + $0x5c] sm:$0xf] %v785
      %818 = vst [vmem:[%s226 + $0x60] sm:$0xf] %v786
      %819 = vst [vmem:[%s226 + $0x64] sm:$0xf] %v787
      %820 = vst [vmem:[%s226 + $0x68] sm:$0xf] %v788
      %821 = vst [vmem:[%s226 + $0x6c] sm:$0xf] %v789
      %822 = vst [vmem:[%s226 + $0x70] sm:$0xf] %v790
      %823 = vst [vmem:[%s226 + $0x74] sm:$0xf] %v791
      %824 = vst [vmem:[%s226 + $0x78] sm:$0xf] %v792
      %825 = vst [vmem:[%s226 + $0x7c] sm:$0xf] %v793
      %s826 = smul.u32 32, %s18
      %p827 = scmp.lt.s32.totalorder %s826, 63
      %s828 = scalar_select %p827, %s826, 63
      %p829 = scmp.lt.s32.totalorder %s19, 0
      %s830 = scalar_select %p829, %s19, 0
      %s831 = sadd.s32 %s830, %s828
      %s832 = smul.addr %s831, 4
      %s833 = scalar_lea.vmem %s3, %s832
      // Predicated region
      $region33: #{_lambda_.17} parent=31 // pred_check
        %p834 = pneg %p124
      $region34: #{_lambda_.17} parent=31 // pred_check_branch
        %836 = sbr.rel (%p834) target = $region36
      $region35: #{_lambda_.17} parent=31 // pred_region
        %s837 = smul.u32 32, %s18
      $region36: #{_lambda_.17} parent=31 // pred_fallthru
        _
    $region32: #{_lambda_.17} parent=5 // pred_fallthru
      _
    %p838 = scmp.le.s32.totalorder 2, %s9
    // Predicated region
    $region37: #{_lambda_.17} parent=5 // pred_check
      %p839 = pneg %p838
    $region38: #{_lambda_.17} parent=5 // pred_check_branch
      %841 = sbr.rel (%p839) target = $region40
    $region39: #{_lambda_.17} parent=5 // pred_region
      %s842 = ssub.s32 %s9, 2
      // Predicated region
      $region41: #{_lambda_.17} parent=39 // pred_check
        %p843 = pneg %p130
      $region42: #{_lambda_.17} parent=39 // pred_check_branch
        %845 = sbr.rel (%p843) target = $region44
      $region43: #{_lambda_.17} parent=39 // pred_region
        %s846 = smul.u32 32, %s20
        %p847 = scmp.lt.s32.totalorder %s846, 63
        %s848 = scalar_select %p847, %s846, 63
        %p849 = scmp.lt.s32.totalorder %s21, 0
        %s850 = scalar_select %p849, %s21, 0
        %s851 = sadd.s32 %s850, %s848
        %s852 = smul.addr %s851, 4
        %s853 = scalar_lea.vmem %s3, %s852
      $region44: #{_lambda_.17} parent=39 // pred_fallthru
        _
    $region40: #{_lambda_.17} parent=5 // pred_fallthru
      _
  $region6: #{_lambda_.17} parent=0 // loop_footer
    %s13 = sadd.s32 1, %s9
  $region7: #{_lambda_.17} parent=0 // loop_footer_branch
    %8 = sbr.rel target = $region3
  $region8: #{_lambda_.17} parent=0 // loop_exit
    _

// kernel: _lambda_.19
$region0: #{_lambda_.19}
  #allocation0 [shape = 'u32[]', space=smem, size = 0x4, offset = 0x4, fixed_abs, tag = 'smem constant byte address 0x4 - core index']
  #allocation1 [shape = 'u32[72,128]{1,0:T(1,128)}', space=vmem, size = 0x9000, scoped, tag = 'internal scratch']
  %s0 = inlined_call_operand.vmem [shape: bf16[512,1152], index: 0, kind: input, shape index: {}]
  %s1 = inlined_call_operand.vmem [shape: bf16[1152,128], index: 1, kind: input, shape index: {}]
  %s2 = inlined_call_operand.vmem [shape: f32[1,128], index: 2, kind: input, shape index: {}]
  %s3 = inlined_call_operand.vmem [shape: bf16[512,128], index: 3, kind: output, shape index: {}]
  %s4 = sld [smem:[#allocation0]]
  $region45: #{_lambda_.19} parent=0
    _
  %s6 = ssub.s32 1, %s4
  %s7 = scalar_select 0, %s6, %s4
  loop: start=0, step=1, limit=4
  $region2: #{_lambda_.19} parent=0 // loop_pre_header
    _
  $region3: #{_lambda_.19} parent=0 // loop_header
    %s9 = sphi 0, %s13
    %p10 = scmp.ge.s32.totalorder %s9, 4
    %s16 = sphi 0, %s28
    %s17 = sphi 0, %s24
    %s18 = sphi 0, %s16
    %s19 = sphi 0, %s17
    %s20 = sphi 0, %s18
    %s21 = sphi 0, %s19
    %s31 = sphi 0, %s33
    %s34 = sphi 0, %s31
    %s35 = sphi 0, %s34
    %s51 = sphi 0, %s35
    %s57 = sphi 0, %s59
    %s60 = sphi 0, %s57
    %s61 = sphi 0, %s60
    %s77 = sphi 0, %s61
    %s83 = sphi 0, %s85
    %s86 = sphi 0, %s83
    %s87 = sphi 0, %s86
    %s103 = sphi 0, %s87
    %s111 = sphi 0, %s113
    %s114 = sphi 0, %s111
    %s115 = sphi 0, %s114
    %s131 = sphi 0, %s115
  $region4: #{_lambda_.19} parent=0 // loop_header_branch
    %12 = sbr.rel (%p10) target = $region8
  $region5: #{_lambda_.19} parent=0 // loop_body
    %s14 = ssub.s32 %s9, 1
    %s15 = ssub.s32 %s9, 2
    %s22 = sadd.s32 1, %s17
    %p23 = scmp.ge.s32.totalorder %s22, 1
    %s24 = scalar_select %p23, 0, %s22
    %s25 = sadd.s32 1, %s16
    %s26 = scalar_select %p23, %s25, %s16
    %p27 = scmp.ge.s32.totalorder %s26, 2
    %s28 = scalar_select %p27, 0, %s26
    %s29 = ssub.s32 %s16, %s28
    %p30 = scmp.eq.s32.totalorder %s29, 0
    %s32 = sadd.s32 %s31, 1
    %s33 = scalar_select %p30, %s31, %s32
    %p36 = pneg %p30
    %p37 = scmp.eq.s32.totalorder %s9, 1
    %p38 = por %p36, %p37
    %p39 = scmp.ne.s32.totalorder %s31, %s34
    %p40 = scmp.eq.s32.totalorder %s9, 0
    %p41 = por %p39, %p40
    %p42 = scmp.ne.s32.totalorder %s31, %s34
    %p43 = scmp.eq.s32.totalorder %s14, 1
    %p44 = por %p42, %p43
    %p45 = scmp.ne.s32.totalorder %s34, %s35
    %p46 = scmp.eq.s32.totalorder %s14, 0
    %p47 = por %p45, %p46
    %p48 = scmp.ne.s32.totalorder %s34, %s35
    %p49 = scmp.eq.s32.totalorder %s15, 1
    %p50 = por %p48, %p49
    %p52 = scmp.ne.s32.totalorder %s35, %s51
    %p53 = scmp.eq.s32.totalorder %s15, 0
    %p54 = por %p52, %p53
    %s55 = ssub.s32 %s17, %s24
    %p56 = scmp.eq.s32.totalorder %s55, 0
    %s58 = sadd.s32 %s57, 1
    %s59 = scalar_select %p56, %s57, %s58
    %p62 = pneg %p56
    %p63 = scmp.eq.s32.totalorder %s9, 1
    %p64 = por %p62, %p63
    %p65 = scmp.ne.s32.totalorder %s57, %s60
    %p66 = scmp.eq.s32.totalorder %s9, 0
    %p67 = por %p65, %p66
    %p68 = scmp.ne.s32.totalorder %s57, %s60
    %p69 = scmp.eq.s32.totalorder %s14, 1
    %p70 = por %p68, %p69
    %p71 = scmp.ne.s32.totalorder %s60, %s61
    %p72 = scmp.eq.s32.totalorder %s14, 0
    %p73 = por %p71, %p72
    %p74 = scmp.ne.s32.totalorder %s60, %s61
    %p75 = scmp.eq.s32.totalorder %s15, 1
    %p76 = por %p74, %p75
    %p78 = scmp.ne.s32.totalorder %s61, %s77
    %p79 = scmp.eq.s32.totalorder %s15, 0
    %p80 = por %p78, %p79
    %s81 = ssub.s32 %s17, %s24
    %p82 = scmp.eq.s32.totalorder %s81, 0
    %s84 = sadd.s32 %s83, 1
    %s85 = scalar_select %p82, %s83, %s84
    %p88 = pneg %p82
    %p89 = scmp.eq.s32.totalorder %s9, 1
    %p90 = por %p88, %p89
    %p91 = scmp.ne.s32.totalorder %s83, %s86
    %p92 = scmp.eq.s32.totalorder %s9, 0
    %p93 = por %p91, %p92
    %p94 = scmp.ne.s32.totalorder %s83, %s86
    %p95 = scmp.eq.s32.totalorder %s14, 1
    %p96 = por %p94, %p95
    %p97 = scmp.ne.s32.totalorder %s86, %s87
    %p98 = scmp.eq.s32.totalorder %s14, 0
    %p99 = por %p97, %p98
    %p100 = scmp.ne.s32.totalorder %s86, %s87
    %p101 = scmp.eq.s32.totalorder %s15, 1
    %p102 = por %p100, %p101
    %p104 = scmp.ne.s32.totalorder %s87, %s103
    %p105 = scmp.eq.s32.totalorder %s15, 0
    %p106 = por %p104, %p105
    %s107 = ssub.s32 %s16, %s28
    %s108 = ssub.s32 %s17, %s24
    %s109 = sor.u32 %s107, %s108
    %p110 = scmp.eq.s32.totalorder %s109, 0
    %s112 = sadd.s32 %s111, 1
    %s113 = scalar_select %p110, %s111, %s112
    %p116 = pneg %p110
    %p117 = scmp.eq.s32.totalorder %s9, 1
    %p118 = por %p116, %p117
    %p119 = scmp.ne.s32.totalorder %s111, %s114
    %p120 = scmp.eq.s32.totalorder %s9, 0
    %p121 = por %p119, %p120
    %p122 = scmp.ne.s32.totalorder %s111, %s114
    %p123 = scmp.eq.s32.totalorder %s14, 1
    %p124 = por %p122, %p123
    %p125 = scmp.ne.s32.totalorder %s114, %s115
    %p126 = scmp.eq.s32.totalorder %s14, 0
    %p127 = por %p125, %p126
    %p128 = scmp.ne.s32.totalorder %s114, %s115
    %p129 = scmp.eq.s32.totalorder %s15, 1
    %p130 = por %p128, %p129
    %p132 = scmp.ne.s32.totalorder %s115, %s131
    %p133 = scmp.eq.s32.totalorder %s15, 0
    %p134 = por %p132, %p133
    %p135 = scmp.le.s32.totalorder 1, %s9
    %p136 = scmp.lt.s32.totalorder %s9, 3
    %p137 = pnand %p135, %p136
    %p138 = pneg %p137
    // Predicated region
    $region9: #{_lambda_.19} parent=5 // pred_check
      _
    $region10: #{_lambda_.19} parent=5 // pred_check_branch
      %140 = sbr.rel (%p137) target = $region12
    $region11: #{_lambda_.19} parent=5 // pred_region
      %s141 = ssub.s32 %s9, 1
      // Predicated region
      $region13: #{_lambda_.19} parent=11 // pred_check
        %p142 = pneg %p73
      $region14: #{_lambda_.19} parent=11 // pred_check_branch
        %144 = sbr.rel (%p142) target = $region16
      $region15: #{_lambda_.19} parent=11 // pred_region
        %p145 = scmp.lt.s32.totalorder %s19, 0
        %s146 = scalar_select %p145, %s19, 0
        %s147 = smul.addr %s146, 4
        %s148 = scalar_lea.vmem %s1, %s147
      $region16: #{_lambda_.19} parent=11 // pred_fallthru
        _
      // Predicated region
      $region17: #{_lambda_.19} parent=11 // pred_check
        %p149 = pneg %p99
      $region18: #{_lambda_.19} parent=11 // pred_check_branch
        %151 = sbr.rel (%p149) target = $region20
      $region19: #{_lambda_.19} parent=11 // pred_region
        %p152 = scmp.lt.s32.totalorder %s19, 0
        %s153 = scalar_select %p152, %s19, 0
        %s154 = scalar_lea.vmem %s2, %s153
      $region20: #{_lambda_.19} parent=11 // pred_fallthru
        _
    $region12: #{_lambda_.19} parent=5 // pred_fallthru
      _
    %p155 = scmp.lt.s32.totalorder %s9, 2
    // Predicated region
    $region21: #{_lambda_.19} parent=5 // pred_check
      %p156 = pneg %p155
    $region22: #{_lambda_.19} parent=5 // pred_check_branch
      %158 = sbr.rel (%p156) target = $region24
    $region23: #{_lambda_.19} parent=5 // pred_region
      // Predicated region
      $region25: #{_lambda_.19} parent=23 // pred_check
        %p159 = pneg %p41
      $region26: #{_lambda_.19} parent=23 // pred_check_branch
        %161 = sbr.rel (%p159) target = $region28
      $region27: #{_lambda_.19} parent=23 // pred_region
        %s162 = smul.u32 32, %s16
        %p163 = scmp.lt.s32.totalorder %s162, 63
        %s164 = scalar_select %p163, %s162, 63
        %s165 = smul.addr %s164, 9
        %s166 = smul.addr %s165, 4
        %s167 = scalar_lea.vmem %s0, %s166
        %s168 = smul.u32 32, %s16
      $region28: #{_lambda_.19} parent=23 // pred_fallthru
        _
    $region24: #{_lambda_.19} parent=5 // pred_fallthru
      _
    %p169 = scmp.le.s32.totalorder 1, %s9
    %p170 = scmp.lt.s32.totalorder %s9, 3
    %p171 = pnand %p169, %p170
    %p172 = pneg %p171
    // Predicated region
    $region29: #{_lambda_.19} parent=5 // pred_check
      _
    $region30: #{_lambda_.19} parent=5 // pred_check_branch
      %174 = sbr.rel (%p171) target = $region32
    $region31: #{_lambda_.19} parent=5 // pred_region
      %s175 = ssub.s32 %s9, 1
      %s176 = smul.u32 32, %s18
      %p177 = scmp.lt.s32.totalorder %s176, 63
      %s178 = scalar_select %p177, %s176, 63
      %s179 = smul.addr %s178, 9
      %s180 = smul.addr %s179, 4
      %s181 = scalar_lea.vmem %s0, %s180
      %p182 = pneg %p47
      %p183 = pneg %p44
      %p184 = scmp.lt.s32.totalorder %s19, 0
      %s185 = scalar_select %p184, %s19, 0
      %s186 = smul.addr %s185, 4
      %s187 = scalar_lea.vmem %s1, %s186
      %p188 = pneg %p73
      %p189 = pneg %p70
      %p190 = scmp.lt.s32.totalorder %s19, 0
      %s191 = scalar_select %p190, %s19, 0
      %s192 = scalar_lea.vmem %s2, %s191
      %p193 = pneg %p99
      %p194 = pneg %p96
      %p195 = pneg %p127
      %p196 = pneg %p124
      %s197 = smul.u32 32, %s18
      %p198 = scmp.lt.s32.totalorder %s197, 63
      %s199 = scalar_select %p198, %s197, 63
      %p200 = scmp.lt.s32.totalorder %s19, 0
      %s201 = scalar_select %p200, %s19, 0
      %s202 = sadd.s32 %s201, %s199
      %s203 = smul.addr %s202, 4
      %s204 = scalar_lea.vmem %s3, %s203
      %s205 = smul.u32 32, %s18
      %p206 = scmp.lt.s32.totalorder %s205, 63
      %s207 = scalar_select %p206, %s205, 63
      %s208 = smul.addr %s207, 9
      %s209 = smul.addr %s208, 4
      %s210 = scalar_lea.vmem %s0, %s209
      %s211 = smul.u32 32, %s18
      %p212 = scmp.lt.s32.totalorder %s19, 0
      %s213 = scalar_select %p212, %s19, 0
      %s214 = smul.addr %s213, 4
      %s215 = scalar_lea.vmem %s1, %s214
      %p216 = scmp.lt.s32.totalorder %s19, 0
      %s217 = scalar_select %p216, %s19, 0
      %s218 = scalar_lea.vmem %s2, %s217
      %s219 = smul.u32 32, %s18
      %p220 = scmp.lt.s32.totalorder %s219, 63
      %s221 = scalar_select %p220, %s219, 63
      %p222 = scmp.lt.s32.totalorder %s19, 0
      %s223 = scalar_select %p222, %s19, 0
      %s224 = sadd.s32 %s223, %s221
      %s225 = smul.addr %s224, 4
      %s226 = scalar_lea.vmem %s3, %s225
      %s227 = smul.u32 32, %s18
      %v228 = vld [vmem:[%s210] sm:$0xff]
      %v229 = vld [vmem:[%s210 + $0x8] sm:$0xff]
      %v230 = vld [vmem:[%s210 + $0x10] sm:$0xff]
      %v231 = vld [vmem:[%s210 + $0x18] sm:$0xff]
      %v232 = vld [vmem:[%s210 + $0x20] sm:$0xf]
      %v233 = vld [vmem:[%s210 + $0x24] sm:$0xff]
      %v234 = vld [vmem:[%s210 + $0x2c] sm:$0xff]
      %v235 = vld [vmem:[%s210 + $0x34] sm:$0xff]
      %v236 = vld [vmem:[%s210 + $0x3c] sm:$0xff]
      %v237 = vld [vmem:[%s210 + $0x44] sm:$0xf]
      %v238 = vld [vmem:[%s210 + $0x48] sm:$0xff]
      %v239 = vld [vmem:[%s210 + $0x50] sm:$0xff]
      %v240 = vld [vmem:[%s210 + $0x58] sm:$0xff]
      %v241 = vld [vmem:[%s210 + $0x60] sm:$0xff]
      %v242 = vld [vmem:[%s210 + $0x68] sm:$0xf]
      %v243 = vld [vmem:[%s210 + $0x6c] sm:$0xff]
      %v244 = vld [vmem:[%s210 + $0x74] sm:$0xff]
      %v245 = vld [vmem:[%s210 + $0x7c] sm:$0xff]
      %v246 = vld [vmem:[%s210 + $0x84] sm:$0xff]
      %v247 = vld [vmem:[%s210 + $0x8c] sm:$0xf]
      %v248 = vld [vmem:[%s210 + $0x90] sm:$0xff]
      %v249 = vld [vmem:[%s210 + $0x98] sm:$0xff]
      %v250 = vld [vmem:[%s210 + $0xa0] sm:$0xff]
      %v251 = vld [vmem:[%s210 + $0xa8] sm:$0xff]
      %v252 = vld [vmem:[%s210 + $0xb0] sm:$0xf]
      %v253 = vld [vmem:[%s210 + $0xb4] sm:$0xff]
      %v254 = vld [vmem:[%s210 + $0xbc] sm:$0xff]
      %v255 = vld [vmem:[%s210 + $0xc4] sm:$0xff]
      %v256 = vld [vmem:[%s210 + $0xcc] sm:$0xff]
      %v257 = vld [vmem:[%s210 + $0xd4] sm:$0xf]
      %v258 = vld [vmem:[%s210 + $0xd8] sm:$0xff]
      %v259 = vld [vmem:[%s210 + $0xe0] sm:$0xff]
      %v260 = vld [vmem:[%s210 + $0xe8] sm:$0xff]
      %v261 = vld [vmem:[%s210 + $0xf0] sm:$0xff]
      %v262 = vld [vmem:[%s210 + $0xf8] sm:$0xf]
      %v263 = vld [vmem:[%s210 + $0xfc] sm:$0xff]
      %v264 = vld [vmem:[%s210 + $0x104] sm:$0xff]
      %v265 = vld [vmem:[%s210 + $0x10c] sm:$0xff]
      %v266 = vld [vmem:[%s210 + $0x114] sm:$0xff]
      %v267 = vld [vmem:[%s210 + $0x11c] sm:$0xf]
      %v268 = vld [vmem:[%s210 + $0x120] sm:$0xff]
      %v269 = vld [vmem:[%s210 + $0x128] sm:$0xff]
      %v270 = vld [vmem:[%s210 + $0x130] sm:$0xff]
      %v271 = vld [vmem:[%s210 + $0x138] sm:$0xff]
      %v272 = vld [vmem:[%s210 + $0x140] sm:$0xf]
      %v273 = vld [vmem:[%s210 + $0x144] sm:$0xff]
      %v274 = vld [vmem:[%s210 + $0x14c] sm:$0xff]
      %v275 = vld [vmem:[%s210 + $0x154] sm:$0xff]
      %v276 = vld [vmem:[%s210 + $0x15c] sm:$0xff]
      %v277 = vld [vmem:[%s210 + $0x164] sm:$0xf]
      %v278 = vld [vmem:[%s210 + $0x168] sm:$0xff]
      %v279 = vld [vmem:[%s210 + $0x170] sm:$0xff]
      %v280 = vld [vmem:[%s210 + $0x178] sm:$0xff]
      %v281 = vld [vmem:[%s210 + $0x180] sm:$0xff]
      %v282 = vld [vmem:[%s210 + $0x188] sm:$0xf]
      %v283 = vld [vmem:[%s210 + $0x18c] sm:$0xff]
      %v284 = vld [vmem:[%s210 + $0x194] sm:$0xff]
      %v285 = vld [vmem:[%s210 + $0x19c] sm:$0xff]
      %v286 = vld [vmem:[%s210 + $0x1a4] sm:$0xff]
      %v287 = vld [vmem:[%s210 + $0x1ac] sm:$0xf]
      %v288 = vld [vmem:[%s210 + $0x1b0] sm:$0xff]
      %v289 = vld [vmem:[%s210 + $0x1b8] sm:$0xff]
      %v290 = vld [vmem:[%s210 + $0x1c0] sm:$0xff]
      %v291 = vld [vmem:[%s210 + $0x1c8] sm:$0xff]
      %v292 = vld [vmem:[%s210 + $0x1d0] sm:$0xf]
      %v293 = vld [vmem:[%s210 + $0x1d4] sm:$0xff]
      %v294 = vld [vmem:[%s210 + $0x1dc] sm:$0xff]
      %v295 = vld [vmem:[%s210 + $0x1e4] sm:$0xff]
      %v296 = vld [vmem:[%s210 + $0x1ec] sm:$0xff]
      %v297 = vld [vmem:[%s210 + $0x1f4] sm:$0xf]
      %v298 = vld [vmem:[%s210 + $0x1f8] sm:$0xff]
      %v299 = vld [vmem:[%s210 + $0x200] sm:$0xff]
      %v300 = vld [vmem:[%s210 + $0x208] sm:$0xff]
      %v301 = vld [vmem:[%s210 + $0x210] sm:$0xff]
      %v302 = vld [vmem:[%s210 + $0x218] sm:$0xf]
      %v303 = vld [vmem:[%s210 + $0x21c] sm:$0xff]
      %v304 = vld [vmem:[%s210 + $0x224] sm:$0xff]
      %v305 = vld [vmem:[%s210 + $0x22c] sm:$0xff]
      %v306 = vld [vmem:[%s210 + $0x234] sm:$0xff]
      %v307 = vld [vmem:[%s210 + $0x23c] sm:$0xf]
      %v308 = vld [vmem:[%s210 + $0x240] sm:$0xff]
      %v309 = vld [vmem:[%s210 + $0x248] sm:$0xff]
      %v310 = vld [vmem:[%s210 + $0x250] sm:$0xff]
      %v311 = vld [vmem:[%s210 + $0x258] sm:$0xff]
      %v312 = vld [vmem:[%s210 + $0x260] sm:$0xf]
      %v313 = vld [vmem:[%s210 + $0x264] sm:$0xff]
      %v314 = vld [vmem:[%s210 + $0x26c] sm:$0xff]
      %v315 = vld [vmem:[%s210 + $0x274] sm:$0xff]
      %v316 = vld [vmem:[%s210 + $0x27c] sm:$0xff]
      %v317 = vld [vmem:[%s210 + $0x284] sm:$0xf]
      %v318 = vld [vmem:[%s210 + $0x288] sm:$0xff]
      %v319 = vld [vmem:[%s210 + $0x290] sm:$0xff]
      %v320 = vld [vmem:[%s210 + $0x298] sm:$0xff]
      %v321 = vld [vmem:[%s210 + $0x2a0] sm:$0xff]
      %v322 = vld [vmem:[%s210 + $0x2a8] sm:$0xf]
      %v323 = vld [vmem:[%s210 + $0x2ac] sm:$0xff]
      %v324 = vld [vmem:[%s210 + $0x2b4] sm:$0xff]
      %v325 = vld [vmem:[%s210 + $0x2bc] sm:$0xff]
      %v326 = vld [vmem:[%s210 + $0x2c4] sm:$0xff]
      %v327 = vld [vmem:[%s210 + $0x2cc] sm:$0xf]
      %v328 = vld [vmem:[%s210 + $0x2d0] sm:$0xff]
      %v329 = vld [vmem:[%s210 + $0x2d8] sm:$0xff]
      %v330 = vld [vmem:[%s210 + $0x2e0] sm:$0xff]
      %v331 = vld [vmem:[%s210 + $0x2e8] sm:$0xff]
      %v332 = vld [vmem:[%s210 + $0x2f0] sm:$0xf]
      %v333 = vld [vmem:[%s210 + $0x2f4] sm:$0xff]
      %v334 = vld [vmem:[%s210 + $0x2fc] sm:$0xff]
      %v335 = vld [vmem:[%s210 + $0x304] sm:$0xff]
      %v336 = vld [vmem:[%s210 + $0x30c] sm:$0xff]
      %v337 = vld [vmem:[%s210 + $0x314] sm:$0xf]
      %v338 = vld [vmem:[%s210 + $0x318] sm:$0xff]
      %v339 = vld [vmem:[%s210 + $0x320] sm:$0xff]
      %v340 = vld [vmem:[%s210 + $0x328] sm:$0xff]
      %v341 = vld [vmem:[%s210 + $0x330] sm:$0xff]
      %v342 = vld [vmem:[%s210 + $0x338] sm:$0xf]
      %v343 = vld [vmem:[%s210 + $0x33c] sm:$0xff]
      %v344 = vld [vmem:[%s210 + $0x344] sm:$0xff]
      %v345 = vld [vmem:[%s210 + $0x34c] sm:$0xff]
      %v346 = vld [vmem:[%s210 + $0x354] sm:$0xff]
      %v347 = vld [vmem:[%s210 + $0x35c] sm:$0xf]
      %v348 = vld [vmem:[%s210 + $0x360] sm:$0xff]
      %v349 = vld [vmem:[%s210 + $0x368] sm:$0xff]
      %v350 = vld [vmem:[%s210 + $0x370] sm:$0xff]
      %v351 = vld [vmem:[%s210 + $0x378] sm:$0xff]
      %v352 = vld [vmem:[%s210 + $0x380] sm:$0xf]
      %v353 = vld [vmem:[%s210 + $0x384] sm:$0xff]
      %v354 = vld [vmem:[%s210 + $0x38c] sm:$0xff]
      %v355 = vld [vmem:[%s210 + $0x394] sm:$0xff]
      %v356 = vld [vmem:[%s210 + $0x39c] sm:$0xff]
      %v357 = vld [vmem:[%s210 + $0x3a4] sm:$0xf]
      %v358 = vld [vmem:[%s210 + $0x3a8] sm:$0xff]
      %v359 = vld [vmem:[%s210 + $0x3b0] sm:$0xff]
      %v360 = vld [vmem:[%s210 + $0x3b8] sm:$0xff]
      %v361 = vld [vmem:[%s210 + $0x3c0] sm:$0xff]
      %v362 = vld [vmem:[%s210 + $0x3c8] sm:$0xf]
      %v363 = vld [vmem:[%s210 + $0x3cc] sm:$0xff]
      %v364 = vld [vmem:[%s210 + $0x3d4] sm:$0xff]
      %v365 = vld [vmem:[%s210 + $0x3dc] sm:$0xff]
      %v366 = vld [vmem:[%s210 + $0x3e4] sm:$0xff]
      %v367 = vld [vmem:[%s210 + $0x3ec] sm:$0xf]
      %v368 = vld [vmem:[%s210 + $0x3f0] sm:$0xff]
      %v369 = vld [vmem:[%s210 + $0x3f8] sm:$0xff]
      %v370 = vld [vmem:[%s210 + $0x400] sm:$0xff]
      %v371 = vld [vmem:[%s210 + $0x408] sm:$0xff]
      %v372 = vld [vmem:[%s210 + $0x410] sm:$0xf]
      %v373 = vld [vmem:[%s210 + $0x414] sm:$0xff]
      %v374 = vld [vmem:[%s210 + $0x41c] sm:$0xff]
      %v375 = vld [vmem:[%s210 + $0x424] sm:$0xff]
      %v376 = vld [vmem:[%s210 + $0x42c] sm:$0xff]
      %v377 = vld [vmem:[%s210 + $0x434] sm:$0xf]
      %v378 = vld [vmem:[%s210 + $0x438] sm:$0xff]
      %v379 = vld [vmem:[%s210 + $0x440] sm:$0xff]
      %v380 = vld [vmem:[%s210 + $0x448] sm:$0xff]
      %v381 = vld [vmem:[%s210 + $0x450] sm:$0xff]
      %v382 = vld [vmem:[%s210 + $0x458] sm:$0xf]
      %v383 = vld [vmem:[%s210 + $0x45c] sm:$0xff]
      %v384 = vld [vmem:[%s210 + $0x464] sm:$0xff]
      %v385 = vld [vmem:[%s210 + $0x46c] sm:$0xff]
      %v386 = vld [vmem:[%s210 + $0x474] sm:$0xff]
      %v387 = vld [vmem:[%s210 + $0x47c] sm:$0xf]
      %v388 = vld [vmem:[%s215] sm:$0xf]
      %v389 = vld [vmem:[%s215 + $0x4] sm:$0xf]
      %v390 = vld [vmem:[%s215 + $0x8] sm:$0xf]
      %v391 = vld [vmem:[%s215 + $0xc] sm:$0xf]
      %v392 = vld [vmem:[%s215 + $0x10] sm:$0xf]
      %v393 = vld [vmem:[%s215 + $0x14] sm:$0xf]
      %v394 = vld [vmem:[%s215 + $0x18] sm:$0xf]
      %v395 = vld [vmem:[%s215 + $0x1c] sm:$0xf]
      %v396 = vld [vmem:[%s215 + $0x20] sm:$0xf]
      %v397 = vld [vmem:[%s215 + $0x24] sm:$0xf]
      %v398 = vld [vmem:[%s215 + $0x28] sm:$0xf]
      %v399 = vld [vmem:[%s215 + $0x2c] sm:$0xf]
      %v400 = vld [vmem:[%s215 + $0x30] sm:$0xf]
      %v401 = vld [vmem:[%s215 + $0x34] sm:$0xf]
      %v402 = vld [vmem:[%s215 + $0x38] sm:$0xf]
      %v403 = vld [vmem:[%s215 + $0x3c] sm:$0xf]
      %v404 = vld [vmem:[%s215 + $0x40] sm:$0xf]
      %v405 = vld [vmem:[%s215 + $0x44] sm:$0xf]
      %v406 = vld [vmem:[%s215 + $0x48] sm:$0xf]
      %v407 = vld [vmem:[%s215 + $0x4c] sm:$0xf]
      %v408 = vld [vmem:[%s215 + $0x50] sm:$0xf]
      %v409 = vld [vmem:[%s215 + $0x54] sm:$0xf]
      %v410 = vld [vmem:[%s215 + $0x58] sm:$0xf]
      %v411 = vld [vmem:[%s215 + $0x5c] sm:$0xf]
      %v412 = vld [vmem:[%s215 + $0x60] sm:$0xf]
      %v413 = vld [vmem:[%s215 + $0x64] sm:$0xf]
      %v414 = vld [vmem:[%s215 + $0x68] sm:$0xf]
      %v415 = vld [vmem:[%s215 + $0x6c] sm:$0xf]
      %v416 = vld [vmem:[%s215 + $0x70] sm:$0xf]
      %v417 = vld [vmem:[%s215 + $0x74] sm:$0xf]
      %v418 = vld [vmem:[%s215 + $0x78] sm:$0xf]
      %v419 = vld [vmem:[%s215 + $0x7c] sm:$0xf]
      %v420 = vld [vmem:[%s215 + $0x80] sm:$0xf]
      %v421 = vld [vmem:[%s215 + $0x84] sm:$0xf]
      %v422 = vld [vmem:[%s215 + $0x88] sm:$0xf]
      %v423 = vld [vmem:[%s215 + $0x8c] sm:$0xf]
      %v424 = vld [vmem:[%s215 + $0x90] sm:$0xf]
      %v425 = vld [vmem:[%s215 + $0x94] sm:$0xf]
      %v426 = vld [vmem:[%s215 + $0x98] sm:$0xf]
      %v427 = vld [vmem:[%s215 + $0x9c] sm:$0xf]
      %v428 = vld [vmem:[%s215 + $0xa0] sm:$0xf]
      %v429 = vld [vmem:[%s215 + $0xa4] sm:$0xf]
      %v430 = vld [vmem:[%s215 + $0xa8] sm:$0xf]
      %v431 = vld [vmem:[%s215 + $0xac] sm:$0xf]
      %v432 = vld [vmem:[%s215 + $0xb0] sm:$0xf]
      %v433 = vld [vmem:[%s215 + $0xb4] sm:$0xf]
      %v434 = vld [vmem:[%s215 + $0xb8] sm:$0xf]
      %v435 = vld [vmem:[%s215 + $0xbc] sm:$0xf]
      %v436 = vld [vmem:[%s215 + $0xc0] sm:$0xf]
      %v437 = vld [vmem:[%s215 + $0xc4] sm:$0xf]
      %v438 = vld [vmem:[%s215 + $0xc8] sm:$0xf]
      %v439 = vld [vmem:[%s215 + $0xcc] sm:$0xf]
      %v440 = vld [vmem:[%s215 + $0xd0] sm:$0xf]
      %v441 = vld [vmem:[%s215 + $0xd4] sm:$0xf]
      %v442 = vld [vmem:[%s215 + $0xd8] sm:$0xf]
      %v443 = vld [vmem:[%s215 + $0xdc] sm:$0xf]
      %v444 = vld [vmem:[%s215 + $0xe0] sm:$0xf]
      %v445 = vld [vmem:[%s215 + $0xe4] sm:$0xf]
      %v446 = vld [vmem:[%s215 + $0xe8] sm:$0xf]
      %v447 = vld [vmem:[%s215 + $0xec] sm:$0xf]
      %v448 = vld [vmem:[%s215 + $0xf0] sm:$0xf]
      %v449 = vld [vmem:[%s215 + $0xf4] sm:$0xf]
      %v450 = vld [vmem:[%s215 + $0xf8] sm:$0xf]
      %v451 = vld [vmem:[%s215 + $0xfc] sm:$0xf]
      %v452 = vld [vmem:[%s215 + $0x100] sm:$0xf]
      %v453 = vld [vmem:[%s215 + $0x104] sm:$0xf]
      %v454 = vld [vmem:[%s215 + $0x108] sm:$0xf]
      %v455 = vld [vmem:[%s215 + $0x10c] sm:$0xf]
      %v456 = vld [vmem:[%s215 + $0x110] sm:$0xf]
      %v457 = vld [vmem:[%s215 + $0x114] sm:$0xf]
      %v458 = vld [vmem:[%s215 + $0x118] sm:$0xf]
      %v459 = vld [vmem:[%s215 + $0x11c] sm:$0xf]
      %v460 = vld [vmem:[%s215 + $0x120] sm:$0xf]
      %v461 = vld [vmem:[%s215 + $0x124] sm:$0xf]
      %v462 = vld [vmem:[%s215 + $0x128] sm:$0xf]
      %v463 = vld [vmem:[%s215 + $0x12c] sm:$0xf]
      %v464 = vld [vmem:[%s215 + $0x130] sm:$0xf]
      %v465 = vld [vmem:[%s215 + $0x134] sm:$0xf]
      %v466 = vld [vmem:[%s215 + $0x138] sm:$0xf]
      %v467 = vld [vmem:[%s215 + $0x13c] sm:$0xf]
      %v468 = vld [vmem:[%s215 + $0x140] sm:$0xf]
      %v469 = vld [vmem:[%s215 + $0x144] sm:$0xf]
      %v470 = vld [vmem:[%s215 + $0x148] sm:$0xf]
      %v471 = vld [vmem:[%s215 + $0x14c] sm:$0xf]
      %v472 = vld [vmem:[%s215 + $0x150] sm:$0xf]
      %v473 = vld [vmem:[%s215 + $0x154] sm:$0xf]
      %v474 = vld [vmem:[%s215 + $0x158] sm:$0xf]
      %v475 = vld [vmem:[%s215 + $0x15c] sm:$0xf]
      %v476 = vld [vmem:[%s215 + $0x160] sm:$0xf]
      %v477 = vld [vmem:[%s215 + $0x164] sm:$0xf]
      %v478 = vld [vmem:[%s215 + $0x168] sm:$0xf]
      %v479 = vld [vmem:[%s215 + $0x16c] sm:$0xf]
      %v480 = vld [vmem:[%s215 + $0x170] sm:$0xf]
      %v481 = vld [vmem:[%s215 + $0x174] sm:$0xf]
      %v482 = vld [vmem:[%s215 + $0x178] sm:$0xf]
      %v483 = vld [vmem:[%s215 + $0x17c] sm:$0xf]
      %v484 = vld [vmem:[%s215 + $0x180] sm:$0xf]
      %v485 = vld [vmem:[%s215 + $0x184] sm:$0xf]
      %v486 = vld [vmem:[%s215 + $0x188] sm:$0xf]
      %v487 = vld [vmem:[%s215 + $0x18c] sm:$0xf]
      %v488 = vld [vmem:[%s215 + $0x190] sm:$0xf]
      %v489 = vld [vmem:[%s215 + $0x194] sm:$0xf]
      %v490 = vld [vmem:[%s215 + $0x198] sm:$0xf]
      %v491 = vld [vmem:[%s215 + $0x19c] sm:$0xf]
      %v492 = vld [vmem:[%s215 + $0x1a0] sm:$0xf]
      %v493 = vld [vmem:[%s215 + $0x1a4] sm:$0xf]
      %v494 = vld [vmem:[%s215 + $0x1a8] sm:$0xf]
      %v495 = vld [vmem:[%s215 + $0x1ac] sm:$0xf]
      %v496 = vld [vmem:[%s215 + $0x1b0] sm:$0xf]
      %v497 = vld [vmem:[%s215 + $0x1b4] sm:$0xf]
      %v498 = vld [vmem:[%s215 + $0x1b8] sm:$0xf]
      %v499 = vld [vmem:[%s215 + $0x1bc] sm:$0xf]
      %v500 = vld [vmem:[%s215 + $0x1c0] sm:$0xf]
      %v501 = vld [vmem:[%s215 + $0x1c4] sm:$0xf]
      %v502 = vld [vmem:[%s215 + $0x1c8] sm:$0xf]
      %v503 = vld [vmem:[%s215 + $0x1cc] sm:$0xf]
      %v504 = vld [vmem:[%s215 + $0x1d0] sm:$0xf]
      %v505 = vld [vmem:[%s215 + $0x1d4] sm:$0xf]
      %v506 = vld [vmem:[%s215 + $0x1d8] sm:$0xf]
      %v507 = vld [vmem:[%s215 + $0x1dc] sm:$0xf]
      %v508 = vld [vmem:[%s215 + $0x1e0] sm:$0xf]
      %v509 = vld [vmem:[%s215 + $0x1e4] sm:$0xf]
      %v510 = vld [vmem:[%s215 + $0x1e8] sm:$0xf]
      %v511 = vld [vmem:[%s215 + $0x1ec] sm:$0xf]
      %v512 = vld [vmem:[%s215 + $0x1f0] sm:$0xf]
      %v513 = vld [vmem:[%s215 + $0x1f4] sm:$0xf]
      %v514 = vld [vmem:[%s215 + $0x1f8] sm:$0xf]
      %v515 = vld [vmem:[%s215 + $0x1fc] sm:$0xf]
      %v516 = vld [vmem:[%s215 + $0x200] sm:$0xf]
      %v517 = vld [vmem:[%s215 + $0x204] sm:$0xf]
      %v518 = vld [vmem:[%s215 + $0x208] sm:$0xf]
      %v519 = vld [vmem:[%s215 + $0x20c] sm:$0xf]
      %v520 = vld [vmem:[%s215 + $0x210] sm:$0xf]
      %v521 = vld [vmem:[%s215 + $0x214] sm:$0xf]
      %v522 = vld [vmem:[%s215 + $0x218] sm:$0xf]
      %v523 = vld [vmem:[%s215 + $0x21c] sm:$0xf]
      %v524 = vld [vmem:[%s215 + $0x220] sm:$0xf]
      %v525 = vld [vmem:[%s215 + $0x224] sm:$0xf]
      %v526 = vld [vmem:[%s215 + $0x228] sm:$0xf]
      %v527 = vld [vmem:[%s215 + $0x22c] sm:$0xf]
      %v528 = vld [vmem:[%s215 + $0x230] sm:$0xf]
      %v529 = vld [vmem:[%s215 + $0x234] sm:$0xf]
      %v530 = vld [vmem:[%s215 + $0x238] sm:$0xf]
      %v531 = vld [vmem:[%s215 + $0x23c] sm:$0xf]
      %v532 = vld [vmem:[%s218] sm:$0x1]
      %v534 = vperm.slane %v532, 0
      %v696 = vunpack.c.l.b16 %v228
      %v697 = vunpack.c.h.b16 %v228
      %v698 = vunpack.c.l.b16 %v229
      %v699 = vunpack.c.h.b16 %v229
      %v700 = vunpack.c.l.b16 %v230
      %v701 = vunpack.c.h.b16 %v230
      %v702 = vunpack.c.l.b16 %v231
      %v703 = vunpack.c.h.b16 %v231
      %v704 = vunpack.c.l.b16 %v232
      %v705 = vunpack.c.l.b16 %v233
      %v706 = vunpack.c.h.b16 %v233
      %v707 = vunpack.c.l.b16 %v234
      %v708 = vunpack.c.h.b16 %v234
      %v709 = vunpack.c.l.b16 %v235
      %v710 = vunpack.c.h.b16 %v235
      %v711 = vunpack.c.l.b16 %v236
      %v712 = vunpack.c.h.b16 %v236
      %v713 = vunpack.c.l.b16 %v237
      %v714 = vunpack.c.l.b16 %v238
      %v715 = vunpack.c.h.b16 %v238
      %v716 = vunpack.c.l.b16 %v239
      %v717 = vunpack.c.h.b16 %v239
      %v718 = vunpack.c.l.b16 %v240
      %v719 = vunpack.c.h.b16 %v240
      %v720 = vunpack.c.l.b16 %v241
      %v721 = vunpack.c.h.b16 %v241
      %v722 = vunpack.c.l.b16 %v242
      %v723 = vunpack.c.l.b16 %v243
      %v724 = vunpack.c.h.b16 %v243
      %v725 = vunpack.c.l.b16 %v244
      %v726 = vunpack.c.h.b16 %v244
      %v727 = vunpack.c.l.b16 %v245
      %v728 = vunpack.c.h.b16 %v245
      %v729 = vunpack.c.l.b16 %v246
      %v730 = vunpack.c.h.b16 %v246
      %v731 = vunpack.c.l.b16 %v247
      %v732 = vunpack.c.l.b16 %v248
      %v733 = vunpack.c.h.b16 %v248
      %v734 = vunpack.c.l.b16 %v249
      %v735 = vunpack.c.h.b16 %v249
      %v736 = vunpack.c.l.b16 %v250
      %v737 = vunpack.c.h.b16 %v250
      %v738 = vunpack.c.l.b16 %v251
      %v739 = vunpack.c.h.b16 %v251
      %v740 = vunpack.c.l.b16 %v252
      %v741 = vunpack.c.l.b16 %v253
      %v742 = vunpack.c.h.b16 %v253
      %v743 = vunpack.c.l.b16 %v254
      %v744 = vunpack.c.h.b16 %v254
      %v745 = vunpack.c.l.b16 %v255
      %v746 = vunpack.c.h.b16 %v255
      %v747 = vunpack.c.l.b16 %v256
      %v748 = vunpack.c.h.b16 %v256
      %v749 = vunpack.c.l.b16 %v257
      %v750 = vunpack.c.l.b16 %v258
      %v751 = vunpack.c.h.b16 %v258
      %v752 = vunpack.c.l.b16 %v259
      %v753 = vunpack.c.h.b16 %v259
      %v754 = vunpack.c.l.b16 %v260
      %v755 = vunpack.c.h.b16 %v260
      %v756 = vunpack.c.l.b16 %v261
      %v757 = vunpack.c.h.b16 %v261
      %v758 = vunpack.c.l.b16 %v262
      %v759 = vunpack.c.l.b16 %v263
      %v760 = vunpack.c.h.b16 %v263
      %v761 = vunpack.c.l.b16 %v264
      %v762 = vunpack.c.h.b16 %v264
      %v763 = vunpack.c.l.b16 %v265
      %v764 = vunpack.c.h.b16 %v265
      %v765 = vunpack.c.l.b16 %v266
      %v766 = vunpack.c.h.b16 %v266
      %v767 = vunpack.c.l.b16 %v267
      %v768 = vunpack.c.l.b16 %v268
      %v769 = vunpack.c.h.b16 %v268
      %v770 = vunpack.c.l.b16 %v269
      %v771 = vunpack.c.h.b16 %v269
      %v772 = vunpack.c.l.b16 %v270
      %v773 = vunpack.c.h.b16 %v270
      %v774 = vunpack.c.l.b16 %v271
      %v775 = vunpack.c.h.b16 %v271
      %v776 = vunpack.c.l.b16 %v272
      %v777 = vunpack.c.l.b16 %v273
      %v778 = vunpack.c.h.b16 %v273
      %v779 = vunpack.c.l.b16 %v274
      %v780 = vunpack.c.h.b16 %v274
      %v781 = vunpack.c.l.b16 %v275
      %v782 = vunpack.c.h.b16 %v275
      %v783 = vunpack.c.l.b16 %v276
      %v784 = vunpack.c.h.b16 %v276
      %v785 = vunpack.c.l.b16 %v277
      %v786 = vunpack.c.l.b16 %v278
      %v787 = vunpack.c.h.b16 %v278
      %v788 = vunpack.c.l.b16 %v279
      %v789 = vunpack.c.h.b16 %v279
      %v790 = vunpack.c.l.b16 %v280
      %v791 = vunpack.c.h.b16 %v280
      %v792 = vunpack.c.l.b16 %v281
      %v793 = vunpack.c.h.b16 %v281
      %v794 = vunpack.c.l.b16 %v282
      %v795 = vunpack.c.l.b16 %v283
      %v796 = vunpack.c.h.b16 %v283
      %v797 = vunpack.c.l.b16 %v284
      %v798 = vunpack.c.h.b16 %v284
      %v799 = vunpack.c.l.b16 %v285
      %v800 = vunpack.c.h.b16 %v285
      %v801 = vunpack.c.l.b16 %v286
      %v802 = vunpack.c.h.b16 %v286
      %v803 = vunpack.c.l.b16 %v287
      %v804 = vunpack.c.l.b16 %v288
      %v805 = vunpack.c.h.b16 %v288
      %v806 = vunpack.c.l.b16 %v289
      %v807 = vunpack.c.h.b16 %v289
      %v808 = vunpack.c.l.b16 %v290
      %v809 = vunpack.c.h.b16 %v290
      %v810 = vunpack.c.l.b16 %v291
      %v811 = vunpack.c.h.b16 %v291
      %v812 = vunpack.c.l.b16 %v292
      %v813 = vunpack.c.l.b16 %v293
      %v814 = vunpack.c.h.b16 %v293
      %v815 = vunpack.c.l.b16 %v294
      %v816 = vunpack.c.h.b16 %v294
      %v817 = vunpack.c.l.b16 %v295
      %v818 = vunpack.c.h.b16 %v295
      %v819 = vunpack.c.l.b16 %v296
      %v820 = vunpack.c.h.b16 %v296
      %v821 = vunpack.c.l.b16 %v297
      %v822 = vunpack.c.l.b16 %v298
      %v823 = vunpack.c.h.b16 %v298
      %v824 = vunpack.c.l.b16 %v299
      %v825 = vunpack.c.h.b16 %v299
      %v826 = vunpack.c.l.b16 %v300
      %v827 = vunpack.c.h.b16 %v300
      %v828 = vunpack.c.l.b16 %v301
      %v829 = vunpack.c.h.b16 %v301
      %v830 = vunpack.c.l.b16 %v302
      %v831 = vunpack.c.l.b16 %v303
      %v832 = vunpack.c.h.b16 %v303
      %v833 = vunpack.c.l.b16 %v304
      %v834 = vunpack.c.h.b16 %v304
      %v835 = vunpack.c.l.b16 %v305
      %v836 = vunpack.c.h.b16 %v305
      %v837 = vunpack.c.l.b16 %v306
      %v838 = vunpack.c.h.b16 %v306
      %v839 = vunpack.c.l.b16 %v307
      %v840 = vunpack.c.l.b16 %v308
      %v841 = vunpack.c.h.b16 %v308
      %v842 = vunpack.c.l.b16 %v309
      %v843 = vunpack.c.h.b16 %v309
      %v844 = vunpack.c.l.b16 %v310
      %v845 = vunpack.c.h.b16 %v310
      %v846 = vunpack.c.l.b16 %v311
      %v847 = vunpack.c.h.b16 %v311
      %v848 = vunpack.c.l.b16 %v312
      %v849 = vunpack.c.l.b16 %v313
      %v850 = vunpack.c.h.b16 %v313
      %v851 = vunpack.c.l.b16 %v314
      %v852 = vunpack.c.h.b16 %v314
      %v853 = vunpack.c.l.b16 %v315
      %v854 = vunpack.c.h.b16 %v315
      %v855 = vunpack.c.l.b16 %v316
      %v856 = vunpack.c.h.b16 %v316
      %v857 = vunpack.c.l.b16 %v317
      %v858 = vunpack.c.l.b16 %v318
      %v859 = vunpack.c.h.b16 %v318
      %v860 = vunpack.c.l.b16 %v319
      %v861 = vunpack.c.h.b16 %v319
      %v862 = vunpack.c.l.b16 %v320
      %v863 = vunpack.c.h.b16 %v320
      %v864 = vunpack.c.l.b16 %v321
      %v865 = vunpack.c.h.b16 %v321
      %v866 = vunpack.c.l.b16 %v322
      %v867 = vunpack.c.l.b16 %v323
      %v868 = vunpack.c.h.b16 %v323
      %v869 = vunpack.c.l.b16 %v324
      %v870 = vunpack.c.h.b16 %v324
      %v871 = vunpack.c.l.b16 %v325
      %v872 = vunpack.c.h.b16 %v325
      %v873 = vunpack.c.l.b16 %v326
      %v874 = vunpack.c.h.b16 %v326
      %v875 = vunpack.c.l.b16 %v327
      %v876 = vunpack.c.l.b16 %v328
      %v877 = vunpack.c.h.b16 %v328
      %v878 = vunpack.c.l.b16 %v329
      %v879 = vunpack.c.h.b16 %v329
      %v880 = vunpack.c.l.b16 %v330
      %v881 = vunpack.c.h.b16 %v330
      %v882 = vunpack.c.l.b16 %v331
      %v883 = vunpack.c.h.b16 %v331
      %v884 = vunpack.c.l.b16 %v332
      %v885 = vunpack.c.l.b16 %v333
      %v886 = vunpack.c.h.b16 %v333
      %v887 = vunpack.c.l.b16 %v334
      %v888 = vunpack.c.h.b16 %v334
      %v889 = vunpack.c.l.b16 %v335
      %v890 = vunpack.c.h.b16 %v335
      %v891 = vunpack.c.l.b16 %v336
      %v892 = vunpack.c.h.b16 %v336
      %v893 = vunpack.c.l.b16 %v337
      %v894 = vunpack.c.l.b16 %v338
      %v895 = vunpack.c.h.b16 %v338
      %v896 = vunpack.c.l.b16 %v339
      %v897 = vunpack.c.h.b16 %v339
      %v898 = vunpack.c.l.b16 %v340
      %v899 = vunpack.c.h.b16 %v340
      %v900 = vunpack.c.l.b16 %v341
      %v901 = vunpack.c.h.b16 %v341
      %v902 = vunpack.c.l.b16 %v342
      %v903 = vunpack.c.l.b16 %v343
      %v904 = vunpack.c.h.b16 %v343
      %v905 = vunpack.c.l.b16 %v344
      %v906 = vunpack.c.h.b16 %v344
      %v907 = vunpack.c.l.b16 %v345
      %v908 = vunpack.c.h.b16 %v345
      %v909 = vunpack.c.l.b16 %v346
      %v910 = vunpack.c.h.b16 %v346
      %v911 = vunpack.c.l.b16 %v347
      %v912 = vunpack.c.l.b16 %v348
      %v913 = vunpack.c.h.b16 %v348
      %v914 = vunpack.c.l.b16 %v349
      %v915 = vunpack.c.h.b16 %v349
      %v916 = vunpack.c.l.b16 %v350
      %v917 = vunpack.c.h.b16 %v350
      %v918 = vunpack.c.l.b16 %v351
      %v919 = vunpack.c.h.b16 %v351
      %v920 = vunpack.c.l.b16 %v352
      %v921 = vunpack.c.l.b16 %v353
      %v922 = vunpack.c.h.b16 %v353
      %v923 = vunpack.c.l.b16 %v354
      %v924 = vunpack.c.h.b16 %v354
      %v925 = vunpack.c.l.b16 %v355
      %v926 = vunpack.c.h.b16 %v355
      %v927 = vunpack.c.l.b16 %v356
      %v928 = vunpack.c.h.b16 %v356
      %v929 = vunpack.c.l.b16 %v357
      %v930 = vunpack.c.l.b16 %v358
      %v931 = vunpack.c.h.b16 %v358
      %v932 = vunpack.c.l.b16 %v359
      %v933 = vunpack.c.h.b16 %v359
      %v934 = vunpack.c.l.b16 %v360
      %v935 = vunpack.c.h.b16 %v360
      %v936 = vunpack.c.l.b16 %v361
      %v937 = vunpack.c.h.b16 %v361
      %v938 = vunpack.c.l.b16 %v362
      %v939 = vunpack.c.l.b16 %v363
      %v940 = vunpack.c.h.b16 %v363
      %v941 = vunpack.c.l.b16 %v364
      %v942 = vunpack.c.h.b16 %v364
      %v943 = vunpack.c.l.b16 %v365
      %v944 = vunpack.c.h.b16 %v365
      %v945 = vunpack.c.l.b16 %v366
      %v946 = vunpack.c.h.b16 %v366
      %v947 = vunpack.c.l.b16 %v367
      %v948 = vunpack.c.l.b16 %v368
      %v949 = vunpack.c.h.b16 %v368
      %v950 = vunpack.c.l.b16 %v369
      %v951 = vunpack.c.h.b16 %v369
      %v952 = vunpack.c.l.b16 %v370
      %v953 = vunpack.c.h.b16 %v370
      %v954 = vunpack.c.l.b16 %v371
      %v955 = vunpack.c.h.b16 %v371
      %v956 = vunpack.c.l.b16 %v372
      %v957 = vunpack.c.l.b16 %v373
      %v958 = vunpack.c.h.b16 %v373
      %v959 = vunpack.c.l.b16 %v374
      %v960 = vunpack.c.h.b16 %v374
      %v961 = vunpack.c.l.b16 %v375
      %v962 = vunpack.c.h.b16 %v375
      %v963 = vunpack.c.l.b16 %v376
      %v964 = vunpack.c.h.b16 %v376
      %v965 = vunpack.c.l.b16 %v377
      %v966 = vunpack.c.l.b16 %v378
      %v967 = vunpack.c.h.b16 %v378
      %v968 = vunpack.c.l.b16 %v379
      %v969 = vunpack.c.h.b16 %v379
      %v970 = vunpack.c.l.b16 %v380
      %v971 = vunpack.c.h.b16 %v380
      %v972 = vunpack.c.l.b16 %v381
      %v973 = vunpack.c.h.b16 %v381
      %v974 = vunpack.c.l.b16 %v382
      %v975 = vunpack.c.l.b16 %v383
      %v976 = vunpack.c.h.b16 %v383
      %v977 = vunpack.c.l.b16 %v384
      %v978 = vunpack.c.h.b16 %v384
      %v979 = vunpack.c.l.b16 %v385
      %v980 = vunpack.c.h.b16 %v385
      %v981 = vunpack.c.l.b16 %v386
      %v982 = vunpack.c.h.b16 %v386
      %v983 = vunpack.c.l.b16 %v387
      %v984 = vpack.c.b16 %v705, %v696
      %v985 = vpack.c.b16 %v706, %v697
      %v986 = vpack.c.b16 %v707, %v698
      %v987 = vpack.c.b16 %v708, %v699
      %v988 = vpack.c.b16 %v709, %v700
      %v989 = vpack.c.b16 %v710, %v701
      %v990 = vpack.c.b16 %v711, %v702
      %v991 = vpack.c.b16 %v712, %v703
      %v992 = vpack.c.b16 %v713, %v704
      %v993 = vpack.c.b16 %v723, %v714
      %v994 = vpack.c.b16 %v724, %v715
      %v995 = vpack.c.b16 %v725, %v716
      %v996 = vpack.c.b16 %v726, %v717
      %v997 = vpack.c.b16 %v727, %v718
      %v998 = vpack.c.b16 %v728, %v719
      %v999 = vpack.c.b16 %v729, %v720
      %v1000 = vpack.c.b16 %v730, %v721
      %v1001 = vpack.c.b16 %v731, %v722
      %v1002 = vpack.c.b16 %v741, %v732
      %v1003 = vpack.c.b16 %v742, %v733
      %v1004 = vpack.c.b16 %v743, %v734
      %v1005 = vpack.c.b16 %v744, %v735
      %v1006 = vpack.c.b16 %v745, %v736
      %v1007 = vpack.c.b16 %v746, %v737
      %v1008 = vpack.c.b16 %v747, %v738
      %v1009 = vpack.c.b16 %v748, %v739
      %v1010 = vpack.c.b16 %v749, %v740
      %v1011 = vpack.c.b16 %v759, %v750
      %v1012 = vpack.c.b16 %v760, %v751
      %v1013 = vpack.c.b16 %v761, %v752
      %v1014 = vpack.c.b16 %v762, %v753
      %v1015 = vpack.c.b16 %v763, %v754
      %v1016 = vpack.c.b16 %v764, %v755
      %v1017 = vpack.c.b16 %v765, %v756
      %v1018 = vpack.c.b16 %v766, %v757
      %v1019 = vpack.c.b16 %v767, %v758
      %v1020 = vpack.c.b16 %v777, %v768
      %v1021 = vpack.c.b16 %v778, %v769
      %v1022 = vpack.c.b16 %v779, %v770
      %v1023 = vpack.c.b16 %v780, %v771
      %v1024 = vpack.c.b16 %v781, %v772
      %v1025 = vpack.c.b16 %v782, %v773
      %v1026 = vpack.c.b16 %v783, %v774
      %v1027 = vpack.c.b16 %v784, %v775
      %v1028 = vpack.c.b16 %v785, %v776
      %v1029 = vpack.c.b16 %v795, %v786
      %v1030 = vpack.c.b16 %v796, %v787
      %v1031 = vpack.c.b16 %v797, %v788
      %v1032 = vpack.c.b16 %v798, %v789
      %v1033 = vpack.c.b16 %v799, %v790
      %v1034 = vpack.c.b16 %v800, %v791
      %v1035 = vpack.c.b16 %v801, %v792
      %v1036 = vpack.c.b16 %v802, %v793
      %v1037 = vpack.c.b16 %v803, %v794
      %v1038 = vpack.c.b16 %v813, %v804
      %v1039 = vpack.c.b16 %v814, %v805
      %v1040 = vpack.c.b16 %v815, %v806
      %v1041 = vpack.c.b16 %v816, %v807
      %v1042 = vpack.c.b16 %v817, %v808
      %v1043 = vpack.c.b16 %v818, %v809
      %v1044 = vpack.c.b16 %v819, %v810
      %v1045 = vpack.c.b16 %v820, %v811
      %v1046 = vpack.c.b16 %v821, %v812
      %v1047 = vpack.c.b16 %v831, %v822
      %v1048 = vpack.c.b16 %v832, %v823
      %v1049 = vpack.c.b16 %v833, %v824
      %v1050 = vpack.c.b16 %v834, %v825
      %v1051 = vpack.c.b16 %v835, %v826
      %v1052 = vpack.c.b16 %v836, %v827
      %v1053 = vpack.c.b16 %v837, %v828
      %v1054 = vpack.c.b16 %v838, %v829
      %v1055 = vpack.c.b16 %v839, %v830
      %v1056 = vpack.c.b16 %v849, %v840
      %v1057 = vpack.c.b16 %v850, %v841
      %v1058 = vpack.c.b16 %v851, %v842
      %v1059 = vpack.c.b16 %v852, %v843
      %v1060 = vpack.c.b16 %v853, %v844
      %v1061 = vpack.c.b16 %v854, %v845
      %v1062 = vpack.c.b16 %v855, %v846
      %v1063 = vpack.c.b16 %v856, %v847
      %v1064 = vpack.c.b16 %v857, %v848
      %v1065 = vpack.c.b16 %v867, %v858
      %v1066 = vpack.c.b16 %v868, %v859
      %v1067 = vpack.c.b16 %v869, %v860
      %v1068 = vpack.c.b16 %v870, %v861
      %v1069 = vpack.c.b16 %v871, %v862
      %v1070 = vpack.c.b16 %v872, %v863
      %v1071 = vpack.c.b16 %v873, %v864
      %v1072 = vpack.c.b16 %v874, %v865
      %v1073 = vpack.c.b16 %v875, %v866
      %v1074 = vpack.c.b16 %v885, %v876
      %v1075 = vpack.c.b16 %v886, %v877
      %v1076 = vpack.c.b16 %v887, %v878
      %v1077 = vpack.c.b16 %v888, %v879
      %v1078 = vpack.c.b16 %v889, %v880
      %v1079 = vpack.c.b16 %v890, %v881
      %v1080 = vpack.c.b16 %v891, %v882
      %v1081 = vpack.c.b16 %v892, %v883
      %v1082 = vpack.c.b16 %v893, %v884
      %v1083 = vpack.c.b16 %v903, %v894
      %v1084 = vpack.c.b16 %v904, %v895
      %v1085 = vpack.c.b16 %v905, %v896
      %v1086 = vpack.c.b16 %v906, %v897
      %v1087 = vpack.c.b16 %v907, %v898
      %v1088 = vpack.c.b16 %v908, %v899
      %v1089 = vpack.c.b16 %v909, %v900
      %v1090 = vpack.c.b16 %v910, %v901
      %v1091 = vpack.c.b16 %v911, %v902
      %v1092 = vpack.c.b16 %v921, %v912
      %v1093 = vpack.c.b16 %v922, %v913
      %v1094 = vpack.c.b16 %v923, %v914
      %v1095 = vpack.c.b16 %v924, %v915
      %v1096 = vpack.c.b16 %v925, %v916
      %v1097 = vpack.c.b16 %v926, %v917
      %v1098 = vpack.c.b16 %v927, %v918
      %v1099 = vpack.c.b16 %v928, %v919
      %v1100 = vpack.c.b16 %v929, %v920
      %v1101 = vpack.c.b16 %v939, %v930
      %v1102 = vpack.c.b16 %v940, %v931
      %v1103 = vpack.c.b16 %v941, %v932
      %v1104 = vpack.c.b16 %v942, %v933
      %v1105 = vpack.c.b16 %v943, %v934
      %v1106 = vpack.c.b16 %v944, %v935
      %v1107 = vpack.c.b16 %v945, %v936
      %v1108 = vpack.c.b16 %v946, %v937
      %v1109 = vpack.c.b16 %v947, %v938
      %v1110 = vpack.c.b16 %v957, %v948
      %v1111 = vpack.c.b16 %v958, %v949
      %v1112 = vpack.c.b16 %v959, %v950
      %v1113 = vpack.c.b16 %v960, %v951
      %v1114 = vpack.c.b16 %v961, %v952
      %v1115 = vpack.c.b16 %v962, %v953
      %v1116 = vpack.c.b16 %v963, %v954
      %v1117 = vpack.c.b16 %v964, %v955
      %v1118 = vpack.c.b16 %v965, %v956
      %v1119 = vpack.c.b16 %v975, %v966
      %v1120 = vpack.c.b16 %v976, %v967
      %v1121 = vpack.c.b16 %v977, %v968
      %v1122 = vpack.c.b16 %v978, %v969
      %v1123 = vpack.c.b16 %v979, %v970
      %v1124 = vpack.c.b16 %v980, %v971
      %v1125 = vpack.c.b16 %v981, %v972
      %v1126 = vpack.c.b16 %v982, %v973
      %v1127 = vpack.c.b16 %v983, %v974
      %v1416 = vunpack.c.l.b16 %v388
      %v1417 = vunpack.c.l.b16 %v389
      %v1418 = vunpack.c.l.b16 %v390
      %v1419 = vunpack.c.l.b16 %v391
      %v1420 = vunpack.c.l.b16 %v392
      %v1421 = vunpack.c.l.b16 %v393
      %v1422 = vunpack.c.l.b16 %v394
      %v1423 = vunpack.c.l.b16 %v395
      %v1424 = vunpack.c.l.b16 %v396
      %v1425 = vunpack.c.l.b16 %v397
      %v1426 = vunpack.c.l.b16 %v398
      %v1427 = vunpack.c.l.b16 %v399
      %v1428 = vunpack.c.l.b16 %v400
      %v1429 = vunpack.c.l.b16 %v401
      %v1430 = vunpack.c.l.b16 %v402
      %v1431 = vunpack.c.l.b16 %v403
      %v1432 = vunpack.c.l.b16 %v404
      %v1433 = vunpack.c.l.b16 %v405
      %v1434 = vunpack.c.l.b16 %v406
      %v1435 = vunpack.c.l.b16 %v407
      %v1436 = vunpack.c.l.b16 %v408
      %v1437 = vunpack.c.l.b16 %v409
      %v1438 = vunpack.c.l.b16 %v410
      %v1439 = vunpack.c.l.b16 %v411
      %v1440 = vunpack.c.l.b16 %v412
      %v1441 = vunpack.c.l.b16 %v413
      %v1442 = vunpack.c.l.b16 %v414
      %v1443 = vunpack.c.l.b16 %v415
      %v1444 = vunpack.c.l.b16 %v416
      %v1445 = vunpack.c.l.b16 %v417
      %v1446 = vunpack.c.l.b16 %v418
      %v1447 = vunpack.c.l.b16 %v419
      %v1448 = vunpack.c.l.b16 %v420
      %v1449 = vunpack.c.l.b16 %v421
      %v1450 = vunpack.c.l.b16 %v422
      %v1451 = vunpack.c.l.b16 %v423
      %v1452 = vunpack.c.l.b16 %v424
      %v1453 = vunpack.c.l.b16 %v425
      %v1454 = vunpack.c.l.b16 %v426
      %v1455 = vunpack.c.l.b16 %v427
      %v1456 = vunpack.c.l.b16 %v428
      %v1457 = vunpack.c.l.b16 %v429
      %v1458 = vunpack.c.l.b16 %v430
      %v1459 = vunpack.c.l.b16 %v431
      %v1460 = vunpack.c.l.b16 %v432
      %v1461 = vunpack.c.l.b16 %v433
      %v1462 = vunpack.c.l.b16 %v434
      %v1463 = vunpack.c.l.b16 %v435
      %v1464 = vunpack.c.l.b16 %v436
      %v1465 = vunpack.c.l.b16 %v437
      %v1466 = vunpack.c.l.b16 %v438
      %v1467 = vunpack.c.l.b16 %v439
      %v1468 = vunpack.c.l.b16 %v440
      %v1469 = vunpack.c.l.b16 %v441
      %v1470 = vunpack.c.l.b16 %v442
      %v1471 = vunpack.c.l.b16 %v443
      %v1472 = vunpack.c.l.b16 %v444
      %v1473 = vunpack.c.l.b16 %v445
      %v1474 = vunpack.c.l.b16 %v446
      %v1475 = vunpack.c.l.b16 %v447
      %v1476 = vunpack.c.l.b16 %v448
      %v1477 = vunpack.c.l.b16 %v449
      %v1478 = vunpack.c.l.b16 %v450
      %v1479 = vunpack.c.l.b16 %v451
      %v1480 = vunpack.c.l.b16 %v452
      %v1481 = vunpack.c.l.b16 %v453
      %v1482 = vunpack.c.l.b16 %v454
      %v1483 = vunpack.c.l.b16 %v455
      %v1484 = vunpack.c.l.b16 %v456
      %v1485 = vunpack.c.l.b16 %v457
      %v1486 = vunpack.c.l.b16 %v458
      %v1487 = vunpack.c.l.b16 %v459
      %v1488 = vunpack.c.l.b16 %v460
      %v1489 = vunpack.c.l.b16 %v461
      %v1490 = vunpack.c.l.b16 %v462
      %v1491 = vunpack.c.l.b16 %v463
      %v1492 = vunpack.c.l.b16 %v464
      %v1493 = vunpack.c.l.b16 %v465
      %v1494 = vunpack.c.l.b16 %v466
      %v1495 = vunpack.c.l.b16 %v467
      %v1496 = vunpack.c.l.b16 %v468
      %v1497 = vunpack.c.l.b16 %v469
      %v1498 = vunpack.c.l.b16 %v470
      %v1499 = vunpack.c.l.b16 %v471
      %v1500 = vunpack.c.l.b16 %v472
      %v1501 = vunpack.c.l.b16 %v473
      %v1502 = vunpack.c.l.b16 %v474
      %v1503 = vunpack.c.l.b16 %v475
      %v1504 = vunpack.c.l.b16 %v476
      %v1505 = vunpack.c.l.b16 %v477
      %v1506 = vunpack.c.l.b16 %v478
      %v1507 = vunpack.c.l.b16 %v479
      %v1508 = vunpack.c.l.b16 %v480
      %v1509 = vunpack.c.l.b16 %v481
      %v1510 = vunpack.c.l.b16 %v482
      %v1511 = vunpack.c.l.b16 %v483
      %v1512 = vunpack.c.l.b16 %v484
      %v1513 = vunpack.c.l.b16 %v485
      %v1514 = vunpack.c.l.b16 %v486
      %v1515 = vunpack.c.l.b16 %v487
      %v1516 = vunpack.c.l.b16 %v488
      %v1517 = vunpack.c.l.b16 %v489
      %v1518 = vunpack.c.l.b16 %v490
      %v1519 = vunpack.c.l.b16 %v491
      %v1520 = vunpack.c.l.b16 %v492
      %v1521 = vunpack.c.l.b16 %v493
      %v1522 = vunpack.c.l.b16 %v494
      %v1523 = vunpack.c.l.b16 %v495
      %v1524 = vunpack.c.l.b16 %v496
      %v1525 = vunpack.c.l.b16 %v497
      %v1526 = vunpack.c.l.b16 %v498
      %v1527 = vunpack.c.l.b16 %v499
      %v1528 = vunpack.c.l.b16 %v500
      %v1529 = vunpack.c.l.b16 %v501
      %v1530 = vunpack.c.l.b16 %v502
      %v1531 = vunpack.c.l.b16 %v503
      %v1532 = vunpack.c.l.b16 %v504
      %v1533 = vunpack.c.l.b16 %v505
      %v1534 = vunpack.c.l.b16 %v506
      %v1535 = vunpack.c.l.b16 %v507
      %v1536 = vunpack.c.l.b16 %v508
      %v1537 = vunpack.c.l.b16 %v509
      %v1538 = vunpack.c.l.b16 %v510
      %v1539 = vunpack.c.l.b16 %v511
      %v1540 = vunpack.c.l.b16 %v512
      %v1541 = vunpack.c.l.b16 %v513
      %v1542 = vunpack.c.l.b16 %v514
      %v1543 = vunpack.c.l.b16 %v515
      %v1544 = vunpack.c.l.b16 %v516
      %v1545 = vunpack.c.l.b16 %v517
      %v1546 = vunpack.c.l.b16 %v518
      %v1547 = vunpack.c.l.b16 %v519
      %v1548 = vunpack.c.l.b16 %v520
      %v1549 = vunpack.c.l.b16 %v521
      %v1550 = vunpack.c.l.b16 %v522
      %v1551 = vunpack.c.l.b16 %v523
      %v1552 = vunpack.c.l.b16 %v524
      %v1553 = vunpack.c.l.b16 %v525
      %v1554 = vunpack.c.l.b16 %v526
      %v1555 = vunpack.c.l.b16 %v527
      %v1556 = vunpack.c.l.b16 %v528
      %v1557 = vunpack.c.l.b16 %v529
      %v1558 = vunpack.c.l.b16 %v530
      %v1559 = vunpack.c.l.b16 %v531
      %v1560 = vpack.c.b16 %v1417, %v1416
      %v1561 = vpack.c.b16 %v1419, %v1418
      %v1562 = vpack.c.b16 %v1421, %v1420
      %v1563 = vpack.c.b16 %v1423, %v1422
      %v1564 = vpack.c.b16 %v1425, %v1424
      %v1565 = vpack.c.b16 %v1427, %v1426
      %v1566 = vpack.c.b16 %v1429, %v1428
      %v1567 = vpack.c.b16 %v1431, %v1430
      %v1568 = vpack.c.b16 %v1433, %v1432
      %v1569 = vpack.c.b16 %v1435, %v1434
      %v1570 = vpack.c.b16 %v1437, %v1436
      %v1571 = vpack.c.b16 %v1439, %v1438
      %v1572 = vpack.c.b16 %v1441, %v1440
      %v1573 = vpack.c.b16 %v1443, %v1442
      %v1574 = vpack.c.b16 %v1445, %v1444
      %v1575 = vpack.c.b16 %v1447, %v1446
      %v1576 = vpack.c.b16 %v1449, %v1448
      %v1577 = vpack.c.b16 %v1451, %v1450
      %v1578 = vpack.c.b16 %v1453, %v1452
      %v1579 = vpack.c.b16 %v1455, %v1454
      %v1580 = vpack.c.b16 %v1457, %v1456
      %v1581 = vpack.c.b16 %v1459, %v1458
      %v1582 = vpack.c.b16 %v1461, %v1460
      %v1583 = vpack.c.b16 %v1463, %v1462
      %v1584 = vpack.c.b16 %v1465, %v1464
      %v1585 = vpack.c.b16 %v1467, %v1466
      %v1586 = vpack.c.b16 %v1469, %v1468
      %v1587 = vpack.c.b16 %v1471, %v1470
      %v1588 = vpack.c.b16 %v1473, %v1472
      %v1589 = vpack.c.b16 %v1475, %v1474
      %v1590 = vpack.c.b16 %v1477, %v1476
      %v1591 = vpack.c.b16 %v1479, %v1478
      %v1592 = vpack.c.b16 %v1481, %v1480
      %v1593 = vpack.c.b16 %v1483, %v1482
      %v1594 = vpack.c.b16 %v1485, %v1484
      %v1595 = vpack.c.b16 %v1487, %v1486
      %v1596 = vpack.c.b16 %v1489, %v1488
      %v1597 = vpack.c.b16 %v1491, %v1490
      %v1598 = vpack.c.b16 %v1493, %v1492
      %v1599 = vpack.c.b16 %v1495, %v1494
      %v1600 = vpack.c.b16 %v1497, %v1496
      %v1601 = vpack.c.b16 %v1499, %v1498
      %v1602 = vpack.c.b16 %v1501, %v1500
      %v1603 = vpack.c.b16 %v1503, %v1502
      %v1604 = vpack.c.b16 %v1505, %v1504
      %v1605 = vpack.c.b16 %v1507, %v1506
      %v1606 = vpack.c.b16 %v1509, %v1508
      %v1607 = vpack.c.b16 %v1511, %v1510
      %v1608 = vpack.c.b16 %v1513, %v1512
      %v1609 = vpack.c.b16 %v1515, %v1514
      %v1610 = vpack.c.b16 %v1517, %v1516
      %v1611 = vpack.c.b16 %v1519, %v1518
      %v1612 = vpack.c.b16 %v1521, %v1520
      %v1613 = vpack.c.b16 %v1523, %v1522
      %v1614 = vpack.c.b16 %v1525, %v1524
      %v1615 = vpack.c.b16 %v1527, %v1526
      %v1616 = vpack.c.b16 %v1529, %v1528
      %v1617 = vpack.c.b16 %v1531, %v1530
      %v1618 = vpack.c.b16 %v1533, %v1532
      %v1619 = vpack.c.b16 %v1535, %v1534
      %v1620 = vpack.c.b16 %v1537, %v1536
      %v1621 = vpack.c.b16 %v1539, %v1538
      %v1622 = vpack.c.b16 %v1541, %v1540
      %v1623 = vpack.c.b16 %v1543, %v1542
      %v1624 = vpack.c.b16 %v1545, %v1544
      %v1625 = vpack.c.b16 %v1547, %v1546
      %v1626 = vpack.c.b16 %v1549, %v1548
      %v1627 = vpack.c.b16 %v1551, %v1550
      %v1628 = vpack.c.b16 %v1553, %v1552
      %v1629 = vpack.c.b16 %v1555, %v1554
      %v1630 = vpack.c.b16 %v1557, %v1556
      %v1631 = vpack.c.b16 %v1559, %v1558
      %1704 = vmatpush.bf16.msra.mxu0 %v1567
      %1705 = vmatpush.bf16.msra.mxu0 %v1566
      %1706 = vmatpush.bf16.msra.mxu0 %v1565
      %1707 = vmatpush.bf16.msra.mxu0 %v1564
      %1708 = vmatpush.bf16.msra.mxu0 %v1563
      %1709 = vmatpush.bf16.msra.mxu0 %v1562
      %1710 = vmatpush.bf16.msra.mxu0 %v1561
      %1711 = vmatpush.bf16.msra.mxu0 %v1560
      %1712 = vmatmul.bf16.gmra.mxu0 %v984
      %v1713 = vpop.f32.mrf.mxu0
      %v1714 = vadd.f32 %v534, %v1713
      %v1715 = vpop.f32.mrf.mxu0
      %v1716 = vadd.f32 %v534, %v1715
      %1717 = vmatmul.bf16.gmra.mxu0 %v993
      %v1718 = vpop.f32.mrf.mxu0
      %v1719 = vadd.f32 %v534, %v1718
      %v1720 = vpop.f32.mrf.mxu0
      %v1721 = vadd.f32 %v534, %v1720
      %1722 = vmatmul.bf16.gmra.mxu0 %v1002
      %v1723 = vpop.f32.mrf.mxu0
      %v1724 = vadd.f32 %v534, %v1723
      %v1725 = vpop.f32.mrf.mxu0
      %v1726 = vadd.f32 %v534, %v1725
      %1727 = vmatmul.bf16.gmra.mxu0 %v1011
      %v1728 = vpop.f32.mrf.mxu0
      %v1729 = vadd.f32 %v534, %v1728
      %v1730 = vpop.f32.mrf.mxu0
      %v1731 = vadd.f32 %v534, %v1730
      %1732 = vmatmul.bf16.gmra.mxu0 %v1020
      %v1733 = vpop.f32.mrf.mxu0
      %v1734 = vadd.f32 %v534, %v1733
      %v1735 = vpop.f32.mrf.mxu0
      %v1736 = vadd.f32 %v534, %v1735
      %1737 = vmatmul.bf16.gmra.mxu0 %v1029
      %v1738 = vpop.f32.mrf.mxu0
      %v1739 = vadd.f32 %v534, %v1738
      %v1740 = vpop.f32.mrf.mxu0
      %v1741 = vadd.f32 %v534, %v1740
      %1742 = vmatmul.bf16.gmra.mxu0 %v1038
      %v1743 = vpop.f32.mrf.mxu0
      %v1744 = vadd.f32 %v534, %v1743
      %v1745 = vpop.f32.mrf.mxu0
      %v1746 = vadd.f32 %v534, %v1745
      %1747 = vmatmul.bf16.gmra.mxu0 %v1047
      %v1748 = vpop.f32.mrf.mxu0
      %v1749 = vadd.f32 %v534, %v1748
      %v1750 = vpop.f32.mrf.mxu0
      %v1751 = vadd.f32 %v534, %v1750
      %1752 = vmatmul.bf16.gmra.mxu0 %v1056
      %v1753 = vpop.f32.mrf.mxu0
      %v1754 = vadd.f32 %v534, %v1753
      %v1755 = vpop.f32.mrf.mxu0
      %v1756 = vadd.f32 %v534, %v1755
      %1757 = vmatmul.bf16.gmra.mxu0 %v1065
      %v1758 = vpop.f32.mrf.mxu0
      %v1759 = vadd.f32 %v534, %v1758
      %v1760 = vpop.f32.mrf.mxu0
      %v1761 = vadd.f32 %v534, %v1760
      %1762 = vmatmul.bf16.gmra.mxu0 %v1074
      %v1763 = vpop.f32.mrf.mxu0
      %v1764 = vadd.f32 %v534, %v1763
      %v1765 = vpop.f32.mrf.mxu0
      %v1766 = vadd.f32 %v534, %v1765
      %1767 = vmatmul.bf16.gmra.mxu0 %v1083
      %v1768 = vpop.f32.mrf.mxu0
      %v1769 = vadd.f32 %v534, %v1768
      %v1770 = vpop.f32.mrf.mxu0
      %v1771 = vadd.f32 %v534, %v1770
      %1772 = vmatmul.bf16.gmra.mxu0 %v1092
      %v1773 = vpop.f32.mrf.mxu0
      %v1774 = vadd.f32 %v534, %v1773
      %v1775 = vpop.f32.mrf.mxu0
      %v1776 = vadd.f32 %v534, %v1775
      %1777 = vmatmul.bf16.gmra.mxu0 %v1101
      %v1778 = vpop.f32.mrf.mxu0
      %v1779 = vadd.f32 %v534, %v1778
      %v1780 = vpop.f32.mrf.mxu0
      %v1781 = vadd.f32 %v534, %v1780
      %1782 = vmatmul.bf16.gmra.mxu0 %v1110
      %v1783 = vpop.f32.mrf.mxu0
      %v1784 = vadd.f32 %v534, %v1783
      %v1785 = vpop.f32.mrf.mxu0
      %v1786 = vadd.f32 %v534, %v1785
      %1787 = vmatmul.bf16.gmra.mxu0 %v1119
      %v1788 = vpop.f32.mrf.mxu0
      %v1789 = vadd.f32 %v534, %v1788
      %v1790 = vpop.f32.mrf.mxu0
      %v1791 = vadd.f32 %v534, %v1790
      %1792 = vdwg.mxu0
      %1793 = vmatpush.bf16.msra.mxu0 %v1575
      %1794 = vmatpush.bf16.msra.mxu0 %v1574
      %1795 = vmatpush.bf16.msra.mxu0 %v1573
      %1796 = vmatpush.bf16.msra.mxu0 %v1572
      %1797 = vmatpush.bf16.msra.mxu0 %v1571
      %1798 = vmatpush.bf16.msra.mxu0 %v1570
      %1799 = vmatpush.bf16.msra.mxu0 %v1569
      %1800 = vmatpush.bf16.msra.mxu0 %v1568
      %1801 = vmatmul.bf16.gmra.mxu0 %v985
      %v1802 = vpop.f32.mrf.mxu0
      %v1803 = vadd.f32 %v1714, %v1802
      %v1804 = vpop.f32.mrf.mxu0
      %v1805 = vadd.f32 %v1716, %v1804
      %1806 = vmatmul.bf16.gmra.mxu0 %v994
      %v1807 = vpop.f32.mrf.mxu0
      %v1808 = vadd.f32 %v1719, %v1807
      %v1809 = vpop.f32.mrf.mxu0
      %v1810 = vadd.f32 %v1721, %v1809
      %1811 = vmatmul.bf16.gmra.mxu0 %v1003
      %v1812 = vpop.f32.mrf.mxu0
      %v1813 = vadd.f32 %v1724, %v1812
      %v1814 = vpop.f32.mrf.mxu0
      %v1815 = vadd.f32 %v1726, %v1814
      %1816 = vmatmul.bf16.gmra.mxu0 %v1012
      %v1817 = vpop.f32.mrf.mxu0
      %v1818 = vadd.f32 %v1729, %v1817
      %v1819 = vpop.f32.mrf.mxu0
      %v1820 = vadd.f32 %v1731, %v1819
      %1821 = vmatmul.bf16.gmra.mxu0 %v1021
      %v1822 = vpop.f32.mrf.mxu0
      %v1823 = vadd.f32 %v1734, %v1822
      %v1824 = vpop.f32.mrf.mxu0
      %v1825 = vadd.f32 %v1736, %v1824
      %1826 = vmatmul.bf16.gmra.mxu0 %v1030
      %v1827 = vpop.f32.mrf.mxu0
      %v1828 = vadd.f32 %v1739, %v1827
      %v1829 = vpop.f32.mrf.mxu0
      %v1830 = vadd.f32 %v1741, %v1829
      %1831 = vmatmul.bf16.gmra.mxu0 %v1039
      %v1832 = vpop.f32.mrf.mxu0
      %v1833 = vadd.f32 %v1744, %v1832
      %v1834 = vpop.f32.mrf.mxu0
      %v1835 = vadd.f32 %v1746, %v1834
      %1836 = vmatmul.bf16.gmra.mxu0 %v1048
      %v1837 = vpop.f32.mrf.mxu0
      %v1838 = vadd.f32 %v1749, %v1837
      %v1839 = vpop.f32.mrf.mxu0
      %v1840 = vadd.f32 %v1751, %v1839
      %1841 = vmatmul.bf16.gmra.mxu0 %v1057
      %v1842 = vpop.f32.mrf.mxu0
      %v1843 = vadd.f32 %v1754, %v1842
      %v1844 = vpop.f32.mrf.mxu0
      %v1845 = vadd.f32 %v1756, %v1844
      %1846 = vmatmul.bf16.gmra.mxu0 %v1066
      %v1847 = vpop.f32.mrf.mxu0
      %v1848 = vadd.f32 %v1759, %v1847
      %v1849 = vpop.f32.mrf.mxu0
      %v1850 = vadd.f32 %v1761, %v1849
      %1851 = vmatmul.bf16.gmra.mxu0 %v1075
      %v1852 = vpop.f32.mrf.mxu0
      %v1853 = vadd.f32 %v1764, %v1852
      %v1854 = vpop.f32.mrf.mxu0
      %v1855 = vadd.f32 %v1766, %v1854
      %1856 = vmatmul.bf16.gmra.mxu0 %v1084
      %v1857 = vpop.f32.mrf.mxu0
      %v1858 = vadd.f32 %v1769, %v1857
      %v1859 = vpop.f32.mrf.mxu0
      %v1860 = vadd.f32 %v1771, %v1859
      %1861 = vmatmul.bf16.gmra.mxu0 %v1093
      %v1862 = vpop.f32.mrf.mxu0
      %v1863 = vadd.f32 %v1774, %v1862
      %v1864 = vpop.f32.mrf.mxu0
      %v1865 = vadd.f32 %v1776, %v1864
      %1866 = vmatmul.bf16.gmra.mxu0 %v1102
      %v1867 = vpop.f32.mrf.mxu0
      %v1868 = vadd.f32 %v1779, %v1867
      %v1869 = vpop.f32.mrf.mxu0
      %v1870 = vadd.f32 %v1781, %v1869
      %1871 = vmatmul.bf16.gmra.mxu0 %v1111
      %v1872 = vpop.f32.mrf.mxu0
      %v1873 = vadd.f32 %v1784, %v1872
      %v1874 = vpop.f32.mrf.mxu0
      %v1875 = vadd.f32 %v1786, %v1874
      %1876 = vmatmul.bf16.gmra.mxu0 %v1120
      %v1877 = vpop.f32.mrf.mxu0
      %v1878 = vadd.f32 %v1789, %v1877
      %v1879 = vpop.f32.mrf.mxu0
      %v1880 = vadd.f32 %v1791, %v1879
      %1881 = vdwg.mxu0
      %1882 = vmatpush.bf16.msra.mxu0 %v1583
      %1883 = vmatpush.bf16.msra.mxu0 %v1582
      %1884 = vmatpush.bf16.msra.mxu0 %v1581
      %1885 = vmatpush.bf16.msra.mxu0 %v1580
      %1886 = vmatpush.bf16.msra.mxu0 %v1579
      %1887 = vmatpush.bf16.msra.mxu0 %v1578
      %1888 = vmatpush.bf16.msra.mxu0 %v1577
      %1889 = vmatpush.bf16.msra.mxu0 %v1576
      %1890 = vmatmul.bf16.gmra.mxu0 %v986
      %v1891 = vpop.f32.mrf.mxu0
      %v1892 = vadd.f32 %v1803, %v1891
      %v1893 = vpop.f32.mrf.mxu0
      %v1894 = vadd.f32 %v1805, %v1893
      %1895 = vmatmul.bf16.gmra.mxu0 %v995
      %v1896 = vpop.f32.mrf.mxu0
      %v1897 = vadd.f32 %v1808, %v1896
      %v1898 = vpop.f32.mrf.mxu0
      %v1899 = vadd.f32 %v1810, %v1898
      %1900 = vmatmul.bf16.gmra.mxu0 %v1004
      %v1901 = vpop.f32.mrf.mxu0
      %v1902 = vadd.f32 %v1813, %v1901
      %v1903 = vpop.f32.mrf.mxu0
      %v1904 = vadd.f32 %v1815, %v1903
      %1905 = vmatmul.bf16.gmra.mxu0 %v1013
      %v1906 = vpop.f32.mrf.mxu0
      %v1907 = vadd.f32 %v1818, %v1906
      %v1908 = vpop.f32.mrf.mxu0
      %v1909 = vadd.f32 %v1820, %v1908
      %1910 = vmatmul.bf16.gmra.mxu0 %v1022
      %v1911 = vpop.f32.mrf.mxu0
      %v1912 = vadd.f32 %v1823, %v1911
      %v1913 = vpop.f32.mrf.mxu0
      %v1914 = vadd.f32 %v1825, %v1913
      %1915 = vmatmul.bf16.gmra.mxu0 %v1031
      %v1916 = vpop.f32.mrf.mxu0
      %v1917 = vadd.f32 %v1828, %v1916
      %v1918 = vpop.f32.mrf.mxu0
      %v1919 = vadd.f32 %v1830, %v1918
      %1920 = vmatmul.bf16.gmra.mxu0 %v1040
      %v1921 = vpop.f32.mrf.mxu0
      %v1922 = vadd.f32 %v1833, %v1921
      %v1923 = vpop.f32.mrf.mxu0
      %v1924 = vadd.f32 %v1835, %v1923
      %1925 = vmatmul.bf16.gmra.mxu0 %v1049
      %v1926 = vpop.f32.mrf.mxu0
      %v1927 = vadd.f32 %v1838, %v1926
      %v1928 = vpop.f32.mrf.mxu0
      %v1929 = vadd.f32 %v1840, %v1928
      %1930 = vmatmul.bf16.gmra.mxu0 %v1058
      %v1931 = vpop.f32.mrf.mxu0
      %v1932 = vadd.f32 %v1843, %v1931
      %v1933 = vpop.f32.mrf.mxu0
      %v1934 = vadd.f32 %v1845, %v1933
      %1935 = vmatmul.bf16.gmra.mxu0 %v1067
      %v1936 = vpop.f32.mrf.mxu0
      %v1937 = vadd.f32 %v1848, %v1936
      %v1938 = vpop.f32.mrf.mxu0
      %v1939 = vadd.f32 %v1850, %v1938
      %1940 = vmatmul.bf16.gmra.mxu0 %v1076
      %v1941 = vpop.f32.mrf.mxu0
      %v1942 = vadd.f32 %v1853, %v1941
      %v1943 = vpop.f32.mrf.mxu0
      %v1944 = vadd.f32 %v1855, %v1943
      %1945 = vmatmul.bf16.gmra.mxu0 %v1085
      %v1946 = vpop.f32.mrf.mxu0
      %v1947 = vadd.f32 %v1858, %v1946
      %v1948 = vpop.f32.mrf.mxu0
      %v1949 = vadd.f32 %v1860, %v1948
      %1950 = vmatmul.bf16.gmra.mxu0 %v1094
      %v1951 = vpop.f32.mrf.mxu0
      %v1952 = vadd.f32 %v1863, %v1951
      %v1953 = vpop.f32.mrf.mxu0
      %v1954 = vadd.f32 %v1865, %v1953
      %1955 = vmatmul.bf16.gmra.mxu0 %v1103
      %v1956 = vpop.f32.mrf.mxu0
      %v1957 = vadd.f32 %v1868, %v1956
      %v1958 = vpop.f32.mrf.mxu0
      %v1959 = vadd.f32 %v1870, %v1958
      %1960 = vmatmul.bf16.gmra.mxu0 %v1112
      %v1961 = vpop.f32.mrf.mxu0
      %v1962 = vadd.f32 %v1873, %v1961
      %v1963 = vpop.f32.mrf.mxu0
      %v1964 = vadd.f32 %v1875, %v1963
      %1965 = vmatmul.bf16.gmra.mxu0 %v1121
      %v1966 = vpop.f32.mrf.mxu0
      %v1967 = vadd.f32 %v1878, %v1966
      %v1968 = vpop.f32.mrf.mxu0
      %v1969 = vadd.f32 %v1880, %v1968
      %1970 = vdwg.mxu0
      %1971 = vmatpush.bf16.msra.mxu0 %v1591
      %1972 = vmatpush.bf16.msra.mxu0 %v1590
      %1973 = vmatpush.bf16.msra.mxu0 %v1589
      %1974 = vmatpush.bf16.msra.mxu0 %v1588
      %1975 = vmatpush.bf16.msra.mxu0 %v1587
      %1976 = vmatpush.bf16.msra.mxu0 %v1586
      %1977 = vmatpush.bf16.msra.mxu0 %v1585
      %1978 = vmatpush.bf16.msra.mxu0 %v1584
      %1979 = vmatmul.bf16.gmra.mxu0 %v987
      %v1980 = vpop.f32.mrf.mxu0
      %v1981 = vadd.f32 %v1892, %v1980
      %v1982 = vpop.f32.mrf.mxu0
      %v1983 = vadd.f32 %v1894, %v1982
      %1984 = vmatmul.bf16.gmra.mxu0 %v996
      %v1985 = vpop.f32.mrf.mxu0
      %v1986 = vadd.f32 %v1897, %v1985
      %v1987 = vpop.f32.mrf.mxu0
      %v1988 = vadd.f32 %v1899, %v1987
      %1989 = vmatmul.bf16.gmra.mxu0 %v1005
      %v1990 = vpop.f32.mrf.mxu0
      %v1991 = vadd.f32 %v1902, %v1990
      %v1992 = vpop.f32.mrf.mxu0
      %v1993 = vadd.f32 %v1904, %v1992
      %1994 = vmatmul.bf16.gmra.mxu0 %v1014
      %v1995 = vpop.f32.mrf.mxu0
      %v1996 = vadd.f32 %v1907, %v1995
      %v1997 = vpop.f32.mrf.mxu0
      %v1998 = vadd.f32 %v1909, %v1997
      %1999 = vmatmul.bf16.gmra.mxu0 %v1023
      %v2000 = vpop.f32.mrf.mxu0
      %v2001 = vadd.f32 %v1912, %v2000
      %v2002 = vpop.f32.mrf.mxu0
      %v2003 = vadd.f32 %v1914, %v2002
      %2004 = vmatmul.bf16.gmra.mxu0 %v1032
      %v2005 = vpop.f32.mrf.mxu0
      %v2006 = vadd.f32 %v1917, %v2005
      %v2007 = vpop.f32.mrf.mxu0
      %v2008 = vadd.f32 %v1919, %v2007
      %2009 = vmatmul.bf16.gmra.mxu0 %v1041
      %v2010 = vpop.f32.mrf.mxu0
      %v2011 = vadd.f32 %v1922, %v2010
      %v2012 = vpop.f32.mrf.mxu0
      %v2013 = vadd.f32 %v1924, %v2012
      %2014 = vmatmul.bf16.gmra.mxu0 %v1050
      %v2015 = vpop.f32.mrf.mxu0
      %v2016 = vadd.f32 %v1927, %v2015
      %v2017 = vpop.f32.mrf.mxu0
      %v2018 = vadd.f32 %v1929, %v2017
      %2019 = vmatmul.bf16.gmra.mxu0 %v1059
      %v2020 = vpop.f32.mrf.mxu0
      %v2021 = vadd.f32 %v1932, %v2020
      %v2022 = vpop.f32.mrf.mxu0
      %v2023 = vadd.f32 %v1934, %v2022
      %2024 = vmatmul.bf16.gmra.mxu0 %v1068
      %v2025 = vpop.f32.mrf.mxu0
      %v2026 = vadd.f32 %v1937, %v2025
      %v2027 = vpop.f32.mrf.mxu0
      %v2028 = vadd.f32 %v1939, %v2027
      %2029 = vmatmul.bf16.gmra.mxu0 %v1077
      %v2030 = vpop.f32.mrf.mxu0
      %v2031 = vadd.f32 %v1942, %v2030
      %v2032 = vpop.f32.mrf.mxu0
      %v2033 = vadd.f32 %v1944, %v2032
      %2034 = vmatmul.bf16.gmra.mxu0 %v1086
      %v2035 = vpop.f32.mrf.mxu0
      %v2036 = vadd.f32 %v1947, %v2035
      %v2037 = vpop.f32.mrf.mxu0
      %v2038 = vadd.f32 %v1949, %v2037
      %2039 = vmatmul.bf16.gmra.mxu0 %v1095
      %v2040 = vpop.f32.mrf.mxu0
      %v2041 = vadd.f32 %v1952, %v2040
      %v2042 = vpop.f32.mrf.mxu0
      %v2043 = vadd.f32 %v1954, %v2042
      %2044 = vmatmul.bf16.gmra.mxu0 %v1104
      %v2045 = vpop.f32.mrf.mxu0
      %v2046 = vadd.f32 %v1957, %v2045
      %v2047 = vpop.f32.mrf.mxu0
      %v2048 = vadd.f32 %v1959, %v2047
      %2049 = vmatmul.bf16.gmra.mxu0 %v1113
      %v2050 = vpop.f32.mrf.mxu0
      %v2051 = vadd.f32 %v1962, %v2050
      %v2052 = vpop.f32.mrf.mxu0
      %v2053 = vadd.f32 %v1964, %v2052
      %2054 = vmatmul.bf16.gmra.mxu0 %v1122
      %v2055 = vpop.f32.mrf.mxu0
      %v2056 = vadd.f32 %v1967, %v2055
      %v2057 = vpop.f32.mrf.mxu0
      %v2058 = vadd.f32 %v1969, %v2057
      %2059 = vdwg.mxu0
      %2060 = vmatpush.bf16.msra.mxu0 %v1599
      %2061 = vmatpush.bf16.msra.mxu0 %v1598
      %2062 = vmatpush.bf16.msra.mxu0 %v1597
      %2063 = vmatpush.bf16.msra.mxu0 %v1596
      %2064 = vmatpush.bf16.msra.mxu0 %v1595
      %2065 = vmatpush.bf16.msra.mxu0 %v1594
      %2066 = vmatpush.bf16.msra.mxu0 %v1593
      %2067 = vmatpush.bf16.msra.mxu0 %v1592
      %2068 = vmatmul.bf16.gmra.mxu0 %v988
      %v2069 = vpop.f32.mrf.mxu0
      %v2070 = vadd.f32 %v1981, %v2069
      %v2071 = vpop.f32.mrf.mxu0
      %v2072 = vadd.f32 %v1983, %v2071
      %2073 = vmatmul.bf16.gmra.mxu0 %v997
      %v2074 = vpop.f32.mrf.mxu0
      %v2075 = vadd.f32 %v1986, %v2074
      %v2076 = vpop.f32.mrf.mxu0
      %v2077 = vadd.f32 %v1988, %v2076
      %2078 = vmatmul.bf16.gmra.mxu0 %v1006
      %v2079 = vpop.f32.mrf.mxu0
      %v2080 = vadd.f32 %v1991, %v2079
      %v2081 = vpop.f32.mrf.mxu0
      %v2082 = vadd.f32 %v1993, %v2081
      %2083 = vmatmul.bf16.gmra.mxu0 %v1015
      %v2084 = vpop.f32.mrf.mxu0
      %v2085 = vadd.f32 %v1996, %v2084
      %v2086 = vpop.f32.mrf.mxu0
      %v2087 = vadd.f32 %v1998, %v2086
      %2088 = vmatmul.bf16.gmra.mxu0 %v1024
      %v2089 = vpop.f32.mrf.mxu0
      %v2090 = vadd.f32 %v2001, %v2089
      %v2091 = vpop.f32.mrf.mxu0
      %v2092 = vadd.f32 %v2003, %v2091
      %2093 = vmatmul.bf16.gmra.mxu0 %v1033
      %v2094 = vpop.f32.mrf.mxu0
      %v2095 = vadd.f32 %v2006, %v2094
      %v2096 = vpop.f32.mrf.mxu0
      %v2097 = vadd.f32 %v2008, %v2096
      %2098 = vmatmul.bf16.gmra.mxu0 %v1042
      %v2099 = vpop.f32.mrf.mxu0
      %v2100 = vadd.f32 %v2011, %v2099
      %v2101 = vpop.f32.mrf.mxu0
      %v2102 = vadd.f32 %v2013, %v2101
      %2103 = vmatmul.bf16.gmra.mxu0 %v1051
      %v2104 = vpop.f32.mrf.mxu0
      %v2105 = vadd.f32 %v2016, %v2104
      %v2106 = vpop.f32.mrf.mxu0
      %v2107 = vadd.f32 %v2018, %v2106
      %2108 = vmatmul.bf16.gmra.mxu0 %v1060
      %v2109 = vpop.f32.mrf.mxu0
      %v2110 = vadd.f32 %v2021, %v2109
      %v2111 = vpop.f32.mrf.mxu0
      %v2112 = vadd.f32 %v2023, %v2111
      %2113 = vmatmul.bf16.gmra.mxu0 %v1069
      %v2114 = vpop.f32.mrf.mxu0
      %v2115 = vadd.f32 %v2026, %v2114
      %v2116 = vpop.f32.mrf.mxu0
      %v2117 = vadd.f32 %v2028, %v2116
      %2118 = vmatmul.bf16.gmra.mxu0 %v1078
      %v2119 = vpop.f32.mrf.mxu0
      %v2120 = vadd.f32 %v2031, %v2119
      %v2121 = vpop.f32.mrf.mxu0
      %v2122 = vadd.f32 %v2033, %v2121
      %2123 = vmatmul.bf16.gmra.mxu0 %v1087
      %v2124 = vpop.f32.mrf.mxu0
      %v2125 = vadd.f32 %v2036, %v2124
      %v2126 = vpop.f32.mrf.mxu0
      %v2127 = vadd.f32 %v2038, %v2126
      %2128 = vmatmul.bf16.gmra.mxu0 %v1096
      %v2129 = vpop.f32.mrf.mxu0
      %v2130 = vadd.f32 %v2041, %v2129
      %v2131 = vpop.f32.mrf.mxu0
      %v2132 = vadd.f32 %v2043, %v2131
      %2133 = vmatmul.bf16.gmra.mxu0 %v1105
      %v2134 = vpop.f32.mrf.mxu0
      %v2135 = vadd.f32 %v2046, %v2134
      %v2136 = vpop.f32.mrf.mxu0
      %v2137 = vadd.f32 %v2048, %v2136
      %2138 = vmatmul.bf16.gmra.mxu0 %v1114
      %v2139 = vpop.f32.mrf.mxu0
      %v2140 = vadd.f32 %v2051, %v2139
      %v2141 = vpop.f32.mrf.mxu0
      %v2142 = vadd.f32 %v2053, %v2141
      %2143 = vmatmul.bf16.gmra.mxu0 %v1123
      %v2144 = vpop.f32.mrf.mxu0
      %v2145 = vadd.f32 %v2056, %v2144
      %v2146 = vpop.f32.mrf.mxu0
      %v2147 = vadd.f32 %v2058, %v2146
      %2148 = vdwg.mxu0
      %2149 = vmatpush.bf16.msra.mxu0 %v1607
      %2150 = vmatpush.bf16.msra.mxu0 %v1606
      %2151 = vmatpush.bf16.msra.mxu0 %v1605
      %2152 = vmatpush.bf16.msra.mxu0 %v1604
      %2153 = vmatpush.bf16.msra.mxu0 %v1603
      %2154 = vmatpush.bf16.msra.mxu0 %v1602
      %2155 = vmatpush.bf16.msra.mxu0 %v1601
      %2156 = vmatpush.bf16.msra.mxu0 %v1600
      %2157 = vmatmul.bf16.gmra.mxu0 %v989
      %v2158 = vpop.f32.mrf.mxu0
      %v2159 = vadd.f32 %v2070, %v2158
      %v2160 = vpop.f32.mrf.mxu0
      %v2161 = vadd.f32 %v2072, %v2160
      %2162 = vmatmul.bf16.gmra.mxu0 %v998
      %v2163 = vpop.f32.mrf.mxu0
      %v2164 = vadd.f32 %v2075, %v2163
      %v2165 = vpop.f32.mrf.mxu0
      %v2166 = vadd.f32 %v2077, %v2165
      %2167 = vmatmul.bf16.gmra.mxu0 %v1007
      %v2168 = vpop.f32.mrf.mxu0
      %v2169 = vadd.f32 %v2080, %v2168
      %v2170 = vpop.f32.mrf.mxu0
      %v2171 = vadd.f32 %v2082, %v2170
      %2172 = vmatmul.bf16.gmra.mxu0 %v1016
      %v2173 = vpop.f32.mrf.mxu0
      %v2174 = vadd.f32 %v2085, %v2173
      %v2175 = vpop.f32.mrf.mxu0
      %v2176 = vadd.f32 %v2087, %v2175
      %2177 = vmatmul.bf16.gmra.mxu0 %v1025
      %v2178 = vpop.f32.mrf.mxu0
      %v2179 = vadd.f32 %v2090, %v2178
      %v2180 = vpop.f32.mrf.mxu0
      %v2181 = vadd.f32 %v2092, %v2180
      %2182 = vmatmul.bf16.gmra.mxu0 %v1034
      %v2183 = vpop.f32.mrf.mxu0
      %v2184 = vadd.f32 %v2095, %v2183
      %v2185 = vpop.f32.mrf.mxu0
      %v2186 = vadd.f32 %v2097, %v2185
      %2187 = vmatmul.bf16.gmra.mxu0 %v1043
      %v2188 = vpop.f32.mrf.mxu0
      %v2189 = vadd.f32 %v2100, %v2188
      %v2190 = vpop.f32.mrf.mxu0
      %v2191 = vadd.f32 %v2102, %v2190
      %2192 = vmatmul.bf16.gmra.mxu0 %v1052
      %v2193 = vpop.f32.mrf.mxu0
      %v2194 = vadd.f32 %v2105, %v2193
      %v2195 = vpop.f32.mrf.mxu0
      %v2196 = vadd.f32 %v2107, %v2195
      %2197 = vmatmul.bf16.gmra.mxu0 %v1061
      %v2198 = vpop.f32.mrf.mxu0
      %v2199 = vadd.f32 %v2110, %v2198
      %v2200 = vpop.f32.mrf.mxu0
      %v2201 = vadd.f32 %v2112, %v2200
      %2202 = vmatmul.bf16.gmra.mxu0 %v1070
      %v2203 = vpop.f32.mrf.mxu0
      %v2204 = vadd.f32 %v2115, %v2203
      %v2205 = vpop.f32.mrf.mxu0
      %v2206 = vadd.f32 %v2117, %v2205
      %2207 = vmatmul.bf16.gmra.mxu0 %v1079
      %v2208 = vpop.f32.mrf.mxu0
      %v2209 = vadd.f32 %v2120, %v2208
      %v2210 = vpop.f32.mrf.mxu0
      %v2211 = vadd.f32 %v2122, %v2210
      %2212 = vmatmul.bf16.gmra.mxu0 %v1088
      %v2213 = vpop.f32.mrf.mxu0
      %v2214 = vadd.f32 %v2125, %v2213
      %v2215 = vpop.f32.mrf.mxu0
      %v2216 = vadd.f32 %v2127, %v2215
      %2217 = vmatmul.bf16.gmra.mxu0 %v1097
      %v2218 = vpop.f32.mrf.mxu0
      %v2219 = vadd.f32 %v2130, %v2218
      %v2220 = vpop.f32.mrf.mxu0
      %v2221 = vadd.f32 %v2132, %v2220
      %2222 = vmatmul.bf16.gmra.mxu0 %v1106
      %v2223 = vpop.f32.mrf.mxu0
      %v2224 = vadd.f32 %v2135, %v2223
      %v2225 = vpop.f32.mrf.mxu0
      %v2226 = vadd.f32 %v2137, %v2225
      %2227 = vmatmul.bf16.gmra.mxu0 %v1115
      %v2228 = vpop.f32.mrf.mxu0
      %v2229 = vadd.f32 %v2140, %v2228
      %v2230 = vpop.f32.mrf.mxu0
      %v2231 = vadd.f32 %v2142, %v2230
      %2232 = vmatmul.bf16.gmra.mxu0 %v1124
      %v2233 = vpop.f32.mrf.mxu0
      %v2234 = vadd.f32 %v2145, %v2233
      %v2235 = vpop.f32.mrf.mxu0
      %v2236 = vadd.f32 %v2147, %v2235
      %2237 = vdwg.mxu0
      %2238 = vmatpush.bf16.msra.mxu0 %v1615
      %2239 = vmatpush.bf16.msra.mxu0 %v1614
      %2240 = vmatpush.bf16.msra.mxu0 %v1613
      %2241 = vmatpush.bf16.msra.mxu0 %v1612
      %2242 = vmatpush.bf16.msra.mxu0 %v1611
      %2243 = vmatpush.bf16.msra.mxu0 %v1610
      %2244 = vmatpush.bf16.msra.mxu0 %v1609
      %2245 = vmatpush.bf16.msra.mxu0 %v1608
      %2246 = vmatmul.bf16.gmra.mxu0 %v990
      %v2247 = vpop.f32.mrf.mxu0
      %v2248 = vadd.f32 %v2159, %v2247
      %v2249 = vpop.f32.mrf.mxu0
      %v2250 = vadd.f32 %v2161, %v2249
      %2251 = vmatmul.bf16.gmra.mxu0 %v999
      %v2252 = vpop.f32.mrf.mxu0
      %v2253 = vadd.f32 %v2164, %v2252
      %v2254 = vpop.f32.mrf.mxu0
      %v2255 = vadd.f32 %v2166, %v2254
      %2256 = vmatmul.bf16.gmra.mxu0 %v1008
      %v2257 = vpop.f32.mrf.mxu0
      %v2258 = vadd.f32 %v2169, %v2257
      %v2259 = vpop.f32.mrf.mxu0
      %v2260 = vadd.f32 %v2171, %v2259
      %2261 = vmatmul.bf16.gmra.mxu0 %v1017
      %v2262 = vpop.f32.mrf.mxu0
      %v2263 = vadd.f32 %v2174, %v2262
      %v2264 = vpop.f32.mrf.mxu0
      %v2265 = vadd.f32 %v2176, %v2264
      %2266 = vmatmul.bf16.gmra.mxu0 %v1026
      %v2267 = vpop.f32.mrf.mxu0
      %v2268 = vadd.f32 %v2179, %v2267
      %v2269 = vpop.f32.mrf.mxu0
      %v2270 = vadd.f32 %v2181, %v2269
      %2271 = vmatmul.bf16.gmra.mxu0 %v1035
      %v2272 = vpop.f32.mrf.mxu0
      %v2273 = vadd.f32 %v2184, %v2272
      %v2274 = vpop.f32.mrf.mxu0
      %v2275 = vadd.f32 %v2186, %v2274
      %2276 = vmatmul.bf16.gmra.mxu0 %v1044
      %v2277 = vpop.f32.mrf.mxu0
      %v2278 = vadd.f32 %v2189, %v2277
      %v2279 = vpop.f32.mrf.mxu0
      %v2280 = vadd.f32 %v2191, %v2279
      %2281 = vmatmul.bf16.gmra.mxu0 %v1053
      %v2282 = vpop.f32.mrf.mxu0
      %v2283 = vadd.f32 %v2194, %v2282
      %v2284 = vpop.f32.mrf.mxu0
      %v2285 = vadd.f32 %v2196, %v2284
      %2286 = vmatmul.bf16.gmra.mxu0 %v1062
      %v2287 = vpop.f32.mrf.mxu0
      %v2288 = vadd.f32 %v2199, %v2287
      %v2289 = vpop.f32.mrf.mxu0
      %v2290 = vadd.f32 %v2201, %v2289
      %2291 = vmatmul.bf16.gmra.mxu0 %v1071
      %v2292 = vpop.f32.mrf.mxu0
      %v2293 = vadd.f32 %v2204, %v2292
      %v2294 = vpop.f32.mrf.mxu0
      %v2295 = vadd.f32 %v2206, %v2294
      %2296 = vmatmul.bf16.gmra.mxu0 %v1080
      %v2297 = vpop.f32.mrf.mxu0
      %v2298 = vadd.f32 %v2209, %v2297
      %v2299 = vpop.f32.mrf.mxu0
      %v2300 = vadd.f32 %v2211, %v2299
      %2301 = vmatmul.bf16.gmra.mxu0 %v1089
      %v2302 = vpop.f32.mrf.mxu0
      %v2303 = vadd.f32 %v2214, %v2302
      %v2304 = vpop.f32.mrf.mxu0
      %v2305 = vadd.f32 %v2216, %v2304
      %2306 = vmatmul.bf16.gmra.mxu0 %v1098
      %v2307 = vpop.f32.mrf.mxu0
      %v2308 = vadd.f32 %v2219, %v2307
      %v2309 = vpop.f32.mrf.mxu0
      %v2310 = vadd.f32 %v2221, %v2309
      %2311 = vmatmul.bf16.gmra.mxu0 %v1107
      %v2312 = vpop.f32.mrf.mxu0
      %v2313 = vadd.f32 %v2224, %v2312
      %v2314 = vpop.f32.mrf.mxu0
      %v2315 = vadd.f32 %v2226, %v2314
      %2316 = vmatmul.bf16.gmra.mxu0 %v1116
      %v2317 = vpop.f32.mrf.mxu0
      %v2318 = vadd.f32 %v2229, %v2317
      %v2319 = vpop.f32.mrf.mxu0
      %v2320 = vadd.f32 %v2231, %v2319
      %2321 = vmatmul.bf16.gmra.mxu0 %v1125
      %v2322 = vpop.f32.mrf.mxu0
      %v2323 = vadd.f32 %v2234, %v2322
      %v2324 = vpop.f32.mrf.mxu0
      %v2325 = vadd.f32 %v2236, %v2324
      %2326 = vdwg.mxu0
      %2327 = vmatpush.bf16.msra.mxu0 %v1623
      %2328 = vmatpush.bf16.msra.mxu0 %v1622
      %2329 = vmatpush.bf16.msra.mxu0 %v1621
      %2330 = vmatpush.bf16.msra.mxu0 %v1620
      %2331 = vmatpush.bf16.msra.mxu0 %v1619
      %2332 = vmatpush.bf16.msra.mxu0 %v1618
      %2333 = vmatpush.bf16.msra.mxu0 %v1617
      %2334 = vmatpush.bf16.msra.mxu0 %v1616
      %2335 = vmatmul.bf16.gmra.mxu0 %v991
      %v2336 = vpop.f32.mrf.mxu0
      %v2337 = vadd.f32 %v2248, %v2336
      %v2338 = vpop.f32.mrf.mxu0
      %v2339 = vadd.f32 %v2250, %v2338
      %2340 = vmatmul.bf16.gmra.mxu0 %v1000
      %v2341 = vpop.f32.mrf.mxu0
      %v2342 = vadd.f32 %v2253, %v2341
      %v2343 = vpop.f32.mrf.mxu0
      %v2344 = vadd.f32 %v2255, %v2343
      %2345 = vmatmul.bf16.gmra.mxu0 %v1009
      %v2346 = vpop.f32.mrf.mxu0
      %v2347 = vadd.f32 %v2258, %v2346
      %v2348 = vpop.f32.mrf.mxu0
      %v2349 = vadd.f32 %v2260, %v2348
      %2350 = vmatmul.bf16.gmra.mxu0 %v1018
      %v2351 = vpop.f32.mrf.mxu0
      %v2352 = vadd.f32 %v2263, %v2351
      %v2353 = vpop.f32.mrf.mxu0
      %v2354 = vadd.f32 %v2265, %v2353
      %2355 = vmatmul.bf16.gmra.mxu0 %v1027
      %v2356 = vpop.f32.mrf.mxu0
      %v2357 = vadd.f32 %v2268, %v2356
      %v2358 = vpop.f32.mrf.mxu0
      %v2359 = vadd.f32 %v2270, %v2358
      %2360 = vmatmul.bf16.gmra.mxu0 %v1036
      %v2361 = vpop.f32.mrf.mxu0
      %v2362 = vadd.f32 %v2273, %v2361
      %v2363 = vpop.f32.mrf.mxu0
      %v2364 = vadd.f32 %v2275, %v2363
      %2365 = vmatmul.bf16.gmra.mxu0 %v1045
      %v2366 = vpop.f32.mrf.mxu0
      %v2367 = vadd.f32 %v2278, %v2366
      %v2368 = vpop.f32.mrf.mxu0
      %v2369 = vadd.f32 %v2280, %v2368
      %2370 = vmatmul.bf16.gmra.mxu0 %v1054
      %v2371 = vpop.f32.mrf.mxu0
      %v2372 = vadd.f32 %v2283, %v2371
      %v2373 = vpop.f32.mrf.mxu0
      %v2374 = vadd.f32 %v2285, %v2373
      %2375 = vmatmul.bf16.gmra.mxu0 %v1063
      %v2376 = vpop.f32.mrf.mxu0
      %v2377 = vadd.f32 %v2288, %v2376
      %v2378 = vpop.f32.mrf.mxu0
      %v2379 = vadd.f32 %v2290, %v2378
      %2380 = vmatmul.bf16.gmra.mxu0 %v1072
      %v2381 = vpop.f32.mrf.mxu0
      %v2382 = vadd.f32 %v2293, %v2381
      %v2383 = vpop.f32.mrf.mxu0
      %v2384 = vadd.f32 %v2295, %v2383
      %2385 = vmatmul.bf16.gmra.mxu0 %v1081
      %v2386 = vpop.f32.mrf.mxu0
      %v2387 = vadd.f32 %v2298, %v2386
      %v2388 = vpop.f32.mrf.mxu0
      %v2389 = vadd.f32 %v2300, %v2388
      %2390 = vmatmul.bf16.gmra.mxu0 %v1090
      %v2391 = vpop.f32.mrf.mxu0
      %v2392 = vadd.f32 %v2303, %v2391
      %v2393 = vpop.f32.mrf.mxu0
      %v2394 = vadd.f32 %v2305, %v2393
      %2395 = vmatmul.bf16.gmra.mxu0 %v1099
      %v2396 = vpop.f32.mrf.mxu0
      %v2397 = vadd.f32 %v2308, %v2396
      %v2398 = vpop.f32.mrf.mxu0
      %v2399 = vadd.f32 %v2310, %v2398
      %2400 = vmatmul.bf16.gmra.mxu0 %v1108
      %v2401 = vpop.f32.mrf.mxu0
      %v2402 = vadd.f32 %v2313, %v2401
      %v2403 = vpop.f32.mrf.mxu0
      %v2404 = vadd.f32 %v2315, %v2403
      %2405 = vmatmul.bf16.gmra.mxu0 %v1117
      %v2406 = vpop.f32.mrf.mxu0
      %v2407 = vadd.f32 %v2318, %v2406
      %v2408 = vpop.f32.mrf.mxu0
      %v2409 = vadd.f32 %v2320, %v2408
      %2410 = vmatmul.bf16.gmra.mxu0 %v1126
      %v2411 = vpop.f32.mrf.mxu0
      %v2412 = vadd.f32 %v2323, %v2411
      %v2413 = vpop.f32.mrf.mxu0
      %v2414 = vadd.f32 %v2325, %v2413
      %2415 = vdwg.mxu0
      %2416 = vmatpush.bf16.msra.mxu0 %v1631
      %2417 = vmatpush.bf16.msra.mxu0 %v1630
      %2418 = vmatpush.bf16.msra.mxu0 %v1629
      %2419 = vmatpush.bf16.msra.mxu0 %v1628
      %2420 = vmatpush.bf16.msra.mxu0 %v1627
      %2421 = vmatpush.bf16.msra.mxu0 %v1626
      %2422 = vmatpush.bf16.msra.mxu0 %v1625
      %2423 = vmatpush.bf16.msra.mxu0 %v1624
      %2424 = vmatmul.bf16.gmra.mxu0 %v992
      %v2425 = vpop.f32.mrf.mxu0
      %v2426 = vadd.f32 %v2337, %v2425
      %v2427 = vpop.f32.mrf.mxu0
      %v2428 = vadd.f32 %v2339, %v2427
      %2429 = vmatmul.bf16.gmra.mxu0 %v1001
      %v2430 = vpop.f32.mrf.mxu0
      %v2431 = vadd.f32 %v2342, %v2430
      %v2432 = vpop.f32.mrf.mxu0
      %v2433 = vadd.f32 %v2344, %v2432
      %2434 = vmatmul.bf16.gmra.mxu0 %v1010
      %v2435 = vpop.f32.mrf.mxu0
      %v2436 = vadd.f32 %v2347, %v2435
      %v2437 = vpop.f32.mrf.mxu0
      %v2438 = vadd.f32 %v2349, %v2437
      %2439 = vmatmul.bf16.gmra.mxu0 %v1019
      %v2440 = vpop.f32.mrf.mxu0
      %v2441 = vadd.f32 %v2352, %v2440
      %v2442 = vpop.f32.mrf.mxu0
      %v2443 = vadd.f32 %v2354, %v2442
      %2444 = vmatmul.bf16.gmra.mxu0 %v1028
      %v2445 = vpop.f32.mrf.mxu0
      %v2446 = vadd.f32 %v2357, %v2445
      %v2447 = vpop.f32.mrf.mxu0
      %v2448 = vadd.f32 %v2359, %v2447
      %2449 = vmatmul.bf16.gmra.mxu0 %v1037
      %v2450 = vpop.f32.mrf.mxu0
      %v2451 = vadd.f32 %v2362, %v2450
      %v2452 = vpop.f32.mrf.mxu0
      %v2453 = vadd.f32 %v2364, %v2452
      %2454 = vmatmul.bf16.gmra.mxu0 %v1046
      %v2455 = vpop.f32.mrf.mxu0
      %v2456 = vadd.f32 %v2367, %v2455
      %v2457 = vpop.f32.mrf.mxu0
      %v2458 = vadd.f32 %v2369, %v2457
      %2459 = vmatmul.bf16.gmra.mxu0 %v1055
      %v2460 = vpop.f32.mrf.mxu0
      %v2461 = vadd.f32 %v2372, %v2460
      %v2462 = vpop.f32.mrf.mxu0
      %v2463 = vadd.f32 %v2374, %v2462
      %2464 = vmatmul.bf16.gmra.mxu0 %v1064
      %v2465 = vpop.f32.mrf.mxu0
      %v2466 = vadd.f32 %v2377, %v2465
      %v2467 = vpop.f32.mrf.mxu0
      %v2468 = vadd.f32 %v2379, %v2467
      %2469 = vmatmul.bf16.gmra.mxu0 %v1073
      %v2470 = vpop.f32.mrf.mxu0
      %v2471 = vadd.f32 %v2382, %v2470
      %v2472 = vpop.f32.mrf.mxu0
      %v2473 = vadd.f32 %v2384, %v2472
      %2474 = vmatmul.bf16.gmra.mxu0 %v1082
      %v2475 = vpop.f32.mrf.mxu0
      %v2476 = vadd.f32 %v2387, %v2475
      %v2477 = vpop.f32.mrf.mxu0
      %v2478 = vadd.f32 %v2389, %v2477
      %2479 = vmatmul.bf16.gmra.mxu0 %v1091
      %v2480 = vpop.f32.mrf.mxu0
      %v2481 = vadd.f32 %v2392, %v2480
      %v2482 = vpop.f32.mrf.mxu0
      %v2483 = vadd.f32 %v2394, %v2482
      %2484 = vmatmul.bf16.gmra.mxu0 %v1100
      %v2485 = vpop.f32.mrf.mxu0
      %v2486 = vadd.f32 %v2397, %v2485
      %v2487 = vpop.f32.mrf.mxu0
      %v2488 = vadd.f32 %v2399, %v2487
      %2489 = vmatmul.bf16.gmra.mxu0 %v1109
      %v2490 = vpop.f32.mrf.mxu0
      %v2491 = vadd.f32 %v2402, %v2490
      %v2492 = vpop.f32.mrf.mxu0
      %v2493 = vadd.f32 %v2404, %v2492
      %2494 = vmatmul.bf16.gmra.mxu0 %v1118
      %v2495 = vpop.f32.mrf.mxu0
      %v2496 = vadd.f32 %v2407, %v2495
      %v2497 = vpop.f32.mrf.mxu0
      %v2498 = vadd.f32 %v2409, %v2497
      %2499 = vmatmul.bf16.gmra.mxu0 %v1127
      %v2500 = vpop.f32.mrf.mxu0
      %v2501 = vadd.f32 %v2412, %v2500
      %v2502 = vpop.f32.mrf.mxu0
      %v2503 = vadd.f32 %v2414, %v2502
      %2504 = vdwg.mxu0
      %v2505 = vmax.f32 %v2426, 0.0
      %v2506 = vmax.f32 %v2428, 0.0
      %v2507 = vmax.f32 %v2431, 0.0
      %v2508 = vmax.f32 %v2433, 0.0
      %v2509 = vmax.f32 %v2436, 0.0
      %v2510 = vmax.f32 %v2438, 0.0
      %v2511 = vmax.f32 %v2441, 0.0
      %v2512 = vmax.f32 %v2443, 0.0
      %v2513 = vmax.f32 %v2446, 0.0
      %v2514 = vmax.f32 %v2448, 0.0
      %v2515 = vmax.f32 %v2451, 0.0
      %v2516 = vmax.f32 %v2453, 0.0
      %v2517 = vmax.f32 %v2456, 0.0
      %v2518 = vmax.f32 %v2458, 0.0
      %v2519 = vmax.f32 %v2461, 0.0
      %v2520 = vmax.f32 %v2463, 0.0
      %v2521 = vmax.f32 %v2466, 0.0
      %v2522 = vmax.f32 %v2468, 0.0
      %v2523 = vmax.f32 %v2471, 0.0
      %v2524 = vmax.f32 %v2473, 0.0
      %v2525 = vmax.f32 %v2476, 0.0
      %v2526 = vmax.f32 %v2478, 0.0
      %v2527 = vmax.f32 %v2481, 0.0
      %v2528 = vmax.f32 %v2483, 0.0
      %v2529 = vmax.f32 %v2486, 0.0
      %v2530 = vmax.f32 %v2488, 0.0
      %v2531 = vmax.f32 %v2491, 0.0
      %v2532 = vmax.f32 %v2493, 0.0
      %v2533 = vmax.f32 %v2496, 0.0
      %v2534 = vmax.f32 %v2498, 0.0
      %v2535 = vmax.f32 %v2501, 0.0
      %v2536 = vmax.f32 %v2503, 0.0
      %v2537 = vpack.c.bf16 %v2505, %v2505
      %v2538 = vpack.c.bf16 %v2506, %v2506
      %v2539 = vpack.c.bf16 %v2507, %v2507
      %v2540 = vpack.c.bf16 %v2508, %v2508
      %v2541 = vpack.c.bf16 %v2509, %v2509
      %v2542 = vpack.c.bf16 %v2510, %v2510
      %v2543 = vpack.c.bf16 %v2511, %v2511
      %v2544 = vpack.c.bf16 %v2512, %v2512
      %v2545 = vpack.c.bf16 %v2513, %v2513
      %v2546 = vpack.c.bf16 %v2514, %v2514
      %v2547 = vpack.c.bf16 %v2515, %v2515
      %v2548 = vpack.c.bf16 %v2516, %v2516
      %v2549 = vpack.c.bf16 %v2517, %v2517
      %v2550 = vpack.c.bf16 %v2518, %v2518
      %v2551 = vpack.c.bf16 %v2519, %v2519
      %v2552 = vpack.c.bf16 %v2520, %v2520
      %v2553 = vpack.c.bf16 %v2521, %v2521
      %v2554 = vpack.c.bf16 %v2522, %v2522
      %v2555 = vpack.c.bf16 %v2523, %v2523
      %v2556 = vpack.c.bf16 %v2524, %v2524
      %v2557 = vpack.c.bf16 %v2525, %v2525
      %v2558 = vpack.c.bf16 %v2526, %v2526
      %v2559 = vpack.c.bf16 %v2527, %v2527
      %v2560 = vpack.c.bf16 %v2528, %v2528
      %v2561 = vpack.c.bf16 %v2529, %v2529
      %v2562 = vpack.c.bf16 %v2530, %v2530
      %v2563 = vpack.c.bf16 %v2531, %v2531
      %v2564 = vpack.c.bf16 %v2532, %v2532
      %v2565 = vpack.c.bf16 %v2533, %v2533
      %v2566 = vpack.c.bf16 %v2534, %v2534
      %v2567 = vpack.c.bf16 %v2535, %v2535
      %v2568 = vpack.c.bf16 %v2536, %v2536
      %2569 = vst [vmem:[%s226] sm:$0xf] %v2537
      %2570 = vst [vmem:[%s226 + $0x4] sm:$0xf] %v2538
      %2571 = vst [vmem:[%s226 + $0x8] sm:$0xf] %v2539
      %2572 = vst [vmem:[%s226 + $0xc] sm:$0xf] %v2540
      %2573 = vst [vmem:[%s226 + $0x10] sm:$0xf] %v2541
      %2574 = vst [vmem:[%s226 + $0x14] sm:$0xf] %v2542
      %2575 = vst [vmem:[%s226 + $0x18] sm:$0xf] %v2543
      %2576 = vst [vmem:[%s226 + $0x1c] sm:$0xf] %v2544
      %2577 = vst [vmem:[%s226 + $0x20] sm:$0xf] %v2545
      %2578 = vst [vmem:[%s226 + $0x24] sm:$0xf] %v2546
      %2579 = vst [vmem:[%s226 + $0x28] sm:$0xf] %v2547
      %2580 = vst [vmem:[%s226 + $0x2c] sm:$0xf] %v2548
      %2581 = vst [vmem:[%s226 + $0x30] sm:$0xf] %v2549
      %2582 = vst [vmem:[%s226 + $0x34] sm:$0xf] %v2550
      %2583 = vst [vmem:[%s226 + $0x38] sm:$0xf] %v2551
      %2584 = vst [vmem:[%s226 + $0x3c] sm:$0xf] %v2552
      %2585 = vst [vmem:[%s226 + $0x40] sm:$0xf] %v2553
      %2586 = vst [vmem:[%s226 + $0x44] sm:$0xf] %v2554
      %2587 = vst [vmem:[%s226 + $0x48] sm:$0xf] %v2555
      %2588 = vst [vmem:[%s226 + $0x4c] sm:$0xf] %v2556
      %2589 = vst [vmem:[%s226 + $0x50] sm:$0xf] %v2557
      %2590 = vst [vmem:[%s226 + $0x54] sm:$0xf] %v2558
      %2591 = vst [vmem:[%s226 + $0x58] sm:$0xf] %v2559
      %2592 = vst [vmem:[%s226 + $0x5c] sm:$0xf] %v2560
      %2593 = vst [vmem:[%s226 + $0x60] sm:$0xf] %v2561
      %2594 = vst [vmem:[%s226 + $0x64] sm:$0xf] %v2562
      %2595 = vst [vmem:[%s226 + $0x68] sm:$0xf] %v2563
      %2596 = vst [vmem:[%s226 + $0x6c] sm:$0xf] %v2564
      %2597 = vst [vmem:[%s226 + $0x70] sm:$0xf] %v2565
      %2598 = vst [vmem:[%s226 + $0x74] sm:$0xf] %v2566
      %2599 = vst [vmem:[%s226 + $0x78] sm:$0xf] %v2567
      %2600 = vst [vmem:[%s226 + $0x7c] sm:$0xf] %v2568
      %s2601 = smul.u32 32, %s18
      %p2602 = scmp.lt.s32.totalorder %s2601, 63
      %s2603 = scalar_select %p2602, %s2601, 63
      %p2604 = scmp.lt.s32.totalorder %s19, 0
      %s2605 = scalar_select %p2604, %s19, 0
      %s2606 = sadd.s32 %s2605, %s2603
      %s2607 = smul.addr %s2606, 4
      %s2608 = scalar_lea.vmem %s3, %s2607
      // Predicated region
      $region33: #{_lambda_.19} parent=31 // pred_check
        %p2609 = pneg %p124
      $region34: #{_lambda_.19} parent=31 // pred_check_branch
        %2611 = sbr.rel (%p2609) target = $region36
      $region35: #{_lambda_.19} parent=31 // pred_region
        %s2612 = smul.u32 32, %s18
      $region36: #{_lambda_.19} parent=31 // pred_fallthru
        _
    $region32: #{_lambda_.19} parent=5 // pred_fallthru
      _
    %p2613 = scmp.le.s32.totalorder 2, %s9
    // Predicated region
    $region37: #{_lambda_.19} parent=5 // pred_check
      %p2614 = pneg %p2613
    $region38: #{_lambda_.19} parent=5 // pred_check_branch
      %2616 = sbr.rel (%p2614) target = $region40
    $region39: #{_lambda_.19} parent=5 // pred_region
      %s2617 = ssub.s32 %s9, 2
      // Predicated region
      $region41: #{_lambda_.19} parent=39 // pred_check
        %p2618 = pneg %p130
      $region42: #{_lambda_.19} parent=39 // pred_check_branch
        %2620 = sbr.rel (%p2618) target = $region44
      $region43: #{_lambda_.19} parent=39 // pred_region
        %s2621 = smul.u32 32, %s20
        %p2622 = scmp.lt.s32.totalorder %s2621, 63
        %s2623 = scalar_select %p2622, %s2621, 63
        %p2624 = scmp.lt.s32.totalorder %s21, 0
        %s2625 = scalar_select %p2624, %s21, 0
        %s2626 = sadd.s32 %s2625, %s2623
        %s2627 = smul.addr %s2626, 4
        %s2628 = scalar_lea.vmem %s3, %s2627
      $region44: #{_lambda_.19} parent=39 // pred_fallthru
        _
    $region40: #{_lambda_.19} parent=5 // pred_fallthru
      _
  $region6: #{_lambda_.19} parent=0 // loop_footer
    %s13 = sadd.s32 1, %s9
  $region7: #{_lambda_.19} parent=0 // loop_footer_branch
    %8 = sbr.rel target = $region3
  $region8: #{_lambda_.19} parent=0 // loop_exit
    _

// kernel: _lambda_.20
$region0: #{_lambda_.20}
  #allocation0 [shape = 'u32[]', space=smem, size = 0x4, offset = 0x4, fixed_abs, tag = 'smem constant byte address 0x4 - core index']
  #allocation1 [shape = 'u32[72,128]{1,0:T(1,128)}', space=vmem, size = 0x9000, scoped, tag = 'internal scratch']
  %s0 = inlined_call_operand.vmem [shape: bf16[512,128], index: 0, kind: input, shape index: {}]
  %s1 = inlined_call_operand.vmem [shape: bf16[128,128], index: 1, kind: input, shape index: {}]
  %s2 = inlined_call_operand.vmem [shape: f32[1,128], index: 2, kind: input, shape index: {}]
  %s3 = inlined_call_operand.vmem [shape: bf16[512,128], index: 3, kind: input, shape index: {}]
  %s4 = inlined_call_operand.vmem [shape: bf16[512,128], index: 4, kind: output, shape index: {}]
  %s5 = sld [smem:[#allocation0]]
  $region49: #{_lambda_.20} parent=0
    _
  %s7 = ssub.s32 1, %s5
  %s8 = scalar_select 0, %s7, %s5
  loop: start=0, step=1, limit=4
  $region2: #{_lambda_.20} parent=0 // loop_pre_header
    _
  $region3: #{_lambda_.20} parent=0 // loop_header
    %s10 = sphi 0, %s14
    %p11 = scmp.ge.s32.totalorder %s10, 4
    %s17 = sphi 0, %s29
    %s18 = sphi 0, %s25
    %s19 = sphi 0, %s17
    %s20 = sphi 0, %s18
    %s21 = sphi 0, %s19
    %s22 = sphi 0, %s20
    %s32 = sphi 0, %s34
    %s35 = sphi 0, %s32
    %s36 = sphi 0, %s35
    %s52 = sphi 0, %s36
    %s58 = sphi 0, %s60
    %s61 = sphi 0, %s58
    %s62 = sphi 0, %s61
    %s78 = sphi 0, %s62
    %s84 = sphi 0, %s86
    %s87 = sphi 0, %s84
    %s88 = sphi 0, %s87
    %s104 = sphi 0, %s88
    %s112 = sphi 0, %s114
    %s115 = sphi 0, %s112
    %s116 = sphi 0, %s115
    %s132 = sphi 0, %s116
    %s140 = sphi 0, %s142
    %s143 = sphi 0, %s140
    %s144 = sphi 0, %s143
    %s160 = sphi 0, %s144
  $region4: #{_lambda_.20} parent=0 // loop_header_branch
    %13 = sbr.rel (%p11) target = $region8
  $region5: #{_lambda_.20} parent=0 // loop_body
    %s15 = ssub.s32 %s10, 1
    %s16 = ssub.s32 %s10, 2
    %s23 = sadd.s32 1, %s18
    %p24 = scmp.ge.s32.totalorder %s23, 1
    %s25 = scalar_select %p24, 0, %s23
    %s26 = sadd.s32 1, %s17
    %s27 = scalar_select %p24, %s26, %s17
    %p28 = scmp.ge.s32.totalorder %s27, 2
    %s29 = scalar_select %p28, 0, %s27
    %s30 = ssub.s32 %s17, %s29
    %p31 = scmp.eq.s32.totalorder %s30, 0
    %s33 = sadd.s32 %s32, 1
    %s34 = scalar_select %p31, %s32, %s33
    %p37 = pneg %p31
    %p38 = scmp.eq.s32.totalorder %s10, 1
    %p39 = por %p37, %p38
    %p40 = scmp.ne.s32.totalorder %s32, %s35
    %p41 = scmp.eq.s32.totalorder %s10, 0
    %p42 = por %p40, %p41
    %p43 = scmp.ne.s32.totalorder %s32, %s35
    %p44 = scmp.eq.s32.totalorder %s15, 1
    %p45 = por %p43, %p44
    %p46 = scmp.ne.s32.totalorder %s35, %s36
    %p47 = scmp.eq.s32.totalorder %s15, 0
    %p48 = por %p46, %p47
    %p49 = scmp.ne.s32.totalorder %s35, %s36
    %p50 = scmp.eq.s32.totalorder %s16, 1
    %p51 = por %p49, %p50
    %p53 = scmp.ne.s32.totalorder %s36, %s52
    %p54 = scmp.eq.s32.totalorder %s16, 0
    %p55 = por %p53, %p54
    %s56 = ssub.s32 %s18, %s25
    %p57 = scmp.eq.s32.totalorder %s56, 0
    %s59 = sadd.s32 %s58, 1
    %s60 = scalar_select %p57, %s58, %s59
    %p63 = pneg %p57
    %p64 = scmp.eq.s32.totalorder %s10, 1
    %p65 = por %p63, %p64
    %p66 = scmp.ne.s32.totalorder %s58, %s61
    %p67 = scmp.eq.s32.totalorder %s10, 0
    %p68 = por %p66, %p67
    %p69 = scmp.ne.s32.totalorder %s58, %s61
    %p70 = scmp.eq.s32.totalorder %s15, 1
    %p71 = por %p69, %p70
    %p72 = scmp.ne.s32.totalorder %s61, %s62
    %p73 = scmp.eq.s32.totalorder %s15, 0
    %p74 = por %p72, %p73
    %p75 = scmp.ne.s32.totalorder %s61, %s62
    %p76 = scmp.eq.s32.totalorder %s16, 1
    %p77 = por %p75, %p76
    %p79 = scmp.ne.s32.totalorder %s62, %s78
    %p80 = scmp.eq.s32.totalorder %s16, 0
    %p81 = por %p79, %p80
    %s82 = ssub.s32 %s18, %s25
    %p83 = scmp.eq.s32.totalorder %s82, 0
    %s85 = sadd.s32 %s84, 1
    %s86 = scalar_select %p83, %s84, %s85
    %p89 = pneg %p83
    %p90 = scmp.eq.s32.totalorder %s10, 1
    %p91 = por %p89, %p90
    %p92 = scmp.ne.s32.totalorder %s84, %s87
    %p93 = scmp.eq.s32.totalorder %s10, 0
    %p94 = por %p92, %p93
    %p95 = scmp.ne.s32.totalorder %s84, %s87
    %p96 = scmp.eq.s32.totalorder %s15, 1
    %p97 = por %p95, %p96
    %p98 = scmp.ne.s32.totalorder %s87, %s88
    %p99 = scmp.eq.s32.totalorder %s15, 0
    %p100 = por %p98, %p99
    %p101 = scmp.ne.s32.totalorder %s87, %s88
    %p102 = scmp.eq.s32.totalorder %s16, 1
    %p103 = por %p101, %p102
    %p105 = scmp.ne.s32.totalorder %s88, %s104
    %p106 = scmp.eq.s32.totalorder %s16, 0
    %p107 = por %p105, %p106
    %s108 = ssub.s32 %s17, %s29
    %s109 = ssub.s32 %s18, %s25
    %s110 = sor.u32 %s108, %s109
    %p111 = scmp.eq.s32.totalorder %s110, 0
    %s113 = sadd.s32 %s112, 1
    %s114 = scalar_select %p111, %s112, %s113
    %p117 = pneg %p111
    %p118 = scmp.eq.s32.totalorder %s10, 1
    %p119 = por %p117, %p118
    %p120 = scmp.ne.s32.totalorder %s112, %s115
    %p121 = scmp.eq.s32.totalorder %s10, 0
    %p122 = por %p120, %p121
    %p123 = scmp.ne.s32.totalorder %s112, %s115
    %p124 = scmp.eq.s32.totalorder %s15, 1
    %p125 = por %p123, %p124
    %p126 = scmp.ne.s32.totalorder %s115, %s116
    %p127 = scmp.eq.s32.totalorder %s15, 0
    %p128 = por %p126, %p127
    %p129 = scmp.ne.s32.totalorder %s115, %s116
    %p130 = scmp.eq.s32.totalorder %s16, 1
    %p131 = por %p129, %p130
    %p133 = scmp.ne.s32.totalorder %s116, %s132
    %p134 = scmp.eq.s32.totalorder %s16, 0
    %p135 = por %p133, %p134
    %s136 = ssub.s32 %s17, %s29
    %s137 = ssub.s32 %s18, %s25
    %s138 = sor.u32 %s136, %s137
    %p139 = scmp.eq.s32.totalorder %s138, 0
    %s141 = sadd.s32 %s140, 1
    %s142 = scalar_select %p139, %s140, %s141
    %p145 = pneg %p139
    %p146 = scmp.eq.s32.totalorder %s10, 1
    %p147 = por %p145, %p146
    %p148 = scmp.ne.s32.totalorder %s140, %s143
    %p149 = scmp.eq.s32.totalorder %s10, 0
    %p150 = por %p148, %p149
    %p151 = scmp.ne.s32.totalorder %s140, %s143
    %p152 = scmp.eq.s32.totalorder %s15, 1
    %p153 = por %p151, %p152
    %p154 = scmp.ne.s32.totalorder %s143, %s144
    %p155 = scmp.eq.s32.totalorder %s15, 0
    %p156 = por %p154, %p155
    %p157 = scmp.ne.s32.totalorder %s143, %s144
    %p158 = scmp.eq.s32.totalorder %s16, 1
    %p159 = por %p157, %p158
    %p161 = scmp.ne.s32.totalorder %s144, %s160
    %p162 = scmp.eq.s32.totalorder %s16, 0
    %p163 = por %p161, %p162
    %p164 = scmp.le.s32.totalorder 1, %s10
    %p165 = scmp.lt.s32.totalorder %s10, 3
    %p166 = pnand %p164, %p165
    %p167 = pneg %p166
    // Predicated region
    $region9: #{_lambda_.20} parent=5 // pred_check
      _
    $region10: #{_lambda_.20} parent=5 // pred_check_branch
      %169 = sbr.rel (%p166) target = $region12
    $region11: #{_lambda_.20} parent=5 // pred_region
      %s170 = ssub.s32 %s10, 1
      // Predicated region
      $region13: #{_lambda_.20} parent=11 // pred_check
        %p171 = pneg %p74
      $region14: #{_lambda_.20} parent=11 // pred_check_branch
        %173 = sbr.rel (%p171) target = $region16
      $region15: #{_lambda_.20} parent=11 // pred_region
        %p174 = scmp.lt.s32.totalorder %s20, 0
        %s175 = scalar_select %p174, %s20, 0
        %s176 = smul.addr %s175, 4
        %s177 = scalar_lea.vmem %s1, %s176
      $region16: #{_lambda_.20} parent=11 // pred_fallthru
        _
      // Predicated region
      $region17: #{_lambda_.20} parent=11 // pred_check
        %p178 = pneg %p100
      $region18: #{_lambda_.20} parent=11 // pred_check_branch
        %180 = sbr.rel (%p178) target = $region20
      $region19: #{_lambda_.20} parent=11 // pred_region
        %p181 = scmp.lt.s32.totalorder %s20, 0
        %s182 = scalar_select %p181, %s20, 0
        %s183 = scalar_lea.vmem %s2, %s182
      $region20: #{_lambda_.20} parent=11 // pred_fallthru
        _
    $region12: #{_lambda_.20} parent=5 // pred_fallthru
      _
    %p184 = scmp.lt.s32.totalorder %s10, 2
    // Predicated region
    $region21: #{_lambda_.20} parent=5 // pred_check
      %p185 = pneg %p184
    $region22: #{_lambda_.20} parent=5 // pred_check_branch
      %187 = sbr.rel (%p185) target = $region24
    $region23: #{_lambda_.20} parent=5 // pred_region
      // Predicated region
      $region25: #{_lambda_.20} parent=23 // pred_check
        %p188 = pneg %p42
      $region26: #{_lambda_.20} parent=23 // pred_check_branch
        %190 = sbr.rel (%p188) target = $region28
      $region27: #{_lambda_.20} parent=23 // pred_region
        %s191 = smul.u32 32, %s17
        %p192 = scmp.lt.s32.totalorder %s191, 63
        %s193 = scalar_select %p192, %s191, 63
        %s194 = smul.addr %s193, 4
        %s195 = scalar_lea.vmem %s0, %s194
        %s196 = smul.u32 32, %s17
      $region28: #{_lambda_.20} parent=23 // pred_fallthru
        _
      // Predicated region
      $region29: #{_lambda_.20} parent=23 // pred_check
        %p197 = pneg %p122
      $region30: #{_lambda_.20} parent=23 // pred_check_branch
        %199 = sbr.rel (%p197) target = $region32
      $region31: #{_lambda_.20} parent=23 // pred_region
        %s200 = smul.u32 32, %s17
        %p201 = scmp.lt.s32.totalorder %s200, 63
        %s202 = scalar_select %p201, %s200, 63
        %p203 = scmp.lt.s32.totalorder %s18, 0
        %s204 = scalar_select %p203, %s18, 0
        %s205 = sadd.s32 %s204, %s202
        %s206 = smul.addr %s205, 4
        %s207 = scalar_lea.vmem %s3, %s206
        %s208 = smul.u32 32, %s17
      $region32: #{_lambda_.20} parent=23 // pred_fallthru
        _
    $region24: #{_lambda_.20} parent=5 // pred_fallthru
      _
    %p209 = scmp.le.s32.totalorder 1, %s10
    %p210 = scmp.lt.s32.totalorder %s10, 3
    %p211 = pnand %p209, %p210
    %p212 = pneg %p211
    // Predicated region
    $region33: #{_lambda_.20} parent=5 // pred_check
      _
    $region34: #{_lambda_.20} parent=5 // pred_check_branch
      %214 = sbr.rel (%p211) target = $region36
    $region35: #{_lambda_.20} parent=5 // pred_region
      %s215 = ssub.s32 %s10, 1
      %s216 = smul.u32 32, %s19
      %p217 = scmp.lt.s32.totalorder %s216, 63
      %s218 = scalar_select %p217, %s216, 63
      %s219 = smul.addr %s218, 4
      %s220 = scalar_lea.vmem %s0, %s219
      %p221 = pneg %p48
      %p222 = pneg %p45
      %p223 = scmp.lt.s32.totalorder %s20, 0
      %s224 = scalar_select %p223, %s20, 0
      %s225 = smul.addr %s224, 4
      %s226 = scalar_lea.vmem %s1, %s225
      %p227 = pneg %p74
      %p228 = pneg %p71
      %p229 = scmp.lt.s32.totalorder %s20, 0
      %s230 = scalar_select %p229, %s20, 0
      %s231 = scalar_lea.vmem %s2, %s230
      %p232 = pneg %p100
      %p233 = pneg %p97
      %s234 = smul.u32 32, %s19
      %p235 = scmp.lt.s32.totalorder %s234, 63
      %s236 = scalar_select %p235, %s234, 63
      %p237 = scmp.lt.s32.totalorder %s20, 0
      %s238 = scalar_select %p237, %s20, 0
      %s239 = sadd.s32 %s238, %s236
      %s240 = smul.addr %s239, 4
      %s241 = scalar_lea.vmem %s3, %s240
      %p242 = pneg %p128
      %p243 = pneg %p125
      %p244 = pneg %p156
      %p245 = pneg %p153
      %s246 = smul.u32 32, %s19
      %p247 = scmp.lt.s32.totalorder %s246, 63
      %s248 = scalar_select %p247, %s246, 63
      %p249 = scmp.lt.s32.totalorder %s20, 0
      %s250 = scalar_select %p249, %s20, 0
      %s251 = sadd.s32 %s250, %s248
      %s252 = smul.addr %s251, 4
      %s253 = scalar_lea.vmem %s4, %s252
      %s254 = smul.u32 32, %s19
      %p255 = scmp.lt.s32.totalorder %s254, 63
      %s256 = scalar_select %p255, %s254, 63
      %s257 = smul.addr %s256, 4
      %s258 = scalar_lea.vmem %s0, %s257
      %s259 = smul.u32 32, %s19
      %p260 = scmp.lt.s32.totalorder %s20, 0
      %s261 = scalar_select %p260, %s20, 0
      %s262 = smul.addr %s261, 4
      %s263 = scalar_lea.vmem %s1, %s262
      %p264 = scmp.lt.s32.totalorder %s20, 0
      %s265 = scalar_select %p264, %s20, 0
      %s266 = scalar_lea.vmem %s2, %s265
      %s267 = smul.u32 32, %s19
      %p268 = scmp.lt.s32.totalorder %s267, 63
      %s269 = scalar_select %p268, %s267, 63
      %p270 = scmp.lt.s32.totalorder %s20, 0
      %s271 = scalar_select %p270, %s20, 0
      %s272 = sadd.s32 %s271, %s269
      %s273 = smul.addr %s272, 4
      %s274 = scalar_lea.vmem %s3, %s273
      %s275 = smul.u32 32, %s19
      %s276 = smul.u32 32, %s19
      %p277 = scmp.lt.s32.totalorder %s276, 63
      %s278 = scalar_select %p277, %s276, 63
      %p279 = scmp.lt.s32.totalorder %s20, 0
      %s280 = scalar_select %p279, %s20, 0
      %s281 = sadd.s32 %s280, %s278
      %s282 = smul.addr %s281, 4
      %s283 = scalar_lea.vmem %s4, %s282
      %s284 = smul.u32 32, %s19
      %v285 = vld [vmem:[%s258] sm:$0xf]
      %v286 = vld [vmem:[%s258 + $0x4] sm:$0xf]
      %v287 = vld [vmem:[%s258 + $0x8] sm:$0xf]
      %v288 = vld [vmem:[%s258 + $0xc] sm:$0xf]
      %v289 = vld [vmem:[%s258 + $0x10] sm:$0xf]
      %v290 = vld [vmem:[%s258 + $0x14] sm:$0xf]
      %v291 = vld [vmem:[%s258 + $0x18] sm:$0xf]
      %v292 = vld [vmem:[%s258 + $0x1c] sm:$0xf]
      %v293 = vld [vmem:[%s258 + $0x20] sm:$0xf]
      %v294 = vld [vmem:[%s258 + $0x24] sm:$0xf]
      %v295 = vld [vmem:[%s258 + $0x28] sm:$0xf]
      %v296 = vld [vmem:[%s258 + $0x2c] sm:$0xf]
      %v297 = vld [vmem:[%s258 + $0x30] sm:$0xf]
      %v298 = vld [vmem:[%s258 + $0x34] sm:$0xf]
      %v299 = vld [vmem:[%s258 + $0x38] sm:$0xf]
      %v300 = vld [vmem:[%s258 + $0x3c] sm:$0xf]
      %v301 = vld [vmem:[%s258 + $0x40] sm:$0xf]
      %v302 = vld [vmem:[%s258 + $0x44] sm:$0xf]
      %v303 = vld [vmem:[%s258 + $0x48] sm:$0xf]
      %v304 = vld [vmem:[%s258 + $0x4c] sm:$0xf]
      %v305 = vld [vmem:[%s258 + $0x50] sm:$0xf]
      %v306 = vld [vmem:[%s258 + $0x54] sm:$0xf]
      %v307 = vld [vmem:[%s258 + $0x58] sm:$0xf]
      %v308 = vld [vmem:[%s258 + $0x5c] sm:$0xf]
      %v309 = vld [vmem:[%s258 + $0x60] sm:$0xf]
      %v310 = vld [vmem:[%s258 + $0x64] sm:$0xf]
      %v311 = vld [vmem:[%s258 + $0x68] sm:$0xf]
      %v312 = vld [vmem:[%s258 + $0x6c] sm:$0xf]
      %v313 = vld [vmem:[%s258 + $0x70] sm:$0xf]
      %v314 = vld [vmem:[%s258 + $0x74] sm:$0xf]
      %v315 = vld [vmem:[%s258 + $0x78] sm:$0xf]
      %v316 = vld [vmem:[%s258 + $0x7c] sm:$0xf]
      %v317 = vld [vmem:[%s263] sm:$0xf]
      %v318 = vld [vmem:[%s263 + $0x4] sm:$0xf]
      %v319 = vld [vmem:[%s263 + $0x8] sm:$0xf]
      %v320 = vld [vmem:[%s263 + $0xc] sm:$0xf]
      %v321 = vld [vmem:[%s263 + $0x10] sm:$0xf]
      %v322 = vld [vmem:[%s263 + $0x14] sm:$0xf]
      %v323 = vld [vmem:[%s263 + $0x18] sm:$0xf]
      %v324 = vld [vmem:[%s263 + $0x1c] sm:$0xf]
      %v325 = vld [vmem:[%s263 + $0x20] sm:$0xf]
      %v326 = vld [vmem:[%s263 + $0x24] sm:$0xf]
      %v327 = vld [vmem:[%s263 + $0x28] sm:$0xf]
      %v328 = vld [vmem:[%s263 + $0x2c] sm:$0xf]
      %v329 = vld [vmem:[%s263 + $0x30] sm:$0xf]
      %v330 = vld [vmem:[%s263 + $0x34] sm:$0xf]
      %v331 = vld [vmem:[%s263 + $0x38] sm:$0xf]
      %v332 = vld [vmem:[%s263 + $0x3c] sm:$0xf]
      %v333 = vld [vmem:[%s266] sm:$0x1]
      %v335 = vperm.slane %v333, 0
      %v369 = vunpack.c.l.b16 %v285
      %v370 = vunpack.c.l.b16 %v286
      %v371 = vunpack.c.l.b16 %v287
      %v372 = vunpack.c.l.b16 %v288
      %v373 = vunpack.c.l.b16 %v289
      %v374 = vunpack.c.l.b16 %v290
      %v375 = vunpack.c.l.b16 %v291
      %v376 = vunpack.c.l.b16 %v292
      %v377 = vunpack.c.l.b16 %v293
      %v378 = vunpack.c.l.b16 %v294
      %v379 = vunpack.c.l.b16 %v295
      %v380 = vunpack.c.l.b16 %v296
      %v381 = vunpack.c.l.b16 %v297
      %v382 = vunpack.c.l.b16 %v298
      %v383 = vunpack.c.l.b16 %v299
      %v384 = vunpack.c.l.b16 %v300
      %v385 = vunpack.c.l.b16 %v301
      %v386 = vunpack.c.l.b16 %v302
      %v387 = vunpack.c.l.b16 %v303
      %v388 = vunpack.c.l.b16 %v304
      %v389 = vunpack.c.l.b16 %v305
      %v390 = vunpack.c.l.b16 %v306
      %v391 = vunpack.c.l.b16 %v307
      %v392 = vunpack.c.l.b16 %v308
      %v393 = vunpack.c.l.b16 %v309
      %v394 = vunpack.c.l.b16 %v310
      %v395 = vunpack.c.l.b16 %v311
      %v396 = vunpack.c.l.b16 %v312
      %v397 = vunpack.c.l.b16 %v313
      %v398 = vunpack.c.l.b16 %v314
      %v399 = vunpack.c.l.b16 %v315
      %v400 = vunpack.c.l.b16 %v316
      %v401 = vpack.c.b16 %v370, %v369
      %v402 = vpack.c.b16 %v372, %v371
      %v403 = vpack.c.b16 %v374, %v373
      %v404 = vpack.c.b16 %v376, %v375
      %v405 = vpack.c.b16 %v378, %v377
      %v406 = vpack.c.b16 %v380, %v379
      %v407 = vpack.c.b16 %v382, %v381
      %v408 = vpack.c.b16 %v384, %v383
      %v409 = vpack.c.b16 %v386, %v385
      %v410 = vpack.c.b16 %v388, %v387
      %v411 = vpack.c.b16 %v390, %v389
      %v412 = vpack.c.b16 %v392, %v391
      %v413 = vpack.c.b16 %v394, %v393
      %v414 = vpack.c.b16 %v396, %v395
      %v415 = vpack.c.b16 %v398, %v397
      %v416 = vpack.c.b16 %v400, %v399
      %v449 = vunpack.c.l.b16 %v317
      %v450 = vunpack.c.l.b16 %v318
      %v451 = vunpack.c.l.b16 %v319
      %v452 = vunpack.c.l.b16 %v320
      %v453 = vunpack.c.l.b16 %v321
      %v454 = vunpack.c.l.b16 %v322
      %v455 = vunpack.c.l.b16 %v323
      %v456 = vunpack.c.l.b16 %v324
      %v457 = vunpack.c.l.b16 %v325
      %v458 = vunpack.c.l.b16 %v326
      %v459 = vunpack.c.l.b16 %v327
      %v460 = vunpack.c.l.b16 %v328
      %v461 = vunpack.c.l.b16 %v329
      %v462 = vunpack.c.l.b16 %v330
      %v463 = vunpack.c.l.b16 %v331
      %v464 = vunpack.c.l.b16 %v332
      %v465 = vpack.c.b16 %v450, %v449
      %v466 = vpack.c.b16 %v452, %v451
      %v467 = vpack.c.b16 %v454, %v453
      %v468 = vpack.c.b16 %v456, %v455
      %v469 = vpack.c.b16 %v458, %v457
      %v470 = vpack.c.b16 %v460, %v459
      %v471 = vpack.c.b16 %v462, %v461
      %v472 = vpack.c.b16 %v464, %v463
      %481 = vmatpush.bf16.msra.mxu0 %v472
      %482 = vmatpush.bf16.msra.mxu0 %v471
      %483 = vmatpush.bf16.msra.mxu0 %v470
      %484 = vmatpush.bf16.msra.mxu0 %v469
      %485 = vmatpush.bf16.msra.mxu0 %v468
      %486 = vmatpush.bf16.msra.mxu0 %v467
      %487 = vmatpush.bf16.msra.mxu0 %v466
      %488 = vmatpush.bf16.msra.mxu0 %v465
      %489 = vmatmul.bf16.gmra.mxu0 %v401
      %v490 = vpop.f32.mrf.mxu0
      %v491 = vadd.f32 %v335, %v490
      %v492 = vpop.f32.mrf.mxu0
      %v493 = vadd.f32 %v335, %v492
      %494 = vmatmul.bf16.gmra.mxu0 %v402
      %v495 = vpop.f32.mrf.mxu0
      %v496 = vadd.f32 %v335, %v495
      %v497 = vpop.f32.mrf.mxu0
      %v498 = vadd.f32 %v335, %v497
      %499 = vmatmul.bf16.gmra.mxu0 %v403
      %v500 = vpop.f32.mrf.mxu0
      %v501 = vadd.f32 %v335, %v500
      %v502 = vpop.f32.mrf.mxu0
      %v503 = vadd.f32 %v335, %v502
      %504 = vmatmul.bf16.gmra.mxu0 %v404
      %v505 = vpop.f32.mrf.mxu0
      %v506 = vadd.f32 %v335, %v505
      %v507 = vpop.f32.mrf.mxu0
      %v508 = vadd.f32 %v335, %v507
      %509 = vmatmul.bf16.gmra.mxu0 %v405
      %v510 = vpop.f32.mrf.mxu0
      %v511 = vadd.f32 %v335, %v510
      %v512 = vpop.f32.mrf.mxu0
      %v513 = vadd.f32 %v335, %v512
      %514 = vmatmul.bf16.gmra.mxu0 %v406
      %v515 = vpop.f32.mrf.mxu0
      %v516 = vadd.f32 %v335, %v515
      %v517 = vpop.f32.mrf.mxu0
      %v518 = vadd.f32 %v335, %v517
      %519 = vmatmul.bf16.gmra.mxu0 %v407
      %v520 = vpop.f32.mrf.mxu0
      %v521 = vadd.f32 %v335, %v520
      %v522 = vpop.f32.mrf.mxu0
      %v523 = vadd.f32 %v335, %v522
      %524 = vmatmul.bf16.gmra.mxu0 %v408
      %v525 = vpop.f32.mrf.mxu0
      %v526 = vadd.f32 %v335, %v525
      %v527 = vpop.f32.mrf.mxu0
      %v528 = vadd.f32 %v335, %v527
      %529 = vmatmul.bf16.gmra.mxu0 %v409
      %v530 = vpop.f32.mrf.mxu0
      %v531 = vadd.f32 %v335, %v530
      %v532 = vpop.f32.mrf.mxu0
      %v533 = vadd.f32 %v335, %v532
      %534 = vmatmul.bf16.gmra.mxu0 %v410
      %v535 = vpop.f32.mrf.mxu0
      %v536 = vadd.f32 %v335, %v535
      %v537 = vpop.f32.mrf.mxu0
      %v538 = vadd.f32 %v335, %v537
      %539 = vmatmul.bf16.gmra.mxu0 %v411
      %v540 = vpop.f32.mrf.mxu0
      %v541 = vadd.f32 %v335, %v540
      %v542 = vpop.f32.mrf.mxu0
      %v543 = vadd.f32 %v335, %v542
      %544 = vmatmul.bf16.gmra.mxu0 %v412
      %v545 = vpop.f32.mrf.mxu0
      %v546 = vadd.f32 %v335, %v545
      %v547 = vpop.f32.mrf.mxu0
      %v548 = vadd.f32 %v335, %v547
      %549 = vmatmul.bf16.gmra.mxu0 %v413
      %v550 = vpop.f32.mrf.mxu0
      %v551 = vadd.f32 %v335, %v550
      %v552 = vpop.f32.mrf.mxu0
      %v553 = vadd.f32 %v335, %v552
      %554 = vmatmul.bf16.gmra.mxu0 %v414
      %v555 = vpop.f32.mrf.mxu0
      %v556 = vadd.f32 %v335, %v555
      %v557 = vpop.f32.mrf.mxu0
      %v558 = vadd.f32 %v335, %v557
      %559 = vmatmul.bf16.gmra.mxu0 %v415
      %v560 = vpop.f32.mrf.mxu0
      %v561 = vadd.f32 %v335, %v560
      %v562 = vpop.f32.mrf.mxu0
      %v563 = vadd.f32 %v335, %v562
      %564 = vmatmul.bf16.gmra.mxu0 %v416
      %v565 = vpop.f32.mrf.mxu0
      %v566 = vadd.f32 %v335, %v565
      %v567 = vpop.f32.mrf.mxu0
      %v568 = vadd.f32 %v335, %v567
      %569 = vdwg.mxu0
      %v570 = vld [vmem:[%s274] sm:$0xf]
      %v571 = vld [vmem:[%s274 + $0x4] sm:$0xf]
      %v572 = vld [vmem:[%s274 + $0x8] sm:$0xf]
      %v573 = vld [vmem:[%s274 + $0xc] sm:$0xf]
      %v574 = vld [vmem:[%s274 + $0x10] sm:$0xf]
      %v575 = vld [vmem:[%s274 + $0x14] sm:$0xf]
      %v576 = vld [vmem:[%s274 + $0x18] sm:$0xf]
      %v577 = vld [vmem:[%s274 + $0x1c] sm:$0xf]
      %v578 = vld [vmem:[%s274 + $0x20] sm:$0xf]
      %v579 = vld [vmem:[%s274 + $0x24] sm:$0xf]
      %v580 = vld [vmem:[%s274 + $0x28] sm:$0xf]
      %v581 = vld [vmem:[%s274 + $0x2c] sm:$0xf]
      %v582 = vld [vmem:[%s274 + $0x30] sm:$0xf]
      %v583 = vld [vmem:[%s274 + $0x34] sm:$0xf]
      %v584 = vld [vmem:[%s274 + $0x38] sm:$0xf]
      %v585 = vld [vmem:[%s274 + $0x3c] sm:$0xf]
      %v586 = vld [vmem:[%s274 + $0x40] sm:$0xf]
      %v587 = vld [vmem:[%s274 + $0x44] sm:$0xf]
      %v588 = vld [vmem:[%s274 + $0x48] sm:$0xf]
      %v589 = vld [vmem:[%s274 + $0x4c] sm:$0xf]
      %v590 = vld [vmem:[%s274 + $0x50] sm:$0xf]
      %v591 = vld [vmem:[%s274 + $0x54] sm:$0xf]
      %v592 = vld [vmem:[%s274 + $0x58] sm:$0xf]
      %v593 = vld [vmem:[%s274 + $0x5c] sm:$0xf]
      %v594 = vld [vmem:[%s274 + $0x60] sm:$0xf]
      %v595 = vld [vmem:[%s274 + $0x64] sm:$0xf]
      %v596 = vld [vmem:[%s274 + $0x68] sm:$0xf]
      %v597 = vld [vmem:[%s274 + $0x6c] sm:$0xf]
      %v598 = vld [vmem:[%s274 + $0x70] sm:$0xf]
      %v599 = vld [vmem:[%s274 + $0x74] sm:$0xf]
      %v600 = vld [vmem:[%s274 + $0x78] sm:$0xf]
      %v601 = vld [vmem:[%s274 + $0x7c] sm:$0xf]
      %v602 = vunpack.c.l.bf16 %v570
      %v603 = vunpack.c.l.bf16 %v571
      %v604 = vunpack.c.l.bf16 %v572
      %v605 = vunpack.c.l.bf16 %v573
      %v606 = vunpack.c.l.bf16 %v574
      %v607 = vunpack.c.l.bf16 %v575
      %v608 = vunpack.c.l.bf16 %v576
      %v609 = vunpack.c.l.bf16 %v577
      %v610 = vunpack.c.l.bf16 %v578
      %v611 = vunpack.c.l.bf16 %v579
      %v612 = vunpack.c.l.bf16 %v580
      %v613 = vunpack.c.l.bf16 %v581
      %v614 = vunpack.c.l.bf16 %v582
      %v615 = vunpack.c.l.bf16 %v583
      %v616 = vunpack.c.l.bf16 %v584
      %v617 = vunpack.c.l.bf16 %v585
      %v618 = vunpack.c.l.bf16 %v586
      %v619 = vunpack.c.l.bf16 %v587
      %v620 = vunpack.c.l.bf16 %v588
      %v621 = vunpack.c.l.bf16 %v589
      %v622 = vunpack.c.l.bf16 %v590
      %v623 = vunpack.c.l.bf16 %v591
      %v624 = vunpack.c.l.bf16 %v592
      %v625 = vunpack.c.l.bf16 %v593
      %v626 = vunpack.c.l.bf16 %v594
      %v627 = vunpack.c.l.bf16 %v595
      %v628 = vunpack.c.l.bf16 %v596
      %v629 = vunpack.c.l.bf16 %v597
      %v630 = vunpack.c.l.bf16 %v598
      %v631 = vunpack.c.l.bf16 %v599
      %v632 = vunpack.c.l.bf16 %v600
      %v633 = vunpack.c.l.bf16 %v601
      %v634 = vadd.f32 %v491, %v602
      %v635 = vadd.f32 %v493, %v603
      %v636 = vadd.f32 %v496, %v604
      %v637 = vadd.f32 %v498, %v605
      %v638 = vadd.f32 %v501, %v606
      %v639 = vadd.f32 %v503, %v607
      %v640 = vadd.f32 %v506, %v608
      %v641 = vadd.f32 %v508, %v609
      %v642 = vadd.f32 %v511, %v610
      %v643 = vadd.f32 %v513, %v611
      %v644 = vadd.f32 %v516, %v612
      %v645 = vadd.f32 %v518, %v613
      %v646 = vadd.f32 %v521, %v614
      %v647 = vadd.f32 %v523, %v615
      %v648 = vadd.f32 %v526, %v616
      %v649 = vadd.f32 %v528, %v617
      %v650 = vadd.f32 %v531, %v618
      %v651 = vadd.f32 %v533, %v619
      %v652 = vadd.f32 %v536, %v620
      %v653 = vadd.f32 %v538, %v621
      %v654 = vadd.f32 %v541, %v622
      %v655 = vadd.f32 %v543, %v623
      %v656 = vadd.f32 %v546, %v624
      %v657 = vadd.f32 %v548, %v625
      %v658 = vadd.f32 %v551, %v626
      %v659 = vadd.f32 %v553, %v627
      %v660 = vadd.f32 %v556, %v628
      %v661 = vadd.f32 %v558, %v629
      %v662 = vadd.f32 %v561, %v630
      %v663 = vadd.f32 %v563, %v631
      %v664 = vadd.f32 %v566, %v632
      %v665 = vadd.f32 %v568, %v633
      %v666 = vmax.f32 %v634, 0.0
      %v667 = vmax.f32 %v635, 0.0
      %v668 = vmax.f32 %v636, 0.0
      %v669 = vmax.f32 %v637, 0.0
      %v670 = vmax.f32 %v638, 0.0
      %v671 = vmax.f32 %v639, 0.0
      %v672 = vmax.f32 %v640, 0.0
      %v673 = vmax.f32 %v641, 0.0
      %v674 = vmax.f32 %v642, 0.0
      %v675 = vmax.f32 %v643, 0.0
      %v676 = vmax.f32 %v644, 0.0
      %v677 = vmax.f32 %v645, 0.0
      %v678 = vmax.f32 %v646, 0.0
      %v679 = vmax.f32 %v647, 0.0
      %v680 = vmax.f32 %v648, 0.0
      %v681 = vmax.f32 %v649, 0.0
      %v682 = vmax.f32 %v650, 0.0
      %v683 = vmax.f32 %v651, 0.0
      %v684 = vmax.f32 %v652, 0.0
      %v685 = vmax.f32 %v653, 0.0
      %v686 = vmax.f32 %v654, 0.0
      %v687 = vmax.f32 %v655, 0.0
      %v688 = vmax.f32 %v656, 0.0
      %v689 = vmax.f32 %v657, 0.0
      %v690 = vmax.f32 %v658, 0.0
      %v691 = vmax.f32 %v659, 0.0
      %v692 = vmax.f32 %v660, 0.0
      %v693 = vmax.f32 %v661, 0.0
      %v694 = vmax.f32 %v662, 0.0
      %v695 = vmax.f32 %v663, 0.0
      %v696 = vmax.f32 %v664, 0.0
      %v697 = vmax.f32 %v665, 0.0
      %v698 = vpack.c.bf16 %v666, %v666
      %v699 = vpack.c.bf16 %v667, %v667
      %v700 = vpack.c.bf16 %v668, %v668
      %v701 = vpack.c.bf16 %v669, %v669
      %v702 = vpack.c.bf16 %v670, %v670
      %v703 = vpack.c.bf16 %v671, %v671
      %v704 = vpack.c.bf16 %v672, %v672
      %v705 = vpack.c.bf16 %v673, %v673
      %v706 = vpack.c.bf16 %v674, %v674
      %v707 = vpack.c.bf16 %v675, %v675
      %v708 = vpack.c.bf16 %v676, %v676
      %v709 = vpack.c.bf16 %v677, %v677
      %v710 = vpack.c.bf16 %v678, %v678
      %v711 = vpack.c.bf16 %v679, %v679
      %v712 = vpack.c.bf16 %v680, %v680
      %v713 = vpack.c.bf16 %v681, %v681
      %v714 = vpack.c.bf16 %v682, %v682
      %v715 = vpack.c.bf16 %v683, %v683
      %v716 = vpack.c.bf16 %v684, %v684
      %v717 = vpack.c.bf16 %v685, %v685
      %v718 = vpack.c.bf16 %v686, %v686
      %v719 = vpack.c.bf16 %v687, %v687
      %v720 = vpack.c.bf16 %v688, %v688
      %v721 = vpack.c.bf16 %v689, %v689
      %v722 = vpack.c.bf16 %v690, %v690
      %v723 = vpack.c.bf16 %v691, %v691
      %v724 = vpack.c.bf16 %v692, %v692
      %v725 = vpack.c.bf16 %v693, %v693
      %v726 = vpack.c.bf16 %v694, %v694
      %v727 = vpack.c.bf16 %v695, %v695
      %v728 = vpack.c.bf16 %v696, %v696
      %v729 = vpack.c.bf16 %v697, %v697
      %730 = vst [vmem:[%s283] sm:$0xf] %v698
      %731 = vst [vmem:[%s283 + $0x4] sm:$0xf] %v699
      %732 = vst [vmem:[%s283 + $0x8] sm:$0xf] %v700
      %733 = vst [vmem:[%s283 + $0xc] sm:$0xf] %v701
      %734 = vst [vmem:[%s283 + $0x10] sm:$0xf] %v702
      %735 = vst [vmem:[%s283 + $0x14] sm:$0xf] %v703
      %736 = vst [vmem:[%s283 + $0x18] sm:$0xf] %v704
      %737 = vst [vmem:[%s283 + $0x1c] sm:$0xf] %v705
      %738 = vst [vmem:[%s283 + $0x20] sm:$0xf] %v706
      %739 = vst [vmem:[%s283 + $0x24] sm:$0xf] %v707
      %740 = vst [vmem:[%s283 + $0x28] sm:$0xf] %v708
      %741 = vst [vmem:[%s283 + $0x2c] sm:$0xf] %v709
      %742 = vst [vmem:[%s283 + $0x30] sm:$0xf] %v710
      %743 = vst [vmem:[%s283 + $0x34] sm:$0xf] %v711
      %744 = vst [vmem:[%s283 + $0x38] sm:$0xf] %v712
      %745 = vst [vmem:[%s283 + $0x3c] sm:$0xf] %v713
      %746 = vst [vmem:[%s283 + $0x40] sm:$0xf] %v714
      %747 = vst [vmem:[%s283 + $0x44] sm:$0xf] %v715
      %748 = vst [vmem:[%s283 + $0x48] sm:$0xf] %v716
      %749 = vst [vmem:[%s283 + $0x4c] sm:$0xf] %v717
      %750 = vst [vmem:[%s283 + $0x50] sm:$0xf] %v718
      %751 = vst [vmem:[%s283 + $0x54] sm:$0xf] %v719
      %752 = vst [vmem:[%s283 + $0x58] sm:$0xf] %v720
      %753 = vst [vmem:[%s283 + $0x5c] sm:$0xf] %v721
      %754 = vst [vmem:[%s283 + $0x60] sm:$0xf] %v722
      %755 = vst [vmem:[%s283 + $0x64] sm:$0xf] %v723
      %756 = vst [vmem:[%s283 + $0x68] sm:$0xf] %v724
      %757 = vst [vmem:[%s283 + $0x6c] sm:$0xf] %v725
      %758 = vst [vmem:[%s283 + $0x70] sm:$0xf] %v726
      %759 = vst [vmem:[%s283 + $0x74] sm:$0xf] %v727
      %760 = vst [vmem:[%s283 + $0x78] sm:$0xf] %v728
      %761 = vst [vmem:[%s283 + $0x7c] sm:$0xf] %v729
      %s762 = smul.u32 32, %s19
      %p763 = scmp.lt.s32.totalorder %s762, 63
      %s764 = scalar_select %p763, %s762, 63
      %p765 = scmp.lt.s32.totalorder %s20, 0
      %s766 = scalar_select %p765, %s20, 0
      %s767 = sadd.s32 %s766, %s764
      %s768 = smul.addr %s767, 4
      %s769 = scalar_lea.vmem %s4, %s768
      // Predicated region
      $region37: #{_lambda_.20} parent=35 // pred_check
        %p770 = pneg %p153
      $region38: #{_lambda_.20} parent=35 // pred_check_branch
        %772 = sbr.rel (%p770) target = $region40
      $region39: #{_lambda_.20} parent=35 // pred_region
        %s773 = smul.u32 32, %s19
      $region40: #{_lambda_.20} parent=35 // pred_fallthru
        _
    $region36: #{_lambda_.20} parent=5 // pred_fallthru
      _
    %p774 = scmp.le.s32.totalorder 2, %s10
    // Predicated region
    $region41: #{_lambda_.20} parent=5 // pred_check
      %p775 = pneg %p774
    $region42: #{_lambda_.20} parent=5 // pred_check_branch
      %777 = sbr.rel (%p775) target = $region44
    $region43: #{_lambda_.20} parent=5 // pred_region
      %s778 = ssub.s32 %s10, 2
      // Predicated region
      $region45: #{_lambda_.20} parent=43 // pred_check
        %p779 = pneg %p159
      $region46: #{_lambda_.20} parent=43 // pred_check_branch
        %781 = sbr.rel (%p779) target = $region48
      $region47: #{_lambda_.20} parent=43 // pred_region
        %s782 = smul.u32 32, %s21
        %p783 = scmp.lt.s32.totalorder %s782, 63
        %s784 = scalar_select %p783, %s782, 63
        %p785 = scmp.lt.s32.totalorder %s22, 0
        %s786 = scalar_select %p785, %s22, 0
        %s787 = sadd.s32 %s786, %s784
        %s788 = smul.addr %s787, 4
        %s789 = scalar_lea.vmem %s4, %s788
      $region48: #{_lambda_.20} parent=43 // pred_fallthru
        _
    $region44: #{_lambda_.20} parent=5 // pred_fallthru
      _
  $region6: #{_lambda_.20} parent=0 // loop_footer
    %s14 = sadd.s32 1, %s10
  $region7: #{_lambda_.20} parent=0 // loop_footer_branch
    %9 = sbr.rel target = $region3
  $region8: #{_lambda_.20} parent=0 // loop_exit
    _

// kernel: _lambda_.21
$region0: #{_lambda_.21}
  #allocation0 [shape = 'u32[]', space=smem, size = 0x4, offset = 0x4, fixed_abs, tag = 'smem constant byte address 0x4 - core index']
  #allocation1 [shape = 'u32[72,128]{1,0:T(1,128)}', space=vmem, size = 0x9000, scoped, tag = 'internal scratch']
  %s0 = inlined_call_operand.vmem [shape: bf16[128,128], index: 0, kind: input, shape index: {}]
  %s1 = inlined_call_operand.vmem [shape: bf16[128,128], index: 1, kind: input, shape index: {}]
  %s2 = inlined_call_operand.vmem [shape: f32[1,128], index: 2, kind: input, shape index: {}]
  %s3 = inlined_call_operand.vmem [shape: bf16[128,128], index: 3, kind: output, shape index: {}]
  %s4 = sld [smem:[#allocation0]]
  $region22: #{_lambda_.21} parent=0
    _
  %s6 = ssub.s32 1, %s4
  %s7 = scalar_select 0, %s6, %s4
  // Predicated region
  $region2: #{_lambda_.21} parent=0 // pred_check
    _
  $region3: #{_lambda_.21} parent=0 // pred_check_branch
    %9 = sbr.rel (0) target = $region5
  $region4: #{_lambda_.21} parent=0 // pred_region
    _
  $region5: #{_lambda_.21} parent=0 // pred_fallthru
    _
  // Predicated region
  $region6: #{_lambda_.21} parent=0 // pred_check
    _
  $region7: #{_lambda_.21} parent=0 // pred_check_branch
    %11 = sbr.rel (0) target = $region9
  $region8: #{_lambda_.21} parent=0 // pred_region
    _
  $region9: #{_lambda_.21} parent=0 // pred_fallthru
    _
  // Predicated region
  $region10: #{_lambda_.21} parent=0 // pred_check
    _
  $region11: #{_lambda_.21} parent=0 // pred_check_branch
    %13 = sbr.rel (0) target = $region13
  $region12: #{_lambda_.21} parent=0 // pred_region
    _
  $region13: #{_lambda_.21} parent=0 // pred_fallthru
    _
  %v14 = vld [vmem:[%s0] sm:$0xf]
  %v15 = vld [vmem:[%s0 + $0x4] sm:$0xf]
  %v16 = vld [vmem:[%s0 + $0x8] sm:$0xf]
  %v17 = vld [vmem:[%s0 + $0xc] sm:$0xf]
  %v18 = vld [vmem:[%s0 + $0x10] sm:$0xf]
  %v19 = vld [vmem:[%s0 + $0x14] sm:$0xf]
  %v20 = vld [vmem:[%s0 + $0x18] sm:$0xf]
  %v21 = vld [vmem:[%s0 + $0x1c] sm:$0xf]
  %v22 = vld [vmem:[%s0 + $0x20] sm:$0xf]
  %v23 = vld [vmem:[%s0 + $0x24] sm:$0xf]
  %v24 = vld [vmem:[%s0 + $0x28] sm:$0xf]
  %v25 = vld [vmem:[%s0 + $0x2c] sm:$0xf]
  %v26 = vld [vmem:[%s0 + $0x30] sm:$0xf]
  %v27 = vld [vmem:[%s0 + $0x34] sm:$0xf]
  %v28 = vld [vmem:[%s0 + $0x38] sm:$0xf]
  %v29 = vld [vmem:[%s0 + $0x3c] sm:$0xf]
  %v30 = vld [vmem:[%s1] sm:$0xf]
  %v31 = vld [vmem:[%s1 + $0x4] sm:$0xf]
  %v32 = vld [vmem:[%s1 + $0x8] sm:$0xf]
  %v33 = vld [vmem:[%s1 + $0xc] sm:$0xf]
  %v34 = vld [vmem:[%s1 + $0x10] sm:$0xf]
  %v35 = vld [vmem:[%s1 + $0x14] sm:$0xf]
  %v36 = vld [vmem:[%s1 + $0x18] sm:$0xf]
  %v37 = vld [vmem:[%s1 + $0x1c] sm:$0xf]
  %v38 = vld [vmem:[%s1 + $0x20] sm:$0xf]
  %v39 = vld [vmem:[%s1 + $0x24] sm:$0xf]
  %v40 = vld [vmem:[%s1 + $0x28] sm:$0xf]
  %v41 = vld [vmem:[%s1 + $0x2c] sm:$0xf]
  %v42 = vld [vmem:[%s1 + $0x30] sm:$0xf]
  %v43 = vld [vmem:[%s1 + $0x34] sm:$0xf]
  %v44 = vld [vmem:[%s1 + $0x38] sm:$0xf]
  %v45 = vld [vmem:[%s1 + $0x3c] sm:$0xf]
  %v46 = vld [vmem:[%s2] sm:$0x1]
  %v48 = vperm.slane %v46, 0
  %v66 = vunpack.c.l.b16 %v14
  %v67 = vunpack.c.l.b16 %v15
  %v68 = vunpack.c.l.b16 %v16
  %v69 = vunpack.c.l.b16 %v17
  %v70 = vunpack.c.l.b16 %v18
  %v71 = vunpack.c.l.b16 %v19
  %v72 = vunpack.c.l.b16 %v20
  %v73 = vunpack.c.l.b16 %v21
  %v74 = vunpack.c.l.b16 %v22
  %v75 = vunpack.c.l.b16 %v23
  %v76 = vunpack.c.l.b16 %v24
  %v77 = vunpack.c.l.b16 %v25
  %v78 = vunpack.c.l.b16 %v26
  %v79 = vunpack.c.l.b16 %v27
  %v80 = vunpack.c.l.b16 %v28
  %v81 = vunpack.c.l.b16 %v29
  %v82 = vpack.c.b16 %v67, %v66
  %v83 = vpack.c.b16 %v69, %v68
  %v84 = vpack.c.b16 %v71, %v70
  %v85 = vpack.c.b16 %v73, %v72
  %v86 = vpack.c.b16 %v75, %v74
  %v87 = vpack.c.b16 %v77, %v76
  %v88 = vpack.c.b16 %v79, %v78
  %v89 = vpack.c.b16 %v81, %v80
  %v114 = vunpack.c.l.b16 %v30
  %v115 = vunpack.c.l.b16 %v31
  %v116 = vunpack.c.l.b16 %v32
  %v117 = vunpack.c.l.b16 %v33
  %v118 = vunpack.c.l.b16 %v34
  %v119 = vunpack.c.l.b16 %v35
  %v120 = vunpack.c.l.b16 %v36
  %v121 = vunpack.c.l.b16 %v37
  %v122 = vunpack.c.l.b16 %v38
  %v123 = vunpack.c.l.b16 %v39
  %v124 = vunpack.c.l.b16 %v40
  %v125 = vunpack.c.l.b16 %v41
  %v126 = vunpack.c.l.b16 %v42
  %v127 = vunpack.c.l.b16 %v43
  %v128 = vunpack.c.l.b16 %v44
  %v129 = vunpack.c.l.b16 %v45
  %v130 = vpack.c.b16 %v115, %v114
  %v131 = vpack.c.b16 %v117, %v116
  %v132 = vpack.c.b16 %v119, %v118
  %v133 = vpack.c.b16 %v121, %v120
  %v134 = vpack.c.b16 %v123, %v122
  %v135 = vpack.c.b16 %v125, %v124
  %v136 = vpack.c.b16 %v127, %v126
  %v137 = vpack.c.b16 %v129, %v128
  %146 = vmatpush.bf16.msra.mxu0 %v137
  %147 = vmatpush.bf16.msra.mxu0 %v136
  %148 = vmatpush.bf16.msra.mxu0 %v135
  %149 = vmatpush.bf16.msra.mxu0 %v134
  %150 = vmatpush.bf16.msra.mxu0 %v133
  %151 = vmatpush.bf16.msra.mxu0 %v132
  %152 = vmatpush.bf16.msra.mxu0 %v131
  %153 = vmatpush.bf16.msra.mxu0 %v130
  %154 = vmatmul.bf16.gmra.mxu0 %v82
  %v155 = vpop.f32.mrf.mxu0
  %v156 = vadd.f32 %v48, %v155
  %v157 = vpop.f32.mrf.mxu0
  %v158 = vadd.f32 %v48, %v157
  %159 = vmatmul.bf16.gmra.mxu0 %v83
  %v160 = vpop.f32.mrf.mxu0
  %v161 = vadd.f32 %v48, %v160
  %v162 = vpop.f32.mrf.mxu0
  %v163 = vadd.f32 %v48, %v162
  %164 = vmatmul.bf16.gmra.mxu0 %v84
  %v165 = vpop.f32.mrf.mxu0
  %v166 = vadd.f32 %v48, %v165
  %v167 = vpop.f32.mrf.mxu0
  %v168 = vadd.f32 %v48, %v167
  %169 = vmatmul.bf16.gmra.mxu0 %v85
  %v170 = vpop.f32.mrf.mxu0
  %v171 = vadd.f32 %v48, %v170
  %v172 = vpop.f32.mrf.mxu0
  %v173 = vadd.f32 %v48, %v172
  %174 = vmatmul.bf16.gmra.mxu0 %v86
  %v175 = vpop.f32.mrf.mxu0
  %v176 = vadd.f32 %v48, %v175
  %v177 = vpop.f32.mrf.mxu0
  %v178 = vadd.f32 %v48, %v177
  %179 = vmatmul.bf16.gmra.mxu0 %v87
  %v180 = vpop.f32.mrf.mxu0
  %v181 = vadd.f32 %v48, %v180
  %v182 = vpop.f32.mrf.mxu0
  %v183 = vadd.f32 %v48, %v182
  %184 = vmatmul.bf16.gmra.mxu0 %v88
  %v185 = vpop.f32.mrf.mxu0
  %v186 = vadd.f32 %v48, %v185
  %v187 = vpop.f32.mrf.mxu0
  %v188 = vadd.f32 %v48, %v187
  %189 = vmatmul.bf16.gmra.mxu0 %v89
  %v190 = vpop.f32.mrf.mxu0
  %v191 = vadd.f32 %v48, %v190
  %v192 = vpop.f32.mrf.mxu0
  %v193 = vadd.f32 %v48, %v192
  %194 = vdwg.mxu0
  %v195 = vpack.c.bf16 %v156, %v156
  %v196 = vpack.c.bf16 %v158, %v158
  %v197 = vpack.c.bf16 %v161, %v161
  %v198 = vpack.c.bf16 %v163, %v163
  %v199 = vpack.c.bf16 %v166, %v166
  %v200 = vpack.c.bf16 %v168, %v168
  %v201 = vpack.c.bf16 %v171, %v171
  %v202 = vpack.c.bf16 %v173, %v173
  %v203 = vpack.c.bf16 %v176, %v176
  %v204 = vpack.c.bf16 %v178, %v178
  %v205 = vpack.c.bf16 %v181, %v181
  %v206 = vpack.c.bf16 %v183, %v183
  %v207 = vpack.c.bf16 %v186, %v186
  %v208 = vpack.c.bf16 %v188, %v188
  %v209 = vpack.c.bf16 %v191, %v191
  %v210 = vpack.c.bf16 %v193, %v193
  %211 = vst [vmem:[%s3] sm:$0xf] %v195
  %212 = vst [vmem:[%s3 + $0x4] sm:$0xf] %v196
  %213 = vst [vmem:[%s3 + $0x8] sm:$0xf] %v197
  %214 = vst [vmem:[%s3 + $0xc] sm:$0xf] %v198
  %215 = vst [vmem:[%s3 + $0x10] sm:$0xf] %v199
  %216 = vst [vmem:[%s3 + $0x14] sm:$0xf] %v200
  %217 = vst [vmem:[%s3 + $0x18] sm:$0xf] %v201
  %218 = vst [vmem:[%s3 + $0x1c] sm:$0xf] %v202
  %219 = vst [vmem:[%s3 + $0x20] sm:$0xf] %v203
  %220 = vst [vmem:[%s3 + $0x24] sm:$0xf] %v204
  %221 = vst [vmem:[%s3 + $0x28] sm:$0xf] %v205
  %222 = vst [vmem:[%s3 + $0x2c] sm:$0xf] %v206
  %223 = vst [vmem:[%s3 + $0x30] sm:$0xf] %v207
  %224 = vst [vmem:[%s3 + $0x34] sm:$0xf] %v208
  %225 = vst [vmem:[%s3 + $0x38] sm:$0xf] %v209
  %226 = vst [vmem:[%s3 + $0x3c] sm:$0xf] %v210
  // Predicated region
  $region14: #{_lambda_.21} parent=0 // pred_check
    _
  $region15: #{_lambda_.21} parent=0 // pred_check_branch
    %228 = sbr.rel (0) target = $region17
  $region16: #{_lambda_.21} parent=0 // pred_region
    _
  $region17: #{_lambda_.21} parent=0 // pred_fallthru
    _
  // Predicated region
  $region18: #{_lambda_.21} parent=0 // pred_check
    _
  $region19: #{_lambda_.21} parent=0 // pred_check_branch
    %230 = sbr.rel (0) target = $region21
  $region20: #{_lambda_.21} parent=0 // pred_region
    _
  $region21: #{_lambda_.21} parent=0 // pred_fallthru
    _

// kernel: _lambda_.23
$region0: #{_lambda_.23}
  #allocation0 [shape = 'u32[]', space=smem, size = 0x4, offset = 0x4, fixed_abs, tag = 'smem constant byte address 0x4 - core index']
  #allocation1 [shape = 'u32[72,128]{1,0:T(1,128)}', space=vmem, size = 0x9000, scoped, tag = 'internal scratch']
  %s0 = inlined_call_operand.vmem [shape: bf16[128,1152], index: 0, kind: input, shape index: {}]
  %s1 = inlined_call_operand.vmem [shape: bf16[1152,128], index: 1, kind: input, shape index: {}]
  %s2 = inlined_call_operand.vmem [shape: f32[1,128], index: 2, kind: input, shape index: {}]
  %s3 = inlined_call_operand.vmem [shape: bf16[128,128], index: 3, kind: output, shape index: {}]
  %s4 = sld [smem:[#allocation0]]
  $region22: #{_lambda_.23} parent=0
    _
  %s6 = ssub.s32 1, %s4
  %s7 = scalar_select 0, %s6, %s4
  // Predicated region
  $region2: #{_lambda_.23} parent=0 // pred_check
    _
  $region3: #{_lambda_.23} parent=0 // pred_check_branch
    %9 = sbr.rel (0) target = $region5
  $region4: #{_lambda_.23} parent=0 // pred_region
    _
  $region5: #{_lambda_.23} parent=0 // pred_fallthru
    _
  // Predicated region
  $region6: #{_lambda_.23} parent=0 // pred_check
    _
  $region7: #{_lambda_.23} parent=0 // pred_check_branch
    %11 = sbr.rel (0) target = $region9
  $region8: #{_lambda_.23} parent=0 // pred_region
    _
  $region9: #{_lambda_.23} parent=0 // pred_fallthru
    _
  // Predicated region
  $region10: #{_lambda_.23} parent=0 // pred_check
    _
  $region11: #{_lambda_.23} parent=0 // pred_check_branch
    %13 = sbr.rel (0) target = $region13
  $region12: #{_lambda_.23} parent=0 // pred_region
    _
  $region13: #{_lambda_.23} parent=0 // pred_fallthru
    _
  %v14 = vld [vmem:[%s0] sm:$0xff]
  %v15 = vld [vmem:[%s0 + $0x8] sm:$0xff]
  %v16 = vld [vmem:[%s0 + $0x10] sm:$0xff]
  %v17 = vld [vmem:[%s0 + $0x18] sm:$0xff]
  %v18 = vld [vmem:[%s0 + $0x20] sm:$0xf]
  %v19 = vld [vmem:[%s0 + $0x24] sm:$0xff]
  %v20 = vld [vmem:[%s0 + $0x2c] sm:$0xff]
  %v21 = vld [vmem:[%s0 + $0x34] sm:$0xff]
  %v22 = vld [vmem:[%s0 + $0x3c] sm:$0xff]
  %v23 = vld [vmem:[%s0 + $0x44] sm:$0xf]
  %v24 = vld [vmem:[%s0 + $0x48] sm:$0xff]
  %v25 = vld [vmem:[%s0 + $0x50] sm:$0xff]
  %v26 = vld [vmem:[%s0 + $0x58] sm:$0xff]
  %v27 = vld [vmem:[%s0 + $0x60] sm:$0xff]
  %v28 = vld [vmem:[%s0 + $0x68] sm:$0xf]
  %v29 = vld [vmem:[%s0 + $0x6c] sm:$0xff]
  %v30 = vld [vmem:[%s0 + $0x74] sm:$0xff]
  %v31 = vld [vmem:[%s0 + $0x7c] sm:$0xff]
  %v32 = vld [vmem:[%s0 + $0x84] sm:$0xff]
  %v33 = vld [vmem:[%s0 + $0x8c] sm:$0xf]
  %v34 = vld [vmem:[%s0 + $0x90] sm:$0xff]
  %v35 = vld [vmem:[%s0 + $0x98] sm:$0xff]
  %v36 = vld [vmem:[%s0 + $0xa0] sm:$0xff]
  %v37 = vld [vmem:[%s0 + $0xa8] sm:$0xff]
  %v38 = vld [vmem:[%s0 + $0xb0] sm:$0xf]
  %v39 = vld [vmem:[%s0 + $0xb4] sm:$0xff]
  %v40 = vld [vmem:[%s0 + $0xbc] sm:$0xff]
  %v41 = vld [vmem:[%s0 + $0xc4] sm:$0xff]
  %v42 = vld [vmem:[%s0 + $0xcc] sm:$0xff]
  %v43 = vld [vmem:[%s0 + $0xd4] sm:$0xf]
  %v44 = vld [vmem:[%s0 + $0xd8] sm:$0xff]
  %v45 = vld [vmem:[%s0 + $0xe0] sm:$0xff]
  %v46 = vld [vmem:[%s0 + $0xe8] sm:$0xff]
  %v47 = vld [vmem:[%s0 + $0xf0] sm:$0xff]
  %v48 = vld [vmem:[%s0 + $0xf8] sm:$0xf]
  %v49 = vld [vmem:[%s0 + $0xfc] sm:$0xff]
  %v50 = vld [vmem:[%s0 + $0x104] sm:$0xff]
  %v51 = vld [vmem:[%s0 + $0x10c] sm:$0xff]
  %v52 = vld [vmem:[%s0 + $0x114] sm:$0xff]
  %v53 = vld [vmem:[%s0 + $0x11c] sm:$0xf]
  %v54 = vld [vmem:[%s0 + $0x120] sm:$0xff]
  %v55 = vld [vmem:[%s0 + $0x128] sm:$0xff]
  %v56 = vld [vmem:[%s0 + $0x130] sm:$0xff]
  %v57 = vld [vmem:[%s0 + $0x138] sm:$0xff]
  %v58 = vld [vmem:[%s0 + $0x140] sm:$0xf]
  %v59 = vld [vmem:[%s0 + $0x144] sm:$0xff]
  %v60 = vld [vmem:[%s0 + $0x14c] sm:$0xff]
  %v61 = vld [vmem:[%s0 + $0x154] sm:$0xff]
  %v62 = vld [vmem:[%s0 + $0x15c] sm:$0xff]
  %v63 = vld [vmem:[%s0 + $0x164] sm:$0xf]
  %v64 = vld [vmem:[%s0 + $0x168] sm:$0xff]
  %v65 = vld [vmem:[%s0 + $0x170] sm:$0xff]
  %v66 = vld [vmem:[%s0 + $0x178] sm:$0xff]
  %v67 = vld [vmem:[%s0 + $0x180] sm:$0xff]
  %v68 = vld [vmem:[%s0 + $0x188] sm:$0xf]
  %v69 = vld [vmem:[%s0 + $0x18c] sm:$0xff]
  %v70 = vld [vmem:[%s0 + $0x194] sm:$0xff]
  %v71 = vld [vmem:[%s0 + $0x19c] sm:$0xff]
  %v72 = vld [vmem:[%s0 + $0x1a4] sm:$0xff]
  %v73 = vld [vmem:[%s0 + $0x1ac] sm:$0xf]
  %v74 = vld [vmem:[%s0 + $0x1b0] sm:$0xff]
  %v75 = vld [vmem:[%s0 + $0x1b8] sm:$0xff]
  %v76 = vld [vmem:[%s0 + $0x1c0] sm:$0xff]
  %v77 = vld [vmem:[%s0 + $0x1c8] sm:$0xff]
  %v78 = vld [vmem:[%s0 + $0x1d0] sm:$0xf]
  %v79 = vld [vmem:[%s0 + $0x1d4] sm:$0xff]
  %v80 = vld [vmem:[%s0 + $0x1dc] sm:$0xff]
  %v81 = vld [vmem:[%s0 + $0x1e4] sm:$0xff]
  %v82 = vld [vmem:[%s0 + $0x1ec] sm:$0xff]
  %v83 = vld [vmem:[%s0 + $0x1f4] sm:$0xf]
  %v84 = vld [vmem:[%s0 + $0x1f8] sm:$0xff]
  %v85 = vld [vmem:[%s0 + $0x200] sm:$0xff]
  %v86 = vld [vmem:[%s0 + $0x208] sm:$0xff]
  %v87 = vld [vmem:[%s0 + $0x210] sm:$0xff]
  %v88 = vld [vmem:[%s0 + $0x218] sm:$0xf]
  %v89 = vld [vmem:[%s0 + $0x21c] sm:$0xff]
  %v90 = vld [vmem:[%s0 + $0x224] sm:$0xff]
  %v91 = vld [vmem:[%s0 + $0x22c] sm:$0xff]
  %v92 = vld [vmem:[%s0 + $0x234] sm:$0xff]
  %v93 = vld [vmem:[%s0 + $0x23c] sm:$0xf]
  %v94 = vld [vmem:[%s1] sm:$0xf]
  %v95 = vld [vmem:[%s1 + $0x4] sm:$0xf]
  %v96 = vld [vmem:[%s1 + $0x8] sm:$0xf]
  %v97 = vld [vmem:[%s1 + $0xc] sm:$0xf]
  %v98 = vld [vmem:[%s1 + $0x10] sm:$0xf]
  %v99 = vld [vmem:[%s1 + $0x14] sm:$0xf]
  %v100 = vld [vmem:[%s1 + $0x18] sm:$0xf]
  %v101 = vld [vmem:[%s1 + $0x1c] sm:$0xf]
  %v102 = vld [vmem:[%s1 + $0x20] sm:$0xf]
  %v103 = vld [vmem:[%s1 + $0x24] sm:$0xf]
  %v104 = vld [vmem:[%s1 + $0x28] sm:$0xf]
  %v105 = vld [vmem:[%s1 + $0x2c] sm:$0xf]
  %v106 = vld [vmem:[%s1 + $0x30] sm:$0xf]
  %v107 = vld [vmem:[%s1 + $0x34] sm:$0xf]
  %v108 = vld [vmem:[%s1 + $0x38] sm:$0xf]
  %v109 = vld [vmem:[%s1 + $0x3c] sm:$0xf]
  %v110 = vld [vmem:[%s1 + $0x40] sm:$0xf]
  %v111 = vld [vmem:[%s1 + $0x44] sm:$0xf]
  %v112 = vld [vmem:[%s1 + $0x48] sm:$0xf]
  %v113 = vld [vmem:[%s1 + $0x4c] sm:$0xf]
  %v114 = vld [vmem:[%s1 + $0x50] sm:$0xf]
  %v115 = vld [vmem:[%s1 + $0x54] sm:$0xf]
  %v116 = vld [vmem:[%s1 + $0x58] sm:$0xf]
  %v117 = vld [vmem:[%s1 + $0x5c] sm:$0xf]
  %v118 = vld [vmem:[%s1 + $0x60] sm:$0xf]
  %v119 = vld [vmem:[%s1 + $0x64] sm:$0xf]
  %v120 = vld [vmem:[%s1 + $0x68] sm:$0xf]
  %v121 = vld [vmem:[%s1 + $0x6c] sm:$0xf]
  %v122 = vld [vmem:[%s1 + $0x70] sm:$0xf]
  %v123 = vld [vmem:[%s1 + $0x74] sm:$0xf]
  %v124 = vld [vmem:[%s1 + $0x78] sm:$0xf]
  %v125 = vld [vmem:[%s1 + $0x7c] sm:$0xf]
  %v126 = vld [vmem:[%s1 + $0x80] sm:$0xf]
  %v127 = vld [vmem:[%s1 + $0x84] sm:$0xf]
  %v128 = vld [vmem:[%s1 + $0x88] sm:$0xf]
  %v129 = vld [vmem:[%s1 + $0x8c] sm:$0xf]
  %v130 = vld [vmem:[%s1 + $0x90] sm:$0xf]
  %v131 = vld [vmem:[%s1 + $0x94] sm:$0xf]
  %v132 = vld [vmem:[%s1 + $0x98] sm:$0xf]
  %v133 = vld [vmem:[%s1 + $0x9c] sm:$0xf]
  %v134 = vld [vmem:[%s1 + $0xa0] sm:$0xf]
  %v135 = vld [vmem:[%s1 + $0xa4] sm:$0xf]
  %v136 = vld [vmem:[%s1 + $0xa8] sm:$0xf]
  %v137 = vld [vmem:[%s1 + $0xac] sm:$0xf]
  %v138 = vld [vmem:[%s1 + $0xb0] sm:$0xf]
  %v139 = vld [vmem:[%s1 + $0xb4] sm:$0xf]
  %v140 = vld [vmem:[%s1 + $0xb8] sm:$0xf]
  %v141 = vld [vmem:[%s1 + $0xbc] sm:$0xf]
  %v142 = vld [vmem:[%s1 + $0xc0] sm:$0xf]
  %v143 = vld [vmem:[%s1 + $0xc4] sm:$0xf]
  %v144 = vld [vmem:[%s1 + $0xc8] sm:$0xf]
  %v145 = vld [vmem:[%s1 + $0xcc] sm:$0xf]
  %v146 = vld [vmem:[%s1 + $0xd0] sm:$0xf]
  %v147 = vld [vmem:[%s1 + $0xd4] sm:$0xf]
  %v148 = vld [vmem:[%s1 + $0xd8] sm:$0xf]
  %v149 = vld [vmem:[%s1 + $0xdc] sm:$0xf]
  %v150 = vld [vmem:[%s1 + $0xe0] sm:$0xf]
  %v151 = vld [vmem:[%s1 + $0xe4] sm:$0xf]
  %v152 = vld [vmem:[%s1 + $0xe8] sm:$0xf]
  %v153 = vld [vmem:[%s1 + $0xec] sm:$0xf]
  %v154 = vld [vmem:[%s1 + $0xf0] sm:$0xf]
  %v155 = vld [vmem:[%s1 + $0xf4] sm:$0xf]
  %v156 = vld [vmem:[%s1 + $0xf8] sm:$0xf]
  %v157 = vld [vmem:[%s1 + $0xfc] sm:$0xf]
  %v158 = vld [vmem:[%s1 + $0x100] sm:$0xf]
  %v159 = vld [vmem:[%s1 + $0x104] sm:$0xf]
  %v160 = vld [vmem:[%s1 + $0x108] sm:$0xf]
  %v161 = vld [vmem:[%s1 + $0x10c] sm:$0xf]
  %v162 = vld [vmem:[%s1 + $0x110] sm:$0xf]
  %v163 = vld [vmem:[%s1 + $0x114] sm:$0xf]
  %v164 = vld [vmem:[%s1 + $0x118] sm:$0xf]
  %v165 = vld [vmem:[%s1 + $0x11c] sm:$0xf]
  %v166 = vld [vmem:[%s1 + $0x120] sm:$0xf]
  %v167 = vld [vmem:[%s1 + $0x124] sm:$0xf]
  %v168 = vld [vmem:[%s1 + $0x128] sm:$0xf]
  %v169 = vld [vmem:[%s1 + $0x12c] sm:$0xf]
  %v170 = vld [vmem:[%s1 + $0x130] sm:$0xf]
  %v171 = vld [vmem:[%s1 + $0x134] sm:$0xf]
  %v172 = vld [vmem:[%s1 + $0x138] sm:$0xf]
  %v173 = vld [vmem:[%s1 + $0x13c] sm:$0xf]
  %v174 = vld [vmem:[%s1 + $0x140] sm:$0xf]
  %v175 = vld [vmem:[%s1 + $0x144] sm:$0xf]
  %v176 = vld [vmem:[%s1 + $0x148] sm:$0xf]
  %v177 = vld [vmem:[%s1 + $0x14c] sm:$0xf]
  %v178 = vld [vmem:[%s1 + $0x150] sm:$0xf]
  %v179 = vld [vmem:[%s1 + $0x154] sm:$0xf]
  %v180 = vld [vmem:[%s1 + $0x158] sm:$0xf]
  %v181 = vld [vmem:[%s1 + $0x15c] sm:$0xf]
  %v182 = vld [vmem:[%s1 + $0x160] sm:$0xf]
  %v183 = vld [vmem:[%s1 + $0x164] sm:$0xf]
  %v184 = vld [vmem:[%s1 + $0x168] sm:$0xf]
  %v185 = vld [vmem:[%s1 + $0x16c] sm:$0xf]
  %v186 = vld [vmem:[%s1 + $0x170] sm:$0xf]
  %v187 = vld [vmem:[%s1 + $0x174] sm:$0xf]
  %v188 = vld [vmem:[%s1 + $0x178] sm:$0xf]
  %v189 = vld [vmem:[%s1 + $0x17c] sm:$0xf]
  %v190 = vld [vmem:[%s1 + $0x180] sm:$0xf]
  %v191 = vld [vmem:[%s1 + $0x184] sm:$0xf]
  %v192 = vld [vmem:[%s1 + $0x188] sm:$0xf]
  %v193 = vld [vmem:[%s1 + $0x18c] sm:$0xf]
  %v194 = vld [vmem:[%s1 + $0x190] sm:$0xf]
  %v195 = vld [vmem:[%s1 + $0x194] sm:$0xf]
  %v196 = vld [vmem:[%s1 + $0x198] sm:$0xf]
  %v197 = vld [vmem:[%s1 + $0x19c] sm:$0xf]
  %v198 = vld [vmem:[%s1 + $0x1a0] sm:$0xf]
  %v199 = vld [vmem:[%s1 + $0x1a4] sm:$0xf]
  %v200 = vld [vmem:[%s1 + $0x1a8] sm:$0xf]
  %v201 = vld [vmem:[%s1 + $0x1ac] sm:$0xf]
  %v202 = vld [vmem:[%s1 + $0x1b0] sm:$0xf]
  %v203 = vld [vmem:[%s1 + $0x1b4] sm:$0xf]
  %v204 = vld [vmem:[%s1 + $0x1b8] sm:$0xf]
  %v205 = vld [vmem:[%s1 + $0x1bc] sm:$0xf]
  %v206 = vld [vmem:[%s1 + $0x1c0] sm:$0xf]
  %v207 = vld [vmem:[%s1 + $0x1c4] sm:$0xf]
  %v208 = vld [vmem:[%s1 + $0x1c8] sm:$0xf]
  %v209 = vld [vmem:[%s1 + $0x1cc] sm:$0xf]
  %v210 = vld [vmem:[%s1 + $0x1d0] sm:$0xf]
  %v211 = vld [vmem:[%s1 + $0x1d4] sm:$0xf]
  %v212 = vld [vmem:[%s1 + $0x1d8] sm:$0xf]
  %v213 = vld [vmem:[%s1 + $0x1dc] sm:$0xf]
  %v214 = vld [vmem:[%s1 + $0x1e0] sm:$0xf]
  %v215 = vld [vmem:[%s1 + $0x1e4] sm:$0xf]
  %v216 = vld [vmem:[%s1 + $0x1e8] sm:$0xf]
  %v217 = vld [vmem:[%s1 + $0x1ec] sm:$0xf]
  %v218 = vld [vmem:[%s1 + $0x1f0] sm:$0xf]
  %v219 = vld [vmem:[%s1 + $0x1f4] sm:$0xf]
  %v220 = vld [vmem:[%s1 + $0x1f8] sm:$0xf]
  %v221 = vld [vmem:[%s1 + $0x1fc] sm:$0xf]
  %v222 = vld [vmem:[%s1 + $0x200] sm:$0xf]
  %v223 = vld [vmem:[%s1 + $0x204] sm:$0xf]
  %v224 = vld [vmem:[%s1 + $0x208] sm:$0xf]
  %v225 = vld [vmem:[%s1 + $0x20c] sm:$0xf]
  %v226 = vld [vmem:[%s1 + $0x210] sm:$0xf]
  %v227 = vld [vmem:[%s1 + $0x214] sm:$0xf]
  %v228 = vld [vmem:[%s1 + $0x218] sm:$0xf]
  %v229 = vld [vmem:[%s1 + $0x21c] sm:$0xf]
  %v230 = vld [vmem:[%s1 + $0x220] sm:$0xf]
  %v231 = vld [vmem:[%s1 + $0x224] sm:$0xf]
  %v232 = vld [vmem:[%s1 + $0x228] sm:$0xf]
  %v233 = vld [vmem:[%s1 + $0x22c] sm:$0xf]
  %v234 = vld [vmem:[%s1 + $0x230] sm:$0xf]
  %v235 = vld [vmem:[%s1 + $0x234] sm:$0xf]
  %v236 = vld [vmem:[%s1 + $0x238] sm:$0xf]
  %v237 = vld [vmem:[%s1 + $0x23c] sm:$0xf]
  %v238 = vld [vmem:[%s2] sm:$0x1]
  %v240 = vperm.slane %v238, 0
  %v322 = vunpack.c.l.b16 %v14
  %v323 = vunpack.c.h.b16 %v14
  %v324 = vunpack.c.l.b16 %v15
  %v325 = vunpack.c.h.b16 %v15
  %v326 = vunpack.c.l.b16 %v16
  %v327 = vunpack.c.h.b16 %v16
  %v328 = vunpack.c.l.b16 %v17
  %v329 = vunpack.c.h.b16 %v17
  %v330 = vunpack.c.l.b16 %v18
  %v331 = vunpack.c.l.b16 %v19
  %v332 = vunpack.c.h.b16 %v19
  %v333 = vunpack.c.l.b16 %v20
  %v334 = vunpack.c.h.b16 %v20
  %v335 = vunpack.c.l.b16 %v21
  %v336 = vunpack.c.h.b16 %v21
  %v337 = vunpack.c.l.b16 %v22
  %v338 = vunpack.c.h.b16 %v22
  %v339 = vunpack.c.l.b16 %v23
  %v340 = vunpack.c.l.b16 %v24
  %v341 = vunpack.c.h.b16 %v24
  %v342 = vunpack.c.l.b16 %v25
  %v343 = vunpack.c.h.b16 %v25
  %v344 = vunpack.c.l.b16 %v26
  %v345 = vunpack.c.h.b16 %v26
  %v346 = vunpack.c.l.b16 %v27
  %v347 = vunpack.c.h.b16 %v27
  %v348 = vunpack.c.l.b16 %v28
  %v349 = vunpack.c.l.b16 %v29
  %v350 = vunpack.c.h.b16 %v29
  %v351 = vunpack.c.l.b16 %v30
  %v352 = vunpack.c.h.b16 %v30
  %v353 = vunpack.c.l.b16 %v31
  %v354 = vunpack.c.h.b16 %v31
  %v355 = vunpack.c.l.b16 %v32
  %v356 = vunpack.c.h.b16 %v32
  %v357 = vunpack.c.l.b16 %v33
  %v358 = vunpack.c.l.b16 %v34
  %v359 = vunpack.c.h.b16 %v34
  %v360 = vunpack.c.l.b16 %v35
  %v361 = vunpack.c.h.b16 %v35
  %v362 = vunpack.c.l.b16 %v36
  %v363 = vunpack.c.h.b16 %v36
  %v364 = vunpack.c.l.b16 %v37
  %v365 = vunpack.c.h.b16 %v37
  %v366 = vunpack.c.l.b16 %v38
  %v367 = vunpack.c.l.b16 %v39
  %v368 = vunpack.c.h.b16 %v39
  %v369 = vunpack.c.l.b16 %v40
  %v370 = vunpack.c.h.b16 %v40
  %v371 = vunpack.c.l.b16 %v41
  %v372 = vunpack.c.h.b16 %v41
  %v373 = vunpack.c.l.b16 %v42
  %v374 = vunpack.c.h.b16 %v42
  %v375 = vunpack.c.l.b16 %v43
  %v376 = vunpack.c.l.b16 %v44
  %v377 = vunpack.c.h.b16 %v44
  %v378 = vunpack.c.l.b16 %v45
  %v379 = vunpack.c.h.b16 %v45
  %v380 = vunpack.c.l.b16 %v46
  %v381 = vunpack.c.h.b16 %v46
  %v382 = vunpack.c.l.b16 %v47
  %v383 = vunpack.c.h.b16 %v47
  %v384 = vunpack.c.l.b16 %v48
  %v385 = vunpack.c.l.b16 %v49
  %v386 = vunpack.c.h.b16 %v49
  %v387 = vunpack.c.l.b16 %v50
  %v388 = vunpack.c.h.b16 %v50
  %v389 = vunpack.c.l.b16 %v51
  %v390 = vunpack.c.h.b16 %v51
  %v391 = vunpack.c.l.b16 %v52
  %v392 = vunpack.c.h.b16 %v52
  %v393 = vunpack.c.l.b16 %v53
  %v394 = vunpack.c.l.b16 %v54
  %v395 = vunpack.c.h.b16 %v54
  %v396 = vunpack.c.l.b16 %v55
  %v397 = vunpack.c.h.b16 %v55
  %v398 = vunpack.c.l.b16 %v56
  %v399 = vunpack.c.h.b16 %v56
  %v400 = vunpack.c.l.b16 %v57
  %v401 = vunpack.c.h.b16 %v57
  %v402 = vunpack.c.l.b16 %v58
  %v403 = vunpack.c.l.b16 %v59
  %v404 = vunpack.c.h.b16 %v59
  %v405 = vunpack.c.l.b16 %v60
  %v406 = vunpack.c.h.b16 %v60
  %v407 = vunpack.c.l.b16 %v61
  %v408 = vunpack.c.h.b16 %v61
  %v409 = vunpack.c.l.b16 %v62
  %v410 = vunpack.c.h.b16 %v62
  %v411 = vunpack.c.l.b16 %v63
  %v412 = vunpack.c.l.b16 %v64
  %v413 = vunpack.c.h.b16 %v64
  %v414 = vunpack.c.l.b16 %v65
  %v415 = vunpack.c.h.b16 %v65
  %v416 = vunpack.c.l.b16 %v66
  %v417 = vunpack.c.h.b16 %v66
  %v418 = vunpack.c.l.b16 %v67
  %v419 = vunpack.c.h.b16 %v67
  %v420 = vunpack.c.l.b16 %v68
  %v421 = vunpack.c.l.b16 %v69
  %v422 = vunpack.c.h.b16 %v69
  %v423 = vunpack.c.l.b16 %v70
  %v424 = vunpack.c.h.b16 %v70
  %v425 = vunpack.c.l.b16 %v71
  %v426 = vunpack.c.h.b16 %v71
  %v427 = vunpack.c.l.b16 %v72
  %v428 = vunpack.c.h.b16 %v72
  %v429 = vunpack.c.l.b16 %v73
  %v430 = vunpack.c.l.b16 %v74
  %v431 = vunpack.c.h.b16 %v74
  %v432 = vunpack.c.l.b16 %v75
  %v433 = vunpack.c.h.b16 %v75
  %v434 = vunpack.c.l.b16 %v76
  %v435 = vunpack.c.h.b16 %v76
  %v436 = vunpack.c.l.b16 %v77
  %v437 = vunpack.c.h.b16 %v77
  %v438 = vunpack.c.l.b16 %v78
  %v439 = vunpack.c.l.b16 %v79
  %v440 = vunpack.c.h.b16 %v79
  %v441 = vunpack.c.l.b16 %v80
  %v442 = vunpack.c.h.b16 %v80
  %v443 = vunpack.c.l.b16 %v81
  %v444 = vunpack.c.h.b16 %v81
  %v445 = vunpack.c.l.b16 %v82
  %v446 = vunpack.c.h.b16 %v82
  %v447 = vunpack.c.l.b16 %v83
  %v448 = vunpack.c.l.b16 %v84
  %v449 = vunpack.c.h.b16 %v84
  %v450 = vunpack.c.l.b16 %v85
  %v451 = vunpack.c.h.b16 %v85
  %v452 = vunpack.c.l.b16 %v86
  %v453 = vunpack.c.h.b16 %v86
  %v454 = vunpack.c.l.b16 %v87
  %v455 = vunpack.c.h.b16 %v87
  %v456 = vunpack.c.l.b16 %v88
  %v457 = vunpack.c.l.b16 %v89
  %v458 = vunpack.c.h.b16 %v89
  %v459 = vunpack.c.l.b16 %v90
  %v460 = vunpack.c.h.b16 %v90
  %v461 = vunpack.c.l.b16 %v91
  %v462 = vunpack.c.h.b16 %v91
  %v463 = vunpack.c.l.b16 %v92
  %v464 = vunpack.c.h.b16 %v92
  %v465 = vunpack.c.l.b16 %v93
  %v466 = vpack.c.b16 %v331, %v322
  %v467 = vpack.c.b16 %v332, %v323
  %v468 = vpack.c.b16 %v333, %v324
  %v469 = vpack.c.b16 %v334, %v325
  %v470 = vpack.c.b16 %v335, %v326
  %v471 = vpack.c.b16 %v336, %v327
  %v472 = vpack.c.b16 %v337, %v328
  %v473 = vpack.c.b16 %v338, %v329
  %v474 = vpack.c.b16 %v339, %v330
  %v475 = vpack.c.b16 %v349, %v340
  %v476 = vpack.c.b16 %v350, %v341
  %v477 = vpack.c.b16 %v351, %v342
  %v478 = vpack.c.b16 %v352, %v343
  %v479 = vpack.c.b16 %v353, %v344
  %v480 = vpack.c.b16 %v354, %v345
  %v481 = vpack.c.b16 %v355, %v346
  %v482 = vpack.c.b16 %v356, %v347
  %v483 = vpack.c.b16 %v357, %v348
  %v484 = vpack.c.b16 %v367, %v358
  %v485 = vpack.c.b16 %v368, %v359
  %v486 = vpack.c.b16 %v369, %v360
  %v487 = vpack.c.b16 %v370, %v361
  %v488 = vpack.c.b16 %v371, %v362
  %v489 = vpack.c.b16 %v372, %v363
  %v490 = vpack.c.b16 %v373, %v364
  %v491 = vpack.c.b16 %v374, %v365
  %v492 = vpack.c.b16 %v375, %v366
  %v493 = vpack.c.b16 %v385, %v376
  %v494 = vpack.c.b16 %v386, %v377
  %v495 = vpack.c.b16 %v387, %v378
  %v496 = vpack.c.b16 %v388, %v379
  %v497 = vpack.c.b16 %v389, %v380
  %v498 = vpack.c.b16 %v390, %v381
  %v499 = vpack.c.b16 %v391, %v382
  %v500 = vpack.c.b16 %v392, %v383
  %v501 = vpack.c.b16 %v393, %v384
  %v502 = vpack.c.b16 %v403, %v394
  %v503 = vpack.c.b16 %v404, %v395
  %v504 = vpack.c.b16 %v405, %v396
  %v505 = vpack.c.b16 %v406, %v397
  %v506 = vpack.c.b16 %v407, %v398
  %v507 = vpack.c.b16 %v408, %v399
  %v508 = vpack.c.b16 %v409, %v400
  %v509 = vpack.c.b16 %v410, %v401
  %v510 = vpack.c.b16 %v411, %v402
  %v511 = vpack.c.b16 %v421, %v412
  %v512 = vpack.c.b16 %v422, %v413
  %v513 = vpack.c.b16 %v423, %v414
  %v514 = vpack.c.b16 %v424, %v415
  %v515 = vpack.c.b16 %v425, %v416
  %v516 = vpack.c.b16 %v426, %v417
  %v517 = vpack.c.b16 %v427, %v418
  %v518 = vpack.c.b16 %v428, %v419
  %v519 = vpack.c.b16 %v429, %v420
  %v520 = vpack.c.b16 %v439, %v430
  %v521 = vpack.c.b16 %v440, %v431
  %v522 = vpack.c.b16 %v441, %v432
  %v523 = vpack.c.b16 %v442, %v433
  %v524 = vpack.c.b16 %v443, %v434
  %v525 = vpack.c.b16 %v444, %v435
  %v526 = vpack.c.b16 %v445, %v436
  %v527 = vpack.c.b16 %v446, %v437
  %v528 = vpack.c.b16 %v447, %v438
  %v529 = vpack.c.b16 %v457, %v448
  %v530 = vpack.c.b16 %v458, %v449
  %v531 = vpack.c.b16 %v459, %v450
  %v532 = vpack.c.b16 %v460, %v451
  %v533 = vpack.c.b16 %v461, %v452
  %v534 = vpack.c.b16 %v462, %v453
  %v535 = vpack.c.b16 %v463, %v454
  %v536 = vpack.c.b16 %v464, %v455
  %v537 = vpack.c.b16 %v465, %v456
  %v754 = vunpack.c.l.b16 %v94
  %v755 = vunpack.c.l.b16 %v95
  %v756 = vunpack.c.l.b16 %v96
  %v757 = vunpack.c.l.b16 %v97
  %v758 = vunpack.c.l.b16 %v98
  %v759 = vunpack.c.l.b16 %v99
  %v760 = vunpack.c.l.b16 %v100
  %v761 = vunpack.c.l.b16 %v101
  %v762 = vunpack.c.l.b16 %v102
  %v763 = vunpack.c.l.b16 %v103
  %v764 = vunpack.c.l.b16 %v104
  %v765 = vunpack.c.l.b16 %v105
  %v766 = vunpack.c.l.b16 %v106
  %v767 = vunpack.c.l.b16 %v107
  %v768 = vunpack.c.l.b16 %v108
  %v769 = vunpack.c.l.b16 %v109
  %v770 = vunpack.c.l.b16 %v110
  %v771 = vunpack.c.l.b16 %v111
  %v772 = vunpack.c.l.b16 %v112
  %v773 = vunpack.c.l.b16 %v113
  %v774 = vunpack.c.l.b16 %v114
  %v775 = vunpack.c.l.b16 %v115
  %v776 = vunpack.c.l.b16 %v116
  %v777 = vunpack.c.l.b16 %v117
  %v778 = vunpack.c.l.b16 %v118
  %v779 = vunpack.c.l.b16 %v119
  %v780 = vunpack.c.l.b16 %v120
  %v781 = vunpack.c.l.b16 %v121
  %v782 = vunpack.c.l.b16 %v122
  %v783 = vunpack.c.l.b16 %v123
  %v784 = vunpack.c.l.b16 %v124
  %v785 = vunpack.c.l.b16 %v125
  %v786 = vunpack.c.l.b16 %v126
  %v787 = vunpack.c.l.b16 %v127
  %v788 = vunpack.c.l.b16 %v128
  %v789 = vunpack.c.l.b16 %v129
  %v790 = vunpack.c.l.b16 %v130
  %v791 = vunpack.c.l.b16 %v131
  %v792 = vunpack.c.l.b16 %v132
  %v793 = vunpack.c.l.b16 %v133
  %v794 = vunpack.c.l.b16 %v134
  %v795 = vunpack.c.l.b16 %v135
  %v796 = vunpack.c.l.b16 %v136
  %v797 = vunpack.c.l.b16 %v137
  %v798 = vunpack.c.l.b16 %v138
  %v799 = vunpack.c.l.b16 %v139
  %v800 = vunpack.c.l.b16 %v140
  %v801 = vunpack.c.l.b16 %v141
  %v802 = vunpack.c.l.b16 %v142
  %v803 = vunpack.c.l.b16 %v143
  %v804 = vunpack.c.l.b16 %v144
  %v805 = vunpack.c.l.b16 %v145
  %v806 = vunpack.c.l.b16 %v146
  %v807 = vunpack.c.l.b16 %v147
  %v808 = vunpack.c.l.b16 %v148
  %v809 = vunpack.c.l.b16 %v149
  %v810 = vunpack.c.l.b16 %v150
  %v811 = vunpack.c.l.b16 %v151
  %v812 = vunpack.c.l.b16 %v152
  %v813 = vunpack.c.l.b16 %v153
  %v814 = vunpack.c.l.b16 %v154
  %v815 = vunpack.c.l.b16 %v155
  %v816 = vunpack.c.l.b16 %v156
  %v817 = vunpack.c.l.b16 %v157
  %v818 = vunpack.c.l.b16 %v158
  %v819 = vunpack.c.l.b16 %v159
  %v820 = vunpack.c.l.b16 %v160
  %v821 = vunpack.c.l.b16 %v161
  %v822 = vunpack.c.l.b16 %v162
  %v823 = vunpack.c.l.b16 %v163
  %v824 = vunpack.c.l.b16 %v164
  %v825 = vunpack.c.l.b16 %v165
  %v826 = vunpack.c.l.b16 %v166
  %v827 = vunpack.c.l.b16 %v167
  %v828 = vunpack.c.l.b16 %v168
  %v829 = vunpack.c.l.b16 %v169
  %v830 = vunpack.c.l.b16 %v170
  %v831 = vunpack.c.l.b16 %v171
  %v832 = vunpack.c.l.b16 %v172
  %v833 = vunpack.c.l.b16 %v173
  %v834 = vunpack.c.l.b16 %v174
  %v835 = vunpack.c.l.b16 %v175
  %v836 = vunpack.c.l.b16 %v176
  %v837 = vunpack.c.l.b16 %v177
  %v838 = vunpack.c.l.b16 %v178
  %v839 = vunpack.c.l.b16 %v179
  %v840 = vunpack.c.l.b16 %v180
  %v841 = vunpack.c.l.b16 %v181
  %v842 = vunpack.c.l.b16 %v182
  %v843 = vunpack.c.l.b16 %v183
  %v844 = vunpack.c.l.b16 %v184
  %v845 = vunpack.c.l.b16 %v185
  %v846 = vunpack.c.l.b16 %v186
  %v847 = vunpack.c.l.b16 %v187
  %v848 = vunpack.c.l.b16 %v188
  %v849 = vunpack.c.l.b16 %v189
  %v850 = vunpack.c.l.b16 %v190
  %v851 = vunpack.c.l.b16 %v191
  %v852 = vunpack.c.l.b16 %v192
  %v853 = vunpack.c.l.b16 %v193
  %v854 = vunpack.c.l.b16 %v194
  %v855 = vunpack.c.l.b16 %v195
  %v856 = vunpack.c.l.b16 %v196
  %v857 = vunpack.c.l.b16 %v197
  %v858 = vunpack.c.l.b16 %v198
  %v859 = vunpack.c.l.b16 %v199
  %v860 = vunpack.c.l.b16 %v200
  %v861 = vunpack.c.l.b16 %v201
  %v862 = vunpack.c.l.b16 %v202
  %v863 = vunpack.c.l.b16 %v203
  %v864 = vunpack.c.l.b16 %v204
  %v865 = vunpack.c.l.b16 %v205
  %v866 = vunpack.c.l.b16 %v206
  %v867 = vunpack.c.l.b16 %v207
  %v868 = vunpack.c.l.b16 %v208
  %v869 = vunpack.c.l.b16 %v209
  %v870 = vunpack.c.l.b16 %v210
  %v871 = vunpack.c.l.b16 %v211
  %v872 = vunpack.c.l.b16 %v212
  %v873 = vunpack.c.l.b16 %v213
  %v874 = vunpack.c.l.b16 %v214
  %v875 = vunpack.c.l.b16 %v215
  %v876 = vunpack.c.l.b16 %v216
  %v877 = vunpack.c.l.b16 %v217
  %v878 = vunpack.c.l.b16 %v218
  %v879 = vunpack.c.l.b16 %v219
  %v880 = vunpack.c.l.b16 %v220
  %v881 = vunpack.c.l.b16 %v221
  %v882 = vunpack.c.l.b16 %v222
  %v883 = vunpack.c.l.b16 %v223
  %v884 = vunpack.c.l.b16 %v224
  %v885 = vunpack.c.l.b16 %v225
  %v886 = vunpack.c.l.b16 %v226
  %v887 = vunpack.c.l.b16 %v227
  %v888 = vunpack.c.l.b16 %v228
  %v889 = vunpack.c.l.b16 %v229
  %v890 = vunpack.c.l.b16 %v230
  %v891 = vunpack.c.l.b16 %v231
  %v892 = vunpack.c.l.b16 %v232
  %v893 = vunpack.c.l.b16 %v233
  %v894 = vunpack.c.l.b16 %v234
  %v895 = vunpack.c.l.b16 %v235
  %v896 = vunpack.c.l.b16 %v236
  %v897 = vunpack.c.l.b16 %v237
  %v898 = vpack.c.b16 %v755, %v754
  %v899 = vpack.c.b16 %v757, %v756
  %v900 = vpack.c.b16 %v759, %v758
  %v901 = vpack.c.b16 %v761, %v760
  %v902 = vpack.c.b16 %v763, %v762
  %v903 = vpack.c.b16 %v765, %v764
  %v904 = vpack.c.b16 %v767, %v766
  %v905 = vpack.c.b16 %v769, %v768
  %v906 = vpack.c.b16 %v771, %v770
  %v907 = vpack.c.b16 %v773, %v772
  %v908 = vpack.c.b16 %v775, %v774
  %v909 = vpack.c.b16 %v777, %v776
  %v910 = vpack.c.b16 %v779, %v778
  %v911 = vpack.c.b16 %v781, %v780
  %v912 = vpack.c.b16 %v783, %v782
  %v913 = vpack.c.b16 %v785, %v784
  %v914 = vpack.c.b16 %v787, %v786
  %v915 = vpack.c.b16 %v789, %v788
  %v916 = vpack.c.b16 %v791, %v790
  %v917 = vpack.c.b16 %v793, %v792
  %v918 = vpack.c.b16 %v795, %v794
  %v919 = vpack.c.b16 %v797, %v796
  %v920 = vpack.c.b16 %v799, %v798
  %v921 = vpack.c.b16 %v801, %v800
  %v922 = vpack.c.b16 %v803, %v802
  %v923 = vpack.c.b16 %v805, %v804
  %v924 = vpack.c.b16 %v807, %v806
  %v925 = vpack.c.b16 %v809, %v808
  %v926 = vpack.c.b16 %v811, %v810
  %v927 = vpack.c.b16 %v813, %v812
  %v928 = vpack.c.b16 %v815, %v814
  %v929 = vpack.c.b16 %v817, %v816
  %v930 = vpack.c.b16 %v819, %v818
  %v931 = vpack.c.b16 %v821, %v820
  %v932 = vpack.c.b16 %v823, %v822
  %v933 = vpack.c.b16 %v825, %v824
  %v934 = vpack.c.b16 %v827, %v826
  %v935 = vpack.c.b16 %v829, %v828
  %v936 = vpack.c.b16 %v831, %v830
  %v937 = vpack.c.b16 %v833, %v832
  %v938 = vpack.c.b16 %v835, %v834
  %v939 = vpack.c.b16 %v837, %v836
  %v940 = vpack.c.b16 %v839, %v838
  %v941 = vpack.c.b16 %v841, %v840
  %v942 = vpack.c.b16 %v843, %v842
  %v943 = vpack.c.b16 %v845, %v844
  %v944 = vpack.c.b16 %v847, %v846
  %v945 = vpack.c.b16 %v849, %v848
  %v946 = vpack.c.b16 %v851, %v850
  %v947 = vpack.c.b16 %v853, %v852
  %v948 = vpack.c.b16 %v855, %v854
  %v949 = vpack.c.b16 %v857, %v856
  %v950 = vpack.c.b16 %v859, %v858
  %v951 = vpack.c.b16 %v861, %v860
  %v952 = vpack.c.b16 %v863, %v862
  %v953 = vpack.c.b16 %v865, %v864
  %v954 = vpack.c.b16 %v867, %v866
  %v955 = vpack.c.b16 %v869, %v868
  %v956 = vpack.c.b16 %v871, %v870
  %v957 = vpack.c.b16 %v873, %v872
  %v958 = vpack.c.b16 %v875, %v874
  %v959 = vpack.c.b16 %v877, %v876
  %v960 = vpack.c.b16 %v879, %v878
  %v961 = vpack.c.b16 %v881, %v880
  %v962 = vpack.c.b16 %v883, %v882
  %v963 = vpack.c.b16 %v885, %v884
  %v964 = vpack.c.b16 %v887, %v886
  %v965 = vpack.c.b16 %v889, %v888
  %v966 = vpack.c.b16 %v891, %v890
  %v967 = vpack.c.b16 %v893, %v892
  %v968 = vpack.c.b16 %v895, %v894
  %v969 = vpack.c.b16 %v897, %v896
  %1042 = vmatpush.bf16.msra.mxu0 %v905
  %1043 = vmatpush.bf16.msra.mxu0 %v904
  %1044 = vmatpush.bf16.msra.mxu0 %v903
  %1045 = vmatpush.bf16.msra.mxu0 %v902
  %1046 = vmatpush.bf16.msra.mxu0 %v901
  %1047 = vmatpush.bf16.msra.mxu0 %v900
  %1048 = vmatpush.bf16.msra.mxu0 %v899
  %1049 = vmatpush.bf16.msra.mxu0 %v898
  %1050 = vmatmul.bf16.gmra.mxu0 %v466
  %v1051 = vpop.f32.mrf.mxu0
  %v1052 = vadd.f32 %v240, %v1051
  %v1053 = vpop.f32.mrf.mxu0
  %v1054 = vadd.f32 %v240, %v1053
  %1055 = vmatmul.bf16.gmra.mxu0 %v475
  %v1056 = vpop.f32.mrf.mxu0
  %v1057 = vadd.f32 %v240, %v1056
  %v1058 = vpop.f32.mrf.mxu0
  %v1059 = vadd.f32 %v240, %v1058
  %1060 = vmatmul.bf16.gmra.mxu0 %v484
  %v1061 = vpop.f32.mrf.mxu0
  %v1062 = vadd.f32 %v240, %v1061
  %v1063 = vpop.f32.mrf.mxu0
  %v1064 = vadd.f32 %v240, %v1063
  %1065 = vmatmul.bf16.gmra.mxu0 %v493
  %v1066 = vpop.f32.mrf.mxu0
  %v1067 = vadd.f32 %v240, %v1066
  %v1068 = vpop.f32.mrf.mxu0
  %v1069 = vadd.f32 %v240, %v1068
  %1070 = vmatmul.bf16.gmra.mxu0 %v502
  %v1071 = vpop.f32.mrf.mxu0
  %v1072 = vadd.f32 %v240, %v1071
  %v1073 = vpop.f32.mrf.mxu0
  %v1074 = vadd.f32 %v240, %v1073
  %1075 = vmatmul.bf16.gmra.mxu0 %v511
  %v1076 = vpop.f32.mrf.mxu0
  %v1077 = vadd.f32 %v240, %v1076
  %v1078 = vpop.f32.mrf.mxu0
  %v1079 = vadd.f32 %v240, %v1078
  %1080 = vmatmul.bf16.gmra.mxu0 %v520
  %v1081 = vpop.f32.mrf.mxu0
  %v1082 = vadd.f32 %v240, %v1081
  %v1083 = vpop.f32.mrf.mxu0
  %v1084 = vadd.f32 %v240, %v1083
  %1085 = vmatmul.bf16.gmra.mxu0 %v529
  %v1086 = vpop.f32.mrf.mxu0
  %v1087 = vadd.f32 %v240, %v1086
  %v1088 = vpop.f32.mrf.mxu0
  %v1089 = vadd.f32 %v240, %v1088
  %1090 = vdwg.mxu0
  %1091 = vmatpush.bf16.msra.mxu0 %v913
  %1092 = vmatpush.bf16.msra.mxu0 %v912
  %1093 = vmatpush.bf16.msra.mxu0 %v911
  %1094 = vmatpush.bf16.msra.mxu0 %v910
  %1095 = vmatpush.bf16.msra.mxu0 %v909
  %1096 = vmatpush.bf16.msra.mxu0 %v908
  %1097 = vmatpush.bf16.msra.mxu0 %v907
  %1098 = vmatpush.bf16.msra.mxu0 %v906
  %1099 = vmatmul.bf16.gmra.mxu0 %v467
  %v1100 = vpop.f32.mrf.mxu0
  %v1101 = vadd.f32 %v1052, %v1100
  %v1102 = vpop.f32.mrf.mxu0
  %v1103 = vadd.f32 %v1054, %v1102
  %1104 = vmatmul.bf16.gmra.mxu0 %v476
  %v1105 = vpop.f32.mrf.mxu0
  %v1106 = vadd.f32 %v1057, %v1105
  %v1107 = vpop.f32.mrf.mxu0
  %v1108 = vadd.f32 %v1059, %v1107
  %1109 = vmatmul.bf16.gmra.mxu0 %v485
  %v1110 = vpop.f32.mrf.mxu0
  %v1111 = vadd.f32 %v1062, %v1110
  %v1112 = vpop.f32.mrf.mxu0
  %v1113 = vadd.f32 %v1064, %v1112
  %1114 = vmatmul.bf16.gmra.mxu0 %v494
  %v1115 = vpop.f32.mrf.mxu0
  %v1116 = vadd.f32 %v1067, %v1115
  %v1117 = vpop.f32.mrf.mxu0
  %v1118 = vadd.f32 %v1069, %v1117
  %1119 = vmatmul.bf16.gmra.mxu0 %v503
  %v1120 = vpop.f32.mrf.mxu0
  %v1121 = vadd.f32 %v1072, %v1120
  %v1122 = vpop.f32.mrf.mxu0
  %v1123 = vadd.f32 %v1074, %v1122
  %1124 = vmatmul.bf16.gmra.mxu0 %v512
  %v1125 = vpop.f32.mrf.mxu0
  %v1126 = vadd.f32 %v1077, %v1125
  %v1127 = vpop.f32.mrf.mxu0
  %v1128 = vadd.f32 %v1079, %v1127
  %1129 = vmatmul.bf16.gmra.mxu0 %v521
  %v1130 = vpop.f32.mrf.mxu0
  %v1131 = vadd.f32 %v1082, %v1130
  %v1132 = vpop.f32.mrf.mxu0
  %v1133 = vadd.f32 %v1084, %v1132
  %1134 = vmatmul.bf16.gmra.mxu0 %v530
  %v1135 = vpop.f32.mrf.mxu0
  %v1136 = vadd.f32 %v1087, %v1135
  %v1137 = vpop.f32.mrf.mxu0
  %v1138 = vadd.f32 %v1089, %v1137
  %1139 = vdwg.mxu0
  %1140 = vmatpush.bf16.msra.mxu0 %v921
  %1141 = vmatpush.bf16.msra.mxu0 %v920
  %1142 = vmatpush.bf16.msra.mxu0 %v919
  %1143 = vmatpush.bf16.msra.mxu0 %v918
  %1144 = vmatpush.bf16.msra.mxu0 %v917
  %1145 = vmatpush.bf16.msra.mxu0 %v916
  %1146 = vmatpush.bf16.msra.mxu0 %v915
  %1147 = vmatpush.bf16.msra.mxu0 %v914
  %1148 = vmatmul.bf16.gmra.mxu0 %v468
  %v1149 = vpop.f32.mrf.mxu0
  %v1150 = vadd.f32 %v1101, %v1149
  %v1151 = vpop.f32.mrf.mxu0
  %v1152 = vadd.f32 %v1103, %v1151
  %1153 = vmatmul.bf16.gmra.mxu0 %v477
  %v1154 = vpop.f32.mrf.mxu0
  %v1155 = vadd.f32 %v1106, %v1154
  %v1156 = vpop.f32.mrf.mxu0
  %v1157 = vadd.f32 %v1108, %v1156
  %1158 = vmatmul.bf16.gmra.mxu0 %v486
  %v1159 = vpop.f32.mrf.mxu0
  %v1160 = vadd.f32 %v1111, %v1159
  %v1161 = vpop.f32.mrf.mxu0
  %v1162 = vadd.f32 %v1113, %v1161
  %1163 = vmatmul.bf16.gmra.mxu0 %v495
  %v1164 = vpop.f32.mrf.mxu0
  %v1165 = vadd.f32 %v1116, %v1164
  %v1166 = vpop.f32.mrf.mxu0
  %v1167 = vadd.f32 %v1118, %v1166
  %1168 = vmatmul.bf16.gmra.mxu0 %v504
  %v1169 = vpop.f32.mrf.mxu0
  %v1170 = vadd.f32 %v1121, %v1169
  %v1171 = vpop.f32.mrf.mxu0
  %v1172 = vadd.f32 %v1123, %v1171
  %1173 = vmatmul.bf16.gmra.mxu0 %v513
  %v1174 = vpop.f32.mrf.mxu0
  %v1175 = vadd.f32 %v1126, %v1174
  %v1176 = vpop.f32.mrf.mxu0
  %v1177 = vadd.f32 %v1128, %v1176
  %1178 = vmatmul.bf16.gmra.mxu0 %v522
  %v1179 = vpop.f32.mrf.mxu0
  %v1180 = vadd.f32 %v1131, %v1179
  %v1181 = vpop.f32.mrf.mxu0
  %v1182 = vadd.f32 %v1133, %v1181
  %1183 = vmatmul.bf16.gmra.mxu0 %v531
  %v1184 = vpop.f32.mrf.mxu0
  %v1185 = vadd.f32 %v1136, %v1184
  %v1186 = vpop.f32.mrf.mxu0
  %v1187 = vadd.f32 %v1138, %v1186
  %1188 = vdwg.mxu0
  %1189 = vmatpush.bf16.msra.mxu0 %v929
  %1190 = vmatpush.bf16.msra.mxu0 %v928
  %1191 = vmatpush.bf16.msra.mxu0 %v927
  %1192 = vmatpush.bf16.msra.mxu0 %v926
  %1193 = vmatpush.bf16.msra.mxu0 %v925
  %1194 = vmatpush.bf16.msra.mxu0 %v924
  %1195 = vmatpush.bf16.msra.mxu0 %v923
  %1196 = vmatpush.bf16.msra.mxu0 %v922
  %1197 = vmatmul.bf16.gmra.mxu0 %v469
  %v1198 = vpop.f32.mrf.mxu0
  %v1199 = vadd.f32 %v1150, %v1198
  %v1200 = vpop.f32.mrf.mxu0
  %v1201 = vadd.f32 %v1152, %v1200
  %1202 = vmatmul.bf16.gmra.mxu0 %v478
  %v1203 = vpop.f32.mrf.mxu0
  %v1204 = vadd.f32 %v1155, %v1203
  %v1205 = vpop.f32.mrf.mxu0
  %v1206 = vadd.f32 %v1157, %v1205
  %1207 = vmatmul.bf16.gmra.mxu0 %v487
  %v1208 = vpop.f32.mrf.mxu0
  %v1209 = vadd.f32 %v1160, %v1208
  %v1210 = vpop.f32.mrf.mxu0
  %v1211 = vadd.f32 %v1162, %v1210
  %1212 = vmatmul.bf16.gmra.mxu0 %v496
  %v1213 = vpop.f32.mrf.mxu0
  %v1214 = vadd.f32 %v1165, %v1213
  %v1215 = vpop.f32.mrf.mxu0
  %v1216 = vadd.f32 %v1167, %v1215
  %1217 = vmatmul.bf16.gmra.mxu0 %v505
  %v1218 = vpop.f32.mrf.mxu0
  %v1219 = vadd.f32 %v1170, %v1218
  %v1220 = vpop.f32.mrf.mxu0
  %v1221 = vadd.f32 %v1172, %v1220
  %1222 = vmatmul.bf16.gmra.mxu0 %v514
  %v1223 = vpop.f32.mrf.mxu0
  %v1224 = vadd.f32 %v1175, %v1223
  %v1225 = vpop.f32.mrf.mxu0
  %v1226 = vadd.f32 %v1177, %v1225
  %1227 = vmatmul.bf16.gmra.mxu0 %v523
  %v1228 = vpop.f32.mrf.mxu0
  %v1229 = vadd.f32 %v1180, %v1228
  %v1230 = vpop.f32.mrf.mxu0
  %v1231 = vadd.f32 %v1182, %v1230
  %1232 = vmatmul.bf16.gmra.mxu0 %v532
  %v1233 = vpop.f32.mrf.mxu0
  %v1234 = vadd.f32 %v1185, %v1233
  %v1235 = vpop.f32.mrf.mxu0
  %v1236 = vadd.f32 %v1187, %v1235
  %1237 = vdwg.mxu0
  %1238 = vmatpush.bf16.msra.mxu0 %v937
  %1239 = vmatpush.bf16.msra.mxu0 %v936
  %1240 = vmatpush.bf16.msra.mxu0 %v935
  %1241 = vmatpush.bf16.msra.mxu0 %v934
  %1242 = vmatpush.bf16.msra.mxu0 %v933
  %1243 = vmatpush.bf16.msra.mxu0 %v932
  %1244 = vmatpush.bf16.msra.mxu0 %v931
  %1245 = vmatpush.bf16.msra.mxu0 %v930
  %1246 = vmatmul.bf16.gmra.mxu0 %v470
  %v1247 = vpop.f32.mrf.mxu0
  %v1248 = vadd.f32 %v1199, %v1247
  %v1249 = vpop.f32.mrf.mxu0
  %v1250 = vadd.f32 %v1201, %v1249
  %1251 = vmatmul.bf16.gmra.mxu0 %v479
  %v1252 = vpop.f32.mrf.mxu0
  %v1253 = vadd.f32 %v1204, %v1252
  %v1254 = vpop.f32.mrf.mxu0
  %v1255 = vadd.f32 %v1206, %v1254
  %1256 = vmatmul.bf16.gmra.mxu0 %v488
  %v1257 = vpop.f32.mrf.mxu0
  %v1258 = vadd.f32 %v1209, %v1257
  %v1259 = vpop.f32.mrf.mxu0
  %v1260 = vadd.f32 %v1211, %v1259
  %1261 = vmatmul.bf16.gmra.mxu0 %v497
  %v1262 = vpop.f32.mrf.mxu0
  %v1263 = vadd.f32 %v1214, %v1262
  %v1264 = vpop.f32.mrf.mxu0
  %v1265 = vadd.f32 %v1216, %v1264
  %1266 = vmatmul.bf16.gmra.mxu0 %v506
  %v1267 = vpop.f32.mrf.mxu0
  %v1268 = vadd.f32 %v1219, %v1267
  %v1269 = vpop.f32.mrf.mxu0
  %v1270 = vadd.f32 %v1221, %v1269
  %1271 = vmatmul.bf16.gmra.mxu0 %v515
  %v1272 = vpop.f32.mrf.mxu0
  %v1273 = vadd.f32 %v1224, %v1272
  %v1274 = vpop.f32.mrf.mxu0
  %v1275 = vadd.f32 %v1226, %v1274
  %1276 = vmatmul.bf16.gmra.mxu0 %v524
  %v1277 = vpop.f32.mrf.mxu0
  %v1278 = vadd.f32 %v1229, %v1277
  %v1279 = vpop.f32.mrf.mxu0
  %v1280 = vadd.f32 %v1231, %v1279
  %1281 = vmatmul.bf16.gmra.mxu0 %v533
  %v1282 = vpop.f32.mrf.mxu0
  %v1283 = vadd.f32 %v1234, %v1282
  %v1284 = vpop.f32.mrf.mxu0
  %v1285 = vadd.f32 %v1236, %v1284
  %1286 = vdwg.mxu0
  %1287 = vmatpush.bf16.msra.mxu0 %v945
  %1288 = vmatpush.bf16.msra.mxu0 %v944
  %1289 = vmatpush.bf16.msra.mxu0 %v943
  %1290 = vmatpush.bf16.msra.mxu0 %v942
  %1291 = vmatpush.bf16.msra.mxu0 %v941
  %1292 = vmatpush.bf16.msra.mxu0 %v940
  %1293 = vmatpush.bf16.msra.mxu0 %v939
  %1294 = vmatpush.bf16.msra.mxu0 %v938
  %1295 = vmatmul.bf16.gmra.mxu0 %v471
  %v1296 = vpop.f32.mrf.mxu0
  %v1297 = vadd.f32 %v1248, %v1296
  %v1298 = vpop.f32.mrf.mxu0
  %v1299 = vadd.f32 %v1250, %v1298
  %1300 = vmatmul.bf16.gmra.mxu0 %v480
  %v1301 = vpop.f32.mrf.mxu0
  %v1302 = vadd.f32 %v1253, %v1301
  %v1303 = vpop.f32.mrf.mxu0
  %v1304 = vadd.f32 %v1255, %v1303
  %1305 = vmatmul.bf16.gmra.mxu0 %v489
  %v1306 = vpop.f32.mrf.mxu0
  %v1307 = vadd.f32 %v1258, %v1306
  %v1308 = vpop.f32.mrf.mxu0
  %v1309 = vadd.f32 %v1260, %v1308
  %1310 = vmatmul.bf16.gmra.mxu0 %v498
  %v1311 = vpop.f32.mrf.mxu0
  %v1312 = vadd.f32 %v1263, %v1311
  %v1313 = vpop.f32.mrf.mxu0
  %v1314 = vadd.f32 %v1265, %v1313
  %1315 = vmatmul.bf16.gmra.mxu0 %v507
  %v1316 = vpop.f32.mrf.mxu0
  %v1317 = vadd.f32 %v1268, %v1316
  %v1318 = vpop.f32.mrf.mxu0
  %v1319 = vadd.f32 %v1270, %v1318
  %1320 = vmatmul.bf16.gmra.mxu0 %v516
  %v1321 = vpop.f32.mrf.mxu0
  %v1322 = vadd.f32 %v1273, %v1321
  %v1323 = vpop.f32.mrf.mxu0
  %v1324 = vadd.f32 %v1275, %v1323
  %1325 = vmatmul.bf16.gmra.mxu0 %v525
  %v1326 = vpop.f32.mrf.mxu0
  %v1327 = vadd.f32 %v1278, %v1326
  %v1328 = vpop.f32.mrf.mxu0
  %v1329 = vadd.f32 %v1280, %v1328
  %1330 = vmatmul.bf16.gmra.mxu0 %v534
  %v1331 = vpop.f32.mrf.mxu0
  %v1332 = vadd.f32 %v1283, %v1331
  %v1333 = vpop.f32.mrf.mxu0
  %v1334 = vadd.f32 %v1285, %v1333
  %1335 = vdwg.mxu0
  %1336 = vmatpush.bf16.msra.mxu0 %v953
  %1337 = vmatpush.bf16.msra.mxu0 %v952
  %1338 = vmatpush.bf16.msra.mxu0 %v951
  %1339 = vmatpush.bf16.msra.mxu0 %v950
  %1340 = vmatpush.bf16.msra.mxu0 %v949
  %1341 = vmatpush.bf16.msra.mxu0 %v948
  %1342 = vmatpush.bf16.msra.mxu0 %v947
  %1343 = vmatpush.bf16.msra.mxu0 %v946
  %1344 = vmatmul.bf16.gmra.mxu0 %v472
  %v1345 = vpop.f32.mrf.mxu0
  %v1346 = vadd.f32 %v1297, %v1345
  %v1347 = vpop.f32.mrf.mxu0
  %v1348 = vadd.f32 %v1299, %v1347
  %1349 = vmatmul.bf16.gmra.mxu0 %v481
  %v1350 = vpop.f32.mrf.mxu0
  %v1351 = vadd.f32 %v1302, %v1350
  %v1352 = vpop.f32.mrf.mxu0
  %v1353 = vadd.f32 %v1304, %v1352
  %1354 = vmatmul.bf16.gmra.mxu0 %v490
  %v1355 = vpop.f32.mrf.mxu0
  %v1356 = vadd.f32 %v1307, %v1355
  %v1357 = vpop.f32.mrf.mxu0
  %v1358 = vadd.f32 %v1309, %v1357
  %1359 = vmatmul.bf16.gmra.mxu0 %v499
  %v1360 = vpop.f32.mrf.mxu0
  %v1361 = vadd.f32 %v1312, %v1360
  %v1362 = vpop.f32.mrf.mxu0
  %v1363 = vadd.f32 %v1314, %v1362
  %1364 = vmatmul.bf16.gmra.mxu0 %v508
  %v1365 = vpop.f32.mrf.mxu0
  %v1366 = vadd.f32 %v1317, %v1365
  %v1367 = vpop.f32.mrf.mxu0
  %v1368 = vadd.f32 %v1319, %v1367
  %1369 = vmatmul.bf16.gmra.mxu0 %v517
  %v1370 = vpop.f32.mrf.mxu0
  %v1371 = vadd.f32 %v1322, %v1370
  %v1372 = vpop.f32.mrf.mxu0
  %v1373 = vadd.f32 %v1324, %v1372
  %1374 = vmatmul.bf16.gmra.mxu0 %v526
  %v1375 = vpop.f32.mrf.mxu0
  %v1376 = vadd.f32 %v1327, %v1375
  %v1377 = vpop.f32.mrf.mxu0
  %v1378 = vadd.f32 %v1329, %v1377
  %1379 = vmatmul.bf16.gmra.mxu0 %v535
  %v1380 = vpop.f32.mrf.mxu0
  %v1381 = vadd.f32 %v1332, %v1380
  %v1382 = vpop.f32.mrf.mxu0
  %v1383 = vadd.f32 %v1334, %v1382
  %1384 = vdwg.mxu0
  %1385 = vmatpush.bf16.msra.mxu0 %v961
  %1386 = vmatpush.bf16.msra.mxu0 %v960
  %1387 = vmatpush.bf16.msra.mxu0 %v959
  %1388 = vmatpush.bf16.msra.mxu0 %v958
  %1389 = vmatpush.bf16.msra.mxu0 %v957
  %1390 = vmatpush.bf16.msra.mxu0 %v956
  %1391 = vmatpush.bf16.msra.mxu0 %v955
  %1392 = vmatpush.bf16.msra.mxu0 %v954
  %1393 = vmatmul.bf16.gmra.mxu0 %v473
  %v1394 = vpop.f32.mrf.mxu0
  %v1395 = vadd.f32 %v1346, %v1394
  %v1396 = vpop.f32.mrf.mxu0
  %v1397 = vadd.f32 %v1348, %v1396
  %1398 = vmatmul.bf16.gmra.mxu0 %v482
  %v1399 = vpop.f32.mrf.mxu0
  %v1400 = vadd.f32 %v1351, %v1399
  %v1401 = vpop.f32.mrf.mxu0
  %v1402 = vadd.f32 %v1353, %v1401
  %1403 = vmatmul.bf16.gmra.mxu0 %v491
  %v1404 = vpop.f32.mrf.mxu0
  %v1405 = vadd.f32 %v1356, %v1404
  %v1406 = vpop.f32.mrf.mxu0
  %v1407 = vadd.f32 %v1358, %v1406
  %1408 = vmatmul.bf16.gmra.mxu0 %v500
  %v1409 = vpop.f32.mrf.mxu0
  %v1410 = vadd.f32 %v1361, %v1409
  %v1411 = vpop.f32.mrf.mxu0
  %v1412 = vadd.f32 %v1363, %v1411
  %1413 = vmatmul.bf16.gmra.mxu0 %v509
  %v1414 = vpop.f32.mrf.mxu0
  %v1415 = vadd.f32 %v1366, %v1414
  %v1416 = vpop.f32.mrf.mxu0
  %v1417 = vadd.f32 %v1368, %v1416
  %1418 = vmatmul.bf16.gmra.mxu0 %v518
  %v1419 = vpop.f32.mrf.mxu0
  %v1420 = vadd.f32 %v1371, %v1419
  %v1421 = vpop.f32.mrf.mxu0
  %v1422 = vadd.f32 %v1373, %v1421
  %1423 = vmatmul.bf16.gmra.mxu0 %v527
  %v1424 = vpop.f32.mrf.mxu0
  %v1425 = vadd.f32 %v1376, %v1424
  %v1426 = vpop.f32.mrf.mxu0
  %v1427 = vadd.f32 %v1378, %v1426
  %1428 = vmatmul.bf16.gmra.mxu0 %v536
  %v1429 = vpop.f32.mrf.mxu0
  %v1430 = vadd.f32 %v1381, %v1429
  %v1431 = vpop.f32.mrf.mxu0
  %v1432 = vadd.f32 %v1383, %v1431
  %1433 = vdwg.mxu0
  %1434 = vmatpush.bf16.msra.mxu0 %v969
  %1435 = vmatpush.bf16.msra.mxu0 %v968
  %1436 = vmatpush.bf16.msra.mxu0 %v967
  %1437 = vmatpush.bf16.msra.mxu0 %v966
  %1438 = vmatpush.bf16.msra.mxu0 %v965
  %1439 = vmatpush.bf16.msra.mxu0 %v964
  %1440 = vmatpush.bf16.msra.mxu0 %v963
  %1441 = vmatpush.bf16.msra.mxu0 %v962
  %1442 = vmatmul.bf16.gmra.mxu0 %v474
  %v1443 = vpop.f32.mrf.mxu0
  %v1444 = vadd.f32 %v1395, %v1443
  %v1445 = vpop.f32.mrf.mxu0
  %v1446 = vadd.f32 %v1397, %v1445
  %1447 = vmatmul.bf16.gmra.mxu0 %v483
  %v1448 = vpop.f32.mrf.mxu0
  %v1449 = vadd.f32 %v1400, %v1448
  %v1450 = vpop.f32.mrf.mxu0
  %v1451 = vadd.f32 %v1402, %v1450
  %1452 = vmatmul.bf16.gmra.mxu0 %v492
  %v1453 = vpop.f32.mrf.mxu0
  %v1454 = vadd.f32 %v1405, %v1453
  %v1455 = vpop.f32.mrf.mxu0
  %v1456 = vadd.f32 %v1407, %v1455
  %1457 = vmatmul.bf16.gmra.mxu0 %v501
  %v1458 = vpop.f32.mrf.mxu0
  %v1459 = vadd.f32 %v1410, %v1458
  %v1460 = vpop.f32.mrf.mxu0
  %v1461 = vadd.f32 %v1412, %v1460
  %1462 = vmatmul.bf16.gmra.mxu0 %v510
  %v1463 = vpop.f32.mrf.mxu0
  %v1464 = vadd.f32 %v1415, %v1463
  %v1465 = vpop.f32.mrf.mxu0
  %v1466 = vadd.f32 %v1417, %v1465
  %1467 = vmatmul.bf16.gmra.mxu0 %v519
  %v1468 = vpop.f32.mrf.mxu0
  %v1469 = vadd.f32 %v1420, %v1468
  %v1470 = vpop.f32.mrf.mxu0
  %v1471 = vadd.f32 %v1422, %v1470
  %1472 = vmatmul.bf16.gmra.mxu0 %v528
  %v1473 = vpop.f32.mrf.mxu0
  %v1474 = vadd.f32 %v1425, %v1473
  %v1475 = vpop.f32.mrf.mxu0
  %v1476 = vadd.f32 %v1427, %v1475
  %1477 = vmatmul.bf16.gmra.mxu0 %v537
  %v1478 = vpop.f32.mrf.mxu0
  %v1479 = vadd.f32 %v1430, %v1478
  %v1480 = vpop.f32.mrf.mxu0
  %v1481 = vadd.f32 %v1432, %v1480
  %1482 = vdwg.mxu0
  %v1483 = vmax.f32 %v1444, 0.0
  %v1484 = vmax.f32 %v1446, 0.0
  %v1485 = vmax.f32 %v1449, 0.0
  %v1486 = vmax.f32 %v1451, 0.0
  %v1487 = vmax.f32 %v1454, 0.0
  %v1488 = vmax.f32 %v1456, 0.0
  %v1489 = vmax.f32 %v1459, 0.0
  %v1490 = vmax.f32 %v1461, 0.0
  %v1491 = vmax.f32 %v1464, 0.0
  %v1492 = vmax.f32 %v1466, 0.0
  %v1493 = vmax.f32 %v1469, 0.0
  %v1494 = vmax.f32 %v1471, 0.0
  %v1495 = vmax.f32 %v1474, 0.0
  %v1496 = vmax.f32 %v1476, 0.0
  %v1497 = vmax.f32 %v1479, 0.0
  %v1498 = vmax.f32 %v1481, 0.0
  %v1499 = vpack.c.bf16 %v1483, %v1483
  %v1500 = vpack.c.bf16 %v1484, %v1484
  %v1501 = vpack.c.bf16 %v1485, %v1485
  %v1502 = vpack.c.bf16 %v1486, %v1486
  %v1503 = vpack.c.bf16 %v1487, %v1487
  %v1504 = vpack.c.bf16 %v1488, %v1488
  %v1505 = vpack.c.bf16 %v1489, %v1489
  %v1506 = vpack.c.bf16 %v1490, %v1490
  %v1507 = vpack.c.bf16 %v1491, %v1491
  %v1508 = vpack.c.bf16 %v1492, %v1492
  %v1509 = vpack.c.bf16 %v1493, %v1493
  %v1510 = vpack.c.bf16 %v1494, %v1494
  %v1511 = vpack.c.bf16 %v1495, %v1495
  %v1512 = vpack.c.bf16 %v1496, %v1496
  %v1513 = vpack.c.bf16 %v1497, %v1497
  %v1514 = vpack.c.bf16 %v1498, %v1498
  %1515 = vst [vmem:[%s3] sm:$0xf] %v1499
  %1516 = vst [vmem:[%s3 + $0x4] sm:$0xf] %v1500
  %1517 = vst [vmem:[%s3 + $0x8] sm:$0xf] %v1501
  %1518 = vst [vmem:[%s3 + $0xc] sm:$0xf] %v1502
  %1519 = vst [vmem:[%s3 + $0x10] sm:$0xf] %v1503
  %1520 = vst [vmem:[%s3 + $0x14] sm:$0xf] %v1504
  %1521 = vst [vmem:[%s3 + $0x18] sm:$0xf] %v1505
  %1522 = vst [vmem:[%s3 + $0x1c] sm:$0xf] %v1506
  %1523 = vst [vmem:[%s3 + $0x20] sm:$0xf] %v1507
  %1524 = vst [vmem:[%s3 + $0x24] sm:$0xf] %v1508
  %1525 = vst [vmem:[%s3 + $0x28] sm:$0xf] %v1509
  %1526 = vst [vmem:[%s3 + $0x2c] sm:$0xf] %v1510
  %1527 = vst [vmem:[%s3 + $0x30] sm:$0xf] %v1511
  %1528 = vst [vmem:[%s3 + $0x34] sm:$0xf] %v1512
  %1529 = vst [vmem:[%s3 + $0x38] sm:$0xf] %v1513
  %1530 = vst [vmem:[%s3 + $0x3c] sm:$0xf] %v1514
  // Predicated region
  $region14: #{_lambda_.23} parent=0 // pred_check
    _
  $region15: #{_lambda_.23} parent=0 // pred_check_branch
    %1532 = sbr.rel (0) target = $region17
  $region16: #{_lambda_.23} parent=0 // pred_region
    _
  $region17: #{_lambda_.23} parent=0 // pred_fallthru
    _
  // Predicated region
  $region18: #{_lambda_.23} parent=0 // pred_check
    _
  $region19: #{_lambda_.23} parent=0 // pred_check_branch
    %1534 = sbr.rel (0) target = $region21
  $region20: #{_lambda_.23} parent=0 // pred_region
    _
  $region21: #{_lambda_.23} parent=0 // pred_fallthru
    _

// kernel: _lambda_.24
$region0: #{_lambda_.24}
  #allocation0 [shape = 'u32[]', space=smem, size = 0x4, offset = 0x4, fixed_abs, tag = 'smem constant byte address 0x4 - core index']
  #allocation1 [shape = 'u32[72,128]{1,0:T(1,128)}', space=vmem, size = 0x9000, scoped, tag = 'internal scratch']
  %s0 = inlined_call_operand.vmem [shape: bf16[128,128], index: 0, kind: input, shape index: {}]
  %s1 = inlined_call_operand.vmem [shape: bf16[128,128], index: 1, kind: input, shape index: {}]
  %s2 = inlined_call_operand.vmem [shape: f32[1,128], index: 2, kind: input, shape index: {}]
  %s3 = inlined_call_operand.vmem [shape: bf16[128,128], index: 3, kind: input, shape index: {}]
  %s4 = inlined_call_operand.vmem [shape: bf16[128,128], index: 4, kind: output, shape index: {}]
  %s5 = sld [smem:[#allocation0]]
  $region26: #{_lambda_.24} parent=0
    _
  %s7 = ssub.s32 1, %s5
  %s8 = scalar_select 0, %s7, %s5
  // Predicated region
  $region2: #{_lambda_.24} parent=0 // pred_check
    _
  $region3: #{_lambda_.24} parent=0 // pred_check_branch
    %10 = sbr.rel (0) target = $region5
  $region4: #{_lambda_.24} parent=0 // pred_region
    _
  $region5: #{_lambda_.24} parent=0 // pred_fallthru
    _
  // Predicated region
  $region6: #{_lambda_.24} parent=0 // pred_check
    _
  $region7: #{_lambda_.24} parent=0 // pred_check_branch
    %12 = sbr.rel (0) target = $region9
  $region8: #{_lambda_.24} parent=0 // pred_region
    _
  $region9: #{_lambda_.24} parent=0 // pred_fallthru
    _
  // Predicated region
  $region10: #{_lambda_.24} parent=0 // pred_check
    _
  $region11: #{_lambda_.24} parent=0 // pred_check_branch
    %14 = sbr.rel (0) target = $region13
  $region12: #{_lambda_.24} parent=0 // pred_region
    _
  $region13: #{_lambda_.24} parent=0 // pred_fallthru
    _
  // Predicated region
  $region14: #{_lambda_.24} parent=0 // pred_check
    _
  $region15: #{_lambda_.24} parent=0 // pred_check_branch
    %16 = sbr.rel (0) target = $region17
  $region16: #{_lambda_.24} parent=0 // pred_region
    _
  $region17: #{_lambda_.24} parent=0 // pred_fallthru
    _
  %v17 = vld [vmem:[%s0] sm:$0xf]
  %v18 = vld [vmem:[%s0 + $0x4] sm:$0xf]
  %v19 = vld [vmem:[%s0 + $0x8] sm:$0xf]
  %v20 = vld [vmem:[%s0 + $0xc] sm:$0xf]
  %v21 = vld [vmem:[%s0 + $0x10] sm:$0xf]
  %v22 = vld [vmem:[%s0 + $0x14] sm:$0xf]
  %v23 = vld [vmem:[%s0 + $0x18] sm:$0xf]
  %v24 = vld [vmem:[%s0 + $0x1c] sm:$0xf]
  %v25 = vld [vmem:[%s0 + $0x20] sm:$0xf]
  %v26 = vld [vmem:[%s0 + $0x24] sm:$0xf]
  %v27 = vld [vmem:[%s0 + $0x28] sm:$0xf]
  %v28 = vld [vmem:[%s0 + $0x2c] sm:$0xf]
  %v29 = vld [vmem:[%s0 + $0x30] sm:$0xf]
  %v30 = vld [vmem:[%s0 + $0x34] sm:$0xf]
  %v31 = vld [vmem:[%s0 + $0x38] sm:$0xf]
  %v32 = vld [vmem:[%s0 + $0x3c] sm:$0xf]
  %v33 = vld [vmem:[%s1] sm:$0xf]
  %v34 = vld [vmem:[%s1 + $0x4] sm:$0xf]
  %v35 = vld [vmem:[%s1 + $0x8] sm:$0xf]
  %v36 = vld [vmem:[%s1 + $0xc] sm:$0xf]
  %v37 = vld [vmem:[%s1 + $0x10] sm:$0xf]
  %v38 = vld [vmem:[%s1 + $0x14] sm:$0xf]
  %v39 = vld [vmem:[%s1 + $0x18] sm:$0xf]
  %v40 = vld [vmem:[%s1 + $0x1c] sm:$0xf]
  %v41 = vld [vmem:[%s1 + $0x20] sm:$0xf]
  %v42 = vld [vmem:[%s1 + $0x24] sm:$0xf]
  %v43 = vld [vmem:[%s1 + $0x28] sm:$0xf]
  %v44 = vld [vmem:[%s1 + $0x2c] sm:$0xf]
  %v45 = vld [vmem:[%s1 + $0x30] sm:$0xf]
  %v46 = vld [vmem:[%s1 + $0x34] sm:$0xf]
  %v47 = vld [vmem:[%s1 + $0x38] sm:$0xf]
  %v48 = vld [vmem:[%s1 + $0x3c] sm:$0xf]
  %v49 = vld [vmem:[%s2] sm:$0x1]
  %v51 = vperm.slane %v49, 0
  %v69 = vunpack.c.l.b16 %v17
  %v70 = vunpack.c.l.b16 %v18
  %v71 = vunpack.c.l.b16 %v19
  %v72 = vunpack.c.l.b16 %v20
  %v73 = vunpack.c.l.b16 %v21
  %v74 = vunpack.c.l.b16 %v22
  %v75 = vunpack.c.l.b16 %v23
  %v76 = vunpack.c.l.b16 %v24
  %v77 = vunpack.c.l.b16 %v25
  %v78 = vunpack.c.l.b16 %v26
  %v79 = vunpack.c.l.b16 %v27
  %v80 = vunpack.c.l.b16 %v28
  %v81 = vunpack.c.l.b16 %v29
  %v82 = vunpack.c.l.b16 %v30
  %v83 = vunpack.c.l.b16 %v31
  %v84 = vunpack.c.l.b16 %v32
  %v85 = vpack.c.b16 %v70, %v69
  %v86 = vpack.c.b16 %v72, %v71
  %v87 = vpack.c.b16 %v74, %v73
  %v88 = vpack.c.b16 %v76, %v75
  %v89 = vpack.c.b16 %v78, %v77
  %v90 = vpack.c.b16 %v80, %v79
  %v91 = vpack.c.b16 %v82, %v81
  %v92 = vpack.c.b16 %v84, %v83
  %v117 = vunpack.c.l.b16 %v33
  %v118 = vunpack.c.l.b16 %v34
  %v119 = vunpack.c.l.b16 %v35
  %v120 = vunpack.c.l.b16 %v36
  %v121 = vunpack.c.l.b16 %v37
  %v122 = vunpack.c.l.b16 %v38
  %v123 = vunpack.c.l.b16 %v39
  %v124 = vunpack.c.l.b16 %v40
  %v125 = vunpack.c.l.b16 %v41
  %v126 = vunpack.c.l.b16 %v42
  %v127 = vunpack.c.l.b16 %v43
  %v128 = vunpack.c.l.b16 %v44
  %v129 = vunpack.c.l.b16 %v45
  %v130 = vunpack.c.l.b16 %v46
  %v131 = vunpack.c.l.b16 %v47
  %v132 = vunpack.c.l.b16 %v48
  %v133 = vpack.c.b16 %v118, %v117
  %v134 = vpack.c.b16 %v120, %v119
  %v135 = vpack.c.b16 %v122, %v121
  %v136 = vpack.c.b16 %v124, %v123
  %v137 = vpack.c.b16 %v126, %v125
  %v138 = vpack.c.b16 %v128, %v127
  %v139 = vpack.c.b16 %v130, %v129
  %v140 = vpack.c.b16 %v132, %v131
  %149 = vmatpush.bf16.msra.mxu0 %v140
  %150 = vmatpush.bf16.msra.mxu0 %v139
  %151 = vmatpush.bf16.msra.mxu0 %v138
  %152 = vmatpush.bf16.msra.mxu0 %v137
  %153 = vmatpush.bf16.msra.mxu0 %v136
  %154 = vmatpush.bf16.msra.mxu0 %v135
  %155 = vmatpush.bf16.msra.mxu0 %v134
  %156 = vmatpush.bf16.msra.mxu0 %v133
  %157 = vmatmul.bf16.gmra.mxu0 %v85
  %v158 = vpop.f32.mrf.mxu0
  %v159 = vadd.f32 %v51, %v158
  %v160 = vpop.f32.mrf.mxu0
  %v161 = vadd.f32 %v51, %v160
  %162 = vmatmul.bf16.gmra.mxu0 %v86
  %v163 = vpop.f32.mrf.mxu0
  %v164 = vadd.f32 %v51, %v163
  %v165 = vpop.f32.mrf.mxu0
  %v166 = vadd.f32 %v51, %v165
  %167 = vmatmul.bf16.gmra.mxu0 %v87
  %v168 = vpop.f32.mrf.mxu0
  %v169 = vadd.f32 %v51, %v168
  %v170 = vpop.f32.mrf.mxu0
  %v171 = vadd.f32 %v51, %v170
  %172 = vmatmul.bf16.gmra.mxu0 %v88
  %v173 = vpop.f32.mrf.mxu0
  %v174 = vadd.f32 %v51, %v173
  %v175 = vpop.f32.mrf.mxu0
  %v176 = vadd.f32 %v51, %v175
  %177 = vmatmul.bf16.gmra.mxu0 %v89
  %v178 = vpop.f32.mrf.mxu0
  %v179 = vadd.f32 %v51, %v178
  %v180 = vpop.f32.mrf.mxu0
  %v181 = vadd.f32 %v51, %v180
  %182 = vmatmul.bf16.gmra.mxu0 %v90
  %v183 = vpop.f32.mrf.mxu0
  %v184 = vadd.f32 %v51, %v183
  %v185 = vpop.f32.mrf.mxu0
  %v186 = vadd.f32 %v51, %v185
  %187 = vmatmul.bf16.gmra.mxu0 %v91
  %v188 = vpop.f32.mrf.mxu0
  %v189 = vadd.f32 %v51, %v188
  %v190 = vpop.f32.mrf.mxu0
  %v191 = vadd.f32 %v51, %v190
  %192 = vmatmul.bf16.gmra.mxu0 %v92
  %v193 = vpop.f32.mrf.mxu0
  %v194 = vadd.f32 %v51, %v193
  %v195 = vpop.f32.mrf.mxu0
  %v196 = vadd.f32 %v51, %v195
  %197 = vdwg.mxu0
  %v198 = vld [vmem:[%s3] sm:$0xf]
  %v199 = vld [vmem:[%s3 + $0x4] sm:$0xf]
  %v200 = vld [vmem:[%s3 + $0x8] sm:$0xf]
  %v201 = vld [vmem:[%s3 + $0xc] sm:$0xf]
  %v202 = vld [vmem:[%s3 + $0x10] sm:$0xf]
  %v203 = vld [vmem:[%s3 + $0x14] sm:$0xf]
  %v204 = vld [vmem:[%s3 + $0x18] sm:$0xf]
  %v205 = vld [vmem:[%s3 + $0x1c] sm:$0xf]
  %v206 = vld [vmem:[%s3 + $0x20] sm:$0xf]
  %v207 = vld [vmem:[%s3 + $0x24] sm:$0xf]
  %v208 = vld [vmem:[%s3 + $0x28] sm:$0xf]
  %v209 = vld [vmem:[%s3 + $0x2c] sm:$0xf]
  %v210 = vld [vmem:[%s3 + $0x30] sm:$0xf]
  %v211 = vld [vmem:[%s3 + $0x34] sm:$0xf]
  %v212 = vld [vmem:[%s3 + $0x38] sm:$0xf]
  %v213 = vld [vmem:[%s3 + $0x3c] sm:$0xf]
  %v214 = vunpack.c.l.bf16 %v198
  %v215 = vunpack.c.l.bf16 %v199
  %v216 = vunpack.c.l.bf16 %v200
  %v217 = vunpack.c.l.bf16 %v201
  %v218 = vunpack.c.l.bf16 %v202
  %v219 = vunpack.c.l.bf16 %v203
  %v220 = vunpack.c.l.bf16 %v204
  %v221 = vunpack.c.l.bf16 %v205
  %v222 = vunpack.c.l.bf16 %v206
  %v223 = vunpack.c.l.bf16 %v207
  %v224 = vunpack.c.l.bf16 %v208
  %v225 = vunpack.c.l.bf16 %v209
  %v226 = vunpack.c.l.bf16 %v210
  %v227 = vunpack.c.l.bf16 %v211
  %v228 = vunpack.c.l.bf16 %v212
  %v229 = vunpack.c.l.bf16 %v213
  %v230 = vadd.f32 %v159, %v214
  %v231 = vadd.f32 %v161, %v215
  %v232 = vadd.f32 %v164, %v216
  %v233 = vadd.f32 %v166, %v217
  %v234 = vadd.f32 %v169, %v218
  %v235 = vadd.f32 %v171, %v219
  %v236 = vadd.f32 %v174, %v220
  %v237 = vadd.f32 %v176, %v221
  %v238 = vadd.f32 %v179, %v222
  %v239 = vadd.f32 %v181, %v223
  %v240 = vadd.f32 %v184, %v224
  %v241 = vadd.f32 %v186, %v225
  %v242 = vadd.f32 %v189, %v226
  %v243 = vadd.f32 %v191, %v227
  %v244 = vadd.f32 %v194, %v228
  %v245 = vadd.f32 %v196, %v229
  %v246 = vmax.f32 %v230, 0.0
  %v247 = vmax.f32 %v231, 0.0
  %v248 = vmax.f32 %v232, 0.0
  %v249 = vmax.f32 %v233, 0.0
  %v250 = vmax.f32 %v234, 0.0
  %v251 = vmax.f32 %v235, 0.0
  %v252 = vmax.f32 %v236, 0.0
  %v253 = vmax.f32 %v237, 0.0
  %v254 = vmax.f32 %v238, 0.0
  %v255 = vmax.f32 %v239, 0.0
  %v256 = vmax.f32 %v240, 0.0
  %v257 = vmax.f32 %v241, 0.0
  %v258 = vmax.f32 %v242, 0.0
  %v259 = vmax.f32 %v243, 0.0
  %v260 = vmax.f32 %v244, 0.0
  %v261 = vmax.f32 %v245, 0.0
  %v262 = vpack.c.bf16 %v246, %v246
  %v263 = vpack.c.bf16 %v247, %v247
  %v264 = vpack.c.bf16 %v248, %v248
  %v265 = vpack.c.bf16 %v249, %v249
  %v266 = vpack.c.bf16 %v250, %v250
  %v267 = vpack.c.bf16 %v251, %v251
  %v268 = vpack.c.bf16 %v252, %v252
  %v269 = vpack.c.bf16 %v253, %v253
  %v270 = vpack.c.bf16 %v254, %v254
  %v271 = vpack.c.bf16 %v255, %v255
  %v272 = vpack.c.bf16 %v256, %v256
  %v273 = vpack.c.bf16 %v257, %v257
  %v274 = vpack.c.bf16 %v258, %v258
  %v275 = vpack.c.bf16 %v259, %v259
  %v276 = vpack.c.bf16 %v260, %v260
  %v277 = vpack.c.bf16 %v261, %v261
  %278 = vst [vmem:[%s4] sm:$0xf] %v262
  %279 = vst [vmem:[%s4 + $0x4] sm:$0xf] %v263
  %280 = vst [vmem:[%s4 + $0x8] sm:$0xf] %v264
  %281 = vst [vmem:[%s4 + $0xc] sm:$0xf] %v265
  %282 = vst [vmem:[%s4 + $0x10] sm:$0xf] %v266
  %283 = vst [vmem:[%s4 + $0x14] sm:$0xf] %v267
  %284 = vst [vmem:[%s4 + $0x18] sm:$0xf] %v268
  %285 = vst [vmem:[%s4 + $0x1c] sm:$0xf] %v269
  %286 = vst [vmem:[%s4 + $0x20] sm:$0xf] %v270
  %287 = vst [vmem:[%s4 + $0x24] sm:$0xf] %v271
  %288 = vst [vmem:[%s4 + $0x28] sm:$0xf] %v272
  %289 = vst [vmem:[%s4 + $0x2c] sm:$0xf] %v273
  %290 = vst [vmem:[%s4 + $0x30] sm:$0xf] %v274
  %291 = vst [vmem:[%s4 + $0x34] sm:$0xf] %v275
  %292 = vst [vmem:[%s4 + $0x38] sm:$0xf] %v276
  %293 = vst [vmem:[%s4 + $0x3c] sm:$0xf] %v277
  // Predicated region
  $region18: #{_lambda_.24} parent=0 // pred_check
    _
  $region19: #{_lambda_.24} parent=0 // pred_check_branch
    %295 = sbr.rel (0) target = $region21
  $region20: #{_lambda_.24} parent=0 // pred_region
    _
  $region21: #{_lambda_.24} parent=0 // pred_fallthru
    _
  // Predicated region
  $region22: #{_lambda_.24} parent=0 // pred_check
    _
  $region23: #{_lambda_.24} parent=0 // pred_check_branch
    %297 = sbr.rel (0) target = $region25
  $region24: #{_lambda_.24} parent=0 // pred_region
    _
  $region25: #{_lambda_.24} parent=0 // pred_fallthru
    _

// kernel: _lambda_.26
$region0: #{_lambda_.26}
  #allocation0 [shape = 'u32[]', space=smem, size = 0x4, offset = 0x4, fixed_abs, tag = 'smem constant byte address 0x4 - core index']
  #allocation1 [shape = 'u32[72,128]{1,0:T(1,128)}', space=vmem, size = 0x9000, scoped, tag = 'internal scratch']
  %s0 = inlined_call_operand.vmem [shape: bf16[128,128], index: 0, kind: input, shape index: {}]
  %s1 = inlined_call_operand.vmem [shape: bf16[128,128], index: 1, kind: input, shape index: {}]
  %s2 = inlined_call_operand.vmem [shape: f32[1,128], index: 2, kind: input, shape index: {}]
  %s3 = inlined_call_operand.vmem [shape: bf16[128,128], index: 3, kind: output, shape index: {}]
  %s4 = sld [smem:[#allocation0]]
  $region22: #{_lambda_.26} parent=0
    _
  %s6 = ssub.s32 1, %s4
  %s7 = scalar_select 0, %s6, %s4
  // Predicated region
  $region2: #{_lambda_.26} parent=0 // pred_check
    _
  $region3: #{_lambda_.26} parent=0 // pred_check_branch
    %9 = sbr.rel (0) target = $region5
  $region4: #{_lambda_.26} parent=0 // pred_region
    _
  $region5: #{_lambda_.26} parent=0 // pred_fallthru
    _
  // Predicated region
  $region6: #{_lambda_.26} parent=0 // pred_check
    _
  $region7: #{_lambda_.26} parent=0 // pred_check_branch
    %11 = sbr.rel (0) target = $region9
  $region8: #{_lambda_.26} parent=0 // pred_region
    _
  $region9: #{_lambda_.26} parent=0 // pred_fallthru
    _
  // Predicated region
  $region10: #{_lambda_.26} parent=0 // pred_check
    _
  $region11: #{_lambda_.26} parent=0 // pred_check_branch
    %13 = sbr.rel (0) target = $region13
  $region12: #{_lambda_.26} parent=0 // pred_region
    _
  $region13: #{_lambda_.26} parent=0 // pred_fallthru
    _
  %v14 = vld [vmem:[%s0] sm:$0xf]
  %v15 = vld [vmem:[%s0 + $0x4] sm:$0xf]
  %v16 = vld [vmem:[%s0 + $0x8] sm:$0xf]
  %v17 = vld [vmem:[%s0 + $0xc] sm:$0xf]
  %v18 = vld [vmem:[%s0 + $0x10] sm:$0xf]
  %v19 = vld [vmem:[%s0 + $0x14] sm:$0xf]
  %v20 = vld [vmem:[%s0 + $0x18] sm:$0xf]
  %v21 = vld [vmem:[%s0 + $0x1c] sm:$0xf]
  %v22 = vld [vmem:[%s0 + $0x20] sm:$0xf]
  %v23 = vld [vmem:[%s0 + $0x24] sm:$0xf]
  %v24 = vld [vmem:[%s0 + $0x28] sm:$0xf]
  %v25 = vld [vmem:[%s0 + $0x2c] sm:$0xf]
  %v26 = vld [vmem:[%s0 + $0x30] sm:$0xf]
  %v27 = vld [vmem:[%s0 + $0x34] sm:$0xf]
  %v28 = vld [vmem:[%s0 + $0x38] sm:$0xf]
  %v29 = vld [vmem:[%s0 + $0x3c] sm:$0xf]
  %v30 = vld [vmem:[%s1] sm:$0xf]
  %v31 = vld [vmem:[%s1 + $0x4] sm:$0xf]
  %v32 = vld [vmem:[%s1 + $0x8] sm:$0xf]
  %v33 = vld [vmem:[%s1 + $0xc] sm:$0xf]
  %v34 = vld [vmem:[%s1 + $0x10] sm:$0xf]
  %v35 = vld [vmem:[%s1 + $0x14] sm:$0xf]
  %v36 = vld [vmem:[%s1 + $0x18] sm:$0xf]
  %v37 = vld [vmem:[%s1 + $0x1c] sm:$0xf]
  %v38 = vld [vmem:[%s1 + $0x20] sm:$0xf]
  %v39 = vld [vmem:[%s1 + $0x24] sm:$0xf]
  %v40 = vld [vmem:[%s1 + $0x28] sm:$0xf]
  %v41 = vld [vmem:[%s1 + $0x2c] sm:$0xf]
  %v42 = vld [vmem:[%s1 + $0x30] sm:$0xf]
  %v43 = vld [vmem:[%s1 + $0x34] sm:$0xf]
  %v44 = vld [vmem:[%s1 + $0x38] sm:$0xf]
  %v45 = vld [vmem:[%s1 + $0x3c] sm:$0xf]
  %v46 = vld [vmem:[%s2] sm:$0x1]
  %v48 = vperm.slane %v46, 0
  %v66 = vunpack.c.l.b16 %v14
  %v67 = vunpack.c.l.b16 %v15
  %v68 = vunpack.c.l.b16 %v16
  %v69 = vunpack.c.l.b16 %v17
  %v70 = vunpack.c.l.b16 %v18
  %v71 = vunpack.c.l.b16 %v19
  %v72 = vunpack.c.l.b16 %v20
  %v73 = vunpack.c.l.b16 %v21
  %v74 = vunpack.c.l.b16 %v22
  %v75 = vunpack.c.l.b16 %v23
  %v76 = vunpack.c.l.b16 %v24
  %v77 = vunpack.c.l.b16 %v25
  %v78 = vunpack.c.l.b16 %v26
  %v79 = vunpack.c.l.b16 %v27
  %v80 = vunpack.c.l.b16 %v28
  %v81 = vunpack.c.l.b16 %v29
  %v82 = vpack.c.b16 %v67, %v66
  %v83 = vpack.c.b16 %v69, %v68
  %v84 = vpack.c.b16 %v71, %v70
  %v85 = vpack.c.b16 %v73, %v72
  %v86 = vpack.c.b16 %v75, %v74
  %v87 = vpack.c.b16 %v77, %v76
  %v88 = vpack.c.b16 %v79, %v78
  %v89 = vpack.c.b16 %v81, %v80
  %v114 = vunpack.c.l.b16 %v30
  %v115 = vunpack.c.l.b16 %v31
  %v116 = vunpack.c.l.b16 %v32
  %v117 = vunpack.c.l.b16 %v33
  %v118 = vunpack.c.l.b16 %v34
  %v119 = vunpack.c.l.b16 %v35
  %v120 = vunpack.c.l.b16 %v36
  %v121 = vunpack.c.l.b16 %v37
  %v122 = vunpack.c.l.b16 %v38
  %v123 = vunpack.c.l.b16 %v39
  %v124 = vunpack.c.l.b16 %v40
  %v125 = vunpack.c.l.b16 %v41
  %v126 = vunpack.c.l.b16 %v42
  %v127 = vunpack.c.l.b16 %v43
  %v128 = vunpack.c.l.b16 %v44
  %v129 = vunpack.c.l.b16 %v45
  %v130 = vpack.c.b16 %v115, %v114
  %v131 = vpack.c.b16 %v117, %v116
  %v132 = vpack.c.b16 %v119, %v118
  %v133 = vpack.c.b16 %v121, %v120
  %v134 = vpack.c.b16 %v123, %v122
  %v135 = vpack.c.b16 %v125, %v124
  %v136 = vpack.c.b16 %v127, %v126
  %v137 = vpack.c.b16 %v129, %v128
  %146 = vmatpush.bf16.msra.mxu0 %v137
  %147 = vmatpush.bf16.msra.mxu0 %v136
  %148 = vmatpush.bf16.msra.mxu0 %v135
  %149 = vmatpush.bf16.msra.mxu0 %v134
  %150 = vmatpush.bf16.msra.mxu0 %v133
  %151 = vmatpush.bf16.msra.mxu0 %v132
  %152 = vmatpush.bf16.msra.mxu0 %v131
  %153 = vmatpush.bf16.msra.mxu0 %v130
  %154 = vmatmul.bf16.gmra.mxu0 %v82
  %v155 = vpop.f32.mrf.mxu0
  %v156 = vadd.f32 %v48, %v155
  %v157 = vpop.f32.mrf.mxu0
  %v158 = vadd.f32 %v48, %v157
  %159 = vmatmul.bf16.gmra.mxu0 %v83
  %v160 = vpop.f32.mrf.mxu0
  %v161 = vadd.f32 %v48, %v160
  %v162 = vpop.f32.mrf.mxu0
  %v163 = vadd.f32 %v48, %v162
  %164 = vmatmul.bf16.gmra.mxu0 %v84
  %v165 = vpop.f32.mrf.mxu0
  %v166 = vadd.f32 %v48, %v165
  %v167 = vpop.f32.mrf.mxu0
  %v168 = vadd.f32 %v48, %v167
  %169 = vmatmul.bf16.gmra.mxu0 %v85
  %v170 = vpop.f32.mrf.mxu0
  %v171 = vadd.f32 %v48, %v170
  %v172 = vpop.f32.mrf.mxu0
  %v173 = vadd.f32 %v48, %v172
  %174 = vmatmul.bf16.gmra.mxu0 %v86
  %v175 = vpop.f32.mrf.mxu0
  %v176 = vadd.f32 %v48, %v175
  %v177 = vpop.f32.mrf.mxu0
  %v178 = vadd.f32 %v48, %v177
  %179 = vmatmul.bf16.gmra.mxu0 %v87
  %v180 = vpop.f32.mrf.mxu0
  %v181 = vadd.f32 %v48, %v180
  %v182 = vpop.f32.mrf.mxu0
  %v183 = vadd.f32 %v48, %v182
  %184 = vmatmul.bf16.gmra.mxu0 %v88
  %v185 = vpop.f32.mrf.mxu0
  %v186 = vadd.f32 %v48, %v185
  %v187 = vpop.f32.mrf.mxu0
  %v188 = vadd.f32 %v48, %v187
  %189 = vmatmul.bf16.gmra.mxu0 %v89
  %v190 = vpop.f32.mrf.mxu0
  %v191 = vadd.f32 %v48, %v190
  %v192 = vpop.f32.mrf.mxu0
  %v193 = vadd.f32 %v48, %v192
  %194 = vdwg.mxu0
  %v195 = vmax.f32 %v156, 0.0
  %v196 = vmax.f32 %v158, 0.0
  %v197 = vmax.f32 %v161, 0.0
  %v198 = vmax.f32 %v163, 0.0
  %v199 = vmax.f32 %v166, 0.0
  %v200 = vmax.f32 %v168, 0.0
  %v201 = vmax.f32 %v171, 0.0
  %v202 = vmax.f32 %v173, 0.0
  %v203 = vmax.f32 %v176, 0.0
  %v204 = vmax.f32 %v178, 0.0
  %v205 = vmax.f32 %v181, 0.0
  %v206 = vmax.f32 %v183, 0.0
  %v207 = vmax.f32 %v186, 0.0
  %v208 = vmax.f32 %v188, 0.0
  %v209 = vmax.f32 %v191, 0.0
  %v210 = vmax.f32 %v193, 0.0
  %v211 = vpack.c.bf16 %v195, %v195
  %v212 = vpack.c.bf16 %v196, %v196
  %v213 = vpack.c.bf16 %v197, %v197
  %v214 = vpack.c.bf16 %v198, %v198
  %v215 = vpack.c.bf16 %v199, %v199
  %v216 = vpack.c.bf16 %v200, %v200
  %v217 = vpack.c.bf16 %v201, %v201
  %v218 = vpack.c.bf16 %v202, %v202
  %v219 = vpack.c.bf16 %v203, %v203
  %v220 = vpack.c.bf16 %v204, %v204
  %v221 = vpack.c.bf16 %v205, %v205
  %v222 = vpack.c.bf16 %v206, %v206
  %v223 = vpack.c.bf16 %v207, %v207
  %v224 = vpack.c.bf16 %v208, %v208
  %v225 = vpack.c.bf16 %v209, %v209
  %v226 = vpack.c.bf16 %v210, %v210
  %227 = vst [vmem:[%s3] sm:$0xf] %v211
  %228 = vst [vmem:[%s3 + $0x4] sm:$0xf] %v212
  %229 = vst [vmem:[%s3 + $0x8] sm:$0xf] %v213
  %230 = vst [vmem:[%s3 + $0xc] sm:$0xf] %v214
  %231 = vst [vmem:[%s3 + $0x10] sm:$0xf] %v215
  %232 = vst [vmem:[%s3 + $0x14] sm:$0xf] %v216
  %233 = vst [vmem:[%s3 + $0x18] sm:$0xf] %v217
  %234 = vst [vmem:[%s3 + $0x1c] sm:$0xf] %v218
  %235 = vst [vmem:[%s3 + $0x20] sm:$0xf] %v219
  %236 = vst [vmem:[%s3 + $0x24] sm:$0xf] %v220
  %237 = vst [vmem:[%s3 + $0x28] sm:$0xf] %v221
  %238 = vst [vmem:[%s3 + $0x2c] sm:$0xf] %v222
  %239 = vst [vmem:[%s3 + $0x30] sm:$0xf] %v223
  %240 = vst [vmem:[%s3 + $0x34] sm:$0xf] %v224
  %241 = vst [vmem:[%s3 + $0x38] sm:$0xf] %v225
  %242 = vst [vmem:[%s3 + $0x3c] sm:$0xf] %v226
  // Predicated region
  $region14: #{_lambda_.26} parent=0 // pred_check
    _
  $region15: #{_lambda_.26} parent=0 // pred_check_branch
    %244 = sbr.rel (0) target = $region17
  $region16: #{_lambda_.26} parent=0 // pred_region
    _
  $region17: #{_lambda_.26} parent=0 // pred_fallthru
    _
  // Predicated region
  $region18: #{_lambda_.26} parent=0 // pred_check
    _
  $region19: #{_lambda_.26} parent=0 // pred_check_branch
    %246 = sbr.rel (0) target = $region21
  $region20: #{_lambda_.26} parent=0 // pred_region
    _
  $region21: #{_lambda_.26} parent=0 // pred_fallthru
    _

// kernel: _lambda_.25
$region0: #{_lambda_.25}
  #allocation0 [shape = 'u32[]', space=smem, size = 0x4, offset = 0x4, fixed_abs, tag = 'smem constant byte address 0x4 - core index']
  #allocation1 [shape = 'u32[72,128]{1,0:T(1,128)}', space=vmem, size = 0x9000, scoped, tag = 'internal scratch']
  %s0 = inlined_call_operand.vmem [shape: bf16[32,128], index: 0, kind: input, shape index: {}]
  %s1 = inlined_call_operand.vmem [shape: bf16[128,256], index: 1, kind: input, shape index: {}]
  %s2 = inlined_call_operand.vmem [shape: f32[1,256], index: 2, kind: input, shape index: {}]
  %s3 = inlined_call_operand.vmem [shape: bf16[32,256], index: 3, kind: output, shape index: {}]
  %s4 = sld [smem:[#allocation0]]
  $region22: #{_lambda_.25} parent=0
    _
  %s6 = ssub.s32 1, %s4
  %s7 = scalar_select 0, %s6, %s4
  // Predicated region
  $region2: #{_lambda_.25} parent=0 // pred_check
    _
  $region3: #{_lambda_.25} parent=0 // pred_check_branch
    %9 = sbr.rel (0) target = $region5
  $region4: #{_lambda_.25} parent=0 // pred_region
    _
  $region5: #{_lambda_.25} parent=0 // pred_fallthru
    _
  // Predicated region
  $region6: #{_lambda_.25} parent=0 // pred_check
    _
  $region7: #{_lambda_.25} parent=0 // pred_check_branch
    %11 = sbr.rel (0) target = $region9
  $region8: #{_lambda_.25} parent=0 // pred_region
    _
  $region9: #{_lambda_.25} parent=0 // pred_fallthru
    _
  // Predicated region
  $region10: #{_lambda_.25} parent=0 // pred_check
    _
  $region11: #{_lambda_.25} parent=0 // pred_check_branch
    %13 = sbr.rel (0) target = $region13
  $region12: #{_lambda_.25} parent=0 // pred_region
    _
  $region13: #{_lambda_.25} parent=0 // pred_fallthru
    _
  %v14 = vld [vmem:[%s0] sm:$0xf]
  %v15 = vld [vmem:[%s0 + $0x4] sm:$0xf]
  %v16 = vld [vmem:[%s0 + $0x8] sm:$0xf]
  %v17 = vld [vmem:[%s0 + $0xc] sm:$0xf]
  %v18 = vld [vmem:[%s1] sm:$0xff]
  %v19 = vld [vmem:[%s1 + $0x8] sm:$0xff]
  %v20 = vld [vmem:[%s1 + $0x10] sm:$0xff]
  %v21 = vld [vmem:[%s1 + $0x18] sm:$0xff]
  %v22 = vld [vmem:[%s1 + $0x20] sm:$0xff]
  %v23 = vld [vmem:[%s1 + $0x28] sm:$0xff]
  %v24 = vld [vmem:[%s1 + $0x30] sm:$0xff]
  %v25 = vld [vmem:[%s1 + $0x38] sm:$0xff]
  %v26 = vld [vmem:[%s1 + $0x40] sm:$0xff]
  %v27 = vld [vmem:[%s1 + $0x48] sm:$0xff]
  %v28 = vld [vmem:[%s1 + $0x50] sm:$0xff]
  %v29 = vld [vmem:[%s1 + $0x58] sm:$0xff]
  %v30 = vld [vmem:[%s1 + $0x60] sm:$0xff]
  %v31 = vld [vmem:[%s1 + $0x68] sm:$0xff]
  %v32 = vld [vmem:[%s1 + $0x70] sm:$0xff]
  %v33 = vld [vmem:[%s1 + $0x78] sm:$0xff]
  %v34 = vld [vmem:[%s2] sm:$0x3]
  %v36 = vperm.slane %v34, 0
  %v37 = vperm.slane %v34, 1
  %v44 = vunpack.c.l.b16 %v14
  %v45 = vunpack.c.l.b16 %v15
  %v46 = vunpack.c.l.b16 %v16
  %v47 = vunpack.c.l.b16 %v17
  %v48 = vpack.c.b16 %v45, %v44
  %v49 = vpack.c.b16 %v47, %v46
  %v68 = vunpack.c.l.b16 %v18
  %v69 = vunpack.c.h.b16 %v18
  %v70 = vunpack.c.l.b16 %v19
  %v71 = vunpack.c.h.b16 %v19
  %v72 = vunpack.c.l.b16 %v20
  %v73 = vunpack.c.h.b16 %v20
  %v74 = vunpack.c.l.b16 %v21
  %v75 = vunpack.c.h.b16 %v21
  %v76 = vunpack.c.l.b16 %v22
  %v77 = vunpack.c.h.b16 %v22
  %v78 = vunpack.c.l.b16 %v23
  %v79 = vunpack.c.h.b16 %v23
  %v80 = vunpack.c.l.b16 %v24
  %v81 = vunpack.c.h.b16 %v24
  %v82 = vunpack.c.l.b16 %v25
  %v83 = vunpack.c.h.b16 %v25
  %v84 = vunpack.c.l.b16 %v26
  %v85 = vunpack.c.h.b16 %v26
  %v86 = vunpack.c.l.b16 %v27
  %v87 = vunpack.c.h.b16 %v27
  %v88 = vunpack.c.l.b16 %v28
  %v89 = vunpack.c.h.b16 %v28
  %v90 = vunpack.c.l.b16 %v29
  %v91 = vunpack.c.h.b16 %v29
  %v92 = vunpack.c.l.b16 %v30
  %v93 = vunpack.c.h.b16 %v30
  %v94 = vunpack.c.l.b16 %v31
  %v95 = vunpack.c.h.b16 %v31
  %v96 = vunpack.c.l.b16 %v32
  %v97 = vunpack.c.h.b16 %v32
  %v98 = vunpack.c.l.b16 %v33
  %v99 = vunpack.c.h.b16 %v33
  %v100 = vpack.c.b16 %v70, %v68
  %v101 = vpack.c.b16 %v71, %v69
  %v102 = vpack.c.b16 %v74, %v72
  %v103 = vpack.c.b16 %v75, %v73
  %v104 = vpack.c.b16 %v78, %v76
  %v105 = vpack.c.b16 %v79, %v77
  %v106 = vpack.c.b16 %v82, %v80
  %v107 = vpack.c.b16 %v83, %v81
  %v108 = vpack.c.b16 %v86, %v84
  %v109 = vpack.c.b16 %v87, %v85
  %v110 = vpack.c.b16 %v90, %v88
  %v111 = vpack.c.b16 %v91, %v89
  %v112 = vpack.c.b16 %v94, %v92
  %v113 = vpack.c.b16 %v95, %v93
  %v114 = vpack.c.b16 %v98, %v96
  %v115 = vpack.c.b16 %v99, %v97
  %132 = vmatpush.bf16.msra.mxu0 %v114
  %133 = vmatpush.bf16.msra.mxu0 %v112
  %134 = vmatpush.bf16.msra.mxu0 %v110
  %135 = vmatpush.bf16.msra.mxu0 %v108
  %136 = vmatpush.bf16.msra.mxu0 %v106
  %137 = vmatpush.bf16.msra.mxu0 %v104
  %138 = vmatpush.bf16.msra.mxu0 %v102
  %139 = vmatpush.bf16.msra.mxu0 %v100
  %140 = vmatmul.bf16.gmra.mxu0 %v48
  %v141 = vpop.f32.mrf.mxu0
  %v142 = vadd.f32 %v36, %v141
  %v143 = vpop.f32.mrf.mxu0
  %v144 = vadd.f32 %v36, %v143
  %145 = vmatmul.bf16.gmra.mxu0 %v49
  %v146 = vpop.f32.mrf.mxu0
  %v147 = vadd.f32 %v36, %v146
  %v148 = vpop.f32.mrf.mxu0
  %v149 = vadd.f32 %v36, %v148
  %150 = vdwg.mxu0
  %151 = vmatpush.bf16.msra.mxu0 %v115
  %152 = vmatpush.bf16.msra.mxu0 %v113
  %153 = vmatpush.bf16.msra.mxu0 %v111
  %154 = vmatpush.bf16.msra.mxu0 %v109
  %155 = vmatpush.bf16.msra.mxu0 %v107
  %156 = vmatpush.bf16.msra.mxu0 %v105
  %157 = vmatpush.bf16.msra.mxu0 %v103
  %158 = vmatpush.bf16.msra.mxu0 %v101
  %159 = vmatmul.bf16.gmra.mxu0 %v48
  %v160 = vpop.f32.mrf.mxu0
  %v161 = vadd.f32 %v37, %v160
  %v162 = vpop.f32.mrf.mxu0
  %v163 = vadd.f32 %v37, %v162
  %164 = vmatmul.bf16.gmra.mxu0 %v49
  %v165 = vpop.f32.mrf.mxu0
  %v166 = vadd.f32 %v37, %v165
  %v167 = vpop.f32.mrf.mxu0
  %v168 = vadd.f32 %v37, %v167
  %169 = vdwg.mxu0
  %v170 = vpack.c.bf16 %v161, %v142
  %v171 = vpack.c.bf16 %v163, %v144
  %v172 = vpack.c.bf16 %v166, %v147
  %v173 = vpack.c.bf16 %v168, %v149
  %174 = vst [vmem:[%s3] sm:$0xff] %v170
  %175 = vst [vmem:[%s3 + $0x8] sm:$0xff] %v171
  %176 = vst [vmem:[%s3 + $0x10] sm:$0xff] %v172
  %177 = vst [vmem:[%s3 + $0x18] sm:$0xff] %v173
  // Predicated region
  $region14: #{_lambda_.25} parent=0 // pred_check
    _
  $region15: #{_lambda_.25} parent=0 // pred_check_branch
    %179 = sbr.rel (0) target = $region17
  $region16: #{_lambda_.25} parent=0 // pred_region
    _
  $region17: #{_lambda_.25} parent=0 // pred_fallthru
    _
  // Predicated region
  $region18: #{_lambda_.25} parent=0 // pred_check
    _
  $region19: #{_lambda_.25} parent=0 // pred_check_branch
    %181 = sbr.rel (0) target = $region21
  $region20: #{_lambda_.25} parent=0 // pred_region
    _
  $region21: #{_lambda_.25} parent=0 // pred_fallthru
    _

// kernel: _lambda_.27
$region0: #{_lambda_.27}
  #allocation0 [shape = 'u32[]', space=smem, size = 0x4, offset = 0x4, fixed_abs, tag = 'smem constant byte address 0x4 - core index']
  #allocation1 [shape = 'u32[72,128]{1,0:T(1,128)}', space=vmem, size = 0x9000, scoped, tag = 'internal scratch']
  %s0 = inlined_call_operand.vmem [shape: bf16[32,1152], index: 0, kind: input, shape index: {}]
  %s1 = inlined_call_operand.vmem [shape: bf16[1152,128], index: 1, kind: input, shape index: {}]
  %s2 = inlined_call_operand.vmem [shape: f32[1,128], index: 2, kind: input, shape index: {}]
  %s3 = inlined_call_operand.vmem [shape: bf16[32,128], index: 3, kind: output, shape index: {}]
  %s4 = sld [smem:[#allocation0]]
  $region22: #{_lambda_.27} parent=0
    _
  %s6 = ssub.s32 1, %s4
  %s7 = scalar_select 0, %s6, %s4
  // Predicated region
  $region2: #{_lambda_.27} parent=0 // pred_check
    _
  $region3: #{_lambda_.27} parent=0 // pred_check_branch
    %9 = sbr.rel (0) target = $region5
  $region4: #{_lambda_.27} parent=0 // pred_region
    _
  $region5: #{_lambda_.27} parent=0 // pred_fallthru
    _
  // Predicated region
  $region6: #{_lambda_.27} parent=0 // pred_check
    _
  $region7: #{_lambda_.27} parent=0 // pred_check_branch
    %11 = sbr.rel (0) target = $region9
  $region8: #{_lambda_.27} parent=0 // pred_region
    _
  $region9: #{_lambda_.27} parent=0 // pred_fallthru
    _
  // Predicated region
  $region10: #{_lambda_.27} parent=0 // pred_check
    _
  $region11: #{_lambda_.27} parent=0 // pred_check_branch
    %13 = sbr.rel (0) target = $region13
  $region12: #{_lambda_.27} parent=0 // pred_region
    _
  $region13: #{_lambda_.27} parent=0 // pred_fallthru
    _
  %v14 = vld [vmem:[%s0] sm:$0xff]
  %v15 = vld [vmem:[%s0 + $0x8] sm:$0xff]
  %v16 = vld [vmem:[%s0 + $0x10] sm:$0xff]
  %v17 = vld [vmem:[%s0 + $0x18] sm:$0xff]
  %v18 = vld [vmem:[%s0 + $0x20] sm:$0xf]
  %v19 = vld [vmem:[%s0 + $0x24] sm:$0xff]
  %v20 = vld [vmem:[%s0 + $0x2c] sm:$0xff]
  %v21 = vld [vmem:[%s0 + $0x34] sm:$0xff]
  %v22 = vld [vmem:[%s0 + $0x3c] sm:$0xff]
  %v23 = vld [vmem:[%s0 + $0x44] sm:$0xf]
  %v24 = vld [vmem:[%s0 + $0x48] sm:$0xff]
  %v25 = vld [vmem:[%s0 + $0x50] sm:$0xff]
  %v26 = vld [vmem:[%s0 + $0x58] sm:$0xff]
  %v27 = vld [vmem:[%s0 + $0x60] sm:$0xff]
  %v28 = vld [vmem:[%s0 + $0x68] sm:$0xf]
  %v29 = vld [vmem:[%s0 + $0x6c] sm:$0xff]
  %v30 = vld [vmem:[%s0 + $0x74] sm:$0xff]
  %v31 = vld [vmem:[%s0 + $0x7c] sm:$0xff]
  %v32 = vld [vmem:[%s0 + $0x84] sm:$0xff]
  %v33 = vld [vmem:[%s0 + $0x8c] sm:$0xf]
  %v34 = vld [vmem:[%s1] sm:$0xf]
  %v35 = vld [vmem:[%s1 + $0x4] sm:$0xf]
  %v36 = vld [vmem:[%s1 + $0x8] sm:$0xf]
  %v37 = vld [vmem:[%s1 + $0xc] sm:$0xf]
  %v38 = vld [vmem:[%s1 + $0x10] sm:$0xf]
  %v39 = vld [vmem:[%s1 + $0x14] sm:$0xf]
  %v40 = vld [vmem:[%s1 + $0x18] sm:$0xf]
  %v41 = vld [vmem:[%s1 + $0x1c] sm:$0xf]
  %v42 = vld [vmem:[%s1 + $0x20] sm:$0xf]
  %v43 = vld [vmem:[%s1 + $0x24] sm:$0xf]
  %v44 = vld [vmem:[%s1 + $0x28] sm:$0xf]
  %v45 = vld [vmem:[%s1 + $0x2c] sm:$0xf]
  %v46 = vld [vmem:[%s1 + $0x30] sm:$0xf]
  %v47 = vld [vmem:[%s1 + $0x34] sm:$0xf]
  %v48 = vld [vmem:[%s1 + $0x38] sm:$0xf]
  %v49 = vld [vmem:[%s1 + $0x3c] sm:$0xf]
  %v50 = vld [vmem:[%s1 + $0x40] sm:$0xf]
  %v51 = vld [vmem:[%s1 + $0x44] sm:$0xf]
  %v52 = vld [vmem:[%s1 + $0x48] sm:$0xf]
  %v53 = vld [vmem:[%s1 + $0x4c] sm:$0xf]
  %v54 = vld [vmem:[%s1 + $0x50] sm:$0xf]
  %v55 = vld [vmem:[%s1 + $0x54] sm:$0xf]
  %v56 = vld [vmem:[%s1 + $0x58] sm:$0xf]
  %v57 = vld [vmem:[%s1 + $0x5c] sm:$0xf]
  %v58 = vld [vmem:[%s1 + $0x60] sm:$0xf]
  %v59 = vld [vmem:[%s1 + $0x64] sm:$0xf]
  %v60 = vld [vmem:[%s1 + $0x68] sm:$0xf]
  %v61 = vld [vmem:[%s1 + $0x6c] sm:$0xf]
  %v62 = vld [vmem:[%s1 + $0x70] sm:$0xf]
  %v63 = vld [vmem:[%s1 + $0x74] sm:$0xf]
  %v64 = vld [vmem:[%s1 + $0x78] sm:$0xf]
  %v65 = vld [vmem:[%s1 + $0x7c] sm:$0xf]
  %v66 = vld [vmem:[%s1 + $0x80] sm:$0xf]
  %v67 = vld [vmem:[%s1 + $0x84] sm:$0xf]
  %v68 = vld [vmem:[%s1 + $0x88] sm:$0xf]
  %v69 = vld [vmem:[%s1 + $0x8c] sm:$0xf]
  %v70 = vld [vmem:[%s1 + $0x90] sm:$0xf]
  %v71 = vld [vmem:[%s1 + $0x94] sm:$0xf]
  %v72 = vld [vmem:[%s1 + $0x98] sm:$0xf]
  %v73 = vld [vmem:[%s1 + $0x9c] sm:$0xf]
  %v74 = vld [vmem:[%s1 + $0xa0] sm:$0xf]
  %v75 = vld [vmem:[%s1 + $0xa4] sm:$0xf]
  %v76 = vld [vmem:[%s1 + $0xa8] sm:$0xf]
  %v77 = vld [vmem:[%s1 + $0xac] sm:$0xf]
  %v78 = vld [vmem:[%s1 + $0xb0] sm:$0xf]
  %v79 = vld [vmem:[%s1 + $0xb4] sm:$0xf]
  %v80 = vld [vmem:[%s1 + $0xb8] sm:$0xf]
  %v81 = vld [vmem:[%s1 + $0xbc] sm:$0xf]
  %v82 = vld [vmem:[%s1 + $0xc0] sm:$0xf]
  %v83 = vld [vmem:[%s1 + $0xc4] sm:$0xf]
  %v84 = vld [vmem:[%s1 + $0xc8] sm:$0xf]
  %v85 = vld [vmem:[%s1 + $0xcc] sm:$0xf]
  %v86 = vld [vmem:[%s1 + $0xd0] sm:$0xf]
  %v87 = vld [vmem:[%s1 + $0xd4] sm:$0xf]
  %v88 = vld [vmem:[%s1 + $0xd8] sm:$0xf]
  %v89 = vld [vmem:[%s1 + $0xdc] sm:$0xf]
  %v90 = vld [vmem:[%s1 + $0xe0] sm:$0xf]
  %v91 = vld [vmem:[%s1 + $0xe4] sm:$0xf]
  %v92 = vld [vmem:[%s1 + $0xe8] sm:$0xf]
  %v93 = vld [vmem:[%s1 + $0xec] sm:$0xf]
  %v94 = vld [vmem:[%s1 + $0xf0] sm:$0xf]
  %v95 = vld [vmem:[%s1 + $0xf4] sm:$0xf]
  %v96 = vld [vmem:[%s1 + $0xf8] sm:$0xf]
  %v97 = vld [vmem:[%s1 + $0xfc] sm:$0xf]
  %v98 = vld [vmem:[%s1 + $0x100] sm:$0xf]
  %v99 = vld [vmem:[%s1 + $0x104] sm:$0xf]
  %v100 = vld [vmem:[%s1 + $0x108] sm:$0xf]
  %v101 = vld [vmem:[%s1 + $0x10c] sm:$0xf]
  %v102 = vld [vmem:[%s1 + $0x110] sm:$0xf]
  %v103 = vld [vmem:[%s1 + $0x114] sm:$0xf]
  %v104 = vld [vmem:[%s1 + $0x118] sm:$0xf]
  %v105 = vld [vmem:[%s1 + $0x11c] sm:$0xf]
  %v106 = vld [vmem:[%s1 + $0x120] sm:$0xf]
  %v107 = vld [vmem:[%s1 + $0x124] sm:$0xf]
  %v108 = vld [vmem:[%s1 + $0x128] sm:$0xf]
  %v109 = vld [vmem:[%s1 + $0x12c] sm:$0xf]
  %v110 = vld [vmem:[%s1 + $0x130] sm:$0xf]
  %v111 = vld [vmem:[%s1 + $0x134] sm:$0xf]
  %v112 = vld [vmem:[%s1 + $0x138] sm:$0xf]
  %v113 = vld [vmem:[%s1 + $0x13c] sm:$0xf]
  %v114 = vld [vmem:[%s1 + $0x140] sm:$0xf]
  %v115 = vld [vmem:[%s1 + $0x144] sm:$0xf]
  %v116 = vld [vmem:[%s1 + $0x148] sm:$0xf]
  %v117 = vld [vmem:[%s1 + $0x14c] sm:$0xf]
  %v118 = vld [vmem:[%s1 + $0x150] sm:$0xf]
  %v119 = vld [vmem:[%s1 + $0x154] sm:$0xf]
  %v120 = vld [vmem:[%s1 + $0x158] sm:$0xf]
  %v121 = vld [vmem:[%s1 + $0x15c] sm:$0xf]
  %v122 = vld [vmem:[%s1 + $0x160] sm:$0xf]
  %v123 = vld [vmem:[%s1 + $0x164] sm:$0xf]
  %v124 = vld [vmem:[%s1 + $0x168] sm:$0xf]
  %v125 = vld [vmem:[%s1 + $0x16c] sm:$0xf]
  %v126 = vld [vmem:[%s1 + $0x170] sm:$0xf]
  %v127 = vld [vmem:[%s1 + $0x174] sm:$0xf]
  %v128 = vld [vmem:[%s1 + $0x178] sm:$0xf]
  %v129 = vld [vmem:[%s1 + $0x17c] sm:$0xf]
  %v130 = vld [vmem:[%s1 + $0x180] sm:$0xf]
  %v131 = vld [vmem:[%s1 + $0x184] sm:$0xf]
  %v132 = vld [vmem:[%s1 + $0x188] sm:$0xf]
  %v133 = vld [vmem:[%s1 + $0x18c] sm:$0xf]
  %v134 = vld [vmem:[%s1 + $0x190] sm:$0xf]
  %v135 = vld [vmem:[%s1 + $0x194] sm:$0xf]
  %v136 = vld [vmem:[%s1 + $0x198] sm:$0xf]
  %v137 = vld [vmem:[%s1 + $0x19c] sm:$0xf]
  %v138 = vld [vmem:[%s1 + $0x1a0] sm:$0xf]
  %v139 = vld [vmem:[%s1 + $0x1a4] sm:$0xf]
  %v140 = vld [vmem:[%s1 + $0x1a8] sm:$0xf]
  %v141 = vld [vmem:[%s1 + $0x1ac] sm:$0xf]
  %v142 = vld [vmem:[%s1 + $0x1b0] sm:$0xf]
  %v143 = vld [vmem:[%s1 + $0x1b4] sm:$0xf]
  %v144 = vld [vmem:[%s1 + $0x1b8] sm:$0xf]
  %v145 = vld [vmem:[%s1 + $0x1bc] sm:$0xf]
  %v146 = vld [vmem:[%s1 + $0x1c0] sm:$0xf]
  %v147 = vld [vmem:[%s1 + $0x1c4] sm:$0xf]
  %v148 = vld [vmem:[%s1 + $0x1c8] sm:$0xf]
  %v149 = vld [vmem:[%s1 + $0x1cc] sm:$0xf]
  %v150 = vld [vmem:[%s1 + $0x1d0] sm:$0xf]
  %v151 = vld [vmem:[%s1 + $0x1d4] sm:$0xf]
  %v152 = vld [vmem:[%s1 + $0x1d8] sm:$0xf]
  %v153 = vld [vmem:[%s1 + $0x1dc] sm:$0xf]
  %v154 = vld [vmem:[%s1 + $0x1e0] sm:$0xf]
  %v155 = vld [vmem:[%s1 + $0x1e4] sm:$0xf]
  %v156 = vld [vmem:[%s1 + $0x1e8] sm:$0xf]
  %v157 = vld [vmem:[%s1 + $0x1ec] sm:$0xf]
  %v158 = vld [vmem:[%s1 + $0x1f0] sm:$0xf]
  %v159 = vld [vmem:[%s1 + $0x1f4] sm:$0xf]
  %v160 = vld [vmem:[%s1 + $0x1f8] sm:$0xf]
  %v161 = vld [vmem:[%s1 + $0x1fc] sm:$0xf]
  %v162 = vld [vmem:[%s1 + $0x200] sm:$0xf]
  %v163 = vld [vmem:[%s1 + $0x204] sm:$0xf]
  %v164 = vld [vmem:[%s1 + $0x208] sm:$0xf]
  %v165 = vld [vmem:[%s1 + $0x20c] sm:$0xf]
  %v166 = vld [vmem:[%s1 + $0x210] sm:$0xf]
  %v167 = vld [vmem:[%s1 + $0x214] sm:$0xf]
  %v168 = vld [vmem:[%s1 + $0x218] sm:$0xf]
  %v169 = vld [vmem:[%s1 + $0x21c] sm:$0xf]
  %v170 = vld [vmem:[%s1 + $0x220] sm:$0xf]
  %v171 = vld [vmem:[%s1 + $0x224] sm:$0xf]
  %v172 = vld [vmem:[%s1 + $0x228] sm:$0xf]
  %v173 = vld [vmem:[%s1 + $0x22c] sm:$0xf]
  %v174 = vld [vmem:[%s1 + $0x230] sm:$0xf]
  %v175 = vld [vmem:[%s1 + $0x234] sm:$0xf]
  %v176 = vld [vmem:[%s1 + $0x238] sm:$0xf]
  %v177 = vld [vmem:[%s1 + $0x23c] sm:$0xf]
  %v178 = vld [vmem:[%s2] sm:$0x1]
  %v180 = vperm.slane %v178, 0
  %v202 = vunpack.c.l.b16 %v14
  %v203 = vunpack.c.h.b16 %v14
  %v204 = vunpack.c.l.b16 %v15
  %v205 = vunpack.c.h.b16 %v15
  %v206 = vunpack.c.l.b16 %v16
  %v207 = vunpack.c.h.b16 %v16
  %v208 = vunpack.c.l.b16 %v17
  %v209 = vunpack.c.h.b16 %v17
  %v210 = vunpack.c.l.b16 %v18
  %v211 = vunpack.c.l.b16 %v19
  %v212 = vunpack.c.h.b16 %v19
  %v213 = vunpack.c.l.b16 %v20
  %v214 = vunpack.c.h.b16 %v20
  %v215 = vunpack.c.l.b16 %v21
  %v216 = vunpack.c.h.b16 %v21
  %v217 = vunpack.c.l.b16 %v22
  %v218 = vunpack.c.h.b16 %v22
  %v219 = vunpack.c.l.b16 %v23
  %v220 = vunpack.c.l.b16 %v24
  %v221 = vunpack.c.h.b16 %v24
  %v222 = vunpack.c.l.b16 %v25
  %v223 = vunpack.c.h.b16 %v25
  %v224 = vunpack.c.l.b16 %v26
  %v225 = vunpack.c.h.b16 %v26
  %v226 = vunpack.c.l.b16 %v27
  %v227 = vunpack.c.h.b16 %v27
  %v228 = vunpack.c.l.b16 %v28
  %v229 = vunpack.c.l.b16 %v29
  %v230 = vunpack.c.h.b16 %v29
  %v231 = vunpack.c.l.b16 %v30
  %v232 = vunpack.c.h.b16 %v30
  %v233 = vunpack.c.l.b16 %v31
  %v234 = vunpack.c.h.b16 %v31
  %v235 = vunpack.c.l.b16 %v32
  %v236 = vunpack.c.h.b16 %v32
  %v237 = vunpack.c.l.b16 %v33
  %v238 = vpack.c.b16 %v211, %v202
  %v239 = vpack.c.b16 %v212, %v203
  %v240 = vpack.c.b16 %v213, %v204
  %v241 = vpack.c.b16 %v214, %v205
  %v242 = vpack.c.b16 %v215, %v206
  %v243 = vpack.c.b16 %v216, %v207
  %v244 = vpack.c.b16 %v217, %v208
  %v245 = vpack.c.b16 %v218, %v209
  %v246 = vpack.c.b16 %v219, %v210
  %v247 = vpack.c.b16 %v229, %v220
  %v248 = vpack.c.b16 %v230, %v221
  %v249 = vpack.c.b16 %v231, %v222
  %v250 = vpack.c.b16 %v232, %v223
  %v251 = vpack.c.b16 %v233, %v224
  %v252 = vpack.c.b16 %v234, %v225
  %v253 = vpack.c.b16 %v235, %v226
  %v254 = vpack.c.b16 %v236, %v227
  %v255 = vpack.c.b16 %v237, %v228
  %v418 = vunpack.c.l.b16 %v34
  %v419 = vunpack.c.l.b16 %v35
  %v420 = vunpack.c.l.b16 %v36
  %v421 = vunpack.c.l.b16 %v37
  %v422 = vunpack.c.l.b16 %v38
  %v423 = vunpack.c.l.b16 %v39
  %v424 = vunpack.c.l.b16 %v40
  %v425 = vunpack.c.l.b16 %v41
  %v426 = vunpack.c.l.b16 %v42
  %v427 = vunpack.c.l.b16 %v43
  %v428 = vunpack.c.l.b16 %v44
  %v429 = vunpack.c.l.b16 %v45
  %v430 = vunpack.c.l.b16 %v46
  %v431 = vunpack.c.l.b16 %v47
  %v432 = vunpack.c.l.b16 %v48
  %v433 = vunpack.c.l.b16 %v49
  %v434 = vunpack.c.l.b16 %v50
  %v435 = vunpack.c.l.b16 %v51
  %v436 = vunpack.c.l.b16 %v52
  %v437 = vunpack.c.l.b16 %v53
  %v438 = vunpack.c.l.b16 %v54
  %v439 = vunpack.c.l.b16 %v55
  %v440 = vunpack.c.l.b16 %v56
  %v441 = vunpack.c.l.b16 %v57
  %v442 = vunpack.c.l.b16 %v58
  %v443 = vunpack.c.l.b16 %v59
  %v444 = vunpack.c.l.b16 %v60
  %v445 = vunpack.c.l.b16 %v61
  %v446 = vunpack.c.l.b16 %v62
  %v447 = vunpack.c.l.b16 %v63
  %v448 = vunpack.c.l.b16 %v64
  %v449 = vunpack.c.l.b16 %v65
  %v450 = vunpack.c.l.b16 %v66
  %v451 = vunpack.c.l.b16 %v67
  %v452 = vunpack.c.l.b16 %v68
  %v453 = vunpack.c.l.b16 %v69
  %v454 = vunpack.c.l.b16 %v70
  %v455 = vunpack.c.l.b16 %v71
  %v456 = vunpack.c.l.b16 %v72
  %v457 = vunpack.c.l.b16 %v73
  %v458 = vunpack.c.l.b16 %v74
  %v459 = vunpack.c.l.b16 %v75
  %v460 = vunpack.c.l.b16 %v76
  %v461 = vunpack.c.l.b16 %v77
  %v462 = vunpack.c.l.b16 %v78
  %v463 = vunpack.c.l.b16 %v79
  %v464 = vunpack.c.l.b16 %v80
  %v465 = vunpack.c.l.b16 %v81
  %v466 = vunpack.c.l.b16 %v82
  %v467 = vunpack.c.l.b16 %v83
  %v468 = vunpack.c.l.b16 %v84
  %v469 = vunpack.c.l.b16 %v85
  %v470 = vunpack.c.l.b16 %v86
  %v471 = vunpack.c.l.b16 %v87
  %v472 = vunpack.c.l.b16 %v88
  %v473 = vunpack.c.l.b16 %v89
  %v474 = vunpack.c.l.b16 %v90
  %v475 = vunpack.c.l.b16 %v91
  %v476 = vunpack.c.l.b16 %v92
  %v477 = vunpack.c.l.b16 %v93
  %v478 = vunpack.c.l.b16 %v94
  %v479 = vunpack.c.l.b16 %v95
  %v480 = vunpack.c.l.b16 %v96
  %v481 = vunpack.c.l.b16 %v97
  %v482 = vunpack.c.l.b16 %v98
  %v483 = vunpack.c.l.b16 %v99
  %v484 = vunpack.c.l.b16 %v100
  %v485 = vunpack.c.l.b16 %v101
  %v486 = vunpack.c.l.b16 %v102
  %v487 = vunpack.c.l.b16 %v103
  %v488 = vunpack.c.l.b16 %v104
  %v489 = vunpack.c.l.b16 %v105
  %v490 = vunpack.c.l.b16 %v106
  %v491 = vunpack.c.l.b16 %v107
  %v492 = vunpack.c.l.b16 %v108
  %v493 = vunpack.c.l.b16 %v109
  %v494 = vunpack.c.l.b16 %v110
  %v495 = vunpack.c.l.b16 %v111
  %v496 = vunpack.c.l.b16 %v112
  %v497 = vunpack.c.l.b16 %v113
  %v498 = vunpack.c.l.b16 %v114
  %v499 = vunpack.c.l.b16 %v115
  %v500 = vunpack.c.l.b16 %v116
  %v501 = vunpack.c.l.b16 %v117
  %v502 = vunpack.c.l.b16 %v118
  %v503 = vunpack.c.l.b16 %v119
  %v504 = vunpack.c.l.b16 %v120
  %v505 = vunpack.c.l.b16 %v121
  %v506 = vunpack.c.l.b16 %v122
  %v507 = vunpack.c.l.b16 %v123
  %v508 = vunpack.c.l.b16 %v124
  %v509 = vunpack.c.l.b16 %v125
  %v510 = vunpack.c.l.b16 %v126
  %v511 = vunpack.c.l.b16 %v127
  %v512 = vunpack.c.l.b16 %v128
  %v513 = vunpack.c.l.b16 %v129
  %v514 = vunpack.c.l.b16 %v130
  %v515 = vunpack.c.l.b16 %v131
  %v516 = vunpack.c.l.b16 %v132
  %v517 = vunpack.c.l.b16 %v133
  %v518 = vunpack.c.l.b16 %v134
  %v519 = vunpack.c.l.b16 %v135
  %v520 = vunpack.c.l.b16 %v136
  %v521 = vunpack.c.l.b16 %v137
  %v522 = vunpack.c.l.b16 %v138
  %v523 = vunpack.c.l.b16 %v139
  %v524 = vunpack.c.l.b16 %v140
  %v525 = vunpack.c.l.b16 %v141
  %v526 = vunpack.c.l.b16 %v142
  %v527 = vunpack.c.l.b16 %v143
  %v528 = vunpack.c.l.b16 %v144
  %v529 = vunpack.c.l.b16 %v145
  %v530 = vunpack.c.l.b16 %v146
  %v531 = vunpack.c.l.b16 %v147
  %v532 = vunpack.c.l.b16 %v148
  %v533 = vunpack.c.l.b16 %v149
  %v534 = vunpack.c.l.b16 %v150
  %v535 = vunpack.c.l.b16 %v151
  %v536 = vunpack.c.l.b16 %v152
  %v537 = vunpack.c.l.b16 %v153
  %v538 = vunpack.c.l.b16 %v154
  %v539 = vunpack.c.l.b16 %v155
  %v540 = vunpack.c.l.b16 %v156
  %v541 = vunpack.c.l.b16 %v157
  %v542 = vunpack.c.l.b16 %v158
  %v543 = vunpack.c.l.b16 %v159
  %v544 = vunpack.c.l.b16 %v160
  %v545 = vunpack.c.l.b16 %v161
  %v546 = vunpack.c.l.b16 %v162
  %v547 = vunpack.c.l.b16 %v163
  %v548 = vunpack.c.l.b16 %v164
  %v549 = vunpack.c.l.b16 %v165
  %v550 = vunpack.c.l.b16 %v166
  %v551 = vunpack.c.l.b16 %v167
  %v552 = vunpack.c.l.b16 %v168
  %v553 = vunpack.c.l.b16 %v169
  %v554 = vunpack.c.l.b16 %v170
  %v555 = vunpack.c.l.b16 %v171
  %v556 = vunpack.c.l.b16 %v172
  %v557 = vunpack.c.l.b16 %v173
  %v558 = vunpack.c.l.b16 %v174
  %v559 = vunpack.c.l.b16 %v175
  %v560 = vunpack.c.l.b16 %v176
  %v561 = vunpack.c.l.b16 %v177
  %v562 = vpack.c.b16 %v419, %v418
  %v563 = vpack.c.b16 %v421, %v420
  %v564 = vpack.c.b16 %v423, %v422
  %v565 = vpack.c.b16 %v425, %v424
  %v566 = vpack.c.b16 %v427, %v426
  %v567 = vpack.c.b16 %v429, %v428
  %v568 = vpack.c.b16 %v431, %v430
  %v569 = vpack.c.b16 %v433, %v432
  %v570 = vpack.c.b16 %v435, %v434
  %v571 = vpack.c.b16 %v437, %v436
  %v572 = vpack.c.b16 %v439, %v438
  %v573 = vpack.c.b16 %v441, %v440
  %v574 = vpack.c.b16 %v443, %v442
  %v575 = vpack.c.b16 %v445, %v444
  %v576 = vpack.c.b16 %v447, %v446
  %v577 = vpack.c.b16 %v449, %v448
  %v578 = vpack.c.b16 %v451, %v450
  %v579 = vpack.c.b16 %v453, %v452
  %v580 = vpack.c.b16 %v455, %v454
  %v581 = vpack.c.b16 %v457, %v456
  %v582 = vpack.c.b16 %v459, %v458
  %v583 = vpack.c.b16 %v461, %v460
  %v584 = vpack.c.b16 %v463, %v462
  %v585 = vpack.c.b16 %v465, %v464
  %v586 = vpack.c.b16 %v467, %v466
  %v587 = vpack.c.b16 %v469, %v468
  %v588 = vpack.c.b16 %v471, %v470
  %v589 = vpack.c.b16 %v473, %v472
  %v590 = vpack.c.b16 %v475, %v474
  %v591 = vpack.c.b16 %v477, %v476
  %v592 = vpack.c.b16 %v479, %v478
  %v593 = vpack.c.b16 %v481, %v480
  %v594 = vpack.c.b16 %v483, %v482
  %v595 = vpack.c.b16 %v485, %v484
  %v596 = vpack.c.b16 %v487, %v486
  %v597 = vpack.c.b16 %v489, %v488
  %v598 = vpack.c.b16 %v491, %v490
  %v599 = vpack.c.b16 %v493, %v492
  %v600 = vpack.c.b16 %v495, %v494
  %v601 = vpack.c.b16 %v497, %v496
  %v602 = vpack.c.b16 %v499, %v498
  %v603 = vpack.c.b16 %v501, %v500
  %v604 = vpack.c.b16 %v503, %v502
  %v605 = vpack.c.b16 %v505, %v504
  %v606 = vpack.c.b16 %v507, %v506
  %v607 = vpack.c.b16 %v509, %v508
  %v608 = vpack.c.b16 %v511, %v510
  %v609 = vpack.c.b16 %v513, %v512
  %v610 = vpack.c.b16 %v515, %v514
  %v611 = vpack.c.b16 %v517, %v516
  %v612 = vpack.c.b16 %v519, %v518
  %v613 = vpack.c.b16 %v521, %v520
  %v614 = vpack.c.b16 %v523, %v522
  %v615 = vpack.c.b16 %v525, %v524
  %v616 = vpack.c.b16 %v527, %v526
  %v617 = vpack.c.b16 %v529, %v528
  %v618 = vpack.c.b16 %v531, %v530
  %v619 = vpack.c.b16 %v533, %v532
  %v620 = vpack.c.b16 %v535, %v534
  %v621 = vpack.c.b16 %v537, %v536
  %v622 = vpack.c.b16 %v539, %v538
  %v623 = vpack.c.b16 %v541, %v540
  %v624 = vpack.c.b16 %v543, %v542
  %v625 = vpack.c.b16 %v545, %v544
  %v626 = vpack.c.b16 %v547, %v546
  %v627 = vpack.c.b16 %v549, %v548
  %v628 = vpack.c.b16 %v551, %v550
  %v629 = vpack.c.b16 %v553, %v552
  %v630 = vpack.c.b16 %v555, %v554
  %v631 = vpack.c.b16 %v557, %v556
  %v632 = vpack.c.b16 %v559, %v558
  %v633 = vpack.c.b16 %v561, %v560
  %706 = vmatpush.bf16.msra.mxu0 %v569
  %707 = vmatpush.bf16.msra.mxu0 %v568
  %708 = vmatpush.bf16.msra.mxu0 %v567
  %709 = vmatpush.bf16.msra.mxu0 %v566
  %710 = vmatpush.bf16.msra.mxu0 %v565
  %711 = vmatpush.bf16.msra.mxu0 %v564
  %712 = vmatpush.bf16.msra.mxu0 %v563
  %713 = vmatpush.bf16.msra.mxu0 %v562
  %714 = vmatmul.bf16.gmra.mxu0 %v238
  %v715 = vpop.f32.mrf.mxu0
  %v716 = vadd.f32 %v180, %v715
  %v717 = vpop.f32.mrf.mxu0
  %v718 = vadd.f32 %v180, %v717
  %719 = vmatmul.bf16.gmra.mxu0 %v247
  %v720 = vpop.f32.mrf.mxu0
  %v721 = vadd.f32 %v180, %v720
  %v722 = vpop.f32.mrf.mxu0
  %v723 = vadd.f32 %v180, %v722
  %724 = vdwg.mxu0
  %725 = vmatpush.bf16.msra.mxu0 %v577
  %726 = vmatpush.bf16.msra.mxu0 %v576
  %727 = vmatpush.bf16.msra.mxu0 %v575
  %728 = vmatpush.bf16.msra.mxu0 %v574
  %729 = vmatpush.bf16.msra.mxu0 %v573
  %730 = vmatpush.bf16.msra.mxu0 %v572
  %731 = vmatpush.bf16.msra.mxu0 %v571
  %732 = vmatpush.bf16.msra.mxu0 %v570
  %733 = vmatmul.bf16.gmra.mxu0 %v239
  %v734 = vpop.f32.mrf.mxu0
  %v735 = vadd.f32 %v716, %v734
  %v736 = vpop.f32.mrf.mxu0
  %v737 = vadd.f32 %v718, %v736
  %738 = vmatmul.bf16.gmra.mxu0 %v248
  %v739 = vpop.f32.mrf.mxu0
  %v740 = vadd.f32 %v721, %v739
  %v741 = vpop.f32.mrf.mxu0
  %v742 = vadd.f32 %v723, %v741
  %743 = vdwg.mxu0
  %744 = vmatpush.bf16.msra.mxu0 %v585
  %745 = vmatpush.bf16.msra.mxu0 %v584
  %746 = vmatpush.bf16.msra.mxu0 %v583
  %747 = vmatpush.bf16.msra.mxu0 %v582
  %748 = vmatpush.bf16.msra.mxu0 %v581
  %749 = vmatpush.bf16.msra.mxu0 %v580
  %750 = vmatpush.bf16.msra.mxu0 %v579
  %751 = vmatpush.bf16.msra.mxu0 %v578
  %752 = vmatmul.bf16.gmra.mxu0 %v240
  %v753 = vpop.f32.mrf.mxu0
  %v754 = vadd.f32 %v735, %v753
  %v755 = vpop.f32.mrf.mxu0
  %v756 = vadd.f32 %v737, %v755
  %757 = vmatmul.bf16.gmra.mxu0 %v249
  %v758 = vpop.f32.mrf.mxu0
  %v759 = vadd.f32 %v740, %v758
  %v760 = vpop.f32.mrf.mxu0
  %v761 = vadd.f32 %v742, %v760
  %762 = vdwg.mxu0
  %763 = vmatpush.bf16.msra.mxu0 %v593
  %764 = vmatpush.bf16.msra.mxu0 %v592
  %765 = vmatpush.bf16.msra.mxu0 %v591
  %766 = vmatpush.bf16.msra.mxu0 %v590
  %767 = vmatpush.bf16.msra.mxu0 %v589
  %768 = vmatpush.bf16.msra.mxu0 %v588
  %769 = vmatpush.bf16.msra.mxu0 %v587
  %770 = vmatpush.bf16.msra.mxu0 %v586
  %771 = vmatmul.bf16.gmra.mxu0 %v241
  %v772 = vpop.f32.mrf.mxu0
  %v773 = vadd.f32 %v754, %v772
  %v774 = vpop.f32.mrf.mxu0
  %v775 = vadd.f32 %v756, %v774
  %776 = vmatmul.bf16.gmra.mxu0 %v250
  %v777 = vpop.f32.mrf.mxu0
  %v778 = vadd.f32 %v759, %v777
  %v779 = vpop.f32.mrf.mxu0
  %v780 = vadd.f32 %v761, %v779
  %781 = vdwg.mxu0
  %782 = vmatpush.bf16.msra.mxu0 %v601
  %783 = vmatpush.bf16.msra.mxu0 %v600
  %784 = vmatpush.bf16.msra.mxu0 %v599
  %785 = vmatpush.bf16.msra.mxu0 %v598
  %786 = vmatpush.bf16.msra.mxu0 %v597
  %787 = vmatpush.bf16.msra.mxu0 %v596
  %788 = vmatpush.bf16.msra.mxu0 %v595
  %789 = vmatpush.bf16.msra.mxu0 %v594
  %790 = vmatmul.bf16.gmra.mxu0 %v242
  %v791 = vpop.f32.mrf.mxu0
  %v792 = vadd.f32 %v773, %v791
  %v793 = vpop.f32.mrf.mxu0
  %v794 = vadd.f32 %v775, %v793
  %795 = vmatmul.bf16.gmra.mxu0 %v251
  %v796 = vpop.f32.mrf.mxu0
  %v797 = vadd.f32 %v778, %v796
  %v798 = vpop.f32.mrf.mxu0
  %v799 = vadd.f32 %v780, %v798
  %800 = vdwg.mxu0
  %801 = vmatpush.bf16.msra.mxu0 %v609
  %802 = vmatpush.bf16.msra.mxu0 %v608
  %803 = vmatpush.bf16.msra.mxu0 %v607
  %804 = vmatpush.bf16.msra.mxu0 %v606
  %805 = vmatpush.bf16.msra.mxu0 %v605
  %806 = vmatpush.bf16.msra.mxu0 %v604
  %807 = vmatpush.bf16.msra.mxu0 %v603
  %808 = vmatpush.bf16.msra.mxu0 %v602
  %809 = vmatmul.bf16.gmra.mxu0 %v243
  %v810 = vpop.f32.mrf.mxu0
  %v811 = vadd.f32 %v792, %v810
  %v812 = vpop.f32.mrf.mxu0
  %v813 = vadd.f32 %v794, %v812
  %814 = vmatmul.bf16.gmra.mxu0 %v252
  %v815 = vpop.f32.mrf.mxu0
  %v816 = vadd.f32 %v797, %v815
  %v817 = vpop.f32.mrf.mxu0
  %v818 = vadd.f32 %v799, %v817
  %819 = vdwg.mxu0
  %820 = vmatpush.bf16.msra.mxu0 %v617
  %821 = vmatpush.bf16.msra.mxu0 %v616
  %822 = vmatpush.bf16.msra.mxu0 %v615
  %823 = vmatpush.bf16.msra.mxu0 %v614
  %824 = vmatpush.bf16.msra.mxu0 %v613
  %825 = vmatpush.bf16.msra.mxu0 %v612
  %826 = vmatpush.bf16.msra.mxu0 %v611
  %827 = vmatpush.bf16.msra.mxu0 %v610
  %828 = vmatmul.bf16.gmra.mxu0 %v244
  %v829 = vpop.f32.mrf.mxu0
  %v830 = vadd.f32 %v811, %v829
  %v831 = vpop.f32.mrf.mxu0
  %v832 = vadd.f32 %v813, %v831
  %833 = vmatmul.bf16.gmra.mxu0 %v253
  %v834 = vpop.f32.mrf.mxu0
  %v835 = vadd.f32 %v816, %v834
  %v836 = vpop.f32.mrf.mxu0
  %v837 = vadd.f32 %v818, %v836
  %838 = vdwg.mxu0
  %839 = vmatpush.bf16.msra.mxu0 %v625
  %840 = vmatpush.bf16.msra.mxu0 %v624
  %841 = vmatpush.bf16.msra.mxu0 %v623
  %842 = vmatpush.bf16.msra.mxu0 %v622
  %843 = vmatpush.bf16.msra.mxu0 %v621
  %844 = vmatpush.bf16.msra.mxu0 %v620
  %845 = vmatpush.bf16.msra.mxu0 %v619
  %846 = vmatpush.bf16.msra.mxu0 %v618
  %847 = vmatmul.bf16.gmra.mxu0 %v245
  %v848 = vpop.f32.mrf.mxu0
  %v849 = vadd.f32 %v830, %v848
  %v850 = vpop.f32.mrf.mxu0
  %v851 = vadd.f32 %v832, %v850
  %852 = vmatmul.bf16.gmra.mxu0 %v254
  %v853 = vpop.f32.mrf.mxu0
  %v854 = vadd.f32 %v835, %v853
  %v855 = vpop.f32.mrf.mxu0
  %v856 = vadd.f32 %v837, %v855
  %857 = vdwg.mxu0
  %858 = vmatpush.bf16.msra.mxu0 %v633
  %859 = vmatpush.bf16.msra.mxu0 %v632
  %860 = vmatpush.bf16.msra.mxu0 %v631
  %861 = vmatpush.bf16.msra.mxu0 %v630
  %862 = vmatpush.bf16.msra.mxu0 %v629
  %863 = vmatpush.bf16.msra.mxu0 %v628
  %864 = vmatpush.bf16.msra.mxu0 %v627
  %865 = vmatpush.bf16.msra.mxu0 %v626
  %866 = vmatmul.bf16.gmra.mxu0 %v246
  %v867 = vpop.f32.mrf.mxu0
  %v868 = vadd.f32 %v849, %v867
  %v869 = vpop.f32.mrf.mxu0
  %v870 = vadd.f32 %v851, %v869
  %871 = vmatmul.bf16.gmra.mxu0 %v255
  %v872 = vpop.f32.mrf.mxu0
  %v873 = vadd.f32 %v854, %v872
  %v874 = vpop.f32.mrf.mxu0
  %v875 = vadd.f32 %v856, %v874
  %876 = vdwg.mxu0
  %v877 = vmax.f32 %v868, 0.0
  %v878 = vmax.f32 %v870, 0.0
  %v879 = vmax.f32 %v873, 0.0
  %v880 = vmax.f32 %v875, 0.0
  %v881 = vpack.c.bf16 %v877, %v877
  %v882 = vpack.c.bf16 %v878, %v878
  %v883 = vpack.c.bf16 %v879, %v879
  %v884 = vpack.c.bf16 %v880, %v880
  %885 = vst [vmem:[%s3] sm:$0xf] %v881
  %886 = vst [vmem:[%s3 + $0x4] sm:$0xf] %v882
  %887 = vst [vmem:[%s3 + $0x8] sm:$0xf] %v883
  %888 = vst [vmem:[%s3 + $0xc] sm:$0xf] %v884
  // Predicated region
  $region14: #{_lambda_.27} parent=0 // pred_check
    _
  $region15: #{_lambda_.27} parent=0 // pred_check_branch
    %890 = sbr.rel (0) target = $region17
  $region16: #{_lambda_.27} parent=0 // pred_region
    _
  $region17: #{_lambda_.27} parent=0 // pred_fallthru
    _
  // Predicated region
  $region18: #{_lambda_.27} parent=0 // pred_check
    _
  $region19: #{_lambda_.27} parent=0 // pred_check_branch
    %892 = sbr.rel (0) target = $region21
  $region20: #{_lambda_.27} parent=0 // pred_region
    _
  $region21: #{_lambda_.27} parent=0 // pred_fallthru
    _

// kernel: _lambda_.28
$region0: #{_lambda_.28}
  #allocation0 [shape = 'u32[]', space=smem, size = 0x4, offset = 0x4, fixed_abs, tag = 'smem constant byte address 0x4 - core index']
  #allocation1 [shape = 'u32[72,128]{1,0:T(1,128)}', space=vmem, size = 0x9000, scoped, tag = 'internal scratch']
  %s0 = inlined_call_operand.vmem [shape: bf16[32,128], index: 0, kind: input, shape index: {}]
  %s1 = inlined_call_operand.vmem [shape: bf16[128,256], index: 1, kind: input, shape index: {}]
  %s2 = inlined_call_operand.vmem [shape: f32[1,256], index: 2, kind: input, shape index: {}]
  %s3 = inlined_call_operand.vmem [shape: bf16[32,256], index: 3, kind: input, shape index: {}]
  %s4 = inlined_call_operand.vmem [shape: bf16[32,256], index: 4, kind: output, shape index: {}]
  %s5 = sld [smem:[#allocation0]]
  $region26: #{_lambda_.28} parent=0
    _
  %s7 = ssub.s32 1, %s5
  %s8 = scalar_select 0, %s7, %s5
  // Predicated region
  $region2: #{_lambda_.28} parent=0 // pred_check
    _
  $region3: #{_lambda_.28} parent=0 // pred_check_branch
    %10 = sbr.rel (0) target = $region5
  $region4: #{_lambda_.28} parent=0 // pred_region
    _
  $region5: #{_lambda_.28} parent=0 // pred_fallthru
    _
  // Predicated region
  $region6: #{_lambda_.28} parent=0 // pred_check
    _
  $region7: #{_lambda_.28} parent=0 // pred_check_branch
    %12 = sbr.rel (0) target = $region9
  $region8: #{_lambda_.28} parent=0 // pred_region
    _
  $region9: #{_lambda_.28} parent=0 // pred_fallthru
    _
  // Predicated region
  $region10: #{_lambda_.28} parent=0 // pred_check
    _
  $region11: #{_lambda_.28} parent=0 // pred_check_branch
    %14 = sbr.rel (0) target = $region13
  $region12: #{_lambda_.28} parent=0 // pred_region
    _
  $region13: #{_lambda_.28} parent=0 // pred_fallthru
    _
  // Predicated region
  $region14: #{_lambda_.28} parent=0 // pred_check
    _
  $region15: #{_lambda_.28} parent=0 // pred_check_branch
    %16 = sbr.rel (0) target = $region17
  $region16: #{_lambda_.28} parent=0 // pred_region
    _
  $region17: #{_lambda_.28} parent=0 // pred_fallthru
    _
  %v17 = vld [vmem:[%s0] sm:$0xf]
  %v18 = vld [vmem:[%s0 + $0x4] sm:$0xf]
  %v19 = vld [vmem:[%s0 + $0x8] sm:$0xf]
  %v20 = vld [vmem:[%s0 + $0xc] sm:$0xf]
  %v21 = vld [vmem:[%s1] sm:$0xff]
  %v22 = vld [vmem:[%s1 + $0x8] sm:$0xff]
  %v23 = vld [vmem:[%s1 + $0x10] sm:$0xff]
  %v24 = vld [vmem:[%s1 + $0x18] sm:$0xff]
  %v25 = vld [vmem:[%s1 + $0x20] sm:$0xff]
  %v26 = vld [vmem:[%s1 + $0x28] sm:$0xff]
  %v27 = vld [vmem:[%s1 + $0x30] sm:$0xff]
  %v28 = vld [vmem:[%s1 + $0x38] sm:$0xff]
  %v29 = vld [vmem:[%s1 + $0x40] sm:$0xff]
  %v30 = vld [vmem:[%s1 + $0x48] sm:$0xff]
  %v31 = vld [vmem:[%s1 + $0x50] sm:$0xff]
  %v32 = vld [vmem:[%s1 + $0x58] sm:$0xff]
  %v33 = vld [vmem:[%s1 + $0x60] sm:$0xff]
  %v34 = vld [vmem:[%s1 + $0x68] sm:$0xff]
  %v35 = vld [vmem:[%s1 + $0x70] sm:$0xff]
  %v36 = vld [vmem:[%s1 + $0x78] sm:$0xff]
  %v37 = vld [vmem:[%s2] sm:$0x3]
  %v39 = vperm.slane %v37, 0
  %v40 = vperm.slane %v37, 1
  %v47 = vunpack.c.l.b16 %v17
  %v48 = vunpack.c.l.b16 %v18
  %v49 = vunpack.c.l.b16 %v19
  %v50 = vunpack.c.l.b16 %v20
  %v51 = vpack.c.b16 %v48, %v47
  %v52 = vpack.c.b16 %v50, %v49
  %v71 = vunpack.c.l.b16 %v21
  %v72 = vunpack.c.h.b16 %v21
  %v73 = vunpack.c.l.b16 %v22
  %v74 = vunpack.c.h.b16 %v22
  %v75 = vunpack.c.l.b16 %v23
  %v76 = vunpack.c.h.b16 %v23
  %v77 = vunpack.c.l.b16 %v24
  %v78 = vunpack.c.h.b16 %v24
  %v79 = vunpack.c.l.b16 %v25
  %v80 = vunpack.c.h.b16 %v25
  %v81 = vunpack.c.l.b16 %v26
  %v82 = vunpack.c.h.b16 %v26
  %v83 = vunpack.c.l.b16 %v27
  %v84 = vunpack.c.h.b16 %v27
  %v85 = vunpack.c.l.b16 %v28
  %v86 = vunpack.c.h.b16 %v28
  %v87 = vunpack.c.l.b16 %v29
  %v88 = vunpack.c.h.b16 %v29
  %v89 = vunpack.c.l.b16 %v30
  %v90 = vunpack.c.h.b16 %v30
  %v91 = vunpack.c.l.b16 %v31
  %v92 = vunpack.c.h.b16 %v31
  %v93 = vunpack.c.l.b16 %v32
  %v94 = vunpack.c.h.b16 %v32
  %v95 = vunpack.c.l.b16 %v33
  %v96 = vunpack.c.h.b16 %v33
  %v97 = vunpack.c.l.b16 %v34
  %v98 = vunpack.c.h.b16 %v34
  %v99 = vunpack.c.l.b16 %v35
  %v100 = vunpack.c.h.b16 %v35
  %v101 = vunpack.c.l.b16 %v36
  %v102 = vunpack.c.h.b16 %v36
  %v103 = vpack.c.b16 %v73, %v71
  %v104 = vpack.c.b16 %v74, %v72
  %v105 = vpack.c.b16 %v77, %v75
  %v106 = vpack.c.b16 %v78, %v76
  %v107 = vpack.c.b16 %v81, %v79
  %v108 = vpack.c.b16 %v82, %v80
  %v109 = vpack.c.b16 %v85, %v83
  %v110 = vpack.c.b16 %v86, %v84
  %v111 = vpack.c.b16 %v89, %v87
  %v112 = vpack.c.b16 %v90, %v88
  %v113 = vpack.c.b16 %v93, %v91
  %v114 = vpack.c.b16 %v94, %v92
  %v115 = vpack.c.b16 %v97, %v95
  %v116 = vpack.c.b16 %v98, %v96
  %v117 = vpack.c.b16 %v101, %v99
  %v118 = vpack.c.b16 %v102, %v100
  %135 = vmatpush.bf16.msra.mxu0 %v117
  %136 = vmatpush.bf16.msra.mxu0 %v115
  %137 = vmatpush.bf16.msra.mxu0 %v113
  %138 = vmatpush.bf16.msra.mxu0 %v111
  %139 = vmatpush.bf16.msra.mxu0 %v109
  %140 = vmatpush.bf16.msra.mxu0 %v107
  %141 = vmatpush.bf16.msra.mxu0 %v105
  %142 = vmatpush.bf16.msra.mxu0 %v103
  %143 = vmatmul.bf16.gmra.mxu0 %v51
  %v144 = vpop.f32.mrf.mxu0
  %v145 = vadd.f32 %v39, %v144
  %v146 = vpop.f32.mrf.mxu0
  %v147 = vadd.f32 %v39, %v146
  %148 = vmatmul.bf16.gmra.mxu0 %v52
  %v149 = vpop.f32.mrf.mxu0
  %v150 = vadd.f32 %v39, %v149
  %v151 = vpop.f32.mrf.mxu0
  %v152 = vadd.f32 %v39, %v151
  %153 = vdwg.mxu0
  %154 = vmatpush.bf16.msra.mxu0 %v118
  %155 = vmatpush.bf16.msra.mxu0 %v116
  %156 = vmatpush.bf16.msra.mxu0 %v114
  %157 = vmatpush.bf16.msra.mxu0 %v112
  %158 = vmatpush.bf16.msra.mxu0 %v110
  %159 = vmatpush.bf16.msra.mxu0 %v108
  %160 = vmatpush.bf16.msra.mxu0 %v106
  %161 = vmatpush.bf16.msra.mxu0 %v104
  %162 = vmatmul.bf16.gmra.mxu0 %v51
  %v163 = vpop.f32.mrf.mxu0
  %v164 = vadd.f32 %v40, %v163
  %v165 = vpop.f32.mrf.mxu0
  %v166 = vadd.f32 %v40, %v165
  %167 = vmatmul.bf16.gmra.mxu0 %v52
  %v168 = vpop.f32.mrf.mxu0
  %v169 = vadd.f32 %v40, %v168
  %v170 = vpop.f32.mrf.mxu0
  %v171 = vadd.f32 %v40, %v170
  %172 = vdwg.mxu0
  %v173 = vld [vmem:[%s3] sm:$0xff]
  %v174 = vld [vmem:[%s3 + $0x8] sm:$0xff]
  %v175 = vld [vmem:[%s3 + $0x10] sm:$0xff]
  %v176 = vld [vmem:[%s3 + $0x18] sm:$0xff]
  %v177 = vunpack.c.l.bf16 %v173
  %v178 = vunpack.c.h.bf16 %v173
  %v179 = vunpack.c.l.bf16 %v174
  %v180 = vunpack.c.h.bf16 %v174
  %v181 = vunpack.c.l.bf16 %v175
  %v182 = vunpack.c.h.bf16 %v175
  %v183 = vunpack.c.l.bf16 %v176
  %v184 = vunpack.c.h.bf16 %v176
  %v185 = vadd.f32 %v145, %v177
  %v186 = vadd.f32 %v164, %v178
  %v187 = vadd.f32 %v147, %v179
  %v188 = vadd.f32 %v166, %v180
  %v189 = vadd.f32 %v150, %v181
  %v190 = vadd.f32 %v169, %v182
  %v191 = vadd.f32 %v152, %v183
  %v192 = vadd.f32 %v171, %v184
  %v193 = vmax.f32 %v185, 0.0
  %v194 = vmax.f32 %v186, 0.0
  %v195 = vmax.f32 %v187, 0.0
  %v196 = vmax.f32 %v188, 0.0
  %v197 = vmax.f32 %v189, 0.0
  %v198 = vmax.f32 %v190, 0.0
  %v199 = vmax.f32 %v191, 0.0
  %v200 = vmax.f32 %v192, 0.0
  %v201 = vpack.c.bf16 %v194, %v193
  %v202 = vpack.c.bf16 %v196, %v195
  %v203 = vpack.c.bf16 %v198, %v197
  %v204 = vpack.c.bf16 %v200, %v199
  %205 = vst [vmem:[%s4] sm:$0xff] %v201
  %206 = vst [vmem:[%s4 + $0x8] sm:$0xff] %v202
  %207 = vst [vmem:[%s4 + $0x10] sm:$0xff] %v203
  %208 = vst [vmem:[%s4 + $0x18] sm:$0xff] %v204
  // Predicated region
  $region18: #{_lambda_.28} parent=0 // pred_check
    _
  $region19: #{_lambda_.28} parent=0 // pred_check_branch
    %210 = sbr.rel (0) target = $region21
  $region20: #{_lambda_.28} parent=0 // pred_region
    _
  $region21: #{_lambda_.28} parent=0 // pred_fallthru
    _
  // Predicated region
  $region22: #{_lambda_.28} parent=0 // pred_check
    _
  $region23: #{_lambda_.28} parent=0 // pred_check_branch
    %212 = sbr.rel (0) target = $region25
  $region24: #{_lambda_.28} parent=0 // pred_region
    _
  $region25: #{_lambda_.28} parent=0 // pred_fallthru
    _

// kernel: _lambda_.30
$region0: #{_lambda_.30}
  #allocation0 [shape = 'u32[]', space=smem, size = 0x4, offset = 0x4, fixed_abs, tag = 'smem constant byte address 0x4 - core index']
  #allocation1 [shape = 'u32[72,128]{1,0:T(1,128)}', space=vmem, size = 0x9000, scoped, tag = 'internal scratch']
  %s0 = inlined_call_operand.vmem [shape: bf16[32,256], index: 0, kind: input, shape index: {}]
  %s1 = inlined_call_operand.vmem [shape: bf16[256,128], index: 1, kind: input, shape index: {}]
  %s2 = inlined_call_operand.vmem [shape: f32[1,128], index: 2, kind: input, shape index: {}]
  %s3 = inlined_call_operand.vmem [shape: bf16[32,128], index: 3, kind: output, shape index: {}]
  %s4 = sld [smem:[#allocation0]]
  $region22: #{_lambda_.30} parent=0
    _
  %s6 = ssub.s32 1, %s4
  %s7 = scalar_select 0, %s6, %s4
  // Predicated region
  $region2: #{_lambda_.30} parent=0 // pred_check
    _
  $region3: #{_lambda_.30} parent=0 // pred_check_branch
    %9 = sbr.rel (0) target = $region5
  $region4: #{_lambda_.30} parent=0 // pred_region
    _
  $region5: #{_lambda_.30} parent=0 // pred_fallthru
    _
  // Predicated region
  $region6: #{_lambda_.30} parent=0 // pred_check
    _
  $region7: #{_lambda_.30} parent=0 // pred_check_branch
    %11 = sbr.rel (0) target = $region9
  $region8: #{_lambda_.30} parent=0 // pred_region
    _
  $region9: #{_lambda_.30} parent=0 // pred_fallthru
    _
  // Predicated region
  $region10: #{_lambda_.30} parent=0 // pred_check
    _
  $region11: #{_lambda_.30} parent=0 // pred_check_branch
    %13 = sbr.rel (0) target = $region13
  $region12: #{_lambda_.30} parent=0 // pred_region
    _
  $region13: #{_lambda_.30} parent=0 // pred_fallthru
    _
  %v14 = vld [vmem:[%s0] sm:$0xff]
  %v15 = vld [vmem:[%s0 + $0x8] sm:$0xff]
  %v16 = vld [vmem:[%s0 + $0x10] sm:$0xff]
  %v17 = vld [vmem:[%s0 + $0x18] sm:$0xff]
  %v18 = vld [vmem:[%s1] sm:$0xf]
  %v19 = vld [vmem:[%s1 + $0x4] sm:$0xf]
  %v20 = vld [vmem:[%s1 + $0x8] sm:$0xf]
  %v21 = vld [vmem:[%s1 + $0xc] sm:$0xf]
  %v22 = vld [vmem:[%s1 + $0x10] sm:$0xf]
  %v23 = vld [vmem:[%s1 + $0x14] sm:$0xf]
  %v24 = vld [vmem:[%s1 + $0x18] sm:$0xf]
  %v25 = vld [vmem:[%s1 + $0x1c] sm:$0xf]
  %v26 = vld [vmem:[%s1 + $0x20] sm:$0xf]
  %v27 = vld [vmem:[%s1 + $0x24] sm:$0xf]
  %v28 = vld [vmem:[%s1 + $0x28] sm:$0xf]
  %v29 = vld [vmem:[%s1 + $0x2c] sm:$0xf]
  %v30 = vld [vmem:[%s1 + $0x30] sm:$0xf]
  %v31 = vld [vmem:[%s1 + $0x34] sm:$0xf]
  %v32 = vld [vmem:[%s1 + $0x38] sm:$0xf]
  %v33 = vld [vmem:[%s1 + $0x3c] sm:$0xf]
  %v34 = vld [vmem:[%s1 + $0x40] sm:$0xf]
  %v35 = vld [vmem:[%s1 + $0x44] sm:$0xf]
  %v36 = vld [vmem:[%s1 + $0x48] sm:$0xf]
  %v37 = vld [vmem:[%s1 + $0x4c] sm:$0xf]
  %v38 = vld [vmem:[%s1 + $0x50] sm:$0xf]
  %v39 = vld [vmem:[%s1 + $0x54] sm:$0xf]
  %v40 = vld [vmem:[%s1 + $0x58] sm:$0xf]
  %v41 = vld [vmem:[%s1 + $0x5c] sm:$0xf]
  %v42 = vld [vmem:[%s1 + $0x60] sm:$0xf]
  %v43 = vld [vmem:[%s1 + $0x64] sm:$0xf]
  %v44 = vld [vmem:[%s1 + $0x68] sm:$0xf]
  %v45 = vld [vmem:[%s1 + $0x6c] sm:$0xf]
  %v46 = vld [vmem:[%s1 + $0x70] sm:$0xf]
  %v47 = vld [vmem:[%s1 + $0x74] sm:$0xf]
  %v48 = vld [vmem:[%s1 + $0x78] sm:$0xf]
  %v49 = vld [vmem:[%s1 + $0x7c] sm:$0xf]
  %v50 = vld [vmem:[%s2] sm:$0x1]
  %v52 = vperm.slane %v50, 0
  %v58 = vunpack.c.l.b16 %v14
  %v59 = vunpack.c.h.b16 %v14
  %v60 = vunpack.c.l.b16 %v15
  %v61 = vunpack.c.h.b16 %v15
  %v62 = vunpack.c.l.b16 %v16
  %v63 = vunpack.c.h.b16 %v16
  %v64 = vunpack.c.l.b16 %v17
  %v65 = vunpack.c.h.b16 %v17
  %v66 = vpack.c.b16 %v60, %v58
  %v67 = vpack.c.b16 %v61, %v59
  %v68 = vpack.c.b16 %v64, %v62
  %v69 = vpack.c.b16 %v65, %v63
  %v106 = vunpack.c.l.b16 %v18
  %v107 = vunpack.c.l.b16 %v19
  %v108 = vunpack.c.l.b16 %v20
  %v109 = vunpack.c.l.b16 %v21
  %v110 = vunpack.c.l.b16 %v22
  %v111 = vunpack.c.l.b16 %v23
  %v112 = vunpack.c.l.b16 %v24
  %v113 = vunpack.c.l.b16 %v25
  %v114 = vunpack.c.l.b16 %v26
  %v115 = vunpack.c.l.b16 %v27
  %v116 = vunpack.c.l.b16 %v28
  %v117 = vunpack.c.l.b16 %v29
  %v118 = vunpack.c.l.b16 %v30
  %v119 = vunpack.c.l.b16 %v31
  %v120 = vunpack.c.l.b16 %v32
  %v121 = vunpack.c.l.b16 %v33
  %v122 = vunpack.c.l.b16 %v34
  %v123 = vunpack.c.l.b16 %v35
  %v124 = vunpack.c.l.b16 %v36
  %v125 = vunpack.c.l.b16 %v37
  %v126 = vunpack.c.l.b16 %v38
  %v127 = vunpack.c.l.b16 %v39
  %v128 = vunpack.c.l.b16 %v40
  %v129 = vunpack.c.l.b16 %v41
  %v130 = vunpack.c.l.b16 %v42
  %v131 = vunpack.c.l.b16 %v43
  %v132 = vunpack.c.l.b16 %v44
  %v133 = vunpack.c.l.b16 %v45
  %v134 = vunpack.c.l.b16 %v46
  %v135 = vunpack.c.l.b16 %v47
  %v136 = vunpack.c.l.b16 %v48
  %v137 = vunpack.c.l.b16 %v49
  %v138 = vpack.c.b16 %v107, %v106
  %v139 = vpack.c.b16 %v109, %v108
  %v140 = vpack.c.b16 %v111, %v110
  %v141 = vpack.c.b16 %v113, %v112
  %v142 = vpack.c.b16 %v115, %v114
  %v143 = vpack.c.b16 %v117, %v116
  %v144 = vpack.c.b16 %v119, %v118
  %v145 = vpack.c.b16 %v121, %v120
  %v146 = vpack.c.b16 %v123, %v122
  %v147 = vpack.c.b16 %v125, %v124
  %v148 = vpack.c.b16 %v127, %v126
  %v149 = vpack.c.b16 %v129, %v128
  %v150 = vpack.c.b16 %v131, %v130
  %v151 = vpack.c.b16 %v133, %v132
  %v152 = vpack.c.b16 %v135, %v134
  %v153 = vpack.c.b16 %v137, %v136
  %170 = vmatpush.bf16.msra.mxu0 %v145
  %171 = vmatpush.bf16.msra.mxu0 %v144
  %172 = vmatpush.bf16.msra.mxu0 %v143
  %173 = vmatpush.bf16.msra.mxu0 %v142
  %174 = vmatpush.bf16.msra.mxu0 %v141
  %175 = vmatpush.bf16.msra.mxu0 %v140
  %176 = vmatpush.bf16.msra.mxu0 %v139
  %177 = vmatpush.bf16.msra.mxu0 %v138
  %178 = vmatmul.bf16.gmra.mxu0 %v66
  %v179 = vpop.f32.mrf.mxu0
  %v180 = vadd.f32 %v52, %v179
  %v181 = vpop.f32.mrf.mxu0
  %v182 = vadd.f32 %v52, %v181
  %183 = vmatmul.bf16.gmra.mxu0 %v68
  %v184 = vpop.f32.mrf.mxu0
  %v185 = vadd.f32 %v52, %v184
  %v186 = vpop.f32.mrf.mxu0
  %v187 = vadd.f32 %v52, %v186
  %188 = vdwg.mxu0
  %189 = vmatpush.bf16.msra.mxu0 %v153
  %190 = vmatpush.bf16.msra.mxu0 %v152
  %191 = vmatpush.bf16.msra.mxu0 %v151
  %192 = vmatpush.bf16.msra.mxu0 %v150
  %193 = vmatpush.bf16.msra.mxu0 %v149
  %194 = vmatpush.bf16.msra.mxu0 %v148
  %195 = vmatpush.bf16.msra.mxu0 %v147
  %196 = vmatpush.bf16.msra.mxu0 %v146
  %197 = vmatmul.bf16.gmra.mxu0 %v67
  %v198 = vpop.f32.mrf.mxu0
  %v199 = vadd.f32 %v180, %v198
  %v200 = vpop.f32.mrf.mxu0
  %v201 = vadd.f32 %v182, %v200
  %202 = vmatmul.bf16.gmra.mxu0 %v69
  %v203 = vpop.f32.mrf.mxu0
  %v204 = vadd.f32 %v185, %v203
  %v205 = vpop.f32.mrf.mxu0
  %v206 = vadd.f32 %v187, %v205
  %207 = vdwg.mxu0
  %v208 = vmax.f32 %v199, 0.0
  %v209 = vmax.f32 %v201, 0.0
  %v210 = vmax.f32 %v204, 0.0
  %v211 = vmax.f32 %v206, 0.0
  %v212 = vpack.c.bf16 %v208, %v208
  %v213 = vpack.c.bf16 %v209, %v209
  %v214 = vpack.c.bf16 %v210, %v210
  %v215 = vpack.c.bf16 %v211, %v211
  %216 = vst [vmem:[%s3] sm:$0xf] %v212
  %217 = vst [vmem:[%s3 + $0x4] sm:$0xf] %v213
  %218 = vst [vmem:[%s3 + $0x8] sm:$0xf] %v214
  %219 = vst [vmem:[%s3 + $0xc] sm:$0xf] %v215
  // Predicated region
  $region14: #{_lambda_.30} parent=0 // pred_check
    _
  $region15: #{_lambda_.30} parent=0 // pred_check_branch
    %221 = sbr.rel (0) target = $region17
  $region16: #{_lambda_.30} parent=0 // pred_region
    _
  $region17: #{_lambda_.30} parent=0 // pred_fallthru
    _
  // Predicated region
  $region18: #{_lambda_.30} parent=0 // pred_check
    _
  $region19: #{_lambda_.30} parent=0 // pred_check_branch
    %223 = sbr.rel (0) target = $region21
  $region20: #{_lambda_.30} parent=0 // pred_region
    _
  $region21: #{_lambda_.30} parent=0 // pred_fallthru
    _

// kernel: _lambda_.32
$region0: #{_lambda_.32}
  #allocation0 [shape = 'u32[]', space=smem, size = 0x4, offset = 0x4, fixed_abs, tag = 'smem constant byte address 0x4 - core index']
  #allocation1 [shape = 'u32[72,128]{1,0:T(1,128)}', space=vmem, size = 0x9000, scoped, tag = 'internal scratch']
  %s0 = inlined_call_operand.vmem [shape: bf16[8,128], index: 0, kind: input, shape index: {}]
  %s1 = inlined_call_operand.vmem [shape: bf16[128,512], index: 1, kind: input, shape index: {}]
  %s2 = inlined_call_operand.vmem [shape: f32[1,512], index: 2, kind: input, shape index: {}]
  %s3 = inlined_call_operand.vmem [shape: bf16[8,512], index: 3, kind: input, shape index: {}]
  %s4 = inlined_call_operand.vmem [shape: bf16[8,512], index: 4, kind: output, shape index: {}]
  %s5 = sld [smem:[#allocation0]]
  $region87: #{_lambda_.32} parent=0
    _
  %s7 = ssub.s32 1, %s5
  %s8 = scalar_select 0, %s7, %s5
  $region1: #{_lambda_.32} parent=0
    #allocation2 [shape = 'u8[131072]{0}', space=vmem, size = 0x20000, scoped, tag = 'input window, operand 1']
    loop: start=0, step=1, limit=4
    $region2: #{_lambda_.32} parent=1 // loop_pre_header
      _
    $region3: #{_lambda_.32} parent=1 // loop_header
      %s10 = sphi 0, %s14
      %p11 = scmp.ge.s32.totalorder %s10, 4
      %s17 = sphi 0, %s29
      %s18 = sphi 0, %s25
      %s19 = sphi 0, %s17
      %s20 = sphi 0, %s18
      %s21 = sphi 0, %s19
      %s22 = sphi 0, %s20
      %s32 = sphi 0, %s34
      %s35 = sphi 0, %s32
      %s36 = sphi 0, %s35
      %s52 = sphi 0, %s36
      %s58 = sphi 0, %s60
      %s61 = sphi 0, %s58
      %s62 = sphi 0, %s61
      %s78 = sphi 0, %s62
      %s84 = sphi 0, %s86
      %s87 = sphi 0, %s84
      %s88 = sphi 0, %s87
      %s104 = sphi 0, %s88
      %s112 = sphi 0, %s114
      %s115 = sphi 0, %s112
      %s116 = sphi 0, %s115
      %s132 = sphi 0, %s116
      %s140 = sphi 0, %s142
      %s143 = sphi 0, %s140
      %s144 = sphi 0, %s143
      %s160 = sphi 0, %s144
    $region4: #{_lambda_.32} parent=1 // loop_header_branch
      %13 = sbr.rel (%p11) target = $region8
    $region5: #{_lambda_.32} parent=1 // loop_body
      %s15 = ssub.s32 %s10, 1
      %s16 = ssub.s32 %s10, 2
      %s23 = sadd.s32 1, %s18
      %p24 = scmp.ge.s32.totalorder %s23, 2
      %s25 = scalar_select %p24, 0, %s23
      %s26 = sadd.s32 1, %s17
      %s27 = scalar_select %p24, %s26, %s17
      %p28 = scmp.ge.s32.totalorder %s27, 1
      %s29 = scalar_select %p28, 0, %s27
      %s30 = ssub.s32 %s17, %s29
      %p31 = scmp.eq.s32.totalorder %s30, 0
      %s33 = sadd.s32 %s32, 1
      %s34 = scalar_select %p31, %s32, %s33
      %p37 = pneg %p31
      %p38 = scmp.eq.s32.totalorder %s10, 1
      %p39 = por %p37, %p38
      %p40 = scmp.ne.s32.totalorder %s32, %s35
      %p41 = scmp.eq.s32.totalorder %s10, 0
      %p42 = por %p40, %p41
      %p43 = scmp.ne.s32.totalorder %s32, %s35
      %p44 = scmp.eq.s32.totalorder %s15, 1
      %p45 = por %p43, %p44
      %p46 = scmp.ne.s32.totalorder %s35, %s36
      %p47 = scmp.eq.s32.totalorder %s15, 0
      %p48 = por %p46, %p47
      %p49 = scmp.ne.s32.totalorder %s35, %s36
      %p50 = scmp.eq.s32.totalorder %s16, 1
      %p51 = por %p49, %p50
      %p53 = scmp.ne.s32.totalorder %s36, %s52
      %p54 = scmp.eq.s32.totalorder %s16, 0
      %p55 = por %p53, %p54
      %s56 = ssub.s32 %s18, %s25
      %p57 = scmp.eq.s32.totalorder %s56, 0
      %s59 = sadd.s32 %s58, 1
      %s60 = scalar_select %p57, %s58, %s59
      %p63 = pneg %p57
      %p64 = scmp.eq.s32.totalorder %s10, 1
      %p65 = por %p63, %p64
      %p66 = scmp.ne.s32.totalorder %s58, %s61
      %p67 = scmp.eq.s32.totalorder %s10, 0
      %p68 = por %p66, %p67
      %p69 = scmp.ne.s32.totalorder %s58, %s61
      %p70 = scmp.eq.s32.totalorder %s15, 1
      %p71 = por %p69, %p70
      %p72 = scmp.ne.s32.totalorder %s61, %s62
      %p73 = scmp.eq.s32.totalorder %s15, 0
      %p74 = por %p72, %p73
      %p75 = scmp.ne.s32.totalorder %s61, %s62
      %p76 = scmp.eq.s32.totalorder %s16, 1
      %p77 = por %p75, %p76
      %p79 = scmp.ne.s32.totalorder %s62, %s78
      %p80 = scmp.eq.s32.totalorder %s16, 0
      %p81 = por %p79, %p80
      %s82 = ssub.s32 %s18, %s25
      %p83 = scmp.eq.s32.totalorder %s82, 0
      %s85 = sadd.s32 %s84, 1
      %s86 = scalar_select %p83, %s84, %s85
      %p89 = pneg %p83
      %p90 = scmp.eq.s32.totalorder %s10, 1
      %p91 = por %p89, %p90
      %p92 = scmp.ne.s32.totalorder %s84, %s87
      %p93 = scmp.eq.s32.totalorder %s10, 0
      %p94 = por %p92, %p93
      %p95 = scmp.ne.s32.totalorder %s84, %s87
      %p96 = scmp.eq.s32.totalorder %s15, 1
      %p97 = por %p95, %p96
      %p98 = scmp.ne.s32.totalorder %s87, %s88
      %p99 = scmp.eq.s32.totalorder %s15, 0
      %p100 = por %p98, %p99
      %p101 = scmp.ne.s32.totalorder %s87, %s88
      %p102 = scmp.eq.s32.totalorder %s16, 1
      %p103 = por %p101, %p102
      %p105 = scmp.ne.s32.totalorder %s88, %s104
      %p106 = scmp.eq.s32.totalorder %s16, 0
      %p107 = por %p105, %p106
      %s108 = ssub.s32 %s17, %s29
      %s109 = ssub.s32 %s18, %s25
      %s110 = sor.u32 %s108, %s109
      %p111 = scmp.eq.s32.totalorder %s110, 0
      %s113 = sadd.s32 %s112, 1
      %s114 = scalar_select %p111, %s112, %s113
      %p117 = pneg %p111
      %p118 = scmp.eq.s32.totalorder %s10, 1
      %p119 = por %p117, %p118
      %p120 = scmp.ne.s32.totalorder %s112, %s115
      %p121 = scmp.eq.s32.totalorder %s10, 0
      %p122 = por %p120, %p121
      %p123 = scmp.ne.s32.totalorder %s112, %s115
      %p124 = scmp.eq.s32.totalorder %s15, 1
      %p125 = por %p123, %p124
      %p126 = scmp.ne.s32.totalorder %s115, %s116
      %p127 = scmp.eq.s32.totalorder %s15, 0
      %p128 = por %p126, %p127
      %p129 = scmp.ne.s32.totalorder %s115, %s116
      %p130 = scmp.eq.s32.totalorder %s16, 1
      %p131 = por %p129, %p130
      %p133 = scmp.ne.s32.totalorder %s116, %s132
      %p134 = scmp.eq.s32.totalorder %s16, 0
      %p135 = por %p133, %p134
      %s136 = ssub.s32 %s17, %s29
      %s137 = ssub.s32 %s18, %s25
      %s138 = sor.u32 %s136, %s137
      %p139 = scmp.eq.s32.totalorder %s138, 0
      %s141 = sadd.s32 %s140, 1
      %s142 = scalar_select %p139, %s140, %s141
      %p145 = pneg %p139
      %p146 = scmp.eq.s32.totalorder %s10, 1
      %p147 = por %p145, %p146
      %p148 = scmp.ne.s32.totalorder %s140, %s143
      %p149 = scmp.eq.s32.totalorder %s10, 0
      %p150 = por %p148, %p149
      %p151 = scmp.ne.s32.totalorder %s140, %s143
      %p152 = scmp.eq.s32.totalorder %s15, 1
      %p153 = por %p151, %p152
      %p154 = scmp.ne.s32.totalorder %s143, %s144
      %p155 = scmp.eq.s32.totalorder %s15, 0
      %p156 = por %p154, %p155
      %p157 = scmp.ne.s32.totalorder %s143, %s144
      %p158 = scmp.eq.s32.totalorder %s16, 1
      %p159 = por %p157, %p158
      %p161 = scmp.ne.s32.totalorder %s144, %s160
      %p162 = scmp.eq.s32.totalorder %s16, 0
      %p163 = por %p161, %p162
      %p164 = scmp.le.s32.totalorder 1, %s10
      %p165 = scmp.lt.s32.totalorder %s10, 3
      %p166 = pnand %p164, %p165
      %p167 = pneg %p166
      // Predicated region
      $region9: #{_lambda_.32} parent=5 // pred_check
        _
      $region10: #{_lambda_.32} parent=5 // pred_check_branch
        %169 = sbr.rel (%p166) target = $region12
      $region11: #{_lambda_.32} parent=5 // pred_region
        %s170 = ssub.s32 %s10, 1
        // Predicated region
        $region13: #{_lambda_.32} parent=11 // pred_check
          %p171 = pneg %p48
        $region14: #{_lambda_.32} parent=11 // pred_check_branch
          %173 = sbr.rel (%p171) target = $region16
        $region15: #{_lambda_.32} parent=11 // pred_region
          %p174 = scmp.lt.s32.totalorder %s19, 0
          %s175 = scalar_select %p174, %s19, 0
          %s176 = smul.addr %s175, 4
          %s177 = scalar_lea.vmem %s0, %s176
        $region16: #{_lambda_.32} parent=11 // pred_fallthru
          _
      $region12: #{_lambda_.32} parent=5 // pred_fallthru
        _
      %p178 = scmp.lt.s32.totalorder %s10, 2
      // Predicated region
      $region17: #{_lambda_.32} parent=5 // pred_check
        %p179 = pneg %p178
      $region18: #{_lambda_.32} parent=5 // pred_check_branch
        %181 = sbr.rel (%p179) target = $region20
      $region19: #{_lambda_.32} parent=5 // pred_region
        // Predicated region
        $region21: #{_lambda_.32} parent=19 // pred_check
          %p182 = pneg %p68
        $region22: #{_lambda_.32} parent=19 // pred_check_branch
          %184 = sbr.rel (%p182) target = $region24
        $region23: #{_lambda_.32} parent=19 // pred_region
          %s185 = sand.u32 %s58, 1
          %s186 = sand.u32 %s58, 1
          %s187 = smul.addr %s186, 128
          %s188 = scalar_lea.vmem [#allocation2], %s187
          %s189 = smul.u32 2, %s18
          %s190 = smul.addr %s189, 4
          %s191 = scalar_lea.vmem %s1, %s190
          // Predicated region
          $region25: #{_lambda_.32} parent=23 // pred_check
            _
          $region26: #{_lambda_.32} parent=23 // pred_check_branch
            %193 = sbr.rel (0) target = $region28
          $region27: #{_lambda_.32} parent=23 // pred_region
            // Predicated region
            $region29: #{_lambda_.32} parent=27 // pred_check
              _
            $region30: #{_lambda_.32} parent=27 // pred_check_branch
              %195 = sbr.rel (0) target = $region32
            $region31: #{_lambda_.32} parent=27 // pred_region
              // Predicated region
              $region44: #{_lambda_.32} parent=31 // pred_check
                _
              $region45: #{_lambda_.32} parent=31 // pred_check_branch
                %241 = sbr.rel (0) target = $region47
              $region46: #{_lambda_.32} parent=31 // pred_region
                loop: start=0, step=1, limit=1
                $region48: #{_lambda_.32} parent=46 // loop_pre_header
                  _
                $region49: #{_lambda_.32} parent=46 // loop_header
                  %s243 = sphi 0, %s247
                  %p244 = scmp.ge.s32.totalorder %s243, 1
                  %s248 = sphi %s191, %s191
                  %s249 = sphi %s188, %s188
                $region50: #{_lambda_.32} parent=46 // loop_header_branch
                  %246 = sbr.rel (%p244) target = $region54
                $region51: #{_lambda_.32} parent=46 // loop_body
                  %v250 = vld [vmem:[%s248] sm:$0xff]
                  %251 = vst [vmem:[%s249] sm:$0xff] %v250
                  %v252 = vld [vmem:[%s248 + $0x10] sm:$0xff]
                  %253 = vst [vmem:[%s249 + $0x8] sm:$0xff] %v252
                  %v254 = vld [vmem:[%s248 + $0x20] sm:$0xff]
                  %255 = vst [vmem:[%s249 + $0x10] sm:$0xff] %v254
                  %v256 = vld [vmem:[%s248 + $0x30] sm:$0xff]
                  %257 = vst [vmem:[%s249 + $0x18] sm:$0xff] %v256
                  %v258 = vld [vmem:[%s248 + $0x40] sm:$0xff]
                  %259 = vst [vmem:[%s249 + $0x20] sm:$0xff] %v258
                  %v260 = vld [vmem:[%s248 + $0x50] sm:$0xff]
                  %261 = vst [vmem:[%s249 + $0x28] sm:$0xff] %v260
                  %v262 = vld [vmem:[%s248 + $0x60] sm:$0xff]
                  %263 = vst [vmem:[%s249 + $0x30] sm:$0xff] %v262
                  %v264 = vld [vmem:[%s248 + $0x70] sm:$0xff]
                  %265 = vst [vmem:[%s249 + $0x38] sm:$0xff] %v264
                  %v266 = vld [vmem:[%s248 + $0x80] sm:$0xff]
                  %267 = vst [vmem:[%s249 + $0x40] sm:$0xff] %v266
                  %v268 = vld [vmem:[%s248 + $0x90] sm:$0xff]
                  %269 = vst [vmem:[%s249 + $0x48] sm:$0xff] %v268
                  %v270 = vld [vmem:[%s248 + $0xa0] sm:$0xff]
                  %271 = vst [vmem:[%s249 + $0x50] sm:$0xff] %v270
                  %v272 = vld [vmem:[%s248 + $0xb0] sm:$0xff]
                  %273 = vst [vmem:[%s249 + $0x58] sm:$0xff] %v272
                  %v274 = vld [vmem:[%s248 + $0xc0] sm:$0xff]
                  %275 = vst [vmem:[%s249 + $0x60] sm:$0xff] %v274
                  %v276 = vld [vmem:[%s248 + $0xd0] sm:$0xff]
                  %277 = vst [vmem:[%s249 + $0x68] sm:$0xff] %v276
                  %v278 = vld [vmem:[%s248 + $0xe0] sm:$0xff]
                  %279 = vst [vmem:[%s249 + $0x70] sm:$0xff] %v278
                  %v280 = vld [vmem:[%s248 + $0xf0] sm:$0xff]
                  %281 = vst [vmem:[%s249 + $0x78] sm:$0xff] %v280
                $region52: #{_lambda_.32} parent=46 // loop_footer
                  %s247 = sadd.s32 1, %s243
                $region53: #{_lambda_.32} parent=46 // loop_footer_branch
                  %242 = sbr.rel target = $region49
                $region54: #{_lambda_.32} parent=46 // loop_exit
                  _
              $region47: #{_lambda_.32} parent=31 // pred_fallthru
                _
              // Predicated region
              $region55: #{_lambda_.32} parent=31 // pred_check
                _
              $region56: #{_lambda_.32} parent=31 // pred_check_branch
                %283 = sbr.rel target = $region58
              $region57: #{_lambda_.32} parent=31 // pred_region
                _
              $region58: #{_lambda_.32} parent=31 // pred_fallthru
                _
            $region32: #{_lambda_.32} parent=27 // pred_fallthru
              _
            // Predicated region
            $region33: #{_lambda_.32} parent=27 // pred_check
              _
            $region34: #{_lambda_.32} parent=27 // pred_check_branch
              %197 = sbr.rel target = $region36
            $region35: #{_lambda_.32} parent=27 // pred_region
              %s199 = ssub.s32 256, 1
              loop: start=0, step=1, limit=1
              $region37: #{_lambda_.32} parent=35 // loop_pre_header
                _
              $region38: #{_lambda_.32} parent=35 // loop_header
                %s201 = sphi 0, %s205
                %p202 = scmp.ge.s32.totalorder %s201, 1
                %s206 = sphi %s191, %s191
                %s207 = sphi %s188, %s188
              $region39: #{_lambda_.32} parent=35 // loop_header_branch
                %204 = sbr.rel (%p202) target = $region43
              $region40: #{_lambda_.32} parent=35 // loop_body
                %v208 = vld [vmem:[%s206] sm:%s199]
                %209 = vst [vmem:[%s207] sm:%s199] %v208
                %v210 = vld [vmem:[%s206 + $0x10] sm:%s199]
                %211 = vst [vmem:[%s207 + $0x8] sm:%s199] %v210
                %v212 = vld [vmem:[%s206 + $0x20] sm:%s199]
                %213 = vst [vmem:[%s207 + $0x10] sm:%s199] %v212
                %v214 = vld [vmem:[%s206 + $0x30] sm:%s199]
                %215 = vst [vmem:[%s207 + $0x18] sm:%s199] %v214
                %v216 = vld [vmem:[%s206 + $0x40] sm:%s199]
                %217 = vst [vmem:[%s207 + $0x20] sm:%s199] %v216
                %v218 = vld [vmem:[%s206 + $0x50] sm:%s199]
                %219 = vst [vmem:[%s207 + $0x28] sm:%s199] %v218
                %v220 = vld [vmem:[%s206 + $0x60] sm:%s199]
                %221 = vst [vmem:[%s207 + $0x30] sm:%s199] %v220
                %v222 = vld [vmem:[%s206 + $0x70] sm:%s199]
                %223 = vst [vmem:[%s207 + $0x38] sm:%s199] %v222
                %v224 = vld [vmem:[%s206 + $0x80] sm:%s199]
                %225 = vst [vmem:[%s207 + $0x40] sm:%s199] %v224
                %v226 = vld [vmem:[%s206 + $0x90] sm:%s199]
                %227 = vst [vmem:[%s207 + $0x48] sm:%s199] %v226
                %v228 = vld [vmem:[%s206 + $0xa0] sm:%s199]
                %229 = vst [vmem:[%s207 + $0x50] sm:%s199] %v228
                %v230 = vld [vmem:[%s206 + $0xb0] sm:%s199]
                %231 = vst [vmem:[%s207 + $0x58] sm:%s199] %v230
                %v232 = vld [vmem:[%s206 + $0xc0] sm:%s199]
                %233 = vst [vmem:[%s207 + $0x60] sm:%s199] %v232
                %v234 = vld [vmem:[%s206 + $0xd0] sm:%s199]
                %235 = vst [vmem:[%s207 + $0x68] sm:%s199] %v234
                %v236 = vld [vmem:[%s206 + $0xe0] sm:%s199]
                %237 = vst [vmem:[%s207 + $0x70] sm:%s199] %v236
                %v238 = vld [vmem:[%s206 + $0xf0] sm:%s199]
                %239 = vst [vmem:[%s207 + $0x78] sm:%s199] %v238
              $region41: #{_lambda_.32} parent=35 // loop_footer
                %s205 = sadd.s32 1, %s201
              $region42: #{_lambda_.32} parent=35 // loop_footer_branch
                %200 = sbr.rel target = $region38
              $region43: #{_lambda_.32} parent=35 // loop_exit
                _
            $region36: #{_lambda_.32} parent=27 // pred_fallthru
              _
          $region28: #{_lambda_.32} parent=23 // pred_fallthru
            _
          %284 = vnop
        $region24: #{_lambda_.32} parent=19 // pred_fallthru
          _
        // Predicated region
        $region59: #{_lambda_.32} parent=19 // pred_check
          %p285 = pneg %p94
        $region60: #{_lambda_.32} parent=19 // pred_check_branch
          %287 = sbr.rel (%p285) target = $region62
        $region61: #{_lambda_.32} parent=19 // pred_region
          %s288 = smul.u32 2, %s18
          %p289 = scmp.lt.s32.totalorder %s288, 3
          %s290 = scalar_select %p289, %s288, 3
          %s291 = scalar_lea.vmem %s2, %s290
          %s292 = smul.u32 2, %s18
        $region62: #{_lambda_.32} parent=19 // pred_fallthru
          _
        // Predicated region
        $region63: #{_lambda_.32} parent=19 // pred_check
          %p293 = pneg %p122
        $region64: #{_lambda_.32} parent=19 // pred_check_branch
          %295 = sbr.rel (%p293) target = $region66
        $region65: #{_lambda_.32} parent=19 // pred_region
          %s296 = smul.u32 2, %s18
          %p297 = scmp.lt.s32.totalorder %s17, 0
          %s298 = scalar_select %p297, %s17, 0
          %p299 = scmp.lt.s32.totalorder %s296, 3
          %s300 = scalar_select %p299, %s296, 3
          %s301 = smul.addr %s298, 4
          %s302 = sadd.s32 %s300, %s301
          %s303 = smul.addr %s302, 4
          %s304 = scalar_lea.vmem %s3, %s303
          %s305 = smul.u32 2, %s18
        $region66: #{_lambda_.32} parent=19 // pred_fallthru
          _
      $region20: #{_lambda_.32} parent=5 // pred_fallthru
        _
      %p306 = scmp.le.s32.totalorder 1, %s10
      %p307 = scmp.lt.s32.totalorder %s10, 3
      %p308 = pnand %p306, %p307
      %p309 = pneg %p308
      // Predicated region
      $region67: #{_lambda_.32} parent=5 // pred_check
        _
      $region68: #{_lambda_.32} parent=5 // pred_check_branch
        %311 = sbr.rel (%p308) target = $region70
      $region69: #{_lambda_.32} parent=5 // pred_region
        %s312 = ssub.s32 %s10, 1
        %s313 = sand.u32 %s61, 1
        %s314 = sand.u32 %s61, 1
        %s315 = smul.addr %s314, 128
        %s316 = scalar_lea.vmem [#allocation2], %s315
        // Predicated region
        $region71: #{_lambda_.32} parent=69 // pred_check
          %p317 = pneg %p74
        $region72: #{_lambda_.32} parent=69 // pred_check_branch
          %319 = sbr.rel (%p317) target = $region74
        $region73: #{_lambda_.32} parent=69 // pred_region
          _
        $region74: #{_lambda_.32} parent=69 // pred_fallthru
          _
        %p320 = scmp.lt.s32.totalorder %s19, 0
        %s321 = scalar_select %p320, %s19, 0
        %s322 = smul.addr %s321, 4
        %s323 = scalar_lea.vmem %s0, %s322
        %p324 = pneg %p48
        %p325 = pneg %p45
        %s326 = sand.u32 %s61, 1
        %s327 = sand.u32 %s61, 1
        %s328 = smul.addr %s327, 128
        %s329 = scalar_lea.vmem [#allocation2], %s328
        %p330 = pneg %p74
        %p331 = pneg %p71
        %s332 = smul.u32 2, %s20
        %p333 = scmp.lt.s32.totalorder %s332, 3
        %s334 = scalar_select %p333, %s332, 3
        %s335 = scalar_lea.vmem %s2, %s334
        %p336 = pneg %p100
        %p337 = pneg %p97
        %s338 = smul.u32 2, %s20
        %p339 = scmp.lt.s32.totalorder %s19, 0
        %s340 = scalar_select %p339, %s19, 0
        %p341 = scmp.lt.s32.totalorder %s338, 3
        %s342 = scalar_select %p341, %s338, 3
        %s343 = smul.addr %s340, 4
        %s344 = sadd.s32 %s342, %s343
        %s345 = smul.addr %s344, 4
        %s346 = scalar_lea.vmem %s3, %s345
        %p347 = pneg %p128
        %p348 = pneg %p125
        %p349 = pneg %p156
        %p350 = pneg %p153
        %s351 = smul.u32 2, %s20
        %p352 = scmp.lt.s32.totalorder %s19, 0
        %s353 = scalar_select %p352, %s19, 0
        %p354 = scmp.lt.s32.totalorder %s351, 3
        %s355 = scalar_select %p354, %s351, 3
        %s356 = smul.addr %s353, 4
        %s357 = sadd.s32 %s355, %s356
        %s358 = smul.addr %s357, 4
        %s359 = scalar_lea.vmem %s4, %s358
        %p360 = scmp.lt.s32.totalorder %s19, 0
        %s361 = scalar_select %p360, %s19, 0
        %s362 = smul.addr %s361, 4
        %s363 = scalar_lea.vmem %s0, %s362
        %s364 = smul.u32 2, %s20
        %s365 = smul.u32 2, %s20
        %p366 = scmp.lt.s32.totalorder %s365, 3
        %s367 = scalar_select %p366, %s365, 3
        %s368 = scalar_lea.vmem %s2, %s367
        %s369 = smul.u32 2, %s20
        %s370 = smul.u32 2, %s20
        %p371 = scmp.lt.s32.totalorder %s19, 0
        %s372 = scalar_select %p371, %s19, 0
        %p373 = scmp.lt.s32.totalorder %s370, 3
        %s374 = scalar_select %p373, %s370, 3
        %s375 = smul.addr %s372, 4
        %s376 = sadd.s32 %s374, %s375
        %s377 = smul.addr %s376, 4
        %s378 = scalar_lea.vmem %s3, %s377
        %s379 = smul.u32 2, %s20
        %s380 = smul.u32 2, %s20
        %p381 = scmp.lt.s32.totalorder %s19, 0
        %s382 = scalar_select %p381, %s19, 0
        %p383 = scmp.lt.s32.totalorder %s380, 3
        %s384 = scalar_select %p383, %s380, 3
        %s385 = smul.addr %s382, 4
        %s386 = sadd.s32 %s384, %s385
        %s387 = smul.addr %s386, 4
        %s388 = scalar_lea.vmem %s4, %s387
        %s389 = smul.u32 2, %s20
        %v390 = vld [vmem:[%s363] sm:$0xf]
        %v391 = vld [vmem:[%s316] sm:$0xff]
        %v392 = vld [vmem:[%s316 + $0x8] sm:$0xff]
        %v393 = vld [vmem:[%s316 + $0x10] sm:$0xff]
        %v394 = vld [vmem:[%s316 + $0x18] sm:$0xff]
        %v395 = vld [vmem:[%s316 + $0x20] sm:$0xff]
        %v396 = vld [vmem:[%s316 + $0x28] sm:$0xff]
        %v397 = vld [vmem:[%s316 + $0x30] sm:$0xff]
        %v398 = vld [vmem:[%s316 + $0x38] sm:$0xff]
        %v399 = vld [vmem:[%s316 + $0x40] sm:$0xff]
        %v400 = vld [vmem:[%s316 + $0x48] sm:$0xff]
        %v401 = vld [vmem:[%s316 + $0x50] sm:$0xff]
        %v402 = vld [vmem:[%s316 + $0x58] sm:$0xff]
        %v403 = vld [vmem:[%s316 + $0x60] sm:$0xff]
        %v404 = vld [vmem:[%s316 + $0x68] sm:$0xff]
        %v405 = vld [vmem:[%s316 + $0x70] sm:$0xff]
        %v406 = vld [vmem:[%s316 + $0x78] sm:$0xff]
        %v407 = vld [vmem:[%s368] sm:$0x3]
        %v409 = vperm.slane %v407, 0
        %v410 = vperm.slane %v407, 1
        %v429 = vunpack.c.l.b16 %v391
        %v430 = vunpack.c.h.b16 %v391
        %v431 = vunpack.c.l.b16 %v392
        %v432 = vunpack.c.h.b16 %v392
        %v433 = vunpack.c.l.b16 %v393
        %v434 = vunpack.c.h.b16 %v393
        %v435 = vunpack.c.l.b16 %v394
        %v436 = vunpack.c.h.b16 %v394
        %v437 = vunpack.c.l.b16 %v395
        %v438 = vunpack.c.h.b16 %v395
        %v439 = vunpack.c.l.b16 %v396
        %v440 = vunpack.c.h.b16 %v396
        %v441 = vunpack.c.l.b16 %v397
        %v442 = vunpack.c.h.b16 %v397
        %v443 = vunpack.c.l.b16 %v398
        %v444 = vunpack.c.h.b16 %v398
        %v445 = vunpack.c.l.b16 %v399
        %v446 = vunpack.c.h.b16 %v399
        %v447 = vunpack.c.l.b16 %v400
        %v448 = vunpack.c.h.b16 %v400
        %v449 = vunpack.c.l.b16 %v401
        %v450 = vunpack.c.h.b16 %v401
        %v451 = vunpack.c.l.b16 %v402
        %v452 = vunpack.c.h.b16 %v402
        %v453 = vunpack.c.l.b16 %v403
        %v454 = vunpack.c.h.b16 %v403
        %v455 = vunpack.c.l.b16 %v404
        %v456 = vunpack.c.h.b16 %v404
        %v457 = vunpack.c.l.b16 %v405
        %v458 = vunpack.c.h.b16 %v405
        %v459 = vunpack.c.l.b16 %v406
        %v460 = vunpack.c.h.b16 %v406
        %v461 = vpack.c.b16 %v431, %v429
        %v462 = vpack.c.b16 %v432, %v430
        %v463 = vpack.c.b16 %v435, %v433
        %v464 = vpack.c.b16 %v436, %v434
        %v465 = vpack.c.b16 %v439, %v437
        %v466 = vpack.c.b16 %v440, %v438
        %v467 = vpack.c.b16 %v443, %v441
        %v468 = vpack.c.b16 %v444, %v442
        %v469 = vpack.c.b16 %v447, %v445
        %v470 = vpack.c.b16 %v448, %v446
        %v471 = vpack.c.b16 %v451, %v449
        %v472 = vpack.c.b16 %v452, %v450
        %v473 = vpack.c.b16 %v455, %v453
        %v474 = vpack.c.b16 %v456, %v454
        %v475 = vpack.c.b16 %v459, %v457
        %v476 = vpack.c.b16 %v460, %v458
        %493 = vmatpush.bf16.msra.mxu0 %v475
        %494 = vmatpush.bf16.msra.mxu0 %v473
        %495 = vmatpush.bf16.msra.mxu0 %v471
        %496 = vmatpush.bf16.msra.mxu0 %v469
        %497 = vmatpush.bf16.msra.mxu0 %v467
        %498 = vmatpush.bf16.msra.mxu0 %v465
        %499 = vmatpush.bf16.msra.mxu0 %v463
        %500 = vmatpush.bf16.msra.mxu0 %v461
        %501 = vmatmul.bf16.gmra.mxu0 %v390
        %v502 = vpop.f32.mrf.mxu0
        %v503 = vadd.f32 %v409, %v502
        %v504 = vpop.f32.mrf.mxu0
        %505 = vdwg.mxu0
        %506 = vmatpush.bf16.msra.mxu0 %v476
        %507 = vmatpush.bf16.msra.mxu0 %v474
        %508 = vmatpush.bf16.msra.mxu0 %v472
        %509 = vmatpush.bf16.msra.mxu0 %v470
        %510 = vmatpush.bf16.msra.mxu0 %v468
        %511 = vmatpush.bf16.msra.mxu0 %v466
        %512 = vmatpush.bf16.msra.mxu0 %v464
        %513 = vmatpush.bf16.msra.mxu0 %v462
        %514 = vmatmul.bf16.gmra.mxu0 %v390
        %v515 = vpop.f32.mrf.mxu0
        %v516 = vadd.f32 %v410, %v515
        %v517 = vpop.f32.mrf.mxu0
        %518 = vdwg.mxu0
        %v519 = vld [vmem:[%s378] sm:$0xff]
        %v520 = vunpack.c.l.bf16 %v519
        %v521 = vunpack.c.h.bf16 %v519
        %v522 = vadd.f32 %v503, %v520
        %v523 = vadd.f32 %v516, %v521
        %v524 = vmax.f32 %v522, 0.0
        %v525 = vmax.f32 %v523, 0.0
        %v526 = vpack.c.bf16 %v525, %v524
        %527 = vst [vmem:[%s388] sm:$0xff] %v526
        %s528 = smul.u32 2, %s20
        %p529 = scmp.lt.s32.totalorder %s19, 0
        %s530 = scalar_select %p529, %s19, 0
        %p531 = scmp.lt.s32.totalorder %s528, 3
        %s532 = scalar_select %p531, %s528, 3
        %s533 = smul.addr %s530, 4
        %s534 = sadd.s32 %s532, %s533
        %s535 = smul.addr %s534, 4
        %s536 = scalar_lea.vmem %s4, %s535
        // Predicated region
        $region75: #{_lambda_.32} parent=69 // pred_check
          %p537 = pneg %p153
        $region76: #{_lambda_.32} parent=69 // pred_check_branch
          %539 = sbr.rel (%p537) target = $region78
        $region77: #{_lambda_.32} parent=69 // pred_region
          %s540 = smul.u32 2, %s20
        $region78: #{_lambda_.32} parent=69 // pred_fallthru
          _
      $region70: #{_lambda_.32} parent=5 // pred_fallthru
        _
      %p541 = scmp.le.s32.totalorder 2, %s10
      // Predicated region
      $region79: #{_lambda_.32} parent=5 // pred_check
        %p542 = pneg %p541
      $region80: #{_lambda_.32} parent=5 // pred_check_branch
        %544 = sbr.rel (%p542) target = $region82
      $region81: #{_lambda_.32} parent=5 // pred_region
        %s545 = ssub.s32 %s10, 2
        // Predicated region
        $region83: #{_lambda_.32} parent=81 // pred_check
          %p546 = pneg %p159
        $region84: #{_lambda_.32} parent=81 // pred_check_branch
          %548 = sbr.rel (%p546) target = $region86
        $region85: #{_lambda_.32} parent=81 // pred_region
          %s549 = smul.u32 2, %s22
          %p550 = scmp.lt.s32.totalorder %s21, 0
          %s551 = scalar_select %p550, %s21, 0
          %p552 = scmp.lt.s32.totalorder %s549, 3
          %s553 = scalar_select %p552, %s549, 3
          %s554 = smul.addr %s551, 4
          %s555 = sadd.s32 %s553, %s554
          %s556 = smul.addr %s555, 4
          %s557 = scalar_lea.vmem %s4, %s556
        $region86: #{_lambda_.32} parent=81 // pred_fallthru
          _
      $region82: #{_lambda_.32} parent=5 // pred_fallthru
        _
    $region6: #{_lambda_.32} parent=1 // loop_footer
      %s14 = sadd.s32 1, %s10
    $region7: #{_lambda_.32} parent=1 // loop_footer_branch
      %9 = sbr.rel target = $region3
    $region8: #{_lambda_.32} parent=1 // loop_exit
      _

// kernel: _lambda_.29
$region0: #{_lambda_.29}
  #allocation0 [shape = 'u32[]', space=smem, size = 0x4, offset = 0x4, fixed_abs, tag = 'smem constant byte address 0x4 - core index']
  #allocation1 [shape = 'u32[72,128]{1,0:T(1,128)}', space=vmem, size = 0x9000, scoped, tag = 'internal scratch']
  %s0 = inlined_call_operand.vmem [shape: bf16[8,256], index: 0, kind: input, shape index: {}]
  %s1 = inlined_call_operand.vmem [shape: bf16[256,512], index: 1, kind: input, shape index: {}]
  %s2 = inlined_call_operand.vmem [shape: f32[1,512], index: 2, kind: input, shape index: {}]
  %s3 = inlined_call_operand.vmem [shape: bf16[8,512], index: 3, kind: output, shape index: {}]
  %s4 = sld [smem:[#allocation0]]
  $region83: #{_lambda_.29} parent=0
    _
  %s6 = ssub.s32 1, %s4
  %s7 = scalar_select 0, %s6, %s4
  $region1: #{_lambda_.29} parent=0
    #allocation2 [shape = 'u8[262144]{0}', space=vmem, size = 0x40000, scoped, tag = 'input window, operand 1']
    loop: start=0, step=1, limit=4
    $region2: #{_lambda_.29} parent=1 // loop_pre_header
      _
    $region3: #{_lambda_.29} parent=1 // loop_header
      %s9 = sphi 0, %s13
      %p10 = scmp.ge.s32.totalorder %s9, 4
      %s16 = sphi 0, %s28
      %s17 = sphi 0, %s24
      %s18 = sphi 0, %s16
      %s19 = sphi 0, %s17
      %s20 = sphi 0, %s18
      %s21 = sphi 0, %s19
      %s31 = sphi 0, %s33
      %s34 = sphi 0, %s31
      %s35 = sphi 0, %s34
      %s51 = sphi 0, %s35
      %s57 = sphi 0, %s59
      %s60 = sphi 0, %s57
      %s61 = sphi 0, %s60
      %s77 = sphi 0, %s61
      %s83 = sphi 0, %s85
      %s86 = sphi 0, %s83
      %s87 = sphi 0, %s86
      %s103 = sphi 0, %s87
      %s111 = sphi 0, %s113
      %s114 = sphi 0, %s111
      %s115 = sphi 0, %s114
      %s131 = sphi 0, %s115
    $region4: #{_lambda_.29} parent=1 // loop_header_branch
      %12 = sbr.rel (%p10) target = $region8
    $region5: #{_lambda_.29} parent=1 // loop_body
      %s14 = ssub.s32 %s9, 1
      %s15 = ssub.s32 %s9, 2
      %s22 = sadd.s32 1, %s17
      %p23 = scmp.ge.s32.totalorder %s22, 2
      %s24 = scalar_select %p23, 0, %s22
      %s25 = sadd.s32 1, %s16
      %s26 = scalar_select %p23, %s25, %s16
      %p27 = scmp.ge.s32.totalorder %s26, 1
      %s28 = scalar_select %p27, 0, %s26
      %s29 = ssub.s32 %s16, %s28
      %p30 = scmp.eq.s32.totalorder %s29, 0
      %s32 = sadd.s32 %s31, 1
      %s33 = scalar_select %p30, %s31, %s32
      %p36 = pneg %p30
      %p37 = scmp.eq.s32.totalorder %s9, 1
      %p38 = por %p36, %p37
      %p39 = scmp.ne.s32.totalorder %s31, %s34
      %p40 = scmp.eq.s32.totalorder %s9, 0
      %p41 = por %p39, %p40
      %p42 = scmp.ne.s32.totalorder %s31, %s34
      %p43 = scmp.eq.s32.totalorder %s14, 1
      %p44 = por %p42, %p43
      %p45 = scmp.ne.s32.totalorder %s34, %s35
      %p46 = scmp.eq.s32.totalorder %s14, 0
      %p47 = por %p45, %p46
      %p48 = scmp.ne.s32.totalorder %s34, %s35
      %p49 = scmp.eq.s32.totalorder %s15, 1
      %p50 = por %p48, %p49
      %p52 = scmp.ne.s32.totalorder %s35, %s51
      %p53 = scmp.eq.s32.totalorder %s15, 0
      %p54 = por %p52, %p53
      %s55 = ssub.s32 %s17, %s24
      %p56 = scmp.eq.s32.totalorder %s55, 0
      %s58 = sadd.s32 %s57, 1
      %s59 = scalar_select %p56, %s57, %s58
      %p62 = pneg %p56
      %p63 = scmp.eq.s32.totalorder %s9, 1
      %p64 = por %p62, %p63
      %p65 = scmp.ne.s32.totalorder %s57, %s60
      %p66 = scmp.eq.s32.totalorder %s9, 0
      %p67 = por %p65, %p66
      %p68 = scmp.ne.s32.totalorder %s57, %s60
      %p69 = scmp.eq.s32.totalorder %s14, 1
      %p70 = por %p68, %p69
      %p71 = scmp.ne.s32.totalorder %s60, %s61
      %p72 = scmp.eq.s32.totalorder %s14, 0
      %p73 = por %p71, %p72
      %p74 = scmp.ne.s32.totalorder %s60, %s61
      %p75 = scmp.eq.s32.totalorder %s15, 1
      %p76 = por %p74, %p75
      %p78 = scmp.ne.s32.totalorder %s61, %s77
      %p79 = scmp.eq.s32.totalorder %s15, 0
      %p80 = por %p78, %p79
      %s81 = ssub.s32 %s17, %s24
      %p82 = scmp.eq.s32.totalorder %s81, 0
      %s84 = sadd.s32 %s83, 1
      %s85 = scalar_select %p82, %s83, %s84
      %p88 = pneg %p82
      %p89 = scmp.eq.s32.totalorder %s9, 1
      %p90 = por %p88, %p89
      %p91 = scmp.ne.s32.totalorder %s83, %s86
      %p92 = scmp.eq.s32.totalorder %s9, 0
      %p93 = por %p91, %p92
      %p94 = scmp.ne.s32.totalorder %s83, %s86
      %p95 = scmp.eq.s32.totalorder %s14, 1
      %p96 = por %p94, %p95
      %p97 = scmp.ne.s32.totalorder %s86, %s87
      %p98 = scmp.eq.s32.totalorder %s14, 0
      %p99 = por %p97, %p98
      %p100 = scmp.ne.s32.totalorder %s86, %s87
      %p101 = scmp.eq.s32.totalorder %s15, 1
      %p102 = por %p100, %p101
      %p104 = scmp.ne.s32.totalorder %s87, %s103
      %p105 = scmp.eq.s32.totalorder %s15, 0
      %p106 = por %p104, %p105
      %s107 = ssub.s32 %s16, %s28
      %s108 = ssub.s32 %s17, %s24
      %s109 = sor.u32 %s107, %s108
      %p110 = scmp.eq.s32.totalorder %s109, 0
      %s112 = sadd.s32 %s111, 1
      %s113 = scalar_select %p110, %s111, %s112
      %p116 = pneg %p110
      %p117 = scmp.eq.s32.totalorder %s9, 1
      %p118 = por %p116, %p117
      %p119 = scmp.ne.s32.totalorder %s111, %s114
      %p120 = scmp.eq.s32.totalorder %s9, 0
      %p121 = por %p119, %p120
      %p122 = scmp.ne.s32.totalorder %s111, %s114
      %p123 = scmp.eq.s32.totalorder %s14, 1
      %p124 = por %p122, %p123
      %p125 = scmp.ne.s32.totalorder %s114, %s115
      %p126 = scmp.eq.s32.totalorder %s14, 0
      %p127 = por %p125, %p126
      %p128 = scmp.ne.s32.totalorder %s114, %s115
      %p129 = scmp.eq.s32.totalorder %s15, 1
      %p130 = por %p128, %p129
      %p132 = scmp.ne.s32.totalorder %s115, %s131
      %p133 = scmp.eq.s32.totalorder %s15, 0
      %p134 = por %p132, %p133
      %p135 = scmp.le.s32.totalorder 1, %s9
      %p136 = scmp.lt.s32.totalorder %s9, 3
      %p137 = pnand %p135, %p136
      %p138 = pneg %p137
      // Predicated region
      $region9: #{_lambda_.29} parent=5 // pred_check
        _
      $region10: #{_lambda_.29} parent=5 // pred_check_branch
        %140 = sbr.rel (%p137) target = $region12
      $region11: #{_lambda_.29} parent=5 // pred_region
        %s141 = ssub.s32 %s9, 1
        // Predicated region
        $region13: #{_lambda_.29} parent=11 // pred_check
          %p142 = pneg %p47
        $region14: #{_lambda_.29} parent=11 // pred_check_branch
          %144 = sbr.rel (%p142) target = $region16
        $region15: #{_lambda_.29} parent=11 // pred_region
          %p145 = scmp.lt.s32.totalorder %s18, 0
          %s146 = scalar_select %p145, %s18, 0
          %s147 = smul.addr %s146, 2
          %s148 = smul.addr %s147, 4
          %s149 = scalar_lea.vmem %s0, %s148
        $region16: #{_lambda_.29} parent=11 // pred_fallthru
          _
      $region12: #{_lambda_.29} parent=5 // pred_fallthru
        _
      %p150 = scmp.lt.s32.totalorder %s9, 2
      // Predicated region
      $region17: #{_lambda_.29} parent=5 // pred_check
        %p151 = pneg %p150
      $region18: #{_lambda_.29} parent=5 // pred_check_branch
        %153 = sbr.rel (%p151) target = $region20
      $region19: #{_lambda_.29} parent=5 // pred_region
        // Predicated region
        $region21: #{_lambda_.29} parent=19 // pred_check
          %p154 = pneg %p67
        $region22: #{_lambda_.29} parent=19 // pred_check_branch
          %156 = sbr.rel (%p154) target = $region24
        $region23: #{_lambda_.29} parent=19 // pred_region
          %s157 = sand.u32 %s57, 1
          %s158 = sand.u32 %s57, 1
          %s159 = smul.addr %s158, 256
          %s160 = scalar_lea.vmem [#allocation2], %s159
          %s161 = smul.u32 2, %s17
          %s162 = smul.addr %s161, 4
          %s163 = scalar_lea.vmem %s1, %s162
          // Predicated region
          $region25: #{_lambda_.29} parent=23 // pred_check
            _
          $region26: #{_lambda_.29} parent=23 // pred_check_branch
            %165 = sbr.rel (0) target = $region28
          $region27: #{_lambda_.29} parent=23 // pred_region
            // Predicated region
            $region29: #{_lambda_.29} parent=27 // pred_check
              _
            $region30: #{_lambda_.29} parent=27 // pred_check_branch
              %167 = sbr.rel (0) target = $region32
            $region31: #{_lambda_.29} parent=27 // pred_region
              // Predicated region
              $region44: #{_lambda_.29} parent=31 // pred_check
                _
              $region45: #{_lambda_.29} parent=31 // pred_check_branch
                %245 = sbr.rel (0) target = $region47
              $region46: #{_lambda_.29} parent=31 // pred_region
                loop: start=0, step=1, limit=1
                $region48: #{_lambda_.29} parent=46 // loop_pre_header
                  _
                $region49: #{_lambda_.29} parent=46 // loop_header
                  %s247 = sphi 0, %s251
                  %p248 = scmp.ge.s32.totalorder %s247, 1
                  %s252 = sphi %s163, %s163
                  %s253 = sphi %s160, %s160
                $region50: #{_lambda_.29} parent=46 // loop_header_branch
                  %250 = sbr.rel (%p248) target = $region54
                $region51: #{_lambda_.29} parent=46 // loop_body
                  %v254 = vld [vmem:[%s252] sm:$0xff]
                  %255 = vst [vmem:[%s253] sm:$0xff] %v254
                  %v256 = vld [vmem:[%s252 + $0x10] sm:$0xff]
                  %257 = vst [vmem:[%s253 + $0x8] sm:$0xff] %v256
                  %v258 = vld [vmem:[%s252 + $0x20] sm:$0xff]
                  %259 = vst [vmem:[%s253 + $0x10] sm:$0xff] %v258
                  %v260 = vld [vmem:[%s252 + $0x30] sm:$0xff]
                  %261 = vst [vmem:[%s253 + $0x18] sm:$0xff] %v260
                  %v262 = vld [vmem:[%s252 + $0x40] sm:$0xff]
                  %263 = vst [vmem:[%s253 + $0x20] sm:$0xff] %v262
                  %v264 = vld [vmem:[%s252 + $0x50] sm:$0xff]
                  %265 = vst [vmem:[%s253 + $0x28] sm:$0xff] %v264
                  %v266 = vld [vmem:[%s252 + $0x60] sm:$0xff]
                  %267 = vst [vmem:[%s253 + $0x30] sm:$0xff] %v266
                  %v268 = vld [vmem:[%s252 + $0x70] sm:$0xff]
                  %269 = vst [vmem:[%s253 + $0x38] sm:$0xff] %v268
                  %v270 = vld [vmem:[%s252 + $0x80] sm:$0xff]
                  %271 = vst [vmem:[%s253 + $0x40] sm:$0xff] %v270
                  %v272 = vld [vmem:[%s252 + $0x90] sm:$0xff]
                  %273 = vst [vmem:[%s253 + $0x48] sm:$0xff] %v272
                  %v274 = vld [vmem:[%s252 + $0xa0] sm:$0xff]
                  %275 = vst [vmem:[%s253 + $0x50] sm:$0xff] %v274
                  %v276 = vld [vmem:[%s252 + $0xb0] sm:$0xff]
                  %277 = vst [vmem:[%s253 + $0x58] sm:$0xff] %v276
                  %v278 = vld [vmem:[%s252 + $0xc0] sm:$0xff]
                  %279 = vst [vmem:[%s253 + $0x60] sm:$0xff] %v278
                  %v280 = vld [vmem:[%s252 + $0xd0] sm:$0xff]
                  %281 = vst [vmem:[%s253 + $0x68] sm:$0xff] %v280
                  %v282 = vld [vmem:[%s252 + $0xe0] sm:$0xff]
                  %283 = vst [vmem:[%s253 + $0x70] sm:$0xff] %v282
                  %v284 = vld [vmem:[%s252 + $0xf0] sm:$0xff]
                  %285 = vst [vmem:[%s253 + $0x78] sm:$0xff] %v284
                  %v286 = vld [vmem:[%s252 + $0x100] sm:$0xff]
                  %287 = vst [vmem:[%s253 + $0x80] sm:$0xff] %v286
                  %v288 = vld [vmem:[%s252 + $0x110] sm:$0xff]
                  %289 = vst [vmem:[%s253 + $0x88] sm:$0xff] %v288
                  %v290 = vld [vmem:[%s252 + $0x120] sm:$0xff]
                  %291 = vst [vmem:[%s253 + $0x90] sm:$0xff] %v290
                  %v292 = vld [vmem:[%s252 + $0x130] sm:$0xff]
                  %293 = vst [vmem:[%s253 + $0x98] sm:$0xff] %v292
                  %v294 = vld [vmem:[%s252 + $0x140] sm:$0xff]
                  %295 = vst [vmem:[%s253 + $0xa0] sm:$0xff] %v294
                  %v296 = vld [vmem:[%s252 + $0x150] sm:$0xff]
                  %297 = vst [vmem:[%s253 + $0xa8] sm:$0xff] %v296
                  %v298 = vld [vmem:[%s252 + $0x160] sm:$0xff]
                  %299 = vst [vmem:[%s253 + $0xb0] sm:$0xff] %v298
                  %v300 = vld [vmem:[%s252 + $0x170] sm:$0xff]
                  %301 = vst [vmem:[%s253 + $0xb8] sm:$0xff] %v300
                  %v302 = vld [vmem:[%s252 + $0x180] sm:$0xff]
                  %303 = vst [vmem:[%s253 + $0xc0] sm:$0xff] %v302
                  %v304 = vld [vmem:[%s252 + $0x190] sm:$0xff]
                  %305 = vst [vmem:[%s253 + $0xc8] sm:$0xff] %v304
                  %v306 = vld [vmem:[%s252 + $0x1a0] sm:$0xff]
                  %307 = vst [vmem:[%s253 + $0xd0] sm:$0xff] %v306
                  %v308 = vld [vmem:[%s252 + $0x1b0] sm:$0xff]
                  %309 = vst [vmem:[%s253 + $0xd8] sm:$0xff] %v308
                  %v310 = vld [vmem:[%s252 + $0x1c0] sm:$0xff]
                  %311 = vst [vmem:[%s253 + $0xe0] sm:$0xff] %v310
                  %v312 = vld [vmem:[%s252 + $0x1d0] sm:$0xff]
                  %313 = vst [vmem:[%s253 + $0xe8] sm:$0xff] %v312
                  %v314 = vld [vmem:[%s252 + $0x1e0] sm:$0xff]
                  %315 = vst [vmem:[%s253 + $0xf0] sm:$0xff] %v314
                  %v316 = vld [vmem:[%s252 + $0x1f0] sm:$0xff]
                  %317 = vst [vmem:[%s253 + $0xf8] sm:$0xff] %v316
                $region52: #{_lambda_.29} parent=46 // loop_footer
                  %s251 = sadd.s32 1, %s247
                $region53: #{_lambda_.29} parent=46 // loop_footer_branch
                  %246 = sbr.rel target = $region49
                $region54: #{_lambda_.29} parent=46 // loop_exit
                  _
              $region47: #{_lambda_.29} parent=31 // pred_fallthru
                _
              // Predicated region
              $region55: #{_lambda_.29} parent=31 // pred_check
                _
              $region56: #{_lambda_.29} parent=31 // pred_check_branch
                %319 = sbr.rel target = $region58
              $region57: #{_lambda_.29} parent=31 // pred_region
                _
              $region58: #{_lambda_.29} parent=31 // pred_fallthru
                _
            $region32: #{_lambda_.29} parent=27 // pred_fallthru
              _
            // Predicated region
            $region33: #{_lambda_.29} parent=27 // pred_check
              _
            $region34: #{_lambda_.29} parent=27 // pred_check_branch
              %169 = sbr.rel target = $region36
            $region35: #{_lambda_.29} parent=27 // pred_region
              %s171 = ssub.s32 256, 1
              loop: start=0, step=1, limit=1
              $region37: #{_lambda_.29} parent=35 // loop_pre_header
                _
              $region38: #{_lambda_.29} parent=35 // loop_header
                %s173 = sphi 0, %s177
                %p174 = scmp.ge.s32.totalorder %s173, 1
                %s178 = sphi %s163, %s163
                %s179 = sphi %s160, %s160
              $region39: #{_lambda_.29} parent=35 // loop_header_branch
                %176 = sbr.rel (%p174) target = $region43
              $region40: #{_lambda_.29} parent=35 // loop_body
                %v180 = vld [vmem:[%s178] sm:%s171]
                %181 = vst [vmem:[%s179] sm:%s171] %v180
                %v182 = vld [vmem:[%s178 + $0x10] sm:%s171]
                %183 = vst [vmem:[%s179 + $0x8] sm:%s171] %v182
                %v184 = vld [vmem:[%s178 + $0x20] sm:%s171]
                %185 = vst [vmem:[%s179 + $0x10] sm:%s171] %v184
                %v186 = vld [vmem:[%s178 + $0x30] sm:%s171]
                %187 = vst [vmem:[%s179 + $0x18] sm:%s171] %v186
                %v188 = vld [vmem:[%s178 + $0x40] sm:%s171]
                %189 = vst [vmem:[%s179 + $0x20] sm:%s171] %v188
                %v190 = vld [vmem:[%s178 + $0x50] sm:%s171]
                %191 = vst [vmem:[%s179 + $0x28] sm:%s171] %v190
                %v192 = vld [vmem:[%s178 + $0x60] sm:%s171]
                %193 = vst [vmem:[%s179 + $0x30] sm:%s171] %v192
                %v194 = vld [vmem:[%s178 + $0x70] sm:%s171]
                %195 = vst [vmem:[%s179 + $0x38] sm:%s171] %v194
                %v196 = vld [vmem:[%s178 + $0x80] sm:%s171]
                %197 = vst [vmem:[%s179 + $0x40] sm:%s171] %v196
                %v198 = vld [vmem:[%s178 + $0x90] sm:%s171]
                %199 = vst [vmem:[%s179 + $0x48] sm:%s171] %v198
                %v200 = vld [vmem:[%s178 + $0xa0] sm:%s171]
                %201 = vst [vmem:[%s179 + $0x50] sm:%s171] %v200
                %v202 = vld [vmem:[%s178 + $0xb0] sm:%s171]
                %203 = vst [vmem:[%s179 + $0x58] sm:%s171] %v202
                %v204 = vld [vmem:[%s178 + $0xc0] sm:%s171]
                %205 = vst [vmem:[%s179 + $0x60] sm:%s171] %v204
                %v206 = vld [vmem:[%s178 + $0xd0] sm:%s171]
                %207 = vst [vmem:[%s179 + $0x68] sm:%s171] %v206
                %v208 = vld [vmem:[%s178 + $0xe0] sm:%s171]
                %209 = vst [vmem:[%s179 + $0x70] sm:%s171] %v208
                %v210 = vld [vmem:[%s178 + $0xf0] sm:%s171]
                %211 = vst [vmem:[%s179 + $0x78] sm:%s171] %v210
                %v212 = vld [vmem:[%s178 + $0x100] sm:%s171]
                %213 = vst [vmem:[%s179 + $0x80] sm:%s171] %v212
                %v214 = vld [vmem:[%s178 + $0x110] sm:%s171]
                %215 = vst [vmem:[%s179 + $0x88] sm:%s171] %v214
                %v216 = vld [vmem:[%s178 + $0x120] sm:%s171]
                %217 = vst [vmem:[%s179 + $0x90] sm:%s171] %v216
                %v218 = vld [vmem:[%s178 + $0x130] sm:%s171]
                %219 = vst [vmem:[%s179 + $0x98] sm:%s171] %v218
                %v220 = vld [vmem:[%s178 + $0x140] sm:%s171]
                %221 = vst [vmem:[%s179 + $0xa0] sm:%s171] %v220
                %v222 = vld [vmem:[%s178 + $0x150] sm:%s171]
                %223 = vst [vmem:[%s179 + $0xa8] sm:%s171] %v222
                %v224 = vld [vmem:[%s178 + $0x160] sm:%s171]
                %225 = vst [vmem:[%s179 + $0xb0] sm:%s171] %v224
                %v226 = vld [vmem:[%s178 + $0x170] sm:%s171]
                %227 = vst [vmem:[%s179 + $0xb8] sm:%s171] %v226
                %v228 = vld [vmem:[%s178 + $0x180] sm:%s171]
                %229 = vst [vmem:[%s179 + $0xc0] sm:%s171] %v228
                %v230 = vld [vmem:[%s178 + $0x190] sm:%s171]
                %231 = vst [vmem:[%s179 + $0xc8] sm:%s171] %v230
                %v232 = vld [vmem:[%s178 + $0x1a0] sm:%s171]
                %233 = vst [vmem:[%s179 + $0xd0] sm:%s171] %v232
                %v234 = vld [vmem:[%s178 + $0x1b0] sm:%s171]
                %235 = vst [vmem:[%s179 + $0xd8] sm:%s171] %v234
                %v236 = vld [vmem:[%s178 + $0x1c0] sm:%s171]
                %237 = vst [vmem:[%s179 + $0xe0] sm:%s171] %v236
                %v238 = vld [vmem:[%s178 + $0x1d0] sm:%s171]
                %239 = vst [vmem:[%s179 + $0xe8] sm:%s171] %v238
                %v240 = vld [vmem:[%s178 + $0x1e0] sm:%s171]
                %241 = vst [vmem:[%s179 + $0xf0] sm:%s171] %v240
                %v242 = vld [vmem:[%s178 + $0x1f0] sm:%s171]
                %243 = vst [vmem:[%s179 + $0xf8] sm:%s171] %v242
              $region41: #{_lambda_.29} parent=35 // loop_footer
                %s177 = sadd.s32 1, %s173
              $region42: #{_lambda_.29} parent=35 // loop_footer_branch
                %172 = sbr.rel target = $region38
              $region43: #{_lambda_.29} parent=35 // loop_exit
                _
            $region36: #{_lambda_.29} parent=27 // pred_fallthru
              _
          $region28: #{_lambda_.29} parent=23 // pred_fallthru
            _
          %320 = vnop
        $region24: #{_lambda_.29} parent=19 // pred_fallthru
          _
        // Predicated region
        $region59: #{_lambda_.29} parent=19 // pred_check
          %p321 = pneg %p93
        $region60: #{_lambda_.29} parent=19 // pred_check_branch
          %323 = sbr.rel (%p321) target = $region62
        $region61: #{_lambda_.29} parent=19 // pred_region
          %s324 = smul.u32 2, %s17
          %p325 = scmp.lt.s32.totalorder %s324, 3
          %s326 = scalar_select %p325, %s324, 3
          %s327 = scalar_lea.vmem %s2, %s326
          %s328 = smul.u32 2, %s17
        $region62: #{_lambda_.29} parent=19 // pred_fallthru
          _
      $region20: #{_lambda_.29} parent=5 // pred_fallthru
        _
      %p329 = scmp.le.s32.totalorder 1, %s9
      %p330 = scmp.lt.s32.totalorder %s9, 3
      %p331 = pnand %p329, %p330
      %p332 = pneg %p331
      // Predicated region
      $region63: #{_lambda_.29} parent=5 // pred_check
        _
      $region64: #{_lambda_.29} parent=5 // pred_check_branch
        %334 = sbr.rel (%p331) target = $region66
      $region65: #{_lambda_.29} parent=5 // pred_region
        %s335 = ssub.s32 %s9, 1
        %s336 = sand.u32 %s60, 1
        %s337 = sand.u32 %s60, 1
        %s338 = smul.addr %s337, 256
        %s339 = scalar_lea.vmem [#allocation2], %s338
        // Predicated region
        $region67: #{_lambda_.29} parent=65 // pred_check
          %p340 = pneg %p73
        $region68: #{_lambda_.29} parent=65 // pred_check_branch
          %342 = sbr.rel (%p340) target = $region70
        $region69: #{_lambda_.29} parent=65 // pred_region
          _
        $region70: #{_lambda_.29} parent=65 // pred_fallthru
          _
        %p343 = scmp.lt.s32.totalorder %s18, 0
        %s344 = scalar_select %p343, %s18, 0
        %s345 = smul.addr %s344, 2
        %s346 = smul.addr %s345, 4
        %s347 = scalar_lea.vmem %s0, %s346
        %p348 = pneg %p47
        %p349 = pneg %p44
        %s350 = sand.u32 %s60, 1
        %s351 = sand.u32 %s60, 1
        %s352 = smul.addr %s351, 256
        %s353 = scalar_lea.vmem [#allocation2], %s352
        %p354 = pneg %p73
        %p355 = pneg %p70
        %s356 = smul.u32 2, %s19
        %p357 = scmp.lt.s32.totalorder %s356, 3
        %s358 = scalar_select %p357, %s356, 3
        %s359 = scalar_lea.vmem %s2, %s358
        %p360 = pneg %p99
        %p361 = pneg %p96
        %p362 = pneg %p127
        %p363 = pneg %p124
        %s364 = smul.u32 2, %s19
        %p365 = scmp.lt.s32.totalorder %s18, 0
        %s366 = scalar_select %p365, %s18, 0
        %p367 = scmp.lt.s32.totalorder %s364, 3
        %s368 = scalar_select %p367, %s364, 3
        %s369 = smul.addr %s366, 4
        %s370 = sadd.s32 %s368, %s369
        %s371 = smul.addr %s370, 4
        %s372 = scalar_lea.vmem %s3, %s371
        %p373 = scmp.lt.s32.totalorder %s18, 0
        %s374 = scalar_select %p373, %s18, 0
        %s375 = smul.addr %s374, 2
        %s376 = smul.addr %s375, 4
        %s377 = scalar_lea.vmem %s0, %s376
        %s378 = smul.u32 2, %s19
        %s379 = smul.u32 2, %s19
        %p380 = scmp.lt.s32.totalorder %s379, 3
        %s381 = scalar_select %p380, %s379, 3
        %s382 = scalar_lea.vmem %s2, %s381
        %s383 = smul.u32 2, %s19
        %s384 = smul.u32 2, %s19
        %p385 = scmp.lt.s32.totalorder %s18, 0
        %s386 = scalar_select %p385, %s18, 0
        %p387 = scmp.lt.s32.totalorder %s384, 3
        %s388 = scalar_select %p387, %s384, 3
        %s389 = smul.addr %s386, 4
        %s390 = sadd.s32 %s388, %s389
        %s391 = smul.addr %s390, 4
        %s392 = scalar_lea.vmem %s3, %s391
        %s393 = smul.u32 2, %s19
        %v394 = vld [vmem:[%s377] sm:$0xff]
        %v395 = vld [vmem:[%s339] sm:$0xff]
        %v396 = vld [vmem:[%s339 + $0x8] sm:$0xff]
        %v397 = vld [vmem:[%s339 + $0x10] sm:$0xff]
        %v398 = vld [vmem:[%s339 + $0x18] sm:$0xff]
        %v399 = vld [vmem:[%s339 + $0x20] sm:$0xff]
        %v400 = vld [vmem:[%s339 + $0x28] sm:$0xff]
        %v401 = vld [vmem:[%s339 + $0x30] sm:$0xff]
        %v402 = vld [vmem:[%s339 + $0x38] sm:$0xff]
        %v403 = vld [vmem:[%s339 + $0x40] sm:$0xff]
        %v404 = vld [vmem:[%s339 + $0x48] sm:$0xff]
        %v405 = vld [vmem:[%s339 + $0x50] sm:$0xff]
        %v406 = vld [vmem:[%s339 + $0x58] sm:$0xff]
        %v407 = vld [vmem:[%s339 + $0x60] sm:$0xff]
        %v408 = vld [vmem:[%s339 + $0x68] sm:$0xff]
        %v409 = vld [vmem:[%s339 + $0x70] sm:$0xff]
        %v410 = vld [vmem:[%s339 + $0x78] sm:$0xff]
        %v411 = vld [vmem:[%s339 + $0x80] sm:$0xff]
        %v412 = vld [vmem:[%s339 + $0x88] sm:$0xff]
        %v413 = vld [vmem:[%s339 + $0x90] sm:$0xff]
        %v414 = vld [vmem:[%s339 + $0x98] sm:$0xff]
        %v415 = vld [vmem:[%s339 + $0xa0] sm:$0xff]
        %v416 = vld [vmem:[%s339 + $0xa8] sm:$0xff]
        %v417 = vld [vmem:[%s339 + $0xb0] sm:$0xff]
        %v418 = vld [vmem:[%s339 + $0xb8] sm:$0xff]
        %v419 = vld [vmem:[%s339 + $0xc0] sm:$0xff]
        %v420 = vld [vmem:[%s339 + $0xc8] sm:$0xff]
        %v421 = vld [vmem:[%s339 + $0xd0] sm:$0xff]
        %v422 = vld [vmem:[%s339 + $0xd8] sm:$0xff]
        %v423 = vld [vmem:[%s339 + $0xe0] sm:$0xff]
        %v424 = vld [vmem:[%s339 + $0xe8] sm:$0xff]
        %v425 = vld [vmem:[%s339 + $0xf0] sm:$0xff]
        %v426 = vld [vmem:[%s339 + $0xf8] sm:$0xff]
        %v427 = vld [vmem:[%s382] sm:$0x3]
        %v429 = vperm.slane %v427, 0
        %v430 = vperm.slane %v427, 1
        %v434 = vunpack.c.l.b16 %v394
        %v435 = vunpack.c.h.b16 %v394
        %v436 = vpack.c.b16 %v434, %v434
        %v437 = vpack.c.b16 %v435, %v435
        %v472 = vunpack.c.l.b16 %v395
        %v473 = vunpack.c.h.b16 %v395
        %v474 = vunpack.c.l.b16 %v396
        %v475 = vunpack.c.h.b16 %v396
        %v476 = vunpack.c.l.b16 %v397
        %v477 = vunpack.c.h.b16 %v397
        %v478 = vunpack.c.l.b16 %v398
        %v479 = vunpack.c.h.b16 %v398
        %v480 = vunpack.c.l.b16 %v399
        %v481 = vunpack.c.h.b16 %v399
        %v482 = vunpack.c.l.b16 %v400
        %v483 = vunpack.c.h.b16 %v400
        %v484 = vunpack.c.l.b16 %v401
        %v485 = vunpack.c.h.b16 %v401
        %v486 = vunpack.c.l.b16 %v402
        %v487 = vunpack.c.h.b16 %v402
        %v488 = vunpack.c.l.b16 %v403
        %v489 = vunpack.c.h.b16 %v403
        %v490 = vunpack.c.l.b16 %v404
        %v491 = vunpack.c.h.b16 %v404
        %v492 = vunpack.c.l.b16 %v405
        %v493 = vunpack.c.h.b16 %v405
        %v494 = vunpack.c.l.b16 %v406
        %v495 = vunpack.c.h.b16 %v406
        %v496 = vunpack.c.l.b16 %v407
        %v497 = vunpack.c.h.b16 %v407
        %v498 = vunpack.c.l.b16 %v408
        %v499 = vunpack.c.h.b16 %v408
        %v500 = vunpack.c.l.b16 %v409
        %v501 = vunpack.c.h.b16 %v409
        %v502 = vunpack.c.l.b16 %v410
        %v503 = vunpack.c.h.b16 %v410
        %v504 = vunpack.c.l.b16 %v411
        %v505 = vunpack.c.h.b16 %v411
        %v506 = vunpack.c.l.b16 %v412
        %v507 = vunpack.c.h.b16 %v412
        %v508 = vunpack.c.l.b16 %v413
        %v509 = vunpack.c.h.b16 %v413
        %v510 = vunpack.c.l.b16 %v414
        %v511 = vunpack.c.h.b16 %v414
        %v512 = vunpack.c.l.b16 %v415
        %v513 = vunpack.c.h.b16 %v415
        %v514 = vunpack.c.l.b16 %v416
        %v515 = vunpack.c.h.b16 %v416
        %v516 = vunpack.c.l.b16 %v417
        %v517 = vunpack.c.h.b16 %v417
        %v518 = vunpack.c.l.b16 %v418
        %v519 = vunpack.c.h.b16 %v418
        %v520 = vunpack.c.l.b16 %v419
        %v521 = vunpack.c.h.b16 %v419
        %v522 = vunpack.c.l.b16 %v420
        %v523 = vunpack.c.h.b16 %v420
        %v524 = vunpack.c.l.b16 %v421
        %v525 = vunpack.c.h.b16 %v421
        %v526 = vunpack.c.l.b16 %v422
        %v527 = vunpack.c.h.b16 %v422
        %v528 = vunpack.c.l.b16 %v423
        %v529 = vunpack.c.h.b16 %v423
        %v530 = vunpack.c.l.b16 %v424
        %v531 = vunpack.c.h.b16 %v424
        %v532 = vunpack.c.l.b16 %v425
        %v533 = vunpack.c.h.b16 %v425
        %v534 = vunpack.c.l.b16 %v426
        %v535 = vunpack.c.h.b16 %v426
        %v536 = vpack.c.b16 %v474, %v472
        %v537 = vpack.c.b16 %v475, %v473
        %v538 = vpack.c.b16 %v478, %v476
        %v539 = vpack.c.b16 %v479, %v477
        %v540 = vpack.c.b16 %v482, %v480
        %v541 = vpack.c.b16 %v483, %v481
        %v542 = vpack.c.b16 %v486, %v484
        %v543 = vpack.c.b16 %v487, %v485
        %v544 = vpack.c.b16 %v490, %v488
        %v545 = vpack.c.b16 %v491, %v489
        %v546 = vpack.c.b16 %v494, %v492
        %v547 = vpack.c.b16 %v495, %v493
        %v548 = vpack.c.b16 %v498, %v496
        %v549 = vpack.c.b16 %v499, %v497
        %v550 = vpack.c.b16 %v502, %v500
        %v551 = vpack.c.b16 %v503, %v501
        %v552 = vpack.c.b16 %v506, %v504
        %v553 = vpack.c.b16 %v507, %v505
        %v554 = vpack.c.b16 %v510, %v508
        %v555 = vpack.c.b16 %v511, %v509
        %v556 = vpack.c.b16 %v514, %v512
        %v557 = vpack.c.b16 %v515, %v513
        %v558 = vpack.c.b16 %v518, %v516
        %v559 = vpack.c.b16 %v519, %v517
        %v560 = vpack.c.b16 %v522, %v520
        %v561 = vpack.c.b16 %v523, %v521
        %v562 = vpack.c.b16 %v526, %v524
        %v563 = vpack.c.b16 %v527, %v525
        %v564 = vpack.c.b16 %v530, %v528
        %v565 = vpack.c.b16 %v531, %v529
        %v566 = vpack.c.b16 %v534, %v532
        %v567 = vpack.c.b16 %v535, %v533
        %600 = vmatpush.bf16.msra.mxu0 %v550
        %601 = vmatpush.bf16.msra.mxu0 %v548
        %602 = vmatpush.bf16.msra.mxu0 %v546
        %603 = vmatpush.bf16.msra.mxu0 %v544
        %604 = vmatpush.bf16.msra.mxu0 %v542
        %605 = vmatpush.bf16.msra.mxu0 %v540
        %606 = vmatpush.bf16.msra.mxu0 %v538
        %607 = vmatpush.bf16.msra.mxu0 %v536
        %608 = vmatmul.bf16.gmra.mxu0 %v436
        %v609 = vpop.f32.mrf.mxu0
        %v610 = vadd.f32 %v429, %v609
        %v611 = vpop.f32.mrf.mxu0
        %612 = vdwg.mxu0
        %613 = vmatpush.bf16.msra.mxu0 %v566
        %614 = vmatpush.bf16.msra.mxu0 %v564
        %615 = vmatpush.bf16.msra.mxu0 %v562
        %616 = vmatpush.bf16.msra.mxu0 %v560
        %617 = vmatpush.bf16.msra.mxu0 %v558
        %618 = vmatpush.bf16.msra.mxu0 %v556
        %619 = vmatpush.bf16.msra.mxu0 %v554
        %620 = vmatpush.bf16.msra.mxu0 %v552
        %621 = vmatmul.bf16.gmra.mxu0 %v437
        %v622 = vpop.f32.mrf.mxu0
        %v623 = vadd.f32 %v610, %v622
        %v624 = vpop.f32.mrf.mxu0
        %625 = vdwg.mxu0
        %626 = vmatpush.bf16.msra.mxu0 %v551
        %627 = vmatpush.bf16.msra.mxu0 %v549
        %628 = vmatpush.bf16.msra.mxu0 %v547
        %629 = vmatpush.bf16.msra.mxu0 %v545
        %630 = vmatpush.bf16.msra.mxu0 %v543
        %631 = vmatpush.bf16.msra.mxu0 %v541
        %632 = vmatpush.bf16.msra.mxu0 %v539
        %633 = vmatpush.bf16.msra.mxu0 %v537
        %634 = vmatmul.bf16.gmra.mxu0 %v436
        %v635 = vpop.f32.mrf.mxu0
        %v636 = vadd.f32 %v430, %v635
        %v637 = vpop.f32.mrf.mxu0
        %638 = vdwg.mxu0
        %639 = vmatpush.bf16.msra.mxu0 %v567
        %640 = vmatpush.bf16.msra.mxu0 %v565
        %641 = vmatpush.bf16.msra.mxu0 %v563
        %642 = vmatpush.bf16.msra.mxu0 %v561
        %643 = vmatpush.bf16.msra.mxu0 %v559
        %644 = vmatpush.bf16.msra.mxu0 %v557
        %645 = vmatpush.bf16.msra.mxu0 %v555
        %646 = vmatpush.bf16.msra.mxu0 %v553
        %647 = vmatmul.bf16.gmra.mxu0 %v437
        %v648 = vpop.f32.mrf.mxu0
        %v649 = vadd.f32 %v636, %v648
        %v650 = vpop.f32.mrf.mxu0
        %651 = vdwg.mxu0
        %v652 = vpack.c.bf16 %v649, %v623
        %653 = vst [vmem:[%s392] sm:$0xff] %v652
        %s654 = smul.u32 2, %s19
        %p655 = scmp.lt.s32.totalorder %s18, 0
        %s656 = scalar_select %p655, %s18, 0
        %p657 = scmp.lt.s32.totalorder %s654, 3
        %s658 = scalar_select %p657, %s654, 3
        %s659 = smul.addr %s656, 4
        %s660 = sadd.s32 %s658, %s659
        %s661 = smul.addr %s660, 4
        %s662 = scalar_lea.vmem %s3, %s661
        // Predicated region
        $region71: #{_lambda_.29} parent=65 // pred_check
          %p663 = pneg %p124
        $region72: #{_lambda_.29} parent=65 // pred_check_branch
          %665 = sbr.rel (%p663) target = $region74
        $region73: #{_lambda_.29} parent=65 // pred_region
          %s666 = smul.u32 2, %s19
        $region74: #{_lambda_.29} parent=65 // pred_fallthru
          _
      $region66: #{_lambda_.29} parent=5 // pred_fallthru
        _
      %p667 = scmp.le.s32.totalorder 2, %s9
      // Predicated region
      $region75: #{_lambda_.29} parent=5 // pred_check
        %p668 = pneg %p667
      $region76: #{_lambda_.29} parent=5 // pred_check_branch
        %670 = sbr.rel (%p668) target = $region78
      $region77: #{_lambda_.29} parent=5 // pred_region
        %s671 = ssub.s32 %s9, 2
        // Predicated region
        $region79: #{_lambda_.29} parent=77 // pred_check
          %p672 = pneg %p130
        $region80: #{_lambda_.29} parent=77 // pred_check_branch
          %674 = sbr.rel (%p672) target = $region82
        $region81: #{_lambda_.29} parent=77 // pred_region
          %s675 = smul.u32 2, %s21
          %p676 = scmp.lt.s32.totalorder %s20, 0
          %s677 = scalar_select %p676, %s20, 0
          %p678 = scmp.lt.s32.totalorder %s675, 3
          %s679 = scalar_select %p678, %s675, 3
          %s680 = smul.addr %s677, 4
          %s681 = sadd.s32 %s679, %s680
          %s682 = smul.addr %s681, 4
          %s683 = scalar_lea.vmem %s3, %s682
        $region82: #{_lambda_.29} parent=77 // pred_fallthru
          _
      $region78: #{_lambda_.29} parent=5 // pred_fallthru
        _
    $region6: #{_lambda_.29} parent=1 // loop_footer
      %s13 = sadd.s32 1, %s9
    $region7: #{_lambda_.29} parent=1 // loop_footer_branch
      %8 = sbr.rel target = $region3
    $region8: #{_lambda_.29} parent=1 // loop_exit
      _

// kernel: _lambda_.31
$region0: #{_lambda_.31}
  #allocation0 [shape = 'u32[]', space=smem, size = 0x4, offset = 0x4, fixed_abs, tag = 'smem constant byte address 0x4 - core index']
  #allocation1 [shape = 'u32[72,128]{1,0:T(1,128)}', space=vmem, size = 0x9000, scoped, tag = 'internal scratch']
  %s0 = inlined_call_operand.vmem [shape: bf16[8,1152], index: 0, kind: input, shape index: {}]
  %s1 = inlined_call_operand.vmem [shape: bf16[1152,128], index: 1, kind: input, shape index: {}]
  %s2 = inlined_call_operand.vmem [shape: f32[1,128], index: 2, kind: input, shape index: {}]
  %s3 = inlined_call_operand.vmem [shape: bf16[8,128], index: 3, kind: output, shape index: {}]
  %s4 = sld [smem:[#allocation0]]
  $region22: #{_lambda_.31} parent=0
    _
  %s6 = ssub.s32 1, %s4
  %s7 = scalar_select 0, %s6, %s4
  // Predicated region
  $region2: #{_lambda_.31} parent=0 // pred_check
    _
  $region3: #{_lambda_.31} parent=0 // pred_check_branch
    %9 = sbr.rel (0) target = $region5
  $region4: #{_lambda_.31} parent=0 // pred_region
    _
  $region5: #{_lambda_.31} parent=0 // pred_fallthru
    _
  // Predicated region
  $region6: #{_lambda_.31} parent=0 // pred_check
    _
  $region7: #{_lambda_.31} parent=0 // pred_check_branch
    %11 = sbr.rel (0) target = $region9
  $region8: #{_lambda_.31} parent=0 // pred_region
    _
  $region9: #{_lambda_.31} parent=0 // pred_fallthru
    _
  // Predicated region
  $region10: #{_lambda_.31} parent=0 // pred_check
    _
  $region11: #{_lambda_.31} parent=0 // pred_check_branch
    %13 = sbr.rel (0) target = $region13
  $region12: #{_lambda_.31} parent=0 // pred_region
    _
  $region13: #{_lambda_.31} parent=0 // pred_fallthru
    _
  %v14 = vld [vmem:[%s0] sm:$0xff]
  %v15 = vld [vmem:[%s0 + $0x8] sm:$0xff]
  %v16 = vld [vmem:[%s0 + $0x10] sm:$0xff]
  %v17 = vld [vmem:[%s0 + $0x18] sm:$0xff]
  %v18 = vld [vmem:[%s0 + $0x20] sm:$0xf]
  %v19 = vld [vmem:[%s1] sm:$0xf]
  %v20 = vld [vmem:[%s1 + $0x4] sm:$0xf]
  %v21 = vld [vmem:[%s1 + $0x8] sm:$0xf]
  %v22 = vld [vmem:[%s1 + $0xc] sm:$0xf]
  %v23 = vld [vmem:[%s1 + $0x10] sm:$0xf]
  %v24 = vld [vmem:[%s1 + $0x14] sm:$0xf]
  %v25 = vld [vmem:[%s1 + $0x18] sm:$0xf]
  %v26 = vld [vmem:[%s1 + $0x1c] sm:$0xf]
  %v27 = vld [vmem:[%s1 + $0x20] sm:$0xf]
  %v28 = vld [vmem:[%s1 + $0x24] sm:$0xf]
  %v29 = vld [vmem:[%s1 + $0x28] sm:$0xf]
  %v30 = vld [vmem:[%s1 + $0x2c] sm:$0xf]
  %v31 = vld [vmem:[%s1 + $0x30] sm:$0xf]
  %v32 = vld [vmem:[%s1 + $0x34] sm:$0xf]
  %v33 = vld [vmem:[%s1 + $0x38] sm:$0xf]
  %v34 = vld [vmem:[%s1 + $0x3c] sm:$0xf]
  %v35 = vld [vmem:[%s1 + $0x40] sm:$0xf]
  %v36 = vld [vmem:[%s1 + $0x44] sm:$0xf]
  %v37 = vld [vmem:[%s1 + $0x48] sm:$0xf]
  %v38 = vld [vmem:[%s1 + $0x4c] sm:$0xf]
  %v39 = vld [vmem:[%s1 + $0x50] sm:$0xf]
  %v40 = vld [vmem:[%s1 + $0x54] sm:$0xf]
  %v41 = vld [vmem:[%s1 + $0x58] sm:$0xf]
  %v42 = vld [vmem:[%s1 + $0x5c] sm:$0xf]
  %v43 = vld [vmem:[%s1 + $0x60] sm:$0xf]
  %v44 = vld [vmem:[%s1 + $0x64] sm:$0xf]
  %v45 = vld [vmem:[%s1 + $0x68] sm:$0xf]
  %v46 = vld [vmem:[%s1 + $0x6c] sm:$0xf]
  %v47 = vld [vmem:[%s1 + $0x70] sm:$0xf]
  %v48 = vld [vmem:[%s1 + $0x74] sm:$0xf]
  %v49 = vld [vmem:[%s1 + $0x78] sm:$0xf]
  %v50 = vld [vmem:[%s1 + $0x7c] sm:$0xf]
  %v51 = vld [vmem:[%s1 + $0x80] sm:$0xf]
  %v52 = vld [vmem:[%s1 + $0x84] sm:$0xf]
  %v53 = vld [vmem:[%s1 + $0x88] sm:$0xf]
  %v54 = vld [vmem:[%s1 + $0x8c] sm:$0xf]
  %v55 = vld [vmem:[%s1 + $0x90] sm:$0xf]
  %v56 = vld [vmem:[%s1 + $0x94] sm:$0xf]
  %v57 = vld [vmem:[%s1 + $0x98] sm:$0xf]
  %v58 = vld [vmem:[%s1 + $0x9c] sm:$0xf]
  %v59 = vld [vmem:[%s1 + $0xa0] sm:$0xf]
  %v60 = vld [vmem:[%s1 + $0xa4] sm:$0xf]
  %v61 = vld [vmem:[%s1 + $0xa8] sm:$0xf]
  %v62 = vld [vmem:[%s1 + $0xac] sm:$0xf]
  %v63 = vld [vmem:[%s1 + $0xb0] sm:$0xf]
  %v64 = vld [vmem:[%s1 + $0xb4] sm:$0xf]
  %v65 = vld [vmem:[%s1 + $0xb8] sm:$0xf]
  %v66 = vld [vmem:[%s1 + $0xbc] sm:$0xf]
  %v67 = vld [vmem:[%s1 + $0xc0] sm:$0xf]
  %v68 = vld [vmem:[%s1 + $0xc4] sm:$0xf]
  %v69 = vld [vmem:[%s1 + $0xc8] sm:$0xf]
  %v70 = vld [vmem:[%s1 + $0xcc] sm:$0xf]
  %v71 = vld [vmem:[%s1 + $0xd0] sm:$0xf]
  %v72 = vld [vmem:[%s1 + $0xd4] sm:$0xf]
  %v73 = vld [vmem:[%s1 + $0xd8] sm:$0xf]
  %v74 = vld [vmem:[%s1 + $0xdc] sm:$0xf]
  %v75 = vld [vmem:[%s1 + $0xe0] sm:$0xf]
  %v76 = vld [vmem:[%s1 + $0xe4] sm:$0xf]
  %v77 = vld [vmem:[%s1 + $0xe8] sm:$0xf]
  %v78 = vld [vmem:[%s1 + $0xec] sm:$0xf]
  %v79 = vld [vmem:[%s1 + $0xf0] sm:$0xf]
  %v80 = vld [vmem:[%s1 + $0xf4] sm:$0xf]
  %v81 = vld [vmem:[%s1 + $0xf8] sm:$0xf]
  %v82 = vld [vmem:[%s1 + $0xfc] sm:$0xf]
  %v83 = vld [vmem:[%s1 + $0x100] sm:$0xf]
  %v84 = vld [vmem:[%s1 + $0x104] sm:$0xf]
  %v85 = vld [vmem:[%s1 + $0x108] sm:$0xf]
  %v86 = vld [vmem:[%s1 + $0x10c] sm:$0xf]
  %v87 = vld [vmem:[%s1 + $0x110] sm:$0xf]
  %v88 = vld [vmem:[%s1 + $0x114] sm:$0xf]
  %v89 = vld [vmem:[%s1 + $0x118] sm:$0xf]
  %v90 = vld [vmem:[%s1 + $0x11c] sm:$0xf]
  %v91 = vld [vmem:[%s1 + $0x120] sm:$0xf]
  %v92 = vld [vmem:[%s1 + $0x124] sm:$0xf]
  %v93 = vld [vmem:[%s1 + $0x128] sm:$0xf]
  %v94 = vld [vmem:[%s1 + $0x12c] sm:$0xf]
  %v95 = vld [vmem:[%s1 + $0x130] sm:$0xf]
  %v96 = vld [vmem:[%s1 + $0x134] sm:$0xf]
  %v97 = vld [vmem:[%s1 + $0x138] sm:$0xf]
  %v98 = vld [vmem:[%s1 + $0x13c] sm:$0xf]
  %v99 = vld [vmem:[%s1 + $0x140] sm:$0xf]
  %v100 = vld [vmem:[%s1 + $0x144] sm:$0xf]
  %v101 = vld [vmem:[%s1 + $0x148] sm:$0xf]
  %v102 = vld [vmem:[%s1 + $0x14c] sm:$0xf]
  %v103 = vld [vmem:[%s1 + $0x150] sm:$0xf]
  %v104 = vld [vmem:[%s1 + $0x154] sm:$0xf]
  %v105 = vld [vmem:[%s1 + $0x158] sm:$0xf]
  %v106 = vld [vmem:[%s1 + $0x15c] sm:$0xf]
  %v107 = vld [vmem:[%s1 + $0x160] sm:$0xf]
  %v108 = vld [vmem:[%s1 + $0x164] sm:$0xf]
  %v109 = vld [vmem:[%s1 + $0x168] sm:$0xf]
  %v110 = vld [vmem:[%s1 + $0x16c] sm:$0xf]
  %v111 = vld [vmem:[%s1 + $0x170] sm:$0xf]
  %v112 = vld [vmem:[%s1 + $0x174] sm:$0xf]
  %v113 = vld [vmem:[%s1 + $0x178] sm:$0xf]
  %v114 = vld [vmem:[%s1 + $0x17c] sm:$0xf]
  %v115 = vld [vmem:[%s1 + $0x180] sm:$0xf]
  %v116 = vld [vmem:[%s1 + $0x184] sm:$0xf]
  %v117 = vld [vmem:[%s1 + $0x188] sm:$0xf]
  %v118 = vld [vmem:[%s1 + $0x18c] sm:$0xf]
  %v119 = vld [vmem:[%s1 + $0x190] sm:$0xf]
  %v120 = vld [vmem:[%s1 + $0x194] sm:$0xf]
  %v121 = vld [vmem:[%s1 + $0x198] sm:$0xf]
  %v122 = vld [vmem:[%s1 + $0x19c] sm:$0xf]
  %v123 = vld [vmem:[%s1 + $0x1a0] sm:$0xf]
  %v124 = vld [vmem:[%s1 + $0x1a4] sm:$0xf]
  %v125 = vld [vmem:[%s1 + $0x1a8] sm:$0xf]
  %v126 = vld [vmem:[%s1 + $0x1ac] sm:$0xf]
  %v127 = vld [vmem:[%s1 + $0x1b0] sm:$0xf]
  %v128 = vld [vmem:[%s1 + $0x1b4] sm:$0xf]
  %v129 = vld [vmem:[%s1 + $0x1b8] sm:$0xf]
  %v130 = vld [vmem:[%s1 + $0x1bc] sm:$0xf]
  %v131 = vld [vmem:[%s1 + $0x1c0] sm:$0xf]
  %v132 = vld [vmem:[%s1 + $0x1c4] sm:$0xf]
  %v133 = vld [vmem:[%s1 + $0x1c8] sm:$0xf]
  %v134 = vld [vmem:[%s1 + $0x1cc] sm:$0xf]
  %v135 = vld [vmem:[%s1 + $0x1d0] sm:$0xf]
  %v136 = vld [vmem:[%s1 + $0x1d4] sm:$0xf]
  %v137 = vld [vmem:[%s1 + $0x1d8] sm:$0xf]
  %v138 = vld [vmem:[%s1 + $0x1dc] sm:$0xf]
  %v139 = vld [vmem:[%s1 + $0x1e0] sm:$0xf]
  %v140 = vld [vmem:[%s1 + $0x1e4] sm:$0xf]
  %v141 = vld [vmem:[%s1 + $0x1e8] sm:$0xf]
  %v142 = vld [vmem:[%s1 + $0x1ec] sm:$0xf]
  %v143 = vld [vmem:[%s1 + $0x1f0] sm:$0xf]
  %v144 = vld [vmem:[%s1 + $0x1f4] sm:$0xf]
  %v145 = vld [vmem:[%s1 + $0x1f8] sm:$0xf]
  %v146 = vld [vmem:[%s1 + $0x1fc] sm:$0xf]
  %v147 = vld [vmem:[%s1 + $0x200] sm:$0xf]
  %v148 = vld [vmem:[%s1 + $0x204] sm:$0xf]
  %v149 = vld [vmem:[%s1 + $0x208] sm:$0xf]
  %v150 = vld [vmem:[%s1 + $0x20c] sm:$0xf]
  %v151 = vld [vmem:[%s1 + $0x210] sm:$0xf]
  %v152 = vld [vmem:[%s1 + $0x214] sm:$0xf]
  %v153 = vld [vmem:[%s1 + $0x218] sm:$0xf]
  %v154 = vld [vmem:[%s1 + $0x21c] sm:$0xf]
  %v155 = vld [vmem:[%s1 + $0x220] sm:$0xf]
  %v156 = vld [vmem:[%s1 + $0x224] sm:$0xf]
  %v157 = vld [vmem:[%s1 + $0x228] sm:$0xf]
  %v158 = vld [vmem:[%s1 + $0x22c] sm:$0xf]
  %v159 = vld [vmem:[%s1 + $0x230] sm:$0xf]
  %v160 = vld [vmem:[%s1 + $0x234] sm:$0xf]
  %v161 = vld [vmem:[%s1 + $0x238] sm:$0xf]
  %v162 = vld [vmem:[%s1 + $0x23c] sm:$0xf]
  %v163 = vld [vmem:[%s2] sm:$0x1]
  %v165 = vperm.slane %v163, 0
  %v172 = vunpack.c.l.b16 %v14
  %v173 = vunpack.c.h.b16 %v14
  %v174 = vunpack.c.l.b16 %v15
  %v175 = vunpack.c.h.b16 %v15
  %v176 = vunpack.c.l.b16 %v16
  %v177 = vunpack.c.h.b16 %v16
  %v178 = vunpack.c.l.b16 %v17
  %v179 = vunpack.c.h.b16 %v17
  %v180 = vunpack.c.l.b16 %v18
  %v181 = vpack.c.b16 %v172, %v172
  %v182 = vpack.c.b16 %v173, %v173
  %v183 = vpack.c.b16 %v174, %v174
  %v184 = vpack.c.b16 %v175, %v175
  %v185 = vpack.c.b16 %v176, %v176
  %v186 = vpack.c.b16 %v177, %v177
  %v187 = vpack.c.b16 %v178, %v178
  %v188 = vpack.c.b16 %v179, %v179
  %v189 = vpack.c.b16 %v180, %v180
  %v343 = vunpack.c.l.b16 %v19
  %v344 = vunpack.c.l.b16 %v20
  %v345 = vunpack.c.l.b16 %v21
  %v346 = vunpack.c.l.b16 %v22
  %v347 = vunpack.c.l.b16 %v23
  %v348 = vunpack.c.l.b16 %v24
  %v349 = vunpack.c.l.b16 %v25
  %v350 = vunpack.c.l.b16 %v26
  %v351 = vunpack.c.l.b16 %v27
  %v352 = vunpack.c.l.b16 %v28
  %v353 = vunpack.c.l.b16 %v29
  %v354 = vunpack.c.l.b16 %v30
  %v355 = vunpack.c.l.b16 %v31
  %v356 = vunpack.c.l.b16 %v32
  %v357 = vunpack.c.l.b16 %v33
  %v358 = vunpack.c.l.b16 %v34
  %v359 = vunpack.c.l.b16 %v35
  %v360 = vunpack.c.l.b16 %v36
  %v361 = vunpack.c.l.b16 %v37
  %v362 = vunpack.c.l.b16 %v38
  %v363 = vunpack.c.l.b16 %v39
  %v364 = vunpack.c.l.b16 %v40
  %v365 = vunpack.c.l.b16 %v41
  %v366 = vunpack.c.l.b16 %v42
  %v367 = vunpack.c.l.b16 %v43
  %v368 = vunpack.c.l.b16 %v44
  %v369 = vunpack.c.l.b16 %v45
  %v370 = vunpack.c.l.b16 %v46
  %v371 = vunpack.c.l.b16 %v47
  %v372 = vunpack.c.l.b16 %v48
  %v373 = vunpack.c.l.b16 %v49
  %v374 = vunpack.c.l.b16 %v50
  %v375 = vunpack.c.l.b16 %v51
  %v376 = vunpack.c.l.b16 %v52
  %v377 = vunpack.c.l.b16 %v53
  %v378 = vunpack.c.l.b16 %v54
  %v379 = vunpack.c.l.b16 %v55
  %v380 = vunpack.c.l.b16 %v56
  %v381 = vunpack.c.l.b16 %v57
  %v382 = vunpack.c.l.b16 %v58
  %v383 = vunpack.c.l.b16 %v59
  %v384 = vunpack.c.l.b16 %v60
  %v385 = vunpack.c.l.b16 %v61
  %v386 = vunpack.c.l.b16 %v62
  %v387 = vunpack.c.l.b16 %v63
  %v388 = vunpack.c.l.b16 %v64
  %v389 = vunpack.c.l.b16 %v65
  %v390 = vunpack.c.l.b16 %v66
  %v391 = vunpack.c.l.b16 %v67
  %v392 = vunpack.c.l.b16 %v68
  %v393 = vunpack.c.l.b16 %v69
  %v394 = vunpack.c.l.b16 %v70
  %v395 = vunpack.c.l.b16 %v71
  %v396 = vunpack.c.l.b16 %v72
  %v397 = vunpack.c.l.b16 %v73
  %v398 = vunpack.c.l.b16 %v74
  %v399 = vunpack.c.l.b16 %v75
  %v400 = vunpack.c.l.b16 %v76
  %v401 = vunpack.c.l.b16 %v77
  %v402 = vunpack.c.l.b16 %v78
  %v403 = vunpack.c.l.b16 %v79
  %v404 = vunpack.c.l.b16 %v80
  %v405 = vunpack.c.l.b16 %v81
  %v406 = vunpack.c.l.b16 %v82
  %v407 = vunpack.c.l.b16 %v83
  %v408 = vunpack.c.l.b16 %v84
  %v409 = vunpack.c.l.b16 %v85
  %v410 = vunpack.c.l.b16 %v86
  %v411 = vunpack.c.l.b16 %v87
  %v412 = vunpack.c.l.b16 %v88
  %v413 = vunpack.c.l.b16 %v89
  %v414 = vunpack.c.l.b16 %v90
  %v415 = vunpack.c.l.b16 %v91
  %v416 = vunpack.c.l.b16 %v92
  %v417 = vunpack.c.l.b16 %v93
  %v418 = vunpack.c.l.b16 %v94
  %v419 = vunpack.c.l.b16 %v95
  %v420 = vunpack.c.l.b16 %v96
  %v421 = vunpack.c.l.b16 %v97
  %v422 = vunpack.c.l.b16 %v98
  %v423 = vunpack.c.l.b16 %v99
  %v424 = vunpack.c.l.b16 %v100
  %v425 = vunpack.c.l.b16 %v101
  %v426 = vunpack.c.l.b16 %v102
  %v427 = vunpack.c.l.b16 %v103
  %v428 = vunpack.c.l.b16 %v104
  %v429 = vunpack.c.l.b16 %v105
  %v430 = vunpack.c.l.b16 %v106
  %v431 = vunpack.c.l.b16 %v107
  %v432 = vunpack.c.l.b16 %v108
  %v433 = vunpack.c.l.b16 %v109
  %v434 = vunpack.c.l.b16 %v110
  %v435 = vunpack.c.l.b16 %v111
  %v436 = vunpack.c.l.b16 %v112
  %v437 = vunpack.c.l.b16 %v113
  %v438 = vunpack.c.l.b16 %v114
  %v439 = vunpack.c.l.b16 %v115
  %v440 = vunpack.c.l.b16 %v116
  %v441 = vunpack.c.l.b16 %v117
  %v442 = vunpack.c.l.b16 %v118
  %v443 = vunpack.c.l.b16 %v119
  %v444 = vunpack.c.l.b16 %v120
  %v445 = vunpack.c.l.b16 %v121
  %v446 = vunpack.c.l.b16 %v122
  %v447 = vunpack.c.l.b16 %v123
  %v448 = vunpack.c.l.b16 %v124
  %v449 = vunpack.c.l.b16 %v125
  %v450 = vunpack.c.l.b16 %v126
  %v451 = vunpack.c.l.b16 %v127
  %v452 = vunpack.c.l.b16 %v128
  %v453 = vunpack.c.l.b16 %v129
  %v454 = vunpack.c.l.b16 %v130
  %v455 = vunpack.c.l.b16 %v131
  %v456 = vunpack.c.l.b16 %v132
  %v457 = vunpack.c.l.b16 %v133
  %v458 = vunpack.c.l.b16 %v134
  %v459 = vunpack.c.l.b16 %v135
  %v460 = vunpack.c.l.b16 %v136
  %v461 = vunpack.c.l.b16 %v137
  %v462 = vunpack.c.l.b16 %v138
  %v463 = vunpack.c.l.b16 %v139
  %v464 = vunpack.c.l.b16 %v140
  %v465 = vunpack.c.l.b16 %v141
  %v466 = vunpack.c.l.b16 %v142
  %v467 = vunpack.c.l.b16 %v143
  %v468 = vunpack.c.l.b16 %v144
  %v469 = vunpack.c.l.b16 %v145
  %v470 = vunpack.c.l.b16 %v146
  %v471 = vunpack.c.l.b16 %v147
  %v472 = vunpack.c.l.b16 %v148
  %v473 = vunpack.c.l.b16 %v149
  %v474 = vunpack.c.l.b16 %v150
  %v475 = vunpack.c.l.b16 %v151
  %v476 = vunpack.c.l.b16 %v152
  %v477 = vunpack.c.l.b16 %v153
  %v478 = vunpack.c.l.b16 %v154
  %v479 = vunpack.c.l.b16 %v155
  %v480 = vunpack.c.l.b16 %v156
  %v481 = vunpack.c.l.b16 %v157
  %v482 = vunpack.c.l.b16 %v158
  %v483 = vunpack.c.l.b16 %v159
  %v484 = vunpack.c.l.b16 %v160
  %v485 = vunpack.c.l.b16 %v161
  %v486 = vunpack.c.l.b16 %v162
  %v487 = vpack.c.b16 %v344, %v343
  %v488 = vpack.c.b16 %v346, %v345
  %v489 = vpack.c.b16 %v348, %v347
  %v490 = vpack.c.b16 %v350, %v349
  %v491 = vpack.c.b16 %v352, %v351
  %v492 = vpack.c.b16 %v354, %v353
  %v493 = vpack.c.b16 %v356, %v355
  %v494 = vpack.c.b16 %v358, %v357
  %v495 = vpack.c.b16 %v360, %v359
  %v496 = vpack.c.b16 %v362, %v361
  %v497 = vpack.c.b16 %v364, %v363
  %v498 = vpack.c.b16 %v366, %v365
  %v499 = vpack.c.b16 %v368, %v367
  %v500 = vpack.c.b16 %v370, %v369
  %v501 = vpack.c.b16 %v372, %v371
  %v502 = vpack.c.b16 %v374, %v373
  %v503 = vpack.c.b16 %v376, %v375
  %v504 = vpack.c.b16 %v378, %v377
  %v505 = vpack.c.b16 %v380, %v379
  %v506 = vpack.c.b16 %v382, %v381
  %v507 = vpack.c.b16 %v384, %v383
  %v508 = vpack.c.b16 %v386, %v385
  %v509 = vpack.c.b16 %v388, %v387
  %v510 = vpack.c.b16 %v390, %v389
  %v511 = vpack.c.b16 %v392, %v391
  %v512 = vpack.c.b16 %v394, %v393
  %v513 = vpack.c.b16 %v396, %v395
  %v514 = vpack.c.b16 %v398, %v397
  %v515 = vpack.c.b16 %v400, %v399
  %v516 = vpack.c.b16 %v402, %v401
  %v517 = vpack.c.b16 %v404, %v403
  %v518 = vpack.c.b16 %v406, %v405
  %v519 = vpack.c.b16 %v408, %v407
  %v520 = vpack.c.b16 %v410, %v409
  %v521 = vpack.c.b16 %v412, %v411
  %v522 = vpack.c.b16 %v414, %v413
  %v523 = vpack.c.b16 %v416, %v415
  %v524 = vpack.c.b16 %v418, %v417
  %v525 = vpack.c.b16 %v420, %v419
  %v526 = vpack.c.b16 %v422, %v421
  %v527 = vpack.c.b16 %v424, %v423
  %v528 = vpack.c.b16 %v426, %v425
  %v529 = vpack.c.b16 %v428, %v427
  %v530 = vpack.c.b16 %v430, %v429
  %v531 = vpack.c.b16 %v432, %v431
  %v532 = vpack.c.b16 %v434, %v433
  %v533 = vpack.c.b16 %v436, %v435
  %v534 = vpack.c.b16 %v438, %v437
  %v535 = vpack.c.b16 %v440, %v439
  %v536 = vpack.c.b16 %v442, %v441
  %v537 = vpack.c.b16 %v444, %v443
  %v538 = vpack.c.b16 %v446, %v445
  %v539 = vpack.c.b16 %v448, %v447
  %v540 = vpack.c.b16 %v450, %v449
  %v541 = vpack.c.b16 %v452, %v451
  %v542 = vpack.c.b16 %v454, %v453
  %v543 = vpack.c.b16 %v456, %v455
  %v544 = vpack.c.b16 %v458, %v457
  %v545 = vpack.c.b16 %v460, %v459
  %v546 = vpack.c.b16 %v462, %v461
  %v547 = vpack.c.b16 %v464, %v463
  %v548 = vpack.c.b16 %v466, %v465
  %v549 = vpack.c.b16 %v468, %v467
  %v550 = vpack.c.b16 %v470, %v469
  %v551 = vpack.c.b16 %v472, %v471
  %v552 = vpack.c.b16 %v474, %v473
  %v553 = vpack.c.b16 %v476, %v475
  %v554 = vpack.c.b16 %v478, %v477
  %v555 = vpack.c.b16 %v480, %v479
  %v556 = vpack.c.b16 %v482, %v481
  %v557 = vpack.c.b16 %v484, %v483
  %v558 = vpack.c.b16 %v486, %v485
  %631 = vmatpush.bf16.msra.mxu0 %v494
  %632 = vmatpush.bf16.msra.mxu0 %v493
  %633 = vmatpush.bf16.msra.mxu0 %v492
  %634 = vmatpush.bf16.msra.mxu0 %v491
  %635 = vmatpush.bf16.msra.mxu0 %v490
  %636 = vmatpush.bf16.msra.mxu0 %v489
  %637 = vmatpush.bf16.msra.mxu0 %v488
  %638 = vmatpush.bf16.msra.mxu0 %v487
  %639 = vmatmul.bf16.gmra.mxu0 %v181
  %v640 = vpop.f32.mrf.mxu0
  %v641 = vadd.f32 %v165, %v640
  %v642 = vpop.f32.mrf.mxu0
  %643 = vdwg.mxu0
  %644 = vmatpush.bf16.msra.mxu0 %v502
  %645 = vmatpush.bf16.msra.mxu0 %v501
  %646 = vmatpush.bf16.msra.mxu0 %v500
  %647 = vmatpush.bf16.msra.mxu0 %v499
  %648 = vmatpush.bf16.msra.mxu0 %v498
  %649 = vmatpush.bf16.msra.mxu0 %v497
  %650 = vmatpush.bf16.msra.mxu0 %v496
  %651 = vmatpush.bf16.msra.mxu0 %v495
  %652 = vmatmul.bf16.gmra.mxu0 %v182
  %v653 = vpop.f32.mrf.mxu0
  %v654 = vadd.f32 %v641, %v653
  %v655 = vpop.f32.mrf.mxu0
  %656 = vdwg.mxu0
  %657 = vmatpush.bf16.msra.mxu0 %v510
  %658 = vmatpush.bf16.msra.mxu0 %v509
  %659 = vmatpush.bf16.msra.mxu0 %v508
  %660 = vmatpush.bf16.msra.mxu0 %v507
  %661 = vmatpush.bf16.msra.mxu0 %v506
  %662 = vmatpush.bf16.msra.mxu0 %v505
  %663 = vmatpush.bf16.msra.mxu0 %v504
  %664 = vmatpush.bf16.msra.mxu0 %v503
  %665 = vmatmul.bf16.gmra.mxu0 %v183
  %v666 = vpop.f32.mrf.mxu0
  %v667 = vadd.f32 %v654, %v666
  %v668 = vpop.f32.mrf.mxu0
  %669 = vdwg.mxu0
  %670 = vmatpush.bf16.msra.mxu0 %v518
  %671 = vmatpush.bf16.msra.mxu0 %v517
  %672 = vmatpush.bf16.msra.mxu0 %v516
  %673 = vmatpush.bf16.msra.mxu0 %v515
  %674 = vmatpush.bf16.msra.mxu0 %v514
  %675 = vmatpush.bf16.msra.mxu0 %v513
  %676 = vmatpush.bf16.msra.mxu0 %v512
  %677 = vmatpush.bf16.msra.mxu0 %v511
  %678 = vmatmul.bf16.gmra.mxu0 %v184
  %v679 = vpop.f32.mrf.mxu0
  %v680 = vadd.f32 %v667, %v679
  %v681 = vpop.f32.mrf.mxu0
  %682 = vdwg.mxu0
  %683 = vmatpush.bf16.msra.mxu0 %v526
  %684 = vmatpush.bf16.msra.mxu0 %v525
  %685 = vmatpush.bf16.msra.mxu0 %v524
  %686 = vmatpush.bf16.msra.mxu0 %v523
  %687 = vmatpush.bf16.msra.mxu0 %v522
  %688 = vmatpush.bf16.msra.mxu0 %v521
  %689 = vmatpush.bf16.msra.mxu0 %v520
  %690 = vmatpush.bf16.msra.mxu0 %v519
  %691 = vmatmul.bf16.gmra.mxu0 %v185
  %v692 = vpop.f32.mrf.mxu0
  %v693 = vadd.f32 %v680, %v692
  %v694 = vpop.f32.mrf.mxu0
  %695 = vdwg.mxu0
  %696 = vmatpush.bf16.msra.mxu0 %v534
  %697 = vmatpush.bf16.msra.mxu0 %v533
  %698 = vmatpush.bf16.msra.mxu0 %v532
  %699 = vmatpush.bf16.msra.mxu0 %v531
  %700 = vmatpush.bf16.msra.mxu0 %v530
  %701 = vmatpush.bf16.msra.mxu0 %v529
  %702 = vmatpush.bf16.msra.mxu0 %v528
  %703 = vmatpush.bf16.msra.mxu0 %v527
  %704 = vmatmul.bf16.gmra.mxu0 %v186
  %v705 = vpop.f32.mrf.mxu0
  %v706 = vadd.f32 %v693, %v705
  %v707 = vpop.f32.mrf.mxu0
  %708 = vdwg.mxu0
  %709 = vmatpush.bf16.msra.mxu0 %v542
  %710 = vmatpush.bf16.msra.mxu0 %v541
  %711 = vmatpush.bf16.msra.mxu0 %v540
  %712 = vmatpush.bf16.msra.mxu0 %v539
  %713 = vmatpush.bf16.msra.mxu0 %v538
  %714 = vmatpush.bf16.msra.mxu0 %v537
  %715 = vmatpush.bf16.msra.mxu0 %v536
  %716 = vmatpush.bf16.msra.mxu0 %v535
  %717 = vmatmul.bf16.gmra.mxu0 %v187
  %v718 = vpop.f32.mrf.mxu0
  %v719 = vadd.f32 %v706, %v718
  %v720 = vpop.f32.mrf.mxu0
  %721 = vdwg.mxu0
  %722 = vmatpush.bf16.msra.mxu0 %v550
  %723 = vmatpush.bf16.msra.mxu0 %v549
  %724 = vmatpush.bf16.msra.mxu0 %v548
  %725 = vmatpush.bf16.msra.mxu0 %v547
  %726 = vmatpush.bf16.msra.mxu0 %v546
  %727 = vmatpush.bf16.msra.mxu0 %v545
  %728 = vmatpush.bf16.msra.mxu0 %v544
  %729 = vmatpush.bf16.msra.mxu0 %v543
  %730 = vmatmul.bf16.gmra.mxu0 %v188
  %v731 = vpop.f32.mrf.mxu0
  %v732 = vadd.f32 %v719, %v731
  %v733 = vpop.f32.mrf.mxu0
  %734 = vdwg.mxu0
  %735 = vmatpush.bf16.msra.mxu0 %v558
  %736 = vmatpush.bf16.msra.mxu0 %v557
  %737 = vmatpush.bf16.msra.mxu0 %v556
  %738 = vmatpush.bf16.msra.mxu0 %v555
  %739 = vmatpush.bf16.msra.mxu0 %v554
  %740 = vmatpush.bf16.msra.mxu0 %v553
  %741 = vmatpush.bf16.msra.mxu0 %v552
  %742 = vmatpush.bf16.msra.mxu0 %v551
  %743 = vmatmul.bf16.gmra.mxu0 %v189
  %v744 = vpop.f32.mrf.mxu0
  %v745 = vadd.f32 %v732, %v744
  %v746 = vpop.f32.mrf.mxu0
  %747 = vdwg.mxu0
  %v748 = vmax.f32 %v745, 0.0
  %v749 = vpack.c.bf16 %v748, %v748
  %750 = vst [vmem:[%s3] sm:$0xf] %v749
  // Predicated region
  $region14: #{_lambda_.31} parent=0 // pred_check
    _
  $region15: #{_lambda_.31} parent=0 // pred_check_branch
    %752 = sbr.rel (0) target = $region17
  $region16: #{_lambda_.31} parent=0 // pred_region
    _
  $region17: #{_lambda_.31} parent=0 // pred_fallthru
    _
  // Predicated region
  $region18: #{_lambda_.31} parent=0 // pred_check
    _
  $region19: #{_lambda_.31} parent=0 // pred_check_branch
    %754 = sbr.rel (0) target = $region21
  $region20: #{_lambda_.31} parent=0 // pred_region
    _
  $region21: #{_lambda_.31} parent=0 // pred_fallthru
    _

// kernel: _lambda_.33
$region0: #{_lambda_.33}
  #allocation0 [shape = 'u32[]', space=smem, size = 0x4, offset = 0x4, fixed_abs, tag = 'smem constant byte address 0x4 - core index']
  #allocation1 [shape = 'u32[72,128]{1,0:T(1,128)}', space=vmem, size = 0x9000, scoped, tag = 'internal scratch']
  %s0 = inlined_call_operand.vmem [shape: bf16[2,4,512], index: 0, kind: input, shape index: {}]
  %s1 = inlined_call_operand.vmem [shape: bf16[512,128], index: 1, kind: input, shape index: {}]
  %s2 = inlined_call_operand.vmem [shape: f32[1,128], index: 2, kind: input, shape index: {}]
  %s3 = inlined_call_operand.hbm [shape: f32[2,128], index: 3, kind: output, shape index: {}]
  %s4 = sld [smem:[#allocation0]]
  $region22: #{_lambda_.33} parent=0
    _
  %s6 = ssub.s32 1, %s4
  %s7 = scalar_select 0, %s6, %s4
  $region1: #{_lambda_.33} parent=0
    #allocation2 [shape = 'u8[1024]{0}', space=vmem, size = 0x400, scoped, tag = 'output window, operand 0, single buffered']
    #allocation3 [shape = 's32[1]{0}', space=sflag, size = 0x4, scoped, tag = 'scoped memory for _lambda_.33']
    %8 = vsyncpa [#allocation3], 0
    // Predicated region
    $region2: #{_lambda_.33} parent=1 // pred_check
      _
    $region3: #{_lambda_.33} parent=1 // pred_check_branch
      %10 = sbr.rel (0) target = $region5
    $region4: #{_lambda_.33} parent=1 // pred_region
      _
    $region5: #{_lambda_.33} parent=1 // pred_fallthru
      _
    // Predicated region
    $region6: #{_lambda_.33} parent=1 // pred_check
      _
    $region7: #{_lambda_.33} parent=1 // pred_check_branch
      %12 = sbr.rel (0) target = $region9
    $region8: #{_lambda_.33} parent=1 // pred_region
      _
    $region9: #{_lambda_.33} parent=1 // pred_fallthru
      _
    // Predicated region
    $region10: #{_lambda_.33} parent=1 // pred_check
      _
    $region11: #{_lambda_.33} parent=1 // pred_check_branch
      %14 = sbr.rel (0) target = $region13
    $region12: #{_lambda_.33} parent=1 // pred_region
      _
    $region13: #{_lambda_.33} parent=1 // pred_fallthru
      _
    %v15 = vld [vmem:[%s0] sm:$0xff]
    %v16 = vld [vmem:[%s0 + $0x8] sm:$0xff]
    %v17 = vunpack.c.l.bf16 %v15
    %v18 = vunpack.c.h.bf16 %v15
    %v19 = vunpack.c.l.bf16 %v16
    %v20 = vunpack.c.h.bf16 %v16
    %25 = vst [vmem:[#allocation1] ss:$2 sm:$0xff] %v17
    %s26 = scalar_lea.vmem [#allocation1], 16
    %27 = vst [vmem:[%s26] ss:$2 sm:$0xff] %v18
    %v28 = vld.sshfl [vmem:[#allocation1] sm:$0xff pattern:$0x75316420]
    %v29 = vld.sshfl [vmem:[#allocation1 + $0x8] sm:$0xff pattern:$0x75316420]
    %v30 = vld.sshfl [vmem:[#allocation1 + $0x10] sm:$0xff pattern:$0x75316420]
    %v31 = vld.sshfl [vmem:[#allocation1 + $0x18] sm:$0xff pattern:$0x75316420]
    %s32 = scalar_lea.vmem [#allocation1], 32
    %33 = vst [vmem:[%s32] ss:$2 sm:$0xff] %v19
    %s34 = scalar_lea.vmem [#allocation1], 48
    %35 = vst [vmem:[%s34] ss:$2 sm:$0xff] %v20
    %v36 = vld.sshfl [vmem:[#allocation1 + $0x20] sm:$0xff pattern:$0x75316420]
    %v37 = vld.sshfl [vmem:[#allocation1 + $0x28] sm:$0xff pattern:$0x75316420]
    %v38 = vld.sshfl [vmem:[#allocation1 + $0x30] sm:$0xff pattern:$0x75316420]
    %v39 = vld.sshfl [vmem:[#allocation1 + $0x38] sm:$0xff pattern:$0x75316420]
    %vm48 = vcmask 1043456
    %v49 = vsel %vm48, %v28, 0.0
    %v50 = vrot.slane %v49, 4
    %v51 = vadd.f32 %v49, %v50
    %v52 = vrot.slane %v51, 2
    %v53 = vadd.f32 %v51, %v52
    %v54 = vrot.slane %v53, 1
    %v55 = vadd.f32 %v53, %v54
    %v56 = vsel %vm48, %v29, 0.0
    %v57 = vrot.slane %v56, 4
    %v58 = vadd.f32 %v56, %v57
    %v59 = vrot.slane %v58, 2
    %v60 = vadd.f32 %v58, %v59
    %v61 = vrot.slane %v60, 1
    %v62 = vadd.f32 %v60, %v61
    %v63 = vsel %vm48, %v30, 0.0
    %v64 = vrot.slane %v63, 4
    %v65 = vadd.f32 %v63, %v64
    %v66 = vrot.slane %v65, 2
    %v67 = vadd.f32 %v65, %v66
    %v68 = vrot.slane %v67, 1
    %v69 = vadd.f32 %v67, %v68
    %v70 = vsel %vm48, %v31, 0.0
    %v71 = vrot.slane %v70, 4
    %v72 = vadd.f32 %v70, %v71
    %v73 = vrot.slane %v72, 2
    %v74 = vadd.f32 %v72, %v73
    %v75 = vrot.slane %v74, 1
    %v76 = vadd.f32 %v74, %v75
    %v77 = vsel %vm48, %v36, 0.0
    %v78 = vrot.slane %v77, 4
    %v79 = vadd.f32 %v77, %v78
    %v80 = vrot.slane %v79, 2
    %v81 = vadd.f32 %v79, %v80
    %v82 = vrot.slane %v81, 1
    %v83 = vadd.f32 %v81, %v82
    %v84 = vsel %vm48, %v37, 0.0
    %v85 = vrot.slane %v84, 4
    %v86 = vadd.f32 %v84, %v85
    %v87 = vrot.slane %v86, 2
    %v88 = vadd.f32 %v86, %v87
    %v89 = vrot.slane %v88, 1
    %v90 = vadd.f32 %v88, %v89
    %v91 = vsel %vm48, %v38, 0.0
    %v92 = vrot.slane %v91, 4
    %v93 = vadd.f32 %v91, %v92
    %v94 = vrot.slane %v93, 2
    %v95 = vadd.f32 %v93, %v94
    %v96 = vrot.slane %v95, 1
    %v97 = vadd.f32 %v95, %v96
    %v98 = vsel %vm48, %v39, 0.0
    %v99 = vrot.slane %v98, 4
    %v100 = vadd.f32 %v98, %v99
    %v101 = vrot.slane %v100, 2
    %v102 = vadd.f32 %v100, %v101
    %v103 = vrot.slane %v102, 1
    %v104 = vadd.f32 %v102, %v103
    %v105 = vrcp.pop 4.0
    %v106 = vmul.f32 4.0, %v105
    %v107 = vsub.f32 1.0, %v106
    %v108 = vmul.f32 %v105, %v107
    %v109 = vadd.f32 %v105, %v108
    %vm110 = vweird.f32 %v105
    %v111 = vsel %vm110, %v105, %v109
    %v112 = vmul.f32 %v55, %v111
    %v113 = vmul.f32 %v62, %v111
    %v114 = vmul.f32 %v69, %v111
    %v115 = vmul.f32 %v76, %v111
    %v116 = vmul.f32 %v83, %v111
    %v117 = vmul.f32 %v90, %v111
    %v118 = vmul.f32 %v97, %v111
    %v119 = vmul.f32 %v104, %v111
    %v120 = vpack.c.bf16 %v112, %v112
    %v121 = vpack.c.bf16 %v113, %v113
    %v122 = vpack.c.bf16 %v114, %v114
    %v123 = vpack.c.bf16 %v115, %v115
    %v124 = vpack.c.bf16 %v116, %v116
    %v125 = vpack.c.bf16 %v117, %v117
    %v126 = vpack.c.bf16 %v118, %v118
    %v127 = vpack.c.bf16 %v119, %v119
    %v128 = vld [vmem:[%s1] sm:$0xf]
    %v129 = vld [vmem:[%s1 + $0x4] sm:$0xf]
    %v130 = vld [vmem:[%s1 + $0x8] sm:$0xf]
    %v131 = vld [vmem:[%s1 + $0xc] sm:$0xf]
    %v132 = vld [vmem:[%s1 + $0x10] sm:$0xf]
    %v133 = vld [vmem:[%s1 + $0x14] sm:$0xf]
    %v134 = vld [vmem:[%s1 + $0x18] sm:$0xf]
    %v135 = vld [vmem:[%s1 + $0x1c] sm:$0xf]
    %v136 = vld [vmem:[%s1 + $0x20] sm:$0xf]
    %v137 = vld [vmem:[%s1 + $0x24] sm:$0xf]
    %v138 = vld [vmem:[%s1 + $0x28] sm:$0xf]
    %v139 = vld [vmem:[%s1 + $0x2c] sm:$0xf]
    %v140 = vld [vmem:[%s1 + $0x30] sm:$0xf]
    %v141 = vld [vmem:[%s1 + $0x34] sm:$0xf]
    %v142 = vld [vmem:[%s1 + $0x38] sm:$0xf]
    %v143 = vld [vmem:[%s1 + $0x3c] sm:$0xf]
    %v144 = vld [vmem:[%s1 + $0x40] sm:$0xf]
    %v145 = vld [vmem:[%s1 + $0x44] sm:$0xf]
    %v146 = vld [vmem:[%s1 + $0x48] sm:$0xf]
    %v147 = vld [vmem:[%s1 + $0x4c] sm:$0xf]
    %v148 = vld [vmem:[%s1 + $0x50] sm:$0xf]
    %v149 = vld [vmem:[%s1 + $0x54] sm:$0xf]
    %v150 = vld [vmem:[%s1 + $0x58] sm:$0xf]
    %v151 = vld [vmem:[%s1 + $0x5c] sm:$0xf]
    %v152 = vld [vmem:[%s1 + $0x60] sm:$0xf]
    %v153 = vld [vmem:[%s1 + $0x64] sm:$0xf]
    %v154 = vld [vmem:[%s1 + $0x68] sm:$0xf]
    %v155 = vld [vmem:[%s1 + $0x6c] sm:$0xf]
    %v156 = vld [vmem:[%s1 + $0x70] sm:$0xf]
    %v157 = vld [vmem:[%s1 + $0x74] sm:$0xf]
    %v158 = vld [vmem:[%s1 + $0x78] sm:$0xf]
    %v159 = vld [vmem:[%s1 + $0x7c] sm:$0xf]
    %v160 = vld [vmem:[%s1 + $0x80] sm:$0xf]
    %v161 = vld [vmem:[%s1 + $0x84] sm:$0xf]
    %v162 = vld [vmem:[%s1 + $0x88] sm:$0xf]
    %v163 = vld [vmem:[%s1 + $0x8c] sm:$0xf]
    %v164 = vld [vmem:[%s1 + $0x90] sm:$0xf]
    %v165 = vld [vmem:[%s1 + $0x94] sm:$0xf]
    %v166 = vld [vmem:[%s1 + $0x98] sm:$0xf]
    %v167 = vld [vmem:[%s1 + $0x9c] sm:$0xf]
    %v168 = vld [vmem:[%s1 + $0xa0] sm:$0xf]
    %v169 = vld [vmem:[%s1 + $0xa4] sm:$0xf]
    %v170 = vld [vmem:[%s1 + $0xa8] sm:$0xf]
    %v171 = vld [vmem:[%s1 + $0xac] sm:$0xf]
    %v172 = vld [vmem:[%s1 + $0xb0] sm:$0xf]
    %v173 = vld [vmem:[%s1 + $0xb4] sm:$0xf]
    %v174 = vld [vmem:[%s1 + $0xb8] sm:$0xf]
    %v175 = vld [vmem:[%s1 + $0xbc] sm:$0xf]
    %v176 = vld [vmem:[%s1 + $0xc0] sm:$0xf]
    %v177 = vld [vmem:[%s1 + $0xc4] sm:$0xf]
    %v178 = vld [vmem:[%s1 + $0xc8] sm:$0xf]
    %v179 = vld [vmem:[%s1 + $0xcc] sm:$0xf]
    %v180 = vld [vmem:[%s1 + $0xd0] sm:$0xf]
    %v181 = vld [vmem:[%s1 + $0xd4] sm:$0xf]
    %v182 = vld [vmem:[%s1 + $0xd8] sm:$0xf]
    %v183 = vld [vmem:[%s1 + $0xdc] sm:$0xf]
    %v184 = vld [vmem:[%s1 + $0xe0] sm:$0xf]
    %v185 = vld [vmem:[%s1 + $0xe4] sm:$0xf]
    %v186 = vld [vmem:[%s1 + $0xe8] sm:$0xf]
    %v187 = vld [vmem:[%s1 + $0xec] sm:$0xf]
    %v188 = vld [vmem:[%s1 + $0xf0] sm:$0xf]
    %v189 = vld [vmem:[%s1 + $0xf4] sm:$0xf]
    %v190 = vld [vmem:[%s1 + $0xf8] sm:$0xf]
    %v191 = vld [vmem:[%s1 + $0xfc] sm:$0xf]
    %v192 = vld [vmem:[%s2] sm:$0x1]
    %v194 = vperm.slane %v192, 0
    %v204 = vunpack.c.l.b16 %v120
    %v205 = vunpack.c.l.b16 %v121
    %v206 = vunpack.c.l.b16 %v122
    %v207 = vunpack.c.l.b16 %v123
    %v208 = vunpack.c.l.b16 %v124
    %v209 = vunpack.c.l.b16 %v125
    %v210 = vunpack.c.l.b16 %v126
    %v211 = vunpack.c.l.b16 %v127
    %vm212 = vcmask 1041409
    %v213 = vsel %vm212, %v208, %v204
    %v214 = vsel %vm212, %v209, %v205
    %v215 = vsel %vm212, %v210, %v206
    %v216 = vsel %vm212, %v211, %v207
    %v217 = vpack.c.b16 %v213, %v213
    %v218 = vpack.c.b16 %v214, %v214
    %v219 = vpack.c.b16 %v215, %v215
    %v220 = vpack.c.b16 %v216, %v216
    %v289 = vunpack.c.l.b16 %v128
    %v290 = vunpack.c.l.b16 %v129
    %v291 = vunpack.c.l.b16 %v130
    %v292 = vunpack.c.l.b16 %v131
    %v293 = vunpack.c.l.b16 %v132
    %v294 = vunpack.c.l.b16 %v133
    %v295 = vunpack.c.l.b16 %v134
    %v296 = vunpack.c.l.b16 %v135
    %v297 = vunpack.c.l.b16 %v136
    %v298 = vunpack.c.l.b16 %v137
    %v299 = vunpack.c.l.b16 %v138
    %v300 = vunpack.c.l.b16 %v139
    %v301 = vunpack.c.l.b16 %v140
    %v302 = vunpack.c.l.b16 %v141
    %v303 = vunpack.c.l.b16 %v142
    %v304 = vunpack.c.l.b16 %v143
    %v305 = vunpack.c.l.b16 %v144
    %v306 = vunpack.c.l.b16 %v145
    %v307 = vunpack.c.l.b16 %v146
    %v308 = vunpack.c.l.b16 %v147
    %v309 = vunpack.c.l.b16 %v148
    %v310 = vunpack.c.l.b16 %v149
    %v311 = vunpack.c.l.b16 %v150
    %v312 = vunpack.c.l.b16 %v151
    %v313 = vunpack.c.l.b16 %v152
    %v314 = vunpack.c.l.b16 %v153
    %v315 = vunpack.c.l.b16 %v154
    %v316 = vunpack.c.l.b16 %v155
    %v317 = vunpack.c.l.b16 %v156
    %v318 = vunpack.c.l.b16 %v157
    %v319 = vunpack.c.l.b16 %v158
    %v320 = vunpack.c.l.b16 %v159
    %v321 = vunpack.c.l.b16 %v160
    %v322 = vunpack.c.l.b16 %v161
    %v323 = vunpack.c.l.b16 %v162
    %v324 = vunpack.c.l.b16 %v163
    %v325 = vunpack.c.l.b16 %v164
    %v326 = vunpack.c.l.b16 %v165
    %v327 = vunpack.c.l.b16 %v166
    %v328 = vunpack.c.l.b16 %v167
    %v329 = vunpack.c.l.b16 %v168
    %v330 = vunpack.c.l.b16 %v169
    %v331 = vunpack.c.l.b16 %v170
    %v332 = vunpack.c.l.b16 %v171
    %v333 = vunpack.c.l.b16 %v172
    %v334 = vunpack.c.l.b16 %v173
    %v335 = vunpack.c.l.b16 %v174
    %v336 = vunpack.c.l.b16 %v175
    %v337 = vunpack.c.l.b16 %v176
    %v338 = vunpack.c.l.b16 %v177
    %v339 = vunpack.c.l.b16 %v178
    %v340 = vunpack.c.l.b16 %v179
    %v341 = vunpack.c.l.b16 %v180
    %v342 = vunpack.c.l.b16 %v181
    %v343 = vunpack.c.l.b16 %v182
    %v344 = vunpack.c.l.b16 %v183
    %v345 = vunpack.c.l.b16 %v184
    %v346 = vunpack.c.l.b16 %v185
    %v347 = vunpack.c.l.b16 %v186
    %v348 = vunpack.c.l.b16 %v187
    %v349 = vunpack.c.l.b16 %v188
    %v350 = vunpack.c.l.b16 %v189
    %v351 = vunpack.c.l.b16 %v190
    %v352 = vunpack.c.l.b16 %v191
    %v353 = vpack.c.b16 %v290, %v289
    %v354 = vpack.c.b16 %v292, %v291
    %v355 = vpack.c.b16 %v294, %v293
    %v356 = vpack.c.b16 %v296, %v295
    %v357 = vpack.c.b16 %v298, %v297
    %v358 = vpack.c.b16 %v300, %v299
    %v359 = vpack.c.b16 %v302, %v301
    %v360 = vpack.c.b16 %v304, %v303
    %v361 = vpack.c.b16 %v306, %v305
    %v362 = vpack.c.b16 %v308, %v307
    %v363 = vpack.c.b16 %v310, %v309
    %v364 = vpack.c.b16 %v312, %v311
    %v365 = vpack.c.b16 %v314, %v313
    %v366 = vpack.c.b16 %v316, %v315
    %v367 = vpack.c.b16 %v318, %v317
    %v368 = vpack.c.b16 %v320, %v319
    %v369 = vpack.c.b16 %v322, %v321
    %v370 = vpack.c.b16 %v324, %v323
    %v371 = vpack.c.b16 %v326, %v325
    %v372 = vpack.c.b16 %v328, %v327
    %v373 = vpack.c.b16 %v330, %v329
    %v374 = vpack.c.b16 %v332, %v331
    %v375 = vpack.c.b16 %v334, %v333
    %v376 = vpack.c.b16 %v336, %v335
    %v377 = vpack.c.b16 %v338, %v337
    %v378 = vpack.c.b16 %v340, %v339
    %v379 = vpack.c.b16 %v342, %v341
    %v380 = vpack.c.b16 %v344, %v343
    %v381 = vpack.c.b16 %v346, %v345
    %v382 = vpack.c.b16 %v348, %v347
    %v383 = vpack.c.b16 %v350, %v349
    %v384 = vpack.c.b16 %v352, %v351
    %417 = vmatpush.bf16.msra.mxu0 %v360
    %418 = vmatpush.bf16.msra.mxu0 %v359
    %419 = vmatpush.bf16.msra.mxu0 %v358
    %420 = vmatpush.bf16.msra.mxu0 %v357
    %421 = vmatpush.bf16.msra.mxu0 %v356
    %422 = vmatpush.bf16.msra.mxu0 %v355
    %423 = vmatpush.bf16.msra.mxu0 %v354
    %424 = vmatpush.bf16.msra.mxu0 %v353
    %425 = vmatmul.bf16.gmra.mxu0 %v217
    %v426 = vpop.f32.mrf.mxu0
    %v427 = vadd.f32 %v194, %v426
    %v428 = vpop.f32.mrf.mxu0
    %429 = vdwg.mxu0
    %430 = vmatpush.bf16.msra.mxu0 %v368
    %431 = vmatpush.bf16.msra.mxu0 %v367
    %432 = vmatpush.bf16.msra.mxu0 %v366
    %433 = vmatpush.bf16.msra.mxu0 %v365
    %434 = vmatpush.bf16.msra.mxu0 %v364
    %435 = vmatpush.bf16.msra.mxu0 %v363
    %436 = vmatpush.bf16.msra.mxu0 %v362
    %437 = vmatpush.bf16.msra.mxu0 %v361
    %438 = vmatmul.bf16.gmra.mxu0 %v218
    %v439 = vpop.f32.mrf.mxu0
    %v440 = vadd.f32 %v427, %v439
    %v441 = vpop.f32.mrf.mxu0
    %442 = vdwg.mxu0
    %443 = vmatpush.bf16.msra.mxu0 %v376
    %444 = vmatpush.bf16.msra.mxu0 %v375
    %445 = vmatpush.bf16.msra.mxu0 %v374
    %446 = vmatpush.bf16.msra.mxu0 %v373
    %447 = vmatpush.bf16.msra.mxu0 %v372
    %448 = vmatpush.bf16.msra.mxu0 %v371
    %449 = vmatpush.bf16.msra.mxu0 %v370
    %450 = vmatpush.bf16.msra.mxu0 %v369
    %451 = vmatmul.bf16.gmra.mxu0 %v219
    %v452 = vpop.f32.mrf.mxu0
    %v453 = vadd.f32 %v440, %v452
    %v454 = vpop.f32.mrf.mxu0
    %455 = vdwg.mxu0
    %456 = vmatpush.bf16.msra.mxu0 %v384
    %457 = vmatpush.bf16.msra.mxu0 %v383
    %458 = vmatpush.bf16.msra.mxu0 %v382
    %459 = vmatpush.bf16.msra.mxu0 %v381
    %460 = vmatpush.bf16.msra.mxu0 %v380
    %461 = vmatpush.bf16.msra.mxu0 %v379
    %462 = vmatpush.bf16.msra.mxu0 %v378
    %463 = vmatpush.bf16.msra.mxu0 %v377
    %464 = vmatmul.bf16.gmra.mxu0 %v220
    %v465 = vpop.f32.mrf.mxu0
    %v466 = vadd.f32 %v453, %v465
    %v467 = vpop.f32.mrf.mxu0
    %468 = vdwg.mxu0
    %469 = vst [vmem:[#allocation2] sm:$0x3] %v466
    // Predicated region
    $region14: #{_lambda_.33} parent=1 // pred_check
      _
    $region15: #{_lambda_.33} parent=1 // pred_check_branch
      %471 = sbr.rel (0) target = $region17
    $region16: #{_lambda_.33} parent=1 // pred_region
      %473 = vsyncadd [#allocation3], 0
      %s475 = sshll.u32 [#allocation2], 4
      %s476 = int_to_ptr.vmem [resolvable:$true] %s475
      %s477 = sshll.u32 %s3, 4
      %s478 = int_to_ptr.hbm [resolvable:$true] %s477
      %480 = dma.vmem_to_hbm [thread:$0]  %s476, 32, %s478, [#allocation3]
    $region17: #{_lambda_.33} parent=1 // pred_fallthru
      _
    // Predicated region
    $region18: #{_lambda_.33} parent=1 // pred_check
      _
    $region19: #{_lambda_.33} parent=1 // pred_check_branch
      %482 = sbr.rel (0) target = $region21
    $region20: #{_lambda_.33} parent=1 // pred_region
      %484 = dma.done [#allocation3], 32
    $region21: #{_lambda_.33} parent=1 // pred_fallthru
      _
    %485 = vsyncpa [#allocation3], 1

</llo_original>
